<compile_context>
chip_gen: v7x
topology: tpu7x:2x2x1
jax: 0.10.0
libtpu: 0.0.40
codegen_flags: <defaults>
</compile_context>

<pallas_src>
import functools

import jax
import jax.numpy as jnp
from jax import lax
from jax.experimental import pallas as pl
from jax.experimental.pallas import tpu as pltpu

EPS = 1e-5
NEG_INF = -1e30
F_IN = 2613
F_IN_PAD = 2688            # 21 * 128, lane aligned K for lin1
OUT_DIM = 25
OUT_PAD = 128              # lane-dense final store; host slices [:, :25]
C_OUT = 256                # per-head GAT output width


def _round_up(x, m):
    return -(-x // m) * m


# ----------------------------- kernel helpers ------------------------------ #

def _elu(z):
    # F.elu, alpha = 1.0 (f32 elementwise; v5e-friendly)
    return jnp.where(z > 0, z, jnp.exp(jnp.minimum(z, 0.0)) - 1.0)


def _batchnorm(y, gamma, beta):
    # BatchNorm1d training-mode forward: batch stats, biased variance, eps=1e-5.
    # One-pass: var = E[y^2] - E[y]^2 (clamped >= 0 for numerical safety).
    mean = jnp.mean(y, axis=0, keepdims=True)
    mean_sq = jnp.mean(y * y, axis=0, keepdims=True)
    var = jnp.maximum(mean_sq - mean * mean, 0.0)
    return gamma * (y - mean) * lax.rsqrt(var + EPS) + beta


def _make_fused_kernel(heads, c_out, n_gat, seg_offsets):
    """Fully fused forward kernel for a static (heads, n_gat) configuration."""

    def kernel(*refs):
        it = iter(refs)
        x_ref = next(it)                            # [N, F_IN_PAD] bf16
        adjb_ref = next(it)                         # [N, N] bf16 additive edge mask
        pvec_ref = next(it)                         # [1, P] packed f32 gamma/beta/bias
        lin_w = [next(it) for _ in range(3)]        # bf16 [din, 256]
        gat_w = [(next(it), next(it)) for _ in range(n_gat)]   # (W, att-matrix) bf16
        pred_w = [next(it) for _ in range(2)]       # bf16
        pw3_ref = next(it)                          # bf16 [H*64, OUT_PAD]
        o_ref = next(it)                            # f32 [N, OUT_PAD]
        hbuf_ref = next(it)                         # VMEM scratch f32 [N, H*C]

        def seg(name):
            off, d = seg_offsets[name]
            return pvec_ref[:, off:off + d]

        adjb = adjb_ref[...].astype(jnp.float32)    # cast once; elementwise stays f32
        h = x_ref[...]                              # bf16 [N, F_IN_PAD]

        # -------- FC backbone: 3 x (linear -> BN -> ELU) --------------------
        # (linear biases dropped: BN mean subtraction cancels them exactly)
        for li, w_ref in enumerate(lin_w):
            y = jnp.dot(h.astype(w_ref.dtype), w_ref[...],
                        preferred_element_type=jnp.float32)
            h = _elu(_batchnorm(y, seg(f'bn{li + 1}_g'), seg(f'bn{li + 1}_b')))

        # -------- GAT layers (concat heads) -> BN -> ELU ---------------------
        for gi, (gw_ref, attw_ref) in enumerate(gat_w):
            bname = 'bn4' if gi == 0 else f'bnl{gi - 1}'
            xw = jnp.dot(h.astype(gw_ref.dtype), gw_ref[...],
                         preferred_element_type=jnp.float32)        # [N, H*C] f32
            xw_b = xw.astype(jnp.bfloat16)                          # cast ONCE per layer
            # per-node (a_dst, a_src) scores for every head in one bf16 matmul
            scores = jnp.dot(xw_b, attw_ref[...],
                             preferred_element_type=jnp.float32)    # [N, ATT_PAD]
            scores_t = jnp.transpose(scores)                        # small [ATT_PAD, N]
            for hd in range(heads):                                  # heads static & small
                a_dst = scores[:, 2 * hd:2 * hd + 1]                 # [N, 1]
                a_src = scores_t[2 * hd + 1:2 * hd + 2, :]           # [1, N]
                e = a_dst + a_src                   # e[i, j] = a_dst[i] + a_src[j]
                e = jnp.where(e > 0, e, 0.2 * e)    # LeakyReLU(0.2)
                e = e + adjb                        # additive edge mask (0 / -1e30)
                e = e - jnp.max(e, axis=1, keepdims=True)   # stable masked softmax
                p = jnp.exp(e)                      # masked entries underflow to 0
                # self-loops guarantee sum(p) >= 1, so the reciprocal is safe
                inv = pl.reciprocal(jnp.sum(p, axis=1, keepdims=True), approx=True)
                alpha = (p * inv).astype(jnp.bfloat16)      # bf16 only at the MXU input
                # direct lane-aligned slice store (c_out is a multiple of 128)
                hbuf_ref[:, hd * c_out:(hd + 1) * c_out] = jnp.dot(
                    alpha, xw_b[:, hd * c_out:(hd + 1) * c_out],
                    preferred_element_type=jnp.float32)
            # GATConv bias dropped (cancelled by the following BatchNorm)
            h = _elu(_batchnorm(hbuf_ref[...], seg(f'{bname}_g'), seg(f'{bname}_b')))

        # -------- Predictor head ---------------------------------------------
        for pi, w_ref in enumerate(pred_w):
            y = jnp.dot(h.astype(w_ref.dtype), w_ref[...],
                        preferred_element_type=jnp.float32)
            h = _elu(_batchnorm(y, seg(f'pbn{pi + 1}_g'), seg(f'pbn{pi + 1}_b')))
        # final linear (the only live bias), lane-dense [N, OUT_PAD] store
        o_ref[...] = jnp.dot(h.astype(pw3_ref.dtype), pw3_ref[...],
                             preferred_element_type=jnp.float32) + seg('plin3_b')

    return kernel


# ------------------------------- parameters -------------------------------- #

def init_params(key, n_heads, n_layers):
    p = {}
    keys = iter(jax.random.split(key, 256))

    def lin(din, dout, pad_in=0, pad_out=0):
        w = jax.random.normal(next(keys), (dout, din), jnp.float32) / jnp.sqrt(din)
        b = 0.01 * jax.random.normal(next(keys), (1, dout), jnp.float32)
        wt = w.T                                              # pre-transposed [din, dout]
        if pad_in:
            wt = jnp.pad(wt, ((0, pad_in), (0, 0)))           # zero-pad K axis
        if pad_out:
            wt = jnp.pad(wt, ((0, 0), (0, pad_out)))          # zero-pad output lanes
            b = jnp.pad(b, ((0, 0), (0, pad_out)))
        return wt.astype(jnp.bfloat16), b                      # bf16 weight, f32 bias

    def bn(d):
        g = 1.0 + 0.1 * jax.random.normal(next(keys), (1, d), jnp.float32)
        b = 0.1 * jax.random.normal(next(keys), (1, d), jnp.float32)
        return g, b

    def gat(din, heads, dout):
        wt, _ = lin(din, heads * dout)                         # GATConv lin has no bias
        asrc = 0.1 * jax.random.normal(next(keys), (heads, dout), jnp.float32)
        adst = 0.1 * jax.random.normal(next(keys), (heads, dout), jnp.float32)
        bias = 0.01 * jax.random.normal(next(keys), (1, heads * dout), jnp.float32)
        return wt, asrc, adst, bias

    # GATSY backbone
    p['lin1'] = lin(F_IN, 256, pad_in=F_IN_PAD - F_IN); p['bn1'] = bn(256)
    p['lin2'] = lin(256, 256);                          p['bn2'] = bn(256)
    p['lin3'] = lin(256, 256);                          p['bn3'] = bn(256)
    p['gat1'] = gat(256, n_heads, C_OUT);               p['bn4'] = bn(n_heads * C_OUT)
    for i in range(n_layers - 1):
        p[f'gat_l{i}'] = gat(n_heads * C_OUT, n_heads, C_OUT)
        p[f'bn_l{i}'] = bn(n_heads * C_OUT)
    # Predictor head
    p['p_lin1'] = lin(n_heads * 256, n_heads * 64); p['p_bn1'] = bn(n_heads * 64)
    p['p_lin2'] = lin(n_heads * 64, n_heads * 64);  p['p_bn2'] = bn(n_heads * 64)
    p['p_lin3'] = lin(n_heads * 64, OUT_DIM, pad_out=OUT_PAD - OUT_DIM)
    return p


def _build_attw(asrc, adst):
    """Block-structured attention projection: one [H*C, ATT_PAD] bf16 matrix so a
    single MXU matmul xW @ attw yields per-node (a_dst, a_src) for every head:
      column 2h   <- adst[h]  (rows h*C:(h+1)*C)
      column 2h+1 <- asrc[h]  (rows h*C:(h+1)*C)
    Padded to >= 128 columns so the matmul result is lane-aligned."""
    H, C = asrc.shape
    att_pad = _round_up(max(2 * H, 128), 128)
    attw = jnp.zeros((H * C, att_pad), jnp.float32)
    for h in range(H):
        attw = attw.at[h * C:(h + 1) * C, 2 * h].set(adst[h])
        attw = attw.at[h * C:(h + 1) * C, 2 * h + 1].set(asrc[h])
    return attw.astype(jnp.bfloat16)


def _pack_small_params(params, n_heads, n_layers):
    """Concatenate all tiny [1, D] f32 parameters (BN gamma/beta + final bias)
    into one lane-aligned vector: a single DMA instead of ~20 tiny ones."""
    rows, names = [], []

    def add(name, arr):
        names.append(name)
        rows.append(arr.astype(jnp.float32))

    for i, bn in enumerate(('bn1', 'bn2', 'bn3')):
        g, b = params[bn]; add(f'bn{i + 1}_g', g); add(f'bn{i + 1}_b', b)
    g, b = params['bn4']; add('bn4_g', g); add('bn4_b', b)
    for i in range(n_layers - 1):
        g, b = params[f'bn_l{i}']; add(f'bnl{i}_g', g); add(f'bnl{i}_b', b)
    for i in (1, 2):
        g, b = params[f'p_bn{i}']; add(f'pbn{i}_g', g); add(f'pbn{i}_b', b)
    add('plin3_b', params['p_lin3'][1])           # only live bias (padded to OUT_PAD)

    offsets, segs, off = {}, [], 0
    for name, r in zip(names, rows):
        d = r.shape[1]
        dp = _round_up(d, 128)                    # keep every segment lane-aligned
        segs.append(jnp.pad(r, ((0, 0), (0, dp - d))))
        offsets[name] = (off, d)
        off += dp
    return jnp.concatenate(segs, axis=1), offsets


# ------------------------------ fused forward ------------------------------ #

@functools.partial(jax.jit, static_argnums=(3, 4))
def gatsyfc_forward(params, x, adjb, n_heads, n_layers):
    N = x.shape[0]
    hc = n_heads * C_OUT

    # x: lane-aligned K pad + bf16 cast once (it was cast to bf16 at the MXU input
    # anyway -> identical precision, half the DMA / VMEM residency).
    x_p = jnp.pad(x.astype(jnp.bfloat16), ((0, 0), (0, F_IN_PAD - x.shape[1])))
    adjb_b = adjb.astype(jnp.bfloat16)            # -1e30 is representable in bf16

    pvec, offsets = _pack_small_params(params, n_heads, n_layers)

    weights = [params['lin1'][0], params['lin2'][0], params['lin3'][0]]
    for g in ['gat1'] + [f'gat_l{i}' for i in range(n_layers - 1)]:
        wt, asrc, adst, _bias = params[g]         # GATConv bias is dead under BN
        weights += [wt, _build_attw(asrc, adst)]
    weights += [params['p_lin1'][0], params['p_lin2'][0], params['p_lin3'][0]]

    args = [x_p, adjb_b, pvec] + weights
    kern = _make_fused_kernel(n_heads, C_OUT, n_layers, offsets)

    # VMEM budget: single-shot kernel (grid size 1 -> no double buffering) =
    # inputs once + output + scratch + attention temporaries; clamp to the
    # device's VMEM capacity (v7x has 64 MiB per core vs 128 MiB on v5e/v6e).
    in_bytes = sum(int(a.size) * a.dtype.itemsize for a in args)
    out_bytes = N * OUT_PAD * 4
    scratch_bytes = N * hc * 4
    temp_bytes = (N * hc * 6                      # xw (f32) + xw_b (bf16)
                  + 4 * N * N * 4                 # adjb_f32 / e / p / alpha
                  + 2 * N * max(hc, F_IN_PAD) * 4)
    vmem_limit = in_bytes + out_bytes + scratch_bytes + temp_bytes + (8 << 20)
    try:
        cap = int(pltpu.get_tpu_info().vmem_capacity_bytes)
    except Exception:
        cap = 64 << 20                            # conservative (v7x per-core)
    vmem_limit = max(min(vmem_limit, cap - (2 << 20)), 16 << 20)

    # TODO(synk): for N beyond the single-shot VMEM ceiling (~2k on v7x), tile the
    # attention stage over destination-row blocks (flash-style grid, two-pass BN)
    # and mark the row axis "parallel" so both v7x TensorCores are used.
    out = pl.pallas_call(
        kern,
        out_shape=jax.ShapeDtypeStruct((N, OUT_PAD), jnp.float32),
        in_specs=[pl.BlockSpec(memory_space=pltpu.MemorySpace.VMEM)] * len(args),
        out_specs=pl.BlockSpec(memory_space=pltpu.MemorySpace.VMEM),
        scratch_shapes=[pltpu.VMEM((N, hc), jnp.float32)],
        compiler_params=pltpu.CompilerParams(vmem_limit_bytes=int(vmem_limit)),
    )(*args)
    return out[:, :OUT_DIM]


# ---------------------------------- main ----------------------------------- #

if __name__ == "__main__":
    n_heads, n_layers = 2, 2
    N = 8

    key = jax.random.PRNGKey(0)
    k_x, k_p = jax.random.split(key)

    x = jax.random.normal(k_x, (N, F_IN), jnp.float32)

    # deterministic small edge set (src -> dst), as PyG edge_index would give
    src = jnp.array([0, 1, 2, 3, 4, 5, 6, 7, 0, 2, 5, 1], dtype=jnp.int32)
    dst = jnp.array([1, 2, 3, 4, 5, 6, 7, 0, 3, 5, 1, 6], dtype=jnp.int32)
    adj = jnp.zeros((N, N), jnp.float32).at[dst, src].set(1.0)
    adj = jnp.maximum(adj, jnp.eye(N, dtype=jnp.float32))   # add_self_loops=True
    # additive attention mask: 0 on edges (incl. self-loops), -1e30 elsewhere
    adjb = jnp.where(adj > 0.5, 0.0, NEG_INF).astype(jnp.float32)

    params = init_params(k_p, n_heads, n_layers)

    out = gatsyfc_forward(params, x, adjb, n_heads, n_layers)
    out = jax.block_until_ready(out)
    assert out.shape == (N, OUT_DIM) and bool(jnp.all(jnp.isfinite(out)))
    print("KERNEL_OK")
</pallas_src>

<mosaic_0001>
module attributes {stable_mosaic.version = 11 : i64} {
  func.func @kernel(%arg0: memref<8x2688xbf16, #tpu.memory_space<vmem>>, %arg1: memref<8x8xbf16, #tpu.memory_space<vmem>>, %arg2: memref<1x4224xf32, #tpu.memory_space<vmem>>, %arg3: memref<2688x256xbf16, #tpu.memory_space<vmem>>, %arg4: memref<256x256xbf16, #tpu.memory_space<vmem>>, %arg5: memref<256x256xbf16, #tpu.memory_space<vmem>>, %arg6: memref<256x512xbf16, #tpu.memory_space<vmem>>, %arg7: memref<512x128xbf16, #tpu.memory_space<vmem>>, %arg8: memref<512x512xbf16, #tpu.memory_space<vmem>>, %arg9: memref<512x128xbf16, #tpu.memory_space<vmem>>, %arg10: memref<512x128xbf16, #tpu.memory_space<vmem>>, %arg11: memref<128x128xbf16, #tpu.memory_space<vmem>>, %arg12: memref<128x128xbf16, #tpu.memory_space<vmem>>, %arg13: memref<8x128xf32, #tpu.memory_space<vmem>>, %arg14: memref<8x512xf32, #tpu.memory_space<vmem>>) attributes {dimension_semantics = [], scalar_prefetch = 0 : i64, scratch_operands = 1 : i64, tpu.core_type = #tpu.core_type<tc>} {
    %c0 = arith.constant 0 : index
    %c0_0 = arith.constant 0 : index
    %0 = vector.load %arg1[%c0, %c0_0] : memref<8x8xbf16, #tpu.memory_space<vmem>>, vector<8x8xbf16>
    %1 = arith.extf %0 : vector<8x8xbf16> to vector<8x8xf32>
    %c0_1 = arith.constant 0 : index
    %c0_2 = arith.constant 0 : index
    %2 = vector.load %arg0[%c0_1, %c0_2] : memref<8x2688xbf16, #tpu.memory_space<vmem>>, vector<8x2688xbf16>
    %c0_3 = arith.constant 0 : index
    %c0_4 = arith.constant 0 : index
    %3 = vector.load %arg3[%c0_3, %c0_4] : memref<2688x256xbf16, #tpu.memory_space<vmem>>, vector<2688x256xbf16>
    %cst = arith.constant dense<0.000000e+00> : vector<8x256xf32>
    %4 = tpu.matmul %2, %3, %cst {dimension_numbers = #tpu.dot_dimension_numbers<[1], [0], [0], [1], [0, 0, 1, 1], [], []>} : vector<8x2688xbf16>, vector<2688x256xbf16>, vector<8x256xf32> -> vector<8x256xf32>
    %c0_5 = arith.constant 0 : index
    %c0_6 = arith.constant 0 : index
    %5 = vector.load %arg2[%c0_5, %c0_6] : memref<1x4224xf32, #tpu.memory_space<vmem>>, vector<1x256xf32>
    %c0_7 = arith.constant 0 : index
    %c256 = arith.constant 256 : index
    %6 = vector.load %arg2[%c0_7, %c256] : memref<1x4224xf32, #tpu.memory_space<vmem>>, vector<1x256xf32>
    %cst_8 = arith.constant dense<0.000000e+00> : vector<256xf32>
    %7 = vector.multi_reduction <add>, %4, %cst_8 [0] : vector<8x256xf32> to vector<256xf32>
    %8 = vector.shape_cast %7 : vector<256xf32> to vector<1x256xf32>
    %cst_9 = arith.constant 8.000000e+00 : f32
    %9 = vector.broadcast %cst_9 : f32 to vector<1x256xf32>
    %10 = arith.divf %8, %9 : vector<1x256xf32>
    %11 = arith.mulf %4, %4 : vector<8x256xf32>
    %cst_10 = arith.constant dense<0.000000e+00> : vector<256xf32>
    %12 = vector.multi_reduction <add>, %11, %cst_10 [0] : vector<8x256xf32> to vector<256xf32>
    %13 = vector.shape_cast %12 : vector<256xf32> to vector<1x256xf32>
    %cst_11 = arith.constant 8.000000e+00 : f32
    %14 = vector.broadcast %cst_11 : f32 to vector<1x256xf32>
    %15 = arith.divf %13, %14 : vector<1x256xf32>
    %16 = arith.mulf %10, %10 : vector<1x256xf32>
    %17 = arith.subf %15, %16 : vector<1x256xf32>
    %cst_12 = arith.constant 0.000000e+00 : f32
    %18 = vector.broadcast %cst_12 : f32 to vector<1x256xf32>
    %19 = arith.maximumf %17, %18 : vector<1x256xf32>
    %20 = vector.broadcast %10 : vector<1x256xf32> to vector<8x256xf32>
    %21 = arith.subf %4, %20 : vector<8x256xf32>
    %22 = vector.broadcast %5 : vector<1x256xf32> to vector<8x256xf32>
    %23 = arith.mulf %22, %21 : vector<8x256xf32>
    %cst_13 = arith.constant 9.99999974E-6 : f32
    %24 = vector.broadcast %cst_13 : f32 to vector<1x256xf32>
    %25 = arith.addf %19, %24 : vector<1x256xf32>
    %26 = math.rsqrt %25 : vector<1x256xf32>
    %27 = vector.broadcast %26 : vector<1x256xf32> to vector<8x256xf32>
    %28 = arith.mulf %23, %27 : vector<8x256xf32>
    %29 = vector.broadcast %6 : vector<1x256xf32> to vector<8x256xf32>
    %30 = arith.addf %28, %29 : vector<8x256xf32>
    %cst_14 = arith.constant 0.000000e+00 : f32
    %31 = vector.broadcast %cst_14 : f32 to vector<8x256xf32>
    %32 = arith.cmpf ogt, %30, %31 : vector<8x256xf32>
    %cst_15 = arith.constant 0.000000e+00 : f32
    %33 = vector.broadcast %cst_15 : f32 to vector<8x256xf32>
    %34 = arith.minimumf %30, %33 : vector<8x256xf32>
    %35 = math.exp %34 : vector<8x256xf32>
    %cst_16 = arith.constant 1.000000e+00 : f32
    %36 = vector.broadcast %cst_16 : f32 to vector<8x256xf32>
    %37 = arith.subf %35, %36 : vector<8x256xf32>
    %38 = arith.select %32, %30, %37 : vector<8x256xi1>, vector<8x256xf32>
    %39 = arith.truncf %38 : vector<8x256xf32> to vector<8x256xbf16>
    %c0_17 = arith.constant 0 : index
    %c0_18 = arith.constant 0 : index
    %40 = vector.load %arg4[%c0_17, %c0_18] : memref<256x256xbf16, #tpu.memory_space<vmem>>, vector<256x256xbf16>
    %cst_19 = arith.constant dense<0.000000e+00> : vector<8x256xf32>
    %41 = tpu.matmul %39, %40, %cst_19 {dimension_numbers = #tpu.dot_dimension_numbers<[1], [0], [0], [1], [0, 0, 1, 1], [], []>} : vector<8x256xbf16>, vector<256x256xbf16>, vector<8x256xf32> -> vector<8x256xf32>
    %c0_20 = arith.constant 0 : index
    %c512 = arith.constant 512 : index
    %42 = vector.load %arg2[%c0_20, %c512] : memref<1x4224xf32, #tpu.memory_space<vmem>>, vector<1x256xf32>
    %c0_21 = arith.constant 0 : index
    %c768 = arith.constant 768 : index
    %43 = vector.load %arg2[%c0_21, %c768] : memref<1x4224xf32, #tpu.memory_space<vmem>>, vector<1x256xf32>
    %cst_22 = arith.constant dense<0.000000e+00> : vector<256xf32>
    %44 = vector.multi_reduction <add>, %41, %cst_22 [0] : vector<8x256xf32> to vector<256xf32>
    %45 = vector.shape_cast %44 : vector<256xf32> to vector<1x256xf32>
    %cst_23 = arith.constant 8.000000e+00 : f32
    %46 = vector.broadcast %cst_23 : f32 to vector<1x256xf32>
    %47 = arith.divf %45, %46 : vector<1x256xf32>
    %48 = arith.mulf %41, %41 : vector<8x256xf32>
    %cst_24 = arith.constant dense<0.000000e+00> : vector<256xf32>
    %49 = vector.multi_reduction <add>, %48, %cst_24 [0] : vector<8x256xf32> to vector<256xf32>
    %50 = vector.shape_cast %49 : vector<256xf32> to vector<1x256xf32>
    %cst_25 = arith.constant 8.000000e+00 : f32
    %51 = vector.broadcast %cst_25 : f32 to vector<1x256xf32>
    %52 = arith.divf %50, %51 : vector<1x256xf32>
    %53 = arith.mulf %47, %47 : vector<1x256xf32>
    %54 = arith.subf %52, %53 : vector<1x256xf32>
    %cst_26 = arith.constant 0.000000e+00 : f32
    %55 = vector.broadcast %cst_26 : f32 to vector<1x256xf32>
    %56 = arith.maximumf %54, %55 : vector<1x256xf32>
    %57 = vector.broadcast %47 : vector<1x256xf32> to vector<8x256xf32>
    %58 = arith.subf %41, %57 : vector<8x256xf32>
    %59 = vector.broadcast %42 : vector<1x256xf32> to vector<8x256xf32>
    %60 = arith.mulf %59, %58 : vector<8x256xf32>
    %cst_27 = arith.constant 9.99999974E-6 : f32
    %61 = vector.broadcast %cst_27 : f32 to vector<1x256xf32>
    %62 = arith.addf %56, %61 : vector<1x256xf32>
    %63 = math.rsqrt %62 : vector<1x256xf32>
    %64 = vector.broadcast %63 : vector<1x256xf32> to vector<8x256xf32>
    %65 = arith.mulf %60, %64 : vector<8x256xf32>
    %66 = vector.broadcast %43 : vector<1x256xf32> to vector<8x256xf32>
    %67 = arith.addf %65, %66 : vector<8x256xf32>
    %cst_28 = arith.constant 0.000000e+00 : f32
    %68 = vector.broadcast %cst_28 : f32 to vector<8x256xf32>
    %69 = arith.cmpf ogt, %67, %68 : vector<8x256xf32>
    %cst_29 = arith.constant 0.000000e+00 : f32
    %70 = vector.broadcast %cst_29 : f32 to vector<8x256xf32>
    %71 = arith.minimumf %67, %70 : vector<8x256xf32>
    %72 = math.exp %71 : vector<8x256xf32>
    %cst_30 = arith.constant 1.000000e+00 : f32
    %73 = vector.broadcast %cst_30 : f32 to vector<8x256xf32>
    %74 = arith.subf %72, %73 : vector<8x256xf32>
    %75 = arith.select %69, %67, %74 : vector<8x256xi1>, vector<8x256xf32>
    %76 = arith.truncf %75 : vector<8x256xf32> to vector<8x256xbf16>
    %c0_31 = arith.constant 0 : index
    %c0_32 = arith.constant 0 : index
    %77 = vector.load %arg5[%c0_31, %c0_32] : memref<256x256xbf16, #tpu.memory_space<vmem>>, vector<256x256xbf16>
    %cst_33 = arith.constant dense<0.000000e+00> : vector<8x256xf32>
    %78 = tpu.matmul %76, %77, %cst_33 {dimension_numbers = #tpu.dot_dimension_numbers<[1], [0], [0], [1], [0, 0, 1, 1], [], []>} : vector<8x256xbf16>, vector<256x256xbf16>, vector<8x256xf32> -> vector<8x256xf32>
    %c0_34 = arith.constant 0 : index
    %c1024 = arith.constant 1024 : index
    %79 = vector.load %arg2[%c0_34, %c1024] : memref<1x4224xf32, #tpu.memory_space<vmem>>, vector<1x256xf32>
    %c0_35 = arith.constant 0 : index
    %c1280 = arith.constant 1280 : index
    %80 = vector.load %arg2[%c0_35, %c1280] : memref<1x4224xf32, #tpu.memory_space<vmem>>, vector<1x256xf32>
    %cst_36 = arith.constant dense<0.000000e+00> : vector<256xf32>
    %81 = vector.multi_reduction <add>, %78, %cst_36 [0] : vector<8x256xf32> to vector<256xf32>
    %82 = vector.shape_cast %81 : vector<256xf32> to vector<1x256xf32>
    %cst_37 = arith.constant 8.000000e+00 : f32
    %83 = vector.broadcast %cst_37 : f32 to vector<1x256xf32>
    %84 = arith.divf %82, %83 : vector<1x256xf32>
    %85 = arith.mulf %78, %78 : vector<8x256xf32>
    %cst_38 = arith.constant dense<0.000000e+00> : vector<256xf32>
    %86 = vector.multi_reduction <add>, %85, %cst_38 [0] : vector<8x256xf32> to vector<256xf32>
    %87 = vector.shape_cast %86 : vector<256xf32> to vector<1x256xf32>
    %cst_39 = arith.constant 8.000000e+00 : f32
    %88 = vector.broadcast %cst_39 : f32 to vector<1x256xf32>
    %89 = arith.divf %87, %88 : vector<1x256xf32>
    %90 = arith.mulf %84, %84 : vector<1x256xf32>
    %91 = arith.subf %89, %90 : vector<1x256xf32>
    %cst_40 = arith.constant 0.000000e+00 : f32
    %92 = vector.broadcast %cst_40 : f32 to vector<1x256xf32>
    %93 = arith.maximumf %91, %92 : vector<1x256xf32>
    %94 = vector.broadcast %84 : vector<1x256xf32> to vector<8x256xf32>
    %95 = arith.subf %78, %94 : vector<8x256xf32>
    %96 = vector.broadcast %79 : vector<1x256xf32> to vector<8x256xf32>
    %97 = arith.mulf %96, %95 : vector<8x256xf32>
    %cst_41 = arith.constant 9.99999974E-6 : f32
    %98 = vector.broadcast %cst_41 : f32 to vector<1x256xf32>
    %99 = arith.addf %93, %98 : vector<1x256xf32>
    %100 = math.rsqrt %99 : vector<1x256xf32>
    %101 = vector.broadcast %100 : vector<1x256xf32> to vector<8x256xf32>
    %102 = arith.mulf %97, %101 : vector<8x256xf32>
    %103 = vector.broadcast %80 : vector<1x256xf32> to vector<8x256xf32>
    %104 = arith.addf %102, %103 : vector<8x256xf32>
    %cst_42 = arith.constant 0.000000e+00 : f32
    %105 = vector.broadcast %cst_42 : f32 to vector<8x256xf32>
    %106 = arith.cmpf ogt, %104, %105 : vector<8x256xf32>
    %cst_43 = arith.constant 0.000000e+00 : f32
    %107 = vector.broadcast %cst_43 : f32 to vector<8x256xf32>
    %108 = arith.minimumf %104, %107 : vector<8x256xf32>
    %109 = math.exp %108 : vector<8x256xf32>
    %cst_44 = arith.constant 1.000000e+00 : f32
    %110 = vector.broadcast %cst_44 : f32 to vector<8x256xf32>
    %111 = arith.subf %109, %110 : vector<8x256xf32>
    %112 = arith.select %106, %104, %111 : vector<8x256xi1>, vector<8x256xf32>
    %113 = arith.truncf %112 : vector<8x256xf32> to vector<8x256xbf16>
    %c0_45 = arith.constant 0 : index
    %c0_46 = arith.constant 0 : index
    %114 = vector.load %arg6[%c0_45, %c0_46] : memref<256x512xbf16, #tpu.memory_space<vmem>>, vector<256x512xbf16>
    %cst_47 = arith.constant dense<0.000000e+00> : vector<8x512xf32>
    %115 = tpu.matmul %113, %114, %cst_47 {dimension_numbers = #tpu.dot_dimension_numbers<[1], [0], [0], [1], [0, 0, 1, 1], [], []>} : vector<8x256xbf16>, vector<256x512xbf16>, vector<8x512xf32> -> vector<8x512xf32>
    %116 = arith.truncf %115 : vector<8x512xf32> to vector<8x512xbf16>
    %c0_48 = arith.constant 0 : index
    %c0_49 = arith.constant 0 : index
    %117 = vector.load %arg7[%c0_48, %c0_49] : memref<512x128xbf16, #tpu.memory_space<vmem>>, vector<512x128xbf16>
    %cst_50 = arith.constant dense<0.000000e+00> : vector<8x128xf32>
    %118 = tpu.matmul %116, %117, %cst_50 {dimension_numbers = #tpu.dot_dimension_numbers<[1], [0], [0], [1], [0, 0, 1, 1], [], []>} : vector<8x512xbf16>, vector<512x128xbf16>, vector<8x128xf32> -> vector<8x128xf32>
    %119 = tpu.transpose %118, [1, 0] : vector<8x128xf32> -> vector<128x8xf32>
    %120 = vector.extract_strided_slice %118 {offsets = [0, 0], sizes = [8, 1], strides = [1, 1]} : vector<8x128xf32> to vector<8x1xf32>
    %121 = vector.extract_strided_slice %119 {offsets = [1, 0], sizes = [1, 8], strides = [1, 1]} : vector<128x8xf32> to vector<1x8xf32>
    %122 = vector.broadcast %120 : vector<8x1xf32> to vector<8x8xf32>
    %123 = vector.broadcast %121 : vector<1x8xf32> to vector<8x8xf32>
    %124 = arith.addf %122, %123 : vector<8x8xf32>
    %cst_51 = arith.constant 0.000000e+00 : f32
    %125 = vector.broadcast %cst_51 : f32 to vector<8x8xf32>
    %126 = arith.cmpf ogt, %124, %125 : vector<8x8xf32>
    %cst_52 = arith.constant 2.000000e-01 : f32
    %127 = vector.broadcast %cst_52 : f32 to vector<8x8xf32>
    %128 = arith.mulf %127, %124 : vector<8x8xf32>
    %129 = arith.select %126, %124, %128 : vector<8x8xi1>, vector<8x8xf32>
    %130 = arith.addf %129, %1 : vector<8x8xf32>
    %cst_53 = arith.constant dense<0xFF800000> : vector<8xf32>
    %131 = vector.multi_reduction <maximumf>, %130, %cst_53 [1] : vector<8x8xf32> to vector<8xf32>
    %132 = vector.shape_cast %131 : vector<8xf32> to vector<8x1xf32>
    %133 = vector.broadcast %132 : vector<8x1xf32> to vector<8x8xf32>
    %134 = arith.subf %130, %133 : vector<8x8xf32>
    %135 = math.exp %134 : vector<8x8xf32>
    %cst_54 = arith.constant dense<0.000000e+00> : vector<8xf32>
    %136 = vector.multi_reduction <add>, %135, %cst_54 [1] : vector<8x8xf32> to vector<8xf32>
    %137 = vector.shape_cast %136 : vector<8xf32> to vector<8x1xf32>
    %138 = tpu.reciprocal %137 {approx = true} : vector<8x1xf32> -> vector<8x1xf32>
    %139 = vector.broadcast %138 : vector<8x1xf32> to vector<8x8xf32>
    %140 = arith.mulf %135, %139 : vector<8x8xf32>
    %141 = arith.truncf %140 : vector<8x8xf32> to vector<8x8xbf16>
    %142 = vector.extract_strided_slice %116 {offsets = [0, 0], sizes = [8, 256], strides = [1, 1]} : vector<8x512xbf16> to vector<8x256xbf16>
    %cst_55 = arith.constant dense<0.000000e+00> : vector<8x256xf32>
    %143 = tpu.matmul %141, %142, %cst_55 {dimension_numbers = #tpu.dot_dimension_numbers<[1], [0], [0], [1], [0, 0, 1, 1], [], []>} : vector<8x8xbf16>, vector<8x256xbf16>, vector<8x256xf32> -> vector<8x256xf32>
    %c0_56 = arith.constant 0 : index
    %c0_57 = arith.constant 0 : index
    %144 = vector.load %arg14[%c0_56, %c0_57] : memref<8x512xf32, #tpu.memory_space<vmem>>, vector<8x256xf32>
    tpu.vector_store %arg14[%c0_56, %c0_57], %143 {strides = array<i32>} : memref<8x512xf32, #tpu.memory_space<vmem>>, vector<8x256xf32>,
    %145 = vector.extract_strided_slice %118 {offsets = [0, 2], sizes = [8, 1], strides = [1, 1]} : vector<8x128xf32> to vector<8x1xf32>
    %146 = vector.extract_strided_slice %119 {offsets = [3, 0], sizes = [1, 8], strides = [1, 1]} : vector<128x8xf32> to vector<1x8xf32>
    %147 = vector.broadcast %145 : vector<8x1xf32> to vector<8x8xf32>
    %148 = vector.broadcast %146 : vector<1x8xf32> to vector<8x8xf32>
    %149 = arith.addf %147, %148 : vector<8x8xf32>
    %cst_58 = arith.constant 0.000000e+00 : f32
    %150 = vector.broadcast %cst_58 : f32 to vector<8x8xf32>
    %151 = arith.cmpf ogt, %149, %150 : vector<8x8xf32>
    %cst_59 = arith.constant 2.000000e-01 : f32
    %152 = vector.broadcast %cst_59 : f32 to vector<8x8xf32>
    %153 = arith.mulf %152, %149 : vector<8x8xf32>
    %154 = arith.select %151, %149, %153 : vector<8x8xi1>, vector<8x8xf32>
    %155 = arith.addf %154, %1 : vector<8x8xf32>
    %cst_60 = arith.constant dense<0xFF800000> : vector<8xf32>
    %156 = vector.multi_reduction <maximumf>, %155, %cst_60 [1] : vector<8x8xf32> to vector<8xf32>
    %157 = vector.shape_cast %156 : vector<8xf32> to vector<8x1xf32>
    %158 = vector.broadcast %157 : vector<8x1xf32> to vector<8x8xf32>
    %159 = arith.subf %155, %158 : vector<8x8xf32>
    %160 = math.exp %159 : vector<8x8xf32>
    %cst_61 = arith.constant dense<0.000000e+00> : vector<8xf32>
    %161 = vector.multi_reduction <add>, %160, %cst_61 [1] : vector<8x8xf32> to vector<8xf32>
    %162 = vector.shape_cast %161 : vector<8xf32> to vector<8x1xf32>
    %163 = tpu.reciprocal %162 {approx = true} : vector<8x1xf32> -> vector<8x1xf32>
    %164 = vector.broadcast %163 : vector<8x1xf32> to vector<8x8xf32>
    %165 = arith.mulf %160, %164 : vector<8x8xf32>
    %166 = arith.truncf %165 : vector<8x8xf32> to vector<8x8xbf16>
    %167 = vector.extract_strided_slice %116 {offsets = [0, 256], sizes = [8, 256], strides = [1, 1]} : vector<8x512xbf16> to vector<8x256xbf16>
    %cst_62 = arith.constant dense<0.000000e+00> : vector<8x256xf32>
    %168 = tpu.matmul %166, %167, %cst_62 {dimension_numbers = #tpu.dot_dimension_numbers<[1], [0], [0], [1], [0, 0, 1, 1], [], []>} : vector<8x8xbf16>, vector<8x256xbf16>, vector<8x256xf32> -> vector<8x256xf32>
    %c0_63 = arith.constant 0 : index
    %c256_64 = arith.constant 256 : index
    %169 = vector.load %arg14[%c0_63, %c256_64] : memref<8x512xf32, #tpu.memory_space<vmem>>, vector<8x256xf32>
    tpu.vector_store %arg14[%c0_63, %c256_64], %168 {strides = array<i32>} : memref<8x512xf32, #tpu.memory_space<vmem>>, vector<8x256xf32>,
    %c0_65 = arith.constant 0 : index
    %c0_66 = arith.constant 0 : index
    %170 = vector.load %arg14[%c0_65, %c0_66] : memref<8x512xf32, #tpu.memory_space<vmem>>, vector<8x512xf32>
    %c0_67 = arith.constant 0 : index
    %c1536 = arith.constant 1536 : index
    %171 = vector.load %arg2[%c0_67, %c1536] : memref<1x4224xf32, #tpu.memory_space<vmem>>, vector<1x512xf32>
    %c0_68 = arith.constant 0 : index
    %c2048 = arith.constant 2048 : index
    %172 = vector.load %arg2[%c0_68, %c2048] : memref<1x4224xf32, #tpu.memory_space<vmem>>, vector<1x512xf32>
    %cst_69 = arith.constant dense<0.000000e+00> : vector<512xf32>
    %173 = vector.multi_reduction <add>, %170, %cst_69 [0] : vector<8x512xf32> to vector<512xf32>
    %174 = vector.shape_cast %173 : vector<512xf32> to vector<1x512xf32>
    %cst_70 = arith.constant 8.000000e+00 : f32
    %175 = vector.broadcast %cst_70 : f32 to vector<1x512xf32>
    %176 = arith.divf %174, %175 : vector<1x512xf32>
    %177 = arith.mulf %170, %170 : vector<8x512xf32>
    %cst_71 = arith.constant dense<0.000000e+00> : vector<512xf32>
    %178 = vector.multi_reduction <add>, %177, %cst_71 [0] : vector<8x512xf32> to vector<512xf32>
    %179 = vector.shape_cast %178 : vector<512xf32> to vector<1x512xf32>
    %cst_72 = arith.constant 8.000000e+00 : f32
    %180 = vector.broadcast %cst_72 : f32 to vector<1x512xf32>
    %181 = arith.divf %179, %180 : vector<1x512xf32>
    %182 = arith.mulf %176, %176 : vector<1x512xf32>
    %183 = arith.subf %181, %182 : vector<1x512xf32>
    %cst_73 = arith.constant 0.000000e+00 : f32
    %184 = vector.broadcast %cst_73 : f32 to vector<1x512xf32>
    %185 = arith.maximumf %183, %184 : vector<1x512xf32>
    %186 = vector.broadcast %176 : vector<1x512xf32> to vector<8x512xf32>
    %187 = arith.subf %170, %186 : vector<8x512xf32>
    %188 = vector.broadcast %171 : vector<1x512xf32> to vector<8x512xf32>
    %189 = arith.mulf %188, %187 : vector<8x512xf32>
    %cst_74 = arith.constant 9.99999974E-6 : f32
    %190 = vector.broadcast %cst_74 : f32 to vector<1x512xf32>
    %191 = arith.addf %185, %190 : vector<1x512xf32>
    %192 = math.rsqrt %191 : vector<1x512xf32>
    %193 = vector.broadcast %192 : vector<1x512xf32> to vector<8x512xf32>
    %194 = arith.mulf %189, %193 : vector<8x512xf32>
    %195 = vector.broadcast %172 : vector<1x512xf32> to vector<8x512xf32>
    %196 = arith.addf %194, %195 : vector<8x512xf32>
    %cst_75 = arith.constant 0.000000e+00 : f32
    %197 = vector.broadcast %cst_75 : f32 to vector<8x512xf32>
    %198 = arith.cmpf ogt, %196, %197 : vector<8x512xf32>
    %cst_76 = arith.constant 0.000000e+00 : f32
    %199 = vector.broadcast %cst_76 : f32 to vector<8x512xf32>
    %200 = arith.minimumf %196, %199 : vector<8x512xf32>
    %201 = math.exp %200 : vector<8x512xf32>
    %cst_77 = arith.constant 1.000000e+00 : f32
    %202 = vector.broadcast %cst_77 : f32 to vector<8x512xf32>
    %203 = arith.subf %201, %202 : vector<8x512xf32>
    %204 = arith.select %198, %196, %203 : vector<8x512xi1>, vector<8x512xf32>
    %205 = arith.truncf %204 : vector<8x512xf32> to vector<8x512xbf16>
    %c0_78 = arith.constant 0 : index
    %c0_79 = arith.constant 0 : index
    %206 = vector.load %arg8[%c0_78, %c0_79] : memref<512x512xbf16, #tpu.memory_space<vmem>>, vector<512x512xbf16>
    %cst_80 = arith.constant dense<0.000000e+00> : vector<8x512xf32>
    %207 = tpu.matmul %205, %206, %cst_80 {dimension_numbers = #tpu.dot_dimension_numbers<[1], [0], [0], [1], [0, 0, 1, 1], [], []>} : vector<8x512xbf16>, vector<512x512xbf16>, vector<8x512xf32> -> vector<8x512xf32>
    %208 = arith.truncf %207 : vector<8x512xf32> to vector<8x512xbf16>
    %c0_81 = arith.constant 0 : index
    %c0_82 = arith.constant 0 : index
    %209 = vector.load %arg9[%c0_81, %c0_82] : memref<512x128xbf16, #tpu.memory_space<vmem>>, vector<512x128xbf16>
    %cst_83 = arith.constant dense<0.000000e+00> : vector<8x128xf32>
    %210 = tpu.matmul %208, %209, %cst_83 {dimension_numbers = #tpu.dot_dimension_numbers<[1], [0], [0], [1], [0, 0, 1, 1], [], []>} : vector<8x512xbf16>, vector<512x128xbf16>, vector<8x128xf32> -> vector<8x128xf32>
    %211 = tpu.transpose %210, [1, 0] : vector<8x128xf32> -> vector<128x8xf32>
    %212 = vector.extract_strided_slice %210 {offsets = [0, 0], sizes = [8, 1], strides = [1, 1]} : vector<8x128xf32> to vector<8x1xf32>
    %213 = vector.extract_strided_slice %211 {offsets = [1, 0], sizes = [1, 8], strides = [1, 1]} : vector<128x8xf32> to vector<1x8xf32>
    %214 = vector.broadcast %212 : vector<8x1xf32> to vector<8x8xf32>
    %215 = vector.broadcast %213 : vector<1x8xf32> to vector<8x8xf32>
    %216 = arith.addf %214, %215 : vector<8x8xf32>
    %cst_84 = arith.constant 0.000000e+00 : f32
    %217 = vector.broadcast %cst_84 : f32 to vector<8x8xf32>
    %218 = arith.cmpf ogt, %216, %217 : vector<8x8xf32>
    %cst_85 = arith.constant 2.000000e-01 : f32
    %219 = vector.broadcast %cst_85 : f32 to vector<8x8xf32>
    %220 = arith.mulf %219, %216 : vector<8x8xf32>
    %221 = arith.select %218, %216, %220 : vector<8x8xi1>, vector<8x8xf32>
    %222 = arith.addf %221, %1 : vector<8x8xf32>
    %cst_86 = arith.constant dense<0xFF800000> : vector<8xf32>
    %223 = vector.multi_reduction <maximumf>, %222, %cst_86 [1] : vector<8x8xf32> to vector<8xf32>
    %224 = vector.shape_cast %223 : vector<8xf32> to vector<8x1xf32>
    %225 = vector.broadcast %224 : vector<8x1xf32> to vector<8x8xf32>
    %226 = arith.subf %222, %225 : vector<8x8xf32>
    %227 = math.exp %226 : vector<8x8xf32>
    %cst_87 = arith.constant dense<0.000000e+00> : vector<8xf32>
    %228 = vector.multi_reduction <add>, %227, %cst_87 [1] : vector<8x8xf32> to vector<8xf32>
    %229 = vector.shape_cast %228 : vector<8xf32> to vector<8x1xf32>
    %230 = tpu.reciprocal %229 {approx = true} : vector<8x1xf32> -> vector<8x1xf32>
    %231 = vector.broadcast %230 : vector<8x1xf32> to vector<8x8xf32>
    %232 = arith.mulf %227, %231 : vector<8x8xf32>
    %233 = arith.truncf %232 : vector<8x8xf32> to vector<8x8xbf16>
    %234 = vector.extract_strided_slice %208 {offsets = [0, 0], sizes = [8, 256], strides = [1, 1]} : vector<8x512xbf16> to vector<8x256xbf16>
    %cst_88 = arith.constant dense<0.000000e+00> : vector<8x256xf32>
    %235 = tpu.matmul %233, %234, %cst_88 {dimension_numbers = #tpu.dot_dimension_numbers<[1], [0], [0], [1], [0, 0, 1, 1], [], []>} : vector<8x8xbf16>, vector<8x256xbf16>, vector<8x256xf32> -> vector<8x256xf32>
    %c0_89 = arith.constant 0 : index
    %c0_90 = arith.constant 0 : index
    %236 = vector.load %arg14[%c0_89, %c0_90] : memref<8x512xf32, #tpu.memory_space<vmem>>, vector<8x256xf32>
    tpu.vector_store %arg14[%c0_89, %c0_90], %235 {strides = array<i32>} : memref<8x512xf32, #tpu.memory_space<vmem>>, vector<8x256xf32>,
    %237 = vector.extract_strided_slice %210 {offsets = [0, 2], sizes = [8, 1], strides = [1, 1]} : vector<8x128xf32> to vector<8x1xf32>
    %238 = vector.extract_strided_slice %211 {offsets = [3, 0], sizes = [1, 8], strides = [1, 1]} : vector<128x8xf32> to vector<1x8xf32>
    %239 = vector.broadcast %237 : vector<8x1xf32> to vector<8x8xf32>
    %240 = vector.broadcast %238 : vector<1x8xf32> to vector<8x8xf32>
    %241 = arith.addf %239, %240 : vector<8x8xf32>
    %cst_91 = arith.constant 0.000000e+00 : f32
    %242 = vector.broadcast %cst_91 : f32 to vector<8x8xf32>
    %243 = arith.cmpf ogt, %241, %242 : vector<8x8xf32>
    %cst_92 = arith.constant 2.000000e-01 : f32
    %244 = vector.broadcast %cst_92 : f32 to vector<8x8xf32>
    %245 = arith.mulf %244, %241 : vector<8x8xf32>
    %246 = arith.select %243, %241, %245 : vector<8x8xi1>, vector<8x8xf32>
    %247 = arith.addf %246, %1 : vector<8x8xf32>
    %cst_93 = arith.constant dense<0xFF800000> : vector<8xf32>
    %248 = vector.multi_reduction <maximumf>, %247, %cst_93 [1] : vector<8x8xf32> to vector<8xf32>
    %249 = vector.shape_cast %248 : vector<8xf32> to vector<8x1xf32>
    %250 = vector.broadcast %249 : vector<8x1xf32> to vector<8x8xf32>
    %251 = arith.subf %247, %250 : vector<8x8xf32>
    %252 = math.exp %251 : vector<8x8xf32>
    %cst_94 = arith.constant dense<0.000000e+00> : vector<8xf32>
    %253 = vector.multi_reduction <add>, %252, %cst_94 [1] : vector<8x8xf32> to vector<8xf32>
    %254 = vector.shape_cast %253 : vector<8xf32> to vector<8x1xf32>
    %255 = tpu.reciprocal %254 {approx = true} : vector<8x1xf32> -> vector<8x1xf32>
    %256 = vector.broadcast %255 : vector<8x1xf32> to vector<8x8xf32>
    %257 = arith.mulf %252, %256 : vector<8x8xf32>
    %258 = arith.truncf %257 : vector<8x8xf32> to vector<8x8xbf16>
    %259 = vector.extract_strided_slice %208 {offsets = [0, 256], sizes = [8, 256], strides = [1, 1]} : vector<8x512xbf16> to vector<8x256xbf16>
    %cst_95 = arith.constant dense<0.000000e+00> : vector<8x256xf32>
    %260 = tpu.matmul %258, %259, %cst_95 {dimension_numbers = #tpu.dot_dimension_numbers<[1], [0], [0], [1], [0, 0, 1, 1], [], []>} : vector<8x8xbf16>, vector<8x256xbf16>, vector<8x256xf32> -> vector<8x256xf32>
    %c0_96 = arith.constant 0 : index
    %c256_97 = arith.constant 256 : index
    %261 = vector.load %arg14[%c0_96, %c256_97] : memref<8x512xf32, #tpu.memory_space<vmem>>, vector<8x256xf32>
    tpu.vector_store %arg14[%c0_96, %c256_97], %260 {strides = array<i32>} : memref<8x512xf32, #tpu.memory_space<vmem>>, vector<8x256xf32>,
    %c0_98 = arith.constant 0 : index
    %c0_99 = arith.constant 0 : index
    %262 = vector.load %arg14[%c0_98, %c0_99] : memref<8x512xf32, #tpu.memory_space<vmem>>, vector<8x512xf32>
    %c0_100 = arith.constant 0 : index
    %c2560 = arith.constant 2560 : index
    %263 = vector.load %arg2[%c0_100, %c2560] : memref<1x4224xf32, #tpu.memory_space<vmem>>, vector<1x512xf32>
    %c0_101 = arith.constant 0 : index
    %c3072 = arith.constant 3072 : index
    %264 = vector.load %arg2[%c0_101, %c3072] : memref<1x4224xf32, #tpu.memory_space<vmem>>, vector<1x512xf32>
    %cst_102 = arith.constant dense<0.000000e+00> : vector<512xf32>
    %265 = vector.multi_reduction <add>, %262, %cst_102 [0] : vector<8x512xf32> to vector<512xf32>
    %266 = vector.shape_cast %265 : vector<512xf32> to vector<1x512xf32>
    %cst_103 = arith.constant 8.000000e+00 : f32
    %267 = vector.broadcast %cst_103 : f32 to vector<1x512xf32>
    %268 = arith.divf %266, %267 : vector<1x512xf32>
    %269 = arith.mulf %262, %262 : vector<8x512xf32>
    %cst_104 = arith.constant dense<0.000000e+00> : vector<512xf32>
    %270 = vector.multi_reduction <add>, %269, %cst_104 [0] : vector<8x512xf32> to vector<512xf32>
    %271 = vector.shape_cast %270 : vector<512xf32> to vector<1x512xf32>
    %cst_105 = arith.constant 8.000000e+00 : f32
    %272 = vector.broadcast %cst_105 : f32 to vector<1x512xf32>
    %273 = arith.divf %271, %272 : vector<1x512xf32>
    %274 = arith.mulf %268, %268 : vector<1x512xf32>
    %275 = arith.subf %273, %274 : vector<1x512xf32>
    %cst_106 = arith.constant 0.000000e+00 : f32
    %276 = vector.broadcast %cst_106 : f32 to vector<1x512xf32>
    %277 = arith.maximumf %275, %276 : vector<1x512xf32>
    %278 = vector.broadcast %268 : vector<1x512xf32> to vector<8x512xf32>
    %279 = arith.subf %262, %278 : vector<8x512xf32>
    %280 = vector.broadcast %263 : vector<1x512xf32> to vector<8x512xf32>
    %281 = arith.mulf %280, %279 : vector<8x512xf32>
    %cst_107 = arith.constant 9.99999974E-6 : f32
    %282 = vector.broadcast %cst_107 : f32 to vector<1x512xf32>
    %283 = arith.addf %277, %282 : vector<1x512xf32>
    %284 = math.rsqrt %283 : vector<1x512xf32>
    %285 = vector.broadcast %284 : vector<1x512xf32> to vector<8x512xf32>
    %286 = arith.mulf %281, %285 : vector<8x512xf32>
    %287 = vector.broadcast %264 : vector<1x512xf32> to vector<8x512xf32>
    %288 = arith.addf %286, %287 : vector<8x512xf32>
    %cst_108 = arith.constant 0.000000e+00 : f32
    %289 = vector.broadcast %cst_108 : f32 to vector<8x512xf32>
    %290 = arith.cmpf ogt, %288, %289 : vector<8x512xf32>
    %cst_109 = arith.constant 0.000000e+00 : f32
    %291 = vector.broadcast %cst_109 : f32 to vector<8x512xf32>
    %292 = arith.minimumf %288, %291 : vector<8x512xf32>
    %293 = math.exp %292 : vector<8x512xf32>
    %cst_110 = arith.constant 1.000000e+00 : f32
    %294 = vector.broadcast %cst_110 : f32 to vector<8x512xf32>
    %295 = arith.subf %293, %294 : vector<8x512xf32>
    %296 = arith.select %290, %288, %295 : vector<8x512xi1>, vector<8x512xf32>
    %297 = arith.truncf %296 : vector<8x512xf32> to vector<8x512xbf16>
    %c0_111 = arith.constant 0 : index
    %c0_112 = arith.constant 0 : index
    %298 = vector.load %arg10[%c0_111, %c0_112] : memref<512x128xbf16, #tpu.memory_space<vmem>>, vector<512x128xbf16>
    %cst_113 = arith.constant dense<0.000000e+00> : vector<8x128xf32>
    %299 = tpu.matmul %297, %298, %cst_113 {dimension_numbers = #tpu.dot_dimension_numbers<[1], [0], [0], [1], [0, 0, 1, 1], [], []>} : vector<8x512xbf16>, vector<512x128xbf16>, vector<8x128xf32> -> vector<8x128xf32>
    %c0_114 = arith.constant 0 : index
    %c3584 = arith.constant 3584 : index
    %300 = vector.load %arg2[%c0_114, %c3584] : memref<1x4224xf32, #tpu.memory_space<vmem>>, vector<1x128xf32>
    %c0_115 = arith.constant 0 : index
    %c3712 = arith.constant 3712 : index
    %301 = vector.load %arg2[%c0_115, %c3712] : memref<1x4224xf32, #tpu.memory_space<vmem>>, vector<1x128xf32>
    %cst_116 = arith.constant dense<0.000000e+00> : vector<128xf32>
    %302 = vector.multi_reduction <add>, %299, %cst_116 [0] : vector<8x128xf32> to vector<128xf32>
    %303 = vector.shape_cast %302 : vector<128xf32> to vector<1x128xf32>
    %cst_117 = arith.constant 8.000000e+00 : f32
    %304 = vector.broadcast %cst_117 : f32 to vector<1x128xf32>
    %305 = arith.divf %303, %304 : vector<1x128xf32>
    %306 = arith.mulf %299, %299 : vector<8x128xf32>
    %cst_118 = arith.constant dense<0.000000e+00> : vector<128xf32>
    %307 = vector.multi_reduction <add>, %306, %cst_118 [0] : vector<8x128xf32> to vector<128xf32>
    %308 = vector.shape_cast %307 : vector<128xf32> to vector<1x128xf32>
    %cst_119 = arith.constant 8.000000e+00 : f32
    %309 = vector.broadcast %cst_119 : f32 to vector<1x128xf32>
    %310 = arith.divf %308, %309 : vector<1x128xf32>
    %311 = arith.mulf %305, %305 : vector<1x128xf32>
    %312 = arith.subf %310, %311 : vector<1x128xf32>
    %cst_120 = arith.constant 0.000000e+00 : f32
    %313 = vector.broadcast %cst_120 : f32 to vector<1x128xf32>
    %314 = arith.maximumf %312, %313 : vector<1x128xf32>
    %315 = vector.broadcast %305 : vector<1x128xf32> to vector<8x128xf32>
    %316 = arith.subf %299, %315 : vector<8x128xf32>
    %317 = vector.broadcast %300 : vector<1x128xf32> to vector<8x128xf32>
    %318 = arith.mulf %317, %316 : vector<8x128xf32>
    %cst_121 = arith.constant 9.99999974E-6 : f32
    %319 = vector.broadcast %cst_121 : f32 to vector<1x128xf32>
    %320 = arith.addf %314, %319 : vector<1x128xf32>
    %321 = math.rsqrt %320 : vector<1x128xf32>
    %322 = vector.broadcast %321 : vector<1x128xf32> to vector<8x128xf32>
    %323 = arith.mulf %318, %322 : vector<8x128xf32>
    %324 = vector.broadcast %301 : vector<1x128xf32> to vector<8x128xf32>
    %325 = arith.addf %323, %324 : vector<8x128xf32>
    %cst_122 = arith.constant 0.000000e+00 : f32
    %326 = vector.broadcast %cst_122 : f32 to vector<8x128xf32>
    %327 = arith.cmpf ogt, %325, %326 : vector<8x128xf32>
    %cst_123 = arith.constant 0.000000e+00 : f32
    %328 = vector.broadcast %cst_123 : f32 to vector<8x128xf32>
    %329 = arith.minimumf %325, %328 : vector<8x128xf32>
    %330 = math.exp %329 : vector<8x128xf32>
    %cst_124 = arith.constant 1.000000e+00 : f32
    %331 = vector.broadcast %cst_124 : f32 to vector<8x128xf32>
    %332 = arith.subf %330, %331 : vector<8x128xf32>
    %333 = arith.select %327, %325, %332 : vector<8x128xi1>, vector<8x128xf32>
    %334 = arith.truncf %333 : vector<8x128xf32> to vector<8x128xbf16>
    %c0_125 = arith.constant 0 : index
    %c0_126 = arith.constant 0 : index
    %335 = vector.load %arg11[%c0_125, %c0_126] : memref<128x128xbf16, #tpu.memory_space<vmem>>, vector<128x128xbf16>
    %cst_127 = arith.constant dense<0.000000e+00> : vector<8x128xf32>
    %336 = tpu.matmul %334, %335, %cst_127 {dimension_numbers = #tpu.dot_dimension_numbers<[1], [0], [0], [1], [0, 0, 1, 1], [], []>} : vector<8x128xbf16>, vector<128x128xbf16>, vector<8x128xf32> -> vector<8x128xf32>
    %c0_128 = arith.constant 0 : index
    %c3840 = arith.constant 3840 : index
    %337 = vector.load %arg2[%c0_128, %c3840] : memref<1x4224xf32, #tpu.memory_space<vmem>>, vector<1x128xf32>
    %c0_129 = arith.constant 0 : index
    %c3968 = arith.constant 3968 : index
    %338 = vector.load %arg2[%c0_129, %c3968] : memref<1x4224xf32, #tpu.memory_space<vmem>>, vector<1x128xf32>
    %cst_130 = arith.constant dense<0.000000e+00> : vector<128xf32>
    %339 = vector.multi_reduction <add>, %336, %cst_130 [0] : vector<8x128xf32> to vector<128xf32>
    %340 = vector.shape_cast %339 : vector<128xf32> to vector<1x128xf32>
    %cst_131 = arith.constant 8.000000e+00 : f32
    %341 = vector.broadcast %cst_131 : f32 to vector<1x128xf32>
    %342 = arith.divf %340, %341 : vector<1x128xf32>
    %343 = arith.mulf %336, %336 : vector<8x128xf32>
    %cst_132 = arith.constant dense<0.000000e+00> : vector<128xf32>
    %344 = vector.multi_reduction <add>, %343, %cst_132 [0] : vector<8x128xf32> to vector<128xf32>
    %345 = vector.shape_cast %344 : vector<128xf32> to vector<1x128xf32>
    %cst_133 = arith.constant 8.000000e+00 : f32
    %346 = vector.broadcast %cst_133 : f32 to vector<1x128xf32>
    %347 = arith.divf %345, %346 : vector<1x128xf32>
    %348 = arith.mulf %342, %342 : vector<1x128xf32>
    %349 = arith.subf %347, %348 : vector<1x128xf32>
    %cst_134 = arith.constant 0.000000e+00 : f32
    %350 = vector.broadcast %cst_134 : f32 to vector<1x128xf32>
    %351 = arith.maximumf %349, %350 : vector<1x128xf32>
    %352 = vector.broadcast %342 : vector<1x128xf32> to vector<8x128xf32>
    %353 = arith.subf %336, %352 : vector<8x128xf32>
    %354 = vector.broadcast %337 : vector<1x128xf32> to vector<8x128xf32>
    %355 = arith.mulf %354, %353 : vector<8x128xf32>
    %cst_135 = arith.constant 9.99999974E-6 : f32
    %356 = vector.broadcast %cst_135 : f32 to vector<1x128xf32>
    %357 = arith.addf %351, %356 : vector<1x128xf32>
    %358 = math.rsqrt %357 : vector<1x128xf32>
    %359 = vector.broadcast %358 : vector<1x128xf32> to vector<8x128xf32>
    %360 = arith.mulf %355, %359 : vector<8x128xf32>
    %361 = vector.broadcast %338 : vector<1x128xf32> to vector<8x128xf32>
    %362 = arith.addf %360, %361 : vector<8x128xf32>
    %cst_136 = arith.constant 0.000000e+00 : f32
    %363 = vector.broadcast %cst_136 : f32 to vector<8x128xf32>
    %364 = arith.cmpf ogt, %362, %363 : vector<8x128xf32>
    %cst_137 = arith.constant 0.000000e+00 : f32
    %365 = vector.broadcast %cst_137 : f32 to vector<8x128xf32>
    %366 = arith.minimumf %362, %365 : vector<8x128xf32>
    %367 = math.exp %366 : vector<8x128xf32>
    %cst_138 = arith.constant 1.000000e+00 : f32
    %368 = vector.broadcast %cst_138 : f32 to vector<8x128xf32>
    %369 = arith.subf %367, %368 : vector<8x128xf32>
    %370 = arith.select %364, %362, %369 : vector<8x128xi1>, vector<8x128xf32>
    %371 = arith.truncf %370 : vector<8x128xf32> to vector<8x128xbf16>
    %c0_139 = arith.constant 0 : index
    %c0_140 = arith.constant 0 : index
    %372 = vector.load %arg12[%c0_139, %c0_140] : memref<128x128xbf16, #tpu.memory_space<vmem>>, vector<128x128xbf16>
    %cst_141 = arith.constant dense<0.000000e+00> : vector<8x128xf32>
    %373 = tpu.matmul %371, %372, %cst_141 {dimension_numbers = #tpu.dot_dimension_numbers<[1], [0], [0], [1], [0, 0, 1, 1], [], []>} : vector<8x128xbf16>, vector<128x128xbf16>, vector<8x128xf32> -> vector<8x128xf32>
    %c0_142 = arith.constant 0 : index
    %c4096 = arith.constant 4096 : index
    %374 = vector.load %arg2[%c0_142, %c4096] : memref<1x4224xf32, #tpu.memory_space<vmem>>, vector<1x128xf32>
    %375 = vector.broadcast %374 : vector<1x128xf32> to vector<8x128xf32>
    %376 = arith.addf %373, %375 : vector<8x128xf32>
    %c0_143 = arith.constant 0 : index
    %c0_144 = arith.constant 0 : index
    %377 = vector.load %arg13[%c0_143, %c0_144] : memref<8x128xf32, #tpu.memory_space<vmem>>, vector<8x128xf32>
    tpu.vector_store %arg13[%c0_143, %c0_144], %376 {strides = array<i32>} : memref<8x128xf32, #tpu.memory_space<vmem>>, vector<8x128xf32>,
    return
  }
}

</mosaic_0001>

<llo_original>
// kernel: gatsyfc_forward.1
$region0: #{gatsyfc_forward.1}
  #allocation0 [shape = 'u32[]', space=smem, size = 0x4, offset = 0x4, fixed_abs, tag = 'smem constant byte address 0x4 - core index']
  #allocation1 [shape = 'u32[144,128]{1,0:T(1,128)}', space=vmem, size = 0x12000, scoped, tag = 'internal scratch']
  #allocation2 [shape = 'f32[8,512]{1,0:T(8,128)}', space=vmem, size = 0x4000, scoped, tag = 'scratch operand']
  %s0 = inlined_call_operand.vmem [shape: bf16[8,2688], index: 0, kind: input, shape index: {}]
  %s1 = inlined_call_operand.vmem [shape: bf16[8,8], index: 1, kind: input, shape index: {}]
  %s2 = inlined_call_operand.vmem [shape: f32[1,4224], index: 2, kind: input, shape index: {}]
  %s3 = inlined_call_operand.vmem [shape: bf16[2688,256], index: 3, kind: input, shape index: {}]
  %s4 = inlined_call_operand.vmem [shape: bf16[256,256], index: 4, kind: input, shape index: {}]
  %s5 = inlined_call_operand.hbm [shape: bf16[256,256], index: 5, kind: input, shape index: {}]
  %s6 = inlined_call_operand.hbm [shape: bf16[256,512], index: 6, kind: input, shape index: {}]
  %s7 = inlined_call_operand.vmem [shape: bf16[512,128], index: 7, kind: input, shape index: {}]
  %s8 = inlined_call_operand.vmem [shape: bf16[512,512], index: 8, kind: input, shape index: {}]
  %s9 = inlined_call_operand.vmem [shape: bf16[512,128], index: 9, kind: input, shape index: {}]
  %s10 = inlined_call_operand.hbm [shape: bf16[512,128], index: 10, kind: input, shape index: {}]
  %s11 = inlined_call_operand.hbm [shape: bf16[128,128], index: 11, kind: input, shape index: {}]
  %s12 = inlined_call_operand.hbm [shape: bf16[128,128], index: 12, kind: input, shape index: {}]
  %s13 = inlined_call_operand.hbm [shape: f32[8,128], index: 13, kind: output, shape index: {}]
  %s14 = sld [smem:[#allocation0]]
  $region82: #{gatsyfc_forward.1} parent=0
    _
  %s16 = ssub.s32 1, %s14
  %s17 = scalar_select 0, %s16, %s14
  $region1: #{gatsyfc_forward.1} parent=0
    #allocation3 [shape = 'u8[131072]{0}', space=vmem, size = 0x20000, scoped, tag = 'input window, operand 5, single buffered']
    #allocation4 [shape = 's32[1]{0}', space=sflag, size = 0x4, scoped, tag = 'scoped memory for gatsyfc_forward.1']
    #allocation5 [shape = 's32[1]{0}', space=sflag, size = 0x4, scoped, tag = 'scoped memory for gatsyfc_forward.1']
    #allocation6 [shape = 'u8[262144]{0}', space=vmem, size = 0x40000, scoped, tag = 'input window, operand 6, single buffered']
    #allocation7 [shape = 's32[1]{0}', space=sflag, size = 0x4, scoped, tag = 'scoped memory for gatsyfc_forward.1']
    #allocation8 [shape = 'u8[131072]{0}', space=vmem, size = 0x20000, scoped, tag = 'input window, operand 10, single buffered']
    #allocation9 [shape = 'u8[32768]{0}', space=vmem, size = 0x8000, scoped, tag = 'input window, operand 11, single buffered']
    #allocation10 [shape = 's32[1]{0}', space=sflag, size = 0x4, scoped, tag = 'scoped memory for gatsyfc_forward.1']
    #allocation11 [shape = 'u8[32768]{0}', space=vmem, size = 0x8000, scoped, tag = 'input window, operand 12, single buffered']
    #allocation12 [shape = 'u8[4096]{0}', space=vmem, size = 0x1000, scoped, tag = 'output window, operand 0, single buffered']
    %18 = vsyncpa [#allocation4], 0
    %19 = vsyncpa [#allocation7], 0
    %20 = vsyncpa [#allocation10], 0
    %21 = vsyncpa [#allocation5], 0
    // Predicated region
    $region2: #{gatsyfc_forward.1} parent=1 // pred_check
      _
    $region3: #{gatsyfc_forward.1} parent=1 // pred_check_branch
      %23 = sbr.rel (0) target = $region5
    $region4: #{gatsyfc_forward.1} parent=1 // pred_region
      _
    $region5: #{gatsyfc_forward.1} parent=1 // pred_fallthru
      _
    // Predicated region
    $region6: #{gatsyfc_forward.1} parent=1 // pred_check
      _
    $region7: #{gatsyfc_forward.1} parent=1 // pred_check_branch
      %25 = sbr.rel (0) target = $region9
    $region8: #{gatsyfc_forward.1} parent=1 // pred_region
      _
    $region9: #{gatsyfc_forward.1} parent=1 // pred_fallthru
      _
    // Predicated region
    $region10: #{gatsyfc_forward.1} parent=1 // pred_check
      _
    $region11: #{gatsyfc_forward.1} parent=1 // pred_check_branch
      %27 = sbr.rel (0) target = $region13
    $region12: #{gatsyfc_forward.1} parent=1 // pred_region
      _
    $region13: #{gatsyfc_forward.1} parent=1 // pred_fallthru
      _
    // Predicated region
    $region14: #{gatsyfc_forward.1} parent=1 // pred_check
      _
    $region15: #{gatsyfc_forward.1} parent=1 // pred_check_branch
      %29 = sbr.rel (0) target = $region17
    $region16: #{gatsyfc_forward.1} parent=1 // pred_region
      _
    $region17: #{gatsyfc_forward.1} parent=1 // pred_fallthru
      _
    // Predicated region
    $region18: #{gatsyfc_forward.1} parent=1 // pred_check
      _
    $region19: #{gatsyfc_forward.1} parent=1 // pred_check_branch
      %31 = sbr.rel (0) target = $region21
    $region20: #{gatsyfc_forward.1} parent=1 // pred_region
      _
    $region21: #{gatsyfc_forward.1} parent=1 // pred_fallthru
      _
    // Predicated region
    $region22: #{gatsyfc_forward.1} parent=1 // pred_check
      _
    $region23: #{gatsyfc_forward.1} parent=1 // pred_check_branch
      %33 = sbr.rel (0) target = $region25
    $region24: #{gatsyfc_forward.1} parent=1 // pred_region
      %s35 = ssub.s32 4096, 4096
      %36 = vsyncadd [#allocation4], %s35
      %s37 = sshll.u32 [#allocation3], 4
      %s38 = int_to_ptr.vmem [resolvable:$true] %s37
      %43 = dma.hbm_to_vmem [thread:$0]  %s5, 4096, %s38, [#allocation4], 128, 128, 8
    $region25: #{gatsyfc_forward.1} parent=1 // pred_fallthru
      _
    // Predicated region
    $region26: #{gatsyfc_forward.1} parent=1 // pred_check
      _
    $region27: #{gatsyfc_forward.1} parent=1 // pred_check_branch
      %45 = sbr.rel (0) target = $region29
    $region28: #{gatsyfc_forward.1} parent=1 // pred_region
      %s47 = ssub.s32 8192, 8192
      %48 = vsyncadd [#allocation7], %s47
      %s49 = sshll.u32 [#allocation6], 4
      %s50 = int_to_ptr.vmem [resolvable:$true] %s49
      %55 = dma.hbm_to_vmem [thread:$0]  %s6, 8192, %s50, [#allocation7], 256, 256, 16
    $region29: #{gatsyfc_forward.1} parent=1 // pred_fallthru
      _
    // Predicated region
    $region30: #{gatsyfc_forward.1} parent=1 // pred_check
      _
    $region31: #{gatsyfc_forward.1} parent=1 // pred_check_branch
      %57 = sbr.rel (0) target = $region33
    $region32: #{gatsyfc_forward.1} parent=1 // pred_region
      _
    $region33: #{gatsyfc_forward.1} parent=1 // pred_fallthru
      _
    // Predicated region
    $region34: #{gatsyfc_forward.1} parent=1 // pred_check
      _
    $region35: #{gatsyfc_forward.1} parent=1 // pred_check_branch
      %59 = sbr.rel (0) target = $region37
    $region36: #{gatsyfc_forward.1} parent=1 // pred_region
      _
    $region37: #{gatsyfc_forward.1} parent=1 // pred_fallthru
      _
    // Predicated region
    $region38: #{gatsyfc_forward.1} parent=1 // pred_check
      _
    $region39: #{gatsyfc_forward.1} parent=1 // pred_check_branch
      %61 = sbr.rel (0) target = $region41
    $region40: #{gatsyfc_forward.1} parent=1 // pred_region
      _
    $region41: #{gatsyfc_forward.1} parent=1 // pred_fallthru
      _
    // Predicated region
    $region42: #{gatsyfc_forward.1} parent=1 // pred_check
      _
    $region43: #{gatsyfc_forward.1} parent=1 // pred_check_branch
      %63 = sbr.rel (0) target = $region45
    $region44: #{gatsyfc_forward.1} parent=1 // pred_region
      %s65 = ssub.s32 4096, 4096
      %66 = vsyncadd [#allocation7], %s65
      %s67 = sshll.u32 [#allocation8], 4
      %s68 = int_to_ptr.vmem [resolvable:$true] %s67
      %73 = dma.hbm_to_vmem [thread:$0]  %s10, 4096, %s68, [#allocation7], 64, 64, 4
    $region45: #{gatsyfc_forward.1} parent=1 // pred_fallthru
      _
    // Predicated region
    $region46: #{gatsyfc_forward.1} parent=1 // pred_check
      _
    $region47: #{gatsyfc_forward.1} parent=1 // pred_check_branch
      %75 = sbr.rel (0) target = $region49
    $region48: #{gatsyfc_forward.1} parent=1 // pred_region
      %s77 = ssub.s32 1024, 1024
      %78 = vsyncadd [#allocation10], %s77
      %s79 = sshll.u32 [#allocation9], 4
      %s80 = int_to_ptr.vmem [resolvable:$true] %s79
      %85 = dma.hbm_to_vmem [thread:$0]  %s11, 1024, %s80, [#allocation10], 64, 64, 4
    $region49: #{gatsyfc_forward.1} parent=1 // pred_fallthru
      _
    // Predicated region
    $region50: #{gatsyfc_forward.1} parent=1 // pred_check
      _
    $region51: #{gatsyfc_forward.1} parent=1 // pred_check_branch
      %87 = sbr.rel (0) target = $region53
    $region52: #{gatsyfc_forward.1} parent=1 // pred_region
      %s89 = ssub.s32 1024, 1024
      %90 = vsyncadd [#allocation10], %s89
      %s91 = sshll.u32 [#allocation11], 4
      %s92 = int_to_ptr.vmem [resolvable:$true] %s91
      %97 = dma.hbm_to_vmem [thread:$0]  %s12, 1024, %s92, [#allocation10], 64, 64, 4
    $region53: #{gatsyfc_forward.1} parent=1 // pred_fallthru
      _
    // Predicated region
    $region54: #{gatsyfc_forward.1} parent=1 // pred_check
      _
    $region55: #{gatsyfc_forward.1} parent=1 // pred_check_branch
      %99 = sbr.rel (0) target = $region57
    $region56: #{gatsyfc_forward.1} parent=1 // pred_region
      %100 = dma.done [#allocation4], 4096
    $region57: #{gatsyfc_forward.1} parent=1 // pred_fallthru
      _
    // Predicated region
    $region58: #{gatsyfc_forward.1} parent=1 // pred_check
      _
    $region59: #{gatsyfc_forward.1} parent=1 // pred_check_branch
      %102 = sbr.rel (0) target = $region61
    $region60: #{gatsyfc_forward.1} parent=1 // pred_region
      %103 = dma.done [#allocation7], 8192
    $region61: #{gatsyfc_forward.1} parent=1 // pred_fallthru
      _
    // Predicated region
    $region62: #{gatsyfc_forward.1} parent=1 // pred_check
      _
    $region63: #{gatsyfc_forward.1} parent=1 // pred_check_branch
      %105 = sbr.rel (0) target = $region65
    $region64: #{gatsyfc_forward.1} parent=1 // pred_region
      %106 = dma.done [#allocation7], 4096
    $region65: #{gatsyfc_forward.1} parent=1 // pred_fallthru
      _
    // Predicated region
    $region66: #{gatsyfc_forward.1} parent=1 // pred_check
      _
    $region67: #{gatsyfc_forward.1} parent=1 // pred_check_branch
      %108 = sbr.rel (0) target = $region69
    $region68: #{gatsyfc_forward.1} parent=1 // pred_region
      %109 = dma.done [#allocation10], 1024
    $region69: #{gatsyfc_forward.1} parent=1 // pred_fallthru
      _
    // Predicated region
    $region70: #{gatsyfc_forward.1} parent=1 // pred_check
      _
    $region71: #{gatsyfc_forward.1} parent=1 // pred_check_branch
      %111 = sbr.rel (0) target = $region73
    $region72: #{gatsyfc_forward.1} parent=1 // pred_region
      %112 = dma.done [#allocation10], 1024
    $region73: #{gatsyfc_forward.1} parent=1 // pred_fallthru
      _
    %v114 = vld [vmem:[%s1] sm:$0xf]
    %v115 = vunpack.c.l.bf16 %v114
    %v116 = vld [vmem:[%s0] sm:$0xff]
    %v117 = vld [vmem:[%s0 + $0x8] sm:$0xff]
    %v118 = vld [vmem:[%s0 + $0x10] sm:$0xff]
    %v119 = vld [vmem:[%s0 + $0x18] sm:$0xff]
    %v120 = vld [vmem:[%s0 + $0x20] sm:$0xff]
    %v121 = vld [vmem:[%s0 + $0x28] sm:$0xff]
    %v122 = vld [vmem:[%s0 + $0x30] sm:$0xff]
    %v123 = vld [vmem:[%s0 + $0x38] sm:$0xff]
    %v124 = vld [vmem:[%s0 + $0x40] sm:$0xff]
    %v125 = vld [vmem:[%s0 + $0x48] sm:$0xff]
    %v126 = vld [vmem:[%s0 + $0x50] sm:$0xf]
    %v127 = vld [vmem:[%s3] sm:$0xff]
    %v128 = vld [vmem:[%s3 + $0x8] sm:$0xff]
    %v129 = vld [vmem:[%s3 + $0x10] sm:$0xff]
    %v130 = vld [vmem:[%s3 + $0x18] sm:$0xff]
    %v131 = vld [vmem:[%s3 + $0x20] sm:$0xff]
    %v132 = vld [vmem:[%s3 + $0x28] sm:$0xff]
    %v133 = vld [vmem:[%s3 + $0x30] sm:$0xff]
    %v134 = vld [vmem:[%s3 + $0x38] sm:$0xff]
    %v135 = vld [vmem:[%s3 + $0x40] sm:$0xff]
    %v136 = vld [vmem:[%s3 + $0x48] sm:$0xff]
    %v137 = vld [vmem:[%s3 + $0x50] sm:$0xff]
    %v138 = vld [vmem:[%s3 + $0x58] sm:$0xff]
    %v139 = vld [vmem:[%s3 + $0x60] sm:$0xff]
    %v140 = vld [vmem:[%s3 + $0x68] sm:$0xff]
    %v141 = vld [vmem:[%s3 + $0x70] sm:$0xff]
    %v142 = vld [vmem:[%s3 + $0x78] sm:$0xff]
    %v143 = vld [vmem:[%s3 + $0x80] sm:$0xff]
    %v144 = vld [vmem:[%s3 + $0x88] sm:$0xff]
    %v145 = vld [vmem:[%s3 + $0x90] sm:$0xff]
    %v146 = vld [vmem:[%s3 + $0x98] sm:$0xff]
    %v147 = vld [vmem:[%s3 + $0xa0] sm:$0xff]
    %v148 = vld [vmem:[%s3 + $0xa8] sm:$0xff]
    %v149 = vld [vmem:[%s3 + $0xb0] sm:$0xff]
    %v150 = vld [vmem:[%s3 + $0xb8] sm:$0xff]
    %v151 = vld [vmem:[%s3 + $0xc0] sm:$0xff]
    %v152 = vld [vmem:[%s3 + $0xc8] sm:$0xff]
    %v153 = vld [vmem:[%s3 + $0xd0] sm:$0xff]
    %v154 = vld [vmem:[%s3 + $0xd8] sm:$0xff]
    %v155 = vld [vmem:[%s3 + $0xe0] sm:$0xff]
    %v156 = vld [vmem:[%s3 + $0xe8] sm:$0xff]
    %v157 = vld [vmem:[%s3 + $0xf0] sm:$0xff]
    %v158 = vld [vmem:[%s3 + $0xf8] sm:$0xff]
    %v159 = vld [vmem:[%s3 + $0x100] sm:$0xff]
    %v160 = vld [vmem:[%s3 + $0x108] sm:$0xff]
    %v161 = vld [vmem:[%s3 + $0x110] sm:$0xff]
    %v162 = vld [vmem:[%s3 + $0x118] sm:$0xff]
    %v163 = vld [vmem:[%s3 + $0x120] sm:$0xff]
    %v164 = vld [vmem:[%s3 + $0x128] sm:$0xff]
    %v165 = vld [vmem:[%s3 + $0x130] sm:$0xff]
    %v166 = vld [vmem:[%s3 + $0x138] sm:$0xff]
    %v167 = vld [vmem:[%s3 + $0x140] sm:$0xff]
    %v168 = vld [vmem:[%s3 + $0x148] sm:$0xff]
    %v169 = vld [vmem:[%s3 + $0x150] sm:$0xff]
    %v170 = vld [vmem:[%s3 + $0x158] sm:$0xff]
    %v171 = vld [vmem:[%s3 + $0x160] sm:$0xff]
    %v172 = vld [vmem:[%s3 + $0x168] sm:$0xff]
    %v173 = vld [vmem:[%s3 + $0x170] sm:$0xff]
    %v174 = vld [vmem:[%s3 + $0x178] sm:$0xff]
    %v175 = vld [vmem:[%s3 + $0x180] sm:$0xff]
    %v176 = vld [vmem:[%s3 + $0x188] sm:$0xff]
    %v177 = vld [vmem:[%s3 + $0x190] sm:$0xff]
    %v178 = vld [vmem:[%s3 + $0x198] sm:$0xff]
    %v179 = vld [vmem:[%s3 + $0x1a0] sm:$0xff]
    %v180 = vld [vmem:[%s3 + $0x1a8] sm:$0xff]
    %v181 = vld [vmem:[%s3 + $0x1b0] sm:$0xff]
    %v182 = vld [vmem:[%s3 + $0x1b8] sm:$0xff]
    %v183 = vld [vmem:[%s3 + $0x1c0] sm:$0xff]
    %v184 = vld [vmem:[%s3 + $0x1c8] sm:$0xff]
    %v185 = vld [vmem:[%s3 + $0x1d0] sm:$0xff]
    %v186 = vld [vmem:[%s3 + $0x1d8] sm:$0xff]
    %v187 = vld [vmem:[%s3 + $0x1e0] sm:$0xff]
    %v188 = vld [vmem:[%s3 + $0x1e8] sm:$0xff]
    %v189 = vld [vmem:[%s3 + $0x1f0] sm:$0xff]
    %v190 = vld [vmem:[%s3 + $0x1f8] sm:$0xff]
    %v191 = vld [vmem:[%s3 + $0x200] sm:$0xff]
    %v192 = vld [vmem:[%s3 + $0x208] sm:$0xff]
    %v193 = vld [vmem:[%s3 + $0x210] sm:$0xff]
    %v194 = vld [vmem:[%s3 + $0x218] sm:$0xff]
    %v195 = vld [vmem:[%s3 + $0x220] sm:$0xff]
    %v196 = vld [vmem:[%s3 + $0x228] sm:$0xff]
    %v197 = vld [vmem:[%s3 + $0x230] sm:$0xff]
    %v198 = vld [vmem:[%s3 + $0x238] sm:$0xff]
    %v199 = vld [vmem:[%s3 + $0x240] sm:$0xff]
    %v200 = vld [vmem:[%s3 + $0x248] sm:$0xff]
    %v201 = vld [vmem:[%s3 + $0x250] sm:$0xff]
    %v202 = vld [vmem:[%s3 + $0x258] sm:$0xff]
    %v203 = vld [vmem:[%s3 + $0x260] sm:$0xff]
    %v204 = vld [vmem:[%s3 + $0x268] sm:$0xff]
    %v205 = vld [vmem:[%s3 + $0x270] sm:$0xff]
    %v206 = vld [vmem:[%s3 + $0x278] sm:$0xff]
    %v207 = vld [vmem:[%s3 + $0x280] sm:$0xff]
    %v208 = vld [vmem:[%s3 + $0x288] sm:$0xff]
    %v209 = vld [vmem:[%s3 + $0x290] sm:$0xff]
    %v210 = vld [vmem:[%s3 + $0x298] sm:$0xff]
    %v211 = vld [vmem:[%s3 + $0x2a0] sm:$0xff]
    %v212 = vld [vmem:[%s3 + $0x2a8] sm:$0xff]
    %v213 = vld [vmem:[%s3 + $0x2b0] sm:$0xff]
    %v214 = vld [vmem:[%s3 + $0x2b8] sm:$0xff]
    %v215 = vld [vmem:[%s3 + $0x2c0] sm:$0xff]
    %v216 = vld [vmem:[%s3 + $0x2c8] sm:$0xff]
    %v217 = vld [vmem:[%s3 + $0x2d0] sm:$0xff]
    %v218 = vld [vmem:[%s3 + $0x2d8] sm:$0xff]
    %v219 = vld [vmem:[%s3 + $0x2e0] sm:$0xff]
    %v220 = vld [vmem:[%s3 + $0x2e8] sm:$0xff]
    %v221 = vld [vmem:[%s3 + $0x2f0] sm:$0xff]
    %v222 = vld [vmem:[%s3 + $0x2f8] sm:$0xff]
    %v223 = vld [vmem:[%s3 + $0x300] sm:$0xff]
    %v224 = vld [vmem:[%s3 + $0x308] sm:$0xff]
    %v225 = vld [vmem:[%s3 + $0x310] sm:$0xff]
    %v226 = vld [vmem:[%s3 + $0x318] sm:$0xff]
    %v227 = vld [vmem:[%s3 + $0x320] sm:$0xff]
    %v228 = vld [vmem:[%s3 + $0x328] sm:$0xff]
    %v229 = vld [vmem:[%s3 + $0x330] sm:$0xff]
    %v230 = vld [vmem:[%s3 + $0x338] sm:$0xff]
    %v231 = vld [vmem:[%s3 + $0x340] sm:$0xff]
    %v232 = vld [vmem:[%s3 + $0x348] sm:$0xff]
    %v233 = vld [vmem:[%s3 + $0x350] sm:$0xff]
    %v234 = vld [vmem:[%s3 + $0x358] sm:$0xff]
    %v235 = vld [vmem:[%s3 + $0x360] sm:$0xff]
    %v236 = vld [vmem:[%s3 + $0x368] sm:$0xff]
    %v237 = vld [vmem:[%s3 + $0x370] sm:$0xff]
    %v238 = vld [vmem:[%s3 + $0x378] sm:$0xff]
    %v239 = vld [vmem:[%s3 + $0x380] sm:$0xff]
    %v240 = vld [vmem:[%s3 + $0x388] sm:$0xff]
    %v241 = vld [vmem:[%s3 + $0x390] sm:$0xff]
    %v242 = vld [vmem:[%s3 + $0x398] sm:$0xff]
    %v243 = vld [vmem:[%s3 + $0x3a0] sm:$0xff]
    %v244 = vld [vmem:[%s3 + $0x3a8] sm:$0xff]
    %v245 = vld [vmem:[%s3 + $0x3b0] sm:$0xff]
    %v246 = vld [vmem:[%s3 + $0x3b8] sm:$0xff]
    %v247 = vld [vmem:[%s3 + $0x3c0] sm:$0xff]
    %v248 = vld [vmem:[%s3 + $0x3c8] sm:$0xff]
    %v249 = vld [vmem:[%s3 + $0x3d0] sm:$0xff]
    %v250 = vld [vmem:[%s3 + $0x3d8] sm:$0xff]
    %v251 = vld [vmem:[%s3 + $0x3e0] sm:$0xff]
    %v252 = vld [vmem:[%s3 + $0x3e8] sm:$0xff]
    %v253 = vld [vmem:[%s3 + $0x3f0] sm:$0xff]
    %v254 = vld [vmem:[%s3 + $0x3f8] sm:$0xff]
    %v255 = vld [vmem:[%s3 + $0x400] sm:$0xff]
    %v256 = vld [vmem:[%s3 + $0x408] sm:$0xff]
    %v257 = vld [vmem:[%s3 + $0x410] sm:$0xff]
    %v258 = vld [vmem:[%s3 + $0x418] sm:$0xff]
    %v259 = vld [vmem:[%s3 + $0x420] sm:$0xff]
    %v260 = vld [vmem:[%s3 + $0x428] sm:$0xff]
    %v261 = vld [vmem:[%s3 + $0x430] sm:$0xff]
    %v262 = vld [vmem:[%s3 + $0x438] sm:$0xff]
    %v263 = vld [vmem:[%s3 + $0x440] sm:$0xff]
    %v264 = vld [vmem:[%s3 + $0x448] sm:$0xff]
    %v265 = vld [vmem:[%s3 + $0x450] sm:$0xff]
    %v266 = vld [vmem:[%s3 + $0x458] sm:$0xff]
    %v267 = vld [vmem:[%s3 + $0x460] sm:$0xff]
    %v268 = vld [vmem:[%s3 + $0x468] sm:$0xff]
    %v269 = vld [vmem:[%s3 + $0x470] sm:$0xff]
    %v270 = vld [vmem:[%s3 + $0x478] sm:$0xff]
    %v271 = vld [vmem:[%s3 + $0x480] sm:$0xff]
    %v272 = vld [vmem:[%s3 + $0x488] sm:$0xff]
    %v273 = vld [vmem:[%s3 + $0x490] sm:$0xff]
    %v274 = vld [vmem:[%s3 + $0x498] sm:$0xff]
    %v275 = vld [vmem:[%s3 + $0x4a0] sm:$0xff]
    %v276 = vld [vmem:[%s3 + $0x4a8] sm:$0xff]
    %v277 = vld [vmem:[%s3 + $0x4b0] sm:$0xff]
    %v278 = vld [vmem:[%s3 + $0x4b8] sm:$0xff]
    %v279 = vld [vmem:[%s3 + $0x4c0] sm:$0xff]
    %v280 = vld [vmem:[%s3 + $0x4c8] sm:$0xff]
    %v281 = vld [vmem:[%s3 + $0x4d0] sm:$0xff]
    %v282 = vld [vmem:[%s3 + $0x4d8] sm:$0xff]
    %v283 = vld [vmem:[%s3 + $0x4e0] sm:$0xff]
    %v284 = vld [vmem:[%s3 + $0x4e8] sm:$0xff]
    %v285 = vld [vmem:[%s3 + $0x4f0] sm:$0xff]
    %v286 = vld [vmem:[%s3 + $0x4f8] sm:$0xff]
    %v287 = vld [vmem:[%s3 + $0x500] sm:$0xff]
    %v288 = vld [vmem:[%s3 + $0x508] sm:$0xff]
    %v289 = vld [vmem:[%s3 + $0x510] sm:$0xff]
    %v290 = vld [vmem:[%s3 + $0x518] sm:$0xff]
    %v291 = vld [vmem:[%s3 + $0x520] sm:$0xff]
    %v292 = vld [vmem:[%s3 + $0x528] sm:$0xff]
    %v293 = vld [vmem:[%s3 + $0x530] sm:$0xff]
    %v294 = vld [vmem:[%s3 + $0x538] sm:$0xff]
    %v295 = vld [vmem:[%s3 + $0x540] sm:$0xff]
    %v296 = vld [vmem:[%s3 + $0x548] sm:$0xff]
    %v297 = vld [vmem:[%s3 + $0x550] sm:$0xff]
    %v298 = vld [vmem:[%s3 + $0x558] sm:$0xff]
    %v299 = vld [vmem:[%s3 + $0x560] sm:$0xff]
    %v300 = vld [vmem:[%s3 + $0x568] sm:$0xff]
    %v301 = vld [vmem:[%s3 + $0x570] sm:$0xff]
    %v302 = vld [vmem:[%s3 + $0x578] sm:$0xff]
    %v303 = vld [vmem:[%s3 + $0x580] sm:$0xff]
    %v304 = vld [vmem:[%s3 + $0x588] sm:$0xff]
    %v305 = vld [vmem:[%s3 + $0x590] sm:$0xff]
    %v306 = vld [vmem:[%s3 + $0x598] sm:$0xff]
    %v307 = vld [vmem:[%s3 + $0x5a0] sm:$0xff]
    %v308 = vld [vmem:[%s3 + $0x5a8] sm:$0xff]
    %v309 = vld [vmem:[%s3 + $0x5b0] sm:$0xff]
    %v310 = vld [vmem:[%s3 + $0x5b8] sm:$0xff]
    %v311 = vld [vmem:[%s3 + $0x5c0] sm:$0xff]
    %v312 = vld [vmem:[%s3 + $0x5c8] sm:$0xff]
    %v313 = vld [vmem:[%s3 + $0x5d0] sm:$0xff]
    %v314 = vld [vmem:[%s3 + $0x5d8] sm:$0xff]
    %v315 = vld [vmem:[%s3 + $0x5e0] sm:$0xff]
    %v316 = vld [vmem:[%s3 + $0x5e8] sm:$0xff]
    %v317 = vld [vmem:[%s3 + $0x5f0] sm:$0xff]
    %v318 = vld [vmem:[%s3 + $0x5f8] sm:$0xff]
    %v319 = vld [vmem:[%s3 + $0x600] sm:$0xff]
    %v320 = vld [vmem:[%s3 + $0x608] sm:$0xff]
    %v321 = vld [vmem:[%s3 + $0x610] sm:$0xff]
    %v322 = vld [vmem:[%s3 + $0x618] sm:$0xff]
    %v323 = vld [vmem:[%s3 + $0x620] sm:$0xff]
    %v324 = vld [vmem:[%s3 + $0x628] sm:$0xff]
    %v325 = vld [vmem:[%s3 + $0x630] sm:$0xff]
    %v326 = vld [vmem:[%s3 + $0x638] sm:$0xff]
    %v327 = vld [vmem:[%s3 + $0x640] sm:$0xff]
    %v328 = vld [vmem:[%s3 + $0x648] sm:$0xff]
    %v329 = vld [vmem:[%s3 + $0x650] sm:$0xff]
    %v330 = vld [vmem:[%s3 + $0x658] sm:$0xff]
    %v331 = vld [vmem:[%s3 + $0x660] sm:$0xff]
    %v332 = vld [vmem:[%s3 + $0x668] sm:$0xff]
    %v333 = vld [vmem:[%s3 + $0x670] sm:$0xff]
    %v334 = vld [vmem:[%s3 + $0x678] sm:$0xff]
    %v335 = vld [vmem:[%s3 + $0x680] sm:$0xff]
    %v336 = vld [vmem:[%s3 + $0x688] sm:$0xff]
    %v337 = vld [vmem:[%s3 + $0x690] sm:$0xff]
    %v338 = vld [vmem:[%s3 + $0x698] sm:$0xff]
    %v339 = vld [vmem:[%s3 + $0x6a0] sm:$0xff]
    %v340 = vld [vmem:[%s3 + $0x6a8] sm:$0xff]
    %v341 = vld [vmem:[%s3 + $0x6b0] sm:$0xff]
    %v342 = vld [vmem:[%s3 + $0x6b8] sm:$0xff]
    %v343 = vld [vmem:[%s3 + $0x6c0] sm:$0xff]
    %v344 = vld [vmem:[%s3 + $0x6c8] sm:$0xff]
    %v345 = vld [vmem:[%s3 + $0x6d0] sm:$0xff]
    %v346 = vld [vmem:[%s3 + $0x6d8] sm:$0xff]
    %v347 = vld [vmem:[%s3 + $0x6e0] sm:$0xff]
    %v348 = vld [vmem:[%s3 + $0x6e8] sm:$0xff]
    %v349 = vld [vmem:[%s3 + $0x6f0] sm:$0xff]
    %v350 = vld [vmem:[%s3 + $0x6f8] sm:$0xff]
    %v351 = vld [vmem:[%s3 + $0x700] sm:$0xff]
    %v352 = vld [vmem:[%s3 + $0x708] sm:$0xff]
    %v353 = vld [vmem:[%s3 + $0x710] sm:$0xff]
    %v354 = vld [vmem:[%s3 + $0x718] sm:$0xff]
    %v355 = vld [vmem:[%s3 + $0x720] sm:$0xff]
    %v356 = vld [vmem:[%s3 + $0x728] sm:$0xff]
    %v357 = vld [vmem:[%s3 + $0x730] sm:$0xff]
    %v358 = vld [vmem:[%s3 + $0x738] sm:$0xff]
    %v359 = vld [vmem:[%s3 + $0x740] sm:$0xff]
    %v360 = vld [vmem:[%s3 + $0x748] sm:$0xff]
    %v361 = vld [vmem:[%s3 + $0x750] sm:$0xff]
    %v362 = vld [vmem:[%s3 + $0x758] sm:$0xff]
    %v363 = vld [vmem:[%s3 + $0x760] sm:$0xff]
    %v364 = vld [vmem:[%s3 + $0x768] sm:$0xff]
    %v365 = vld [vmem:[%s3 + $0x770] sm:$0xff]
    %v366 = vld [vmem:[%s3 + $0x778] sm:$0xff]
    %v367 = vld [vmem:[%s3 + $0x780] sm:$0xff]
    %v368 = vld [vmem:[%s3 + $0x788] sm:$0xff]
    %v369 = vld [vmem:[%s3 + $0x790] sm:$0xff]
    %v370 = vld [vmem:[%s3 + $0x798] sm:$0xff]
    %v371 = vld [vmem:[%s3 + $0x7a0] sm:$0xff]
    %v372 = vld [vmem:[%s3 + $0x7a8] sm:$0xff]
    %v373 = vld [vmem:[%s3 + $0x7b0] sm:$0xff]
    %v374 = vld [vmem:[%s3 + $0x7b8] sm:$0xff]
    %v375 = vld [vmem:[%s3 + $0x7c0] sm:$0xff]
    %v376 = vld [vmem:[%s3 + $0x7c8] sm:$0xff]
    %v377 = vld [vmem:[%s3 + $0x7d0] sm:$0xff]
    %v378 = vld [vmem:[%s3 + $0x7d8] sm:$0xff]
    %v379 = vld [vmem:[%s3 + $0x7e0] sm:$0xff]
    %v380 = vld [vmem:[%s3 + $0x7e8] sm:$0xff]
    %v381 = vld [vmem:[%s3 + $0x7f0] sm:$0xff]
    %v382 = vld [vmem:[%s3 + $0x7f8] sm:$0xff]
    %v383 = vld [vmem:[%s3 + $0x800] sm:$0xff]
    %v384 = vld [vmem:[%s3 + $0x808] sm:$0xff]
    %v385 = vld [vmem:[%s3 + $0x810] sm:$0xff]
    %v386 = vld [vmem:[%s3 + $0x818] sm:$0xff]
    %v387 = vld [vmem:[%s3 + $0x820] sm:$0xff]
    %v388 = vld [vmem:[%s3 + $0x828] sm:$0xff]
    %v389 = vld [vmem:[%s3 + $0x830] sm:$0xff]
    %v390 = vld [vmem:[%s3 + $0x838] sm:$0xff]
    %v391 = vld [vmem:[%s3 + $0x840] sm:$0xff]
    %v392 = vld [vmem:[%s3 + $0x848] sm:$0xff]
    %v393 = vld [vmem:[%s3 + $0x850] sm:$0xff]
    %v394 = vld [vmem:[%s3 + $0x858] sm:$0xff]
    %v395 = vld [vmem:[%s3 + $0x860] sm:$0xff]
    %v396 = vld [vmem:[%s3 + $0x868] sm:$0xff]
    %v397 = vld [vmem:[%s3 + $0x870] sm:$0xff]
    %v398 = vld [vmem:[%s3 + $0x878] sm:$0xff]
    %v399 = vld [vmem:[%s3 + $0x880] sm:$0xff]
    %v400 = vld [vmem:[%s3 + $0x888] sm:$0xff]
    %v401 = vld [vmem:[%s3 + $0x890] sm:$0xff]
    %v402 = vld [vmem:[%s3 + $0x898] sm:$0xff]
    %v403 = vld [vmem:[%s3 + $0x8a0] sm:$0xff]
    %v404 = vld [vmem:[%s3 + $0x8a8] sm:$0xff]
    %v405 = vld [vmem:[%s3 + $0x8b0] sm:$0xff]
    %v406 = vld [vmem:[%s3 + $0x8b8] sm:$0xff]
    %v407 = vld [vmem:[%s3 + $0x8c0] sm:$0xff]
    %v408 = vld [vmem:[%s3 + $0x8c8] sm:$0xff]
    %v409 = vld [vmem:[%s3 + $0x8d0] sm:$0xff]
    %v410 = vld [vmem:[%s3 + $0x8d8] sm:$0xff]
    %v411 = vld [vmem:[%s3 + $0x8e0] sm:$0xff]
    %v412 = vld [vmem:[%s3 + $0x8e8] sm:$0xff]
    %v413 = vld [vmem:[%s3 + $0x8f0] sm:$0xff]
    %v414 = vld [vmem:[%s3 + $0x8f8] sm:$0xff]
    %v415 = vld [vmem:[%s3 + $0x900] sm:$0xff]
    %v416 = vld [vmem:[%s3 + $0x908] sm:$0xff]
    %v417 = vld [vmem:[%s3 + $0x910] sm:$0xff]
    %v418 = vld [vmem:[%s3 + $0x918] sm:$0xff]
    %v419 = vld [vmem:[%s3 + $0x920] sm:$0xff]
    %v420 = vld [vmem:[%s3 + $0x928] sm:$0xff]
    %v421 = vld [vmem:[%s3 + $0x930] sm:$0xff]
    %v422 = vld [vmem:[%s3 + $0x938] sm:$0xff]
    %v423 = vld [vmem:[%s3 + $0x940] sm:$0xff]
    %v424 = vld [vmem:[%s3 + $0x948] sm:$0xff]
    %v425 = vld [vmem:[%s3 + $0x950] sm:$0xff]
    %v426 = vld [vmem:[%s3 + $0x958] sm:$0xff]
    %v427 = vld [vmem:[%s3 + $0x960] sm:$0xff]
    %v428 = vld [vmem:[%s3 + $0x968] sm:$0xff]
    %v429 = vld [vmem:[%s3 + $0x970] sm:$0xff]
    %v430 = vld [vmem:[%s3 + $0x978] sm:$0xff]
    %v431 = vld [vmem:[%s3 + $0x980] sm:$0xff]
    %v432 = vld [vmem:[%s3 + $0x988] sm:$0xff]
    %v433 = vld [vmem:[%s3 + $0x990] sm:$0xff]
    %v434 = vld [vmem:[%s3 + $0x998] sm:$0xff]
    %v435 = vld [vmem:[%s3 + $0x9a0] sm:$0xff]
    %v436 = vld [vmem:[%s3 + $0x9a8] sm:$0xff]
    %v437 = vld [vmem:[%s3 + $0x9b0] sm:$0xff]
    %v438 = vld [vmem:[%s3 + $0x9b8] sm:$0xff]
    %v439 = vld [vmem:[%s3 + $0x9c0] sm:$0xff]
    %v440 = vld [vmem:[%s3 + $0x9c8] sm:$0xff]
    %v441 = vld [vmem:[%s3 + $0x9d0] sm:$0xff]
    %v442 = vld [vmem:[%s3 + $0x9d8] sm:$0xff]
    %v443 = vld [vmem:[%s3 + $0x9e0] sm:$0xff]
    %v444 = vld [vmem:[%s3 + $0x9e8] sm:$0xff]
    %v445 = vld [vmem:[%s3 + $0x9f0] sm:$0xff]
    %v446 = vld [vmem:[%s3 + $0x9f8] sm:$0xff]
    %v447 = vld [vmem:[%s3 + $0xa00] sm:$0xff]
    %v448 = vld [vmem:[%s3 + $0xa08] sm:$0xff]
    %v449 = vld [vmem:[%s3 + $0xa10] sm:$0xff]
    %v450 = vld [vmem:[%s3 + $0xa18] sm:$0xff]
    %v451 = vld [vmem:[%s3 + $0xa20] sm:$0xff]
    %v452 = vld [vmem:[%s3 + $0xa28] sm:$0xff]
    %v453 = vld [vmem:[%s3 + $0xa30] sm:$0xff]
    %v454 = vld [vmem:[%s3 + $0xa38] sm:$0xff]
    %v455 = vld [vmem:[%s3 + $0xa40] sm:$0xff]
    %v456 = vld [vmem:[%s3 + $0xa48] sm:$0xff]
    %v457 = vld [vmem:[%s3 + $0xa50] sm:$0xff]
    %v458 = vld [vmem:[%s3 + $0xa58] sm:$0xff]
    %v459 = vld [vmem:[%s3 + $0xa60] sm:$0xff]
    %v460 = vld [vmem:[%s3 + $0xa68] sm:$0xff]
    %v461 = vld [vmem:[%s3 + $0xa70] sm:$0xff]
    %v462 = vld [vmem:[%s3 + $0xa78] sm:$0xff]
    %v474 = vunpack.c.l.b16 %v116
    %v475 = vunpack.c.h.b16 %v116
    %v476 = vunpack.c.l.b16 %v117
    %v477 = vunpack.c.h.b16 %v117
    %v478 = vunpack.c.l.b16 %v118
    %v479 = vunpack.c.h.b16 %v118
    %v480 = vunpack.c.l.b16 %v119
    %v481 = vunpack.c.h.b16 %v119
    %v482 = vunpack.c.l.b16 %v120
    %v483 = vunpack.c.h.b16 %v120
    %v484 = vunpack.c.l.b16 %v121
    %v485 = vunpack.c.h.b16 %v121
    %v486 = vunpack.c.l.b16 %v122
    %v487 = vunpack.c.h.b16 %v122
    %v488 = vunpack.c.l.b16 %v123
    %v489 = vunpack.c.h.b16 %v123
    %v490 = vunpack.c.l.b16 %v124
    %v491 = vunpack.c.h.b16 %v124
    %v492 = vunpack.c.l.b16 %v125
    %v493 = vunpack.c.h.b16 %v125
    %v494 = vunpack.c.l.b16 %v126
    %v495 = vpack.c.b16 %v474, %v474
    %v496 = vpack.c.b16 %v475, %v475
    %v497 = vpack.c.b16 %v476, %v476
    %v498 = vpack.c.b16 %v477, %v477
    %v499 = vpack.c.b16 %v478, %v478
    %v500 = vpack.c.b16 %v479, %v479
    %v501 = vpack.c.b16 %v480, %v480
    %v502 = vpack.c.b16 %v481, %v481
    %v503 = vpack.c.b16 %v482, %v482
    %v504 = vpack.c.b16 %v483, %v483
    %v505 = vpack.c.b16 %v484, %v484
    %v506 = vpack.c.b16 %v485, %v485
    %v507 = vpack.c.b16 %v486, %v486
    %v508 = vpack.c.b16 %v487, %v487
    %v509 = vpack.c.b16 %v488, %v488
    %v510 = vpack.c.b16 %v489, %v489
    %v511 = vpack.c.b16 %v490, %v490
    %v512 = vpack.c.b16 %v491, %v491
    %v513 = vpack.c.b16 %v492, %v492
    %v514 = vpack.c.b16 %v493, %v493
    %v515 = vpack.c.b16 %v494, %v494
    %v873 = vunpack.c.l.b16 %v127
    %v874 = vunpack.c.h.b16 %v127
    %v875 = vunpack.c.l.b16 %v128
    %v876 = vunpack.c.h.b16 %v128
    %v877 = vunpack.c.l.b16 %v129
    %v878 = vunpack.c.h.b16 %v129
    %v879 = vunpack.c.l.b16 %v130
    %v880 = vunpack.c.h.b16 %v130
    %v881 = vunpack.c.l.b16 %v131
    %v882 = vunpack.c.h.b16 %v131
    %v883 = vunpack.c.l.b16 %v132
    %v884 = vunpack.c.h.b16 %v132
    %v885 = vunpack.c.l.b16 %v133
    %v886 = vunpack.c.h.b16 %v133
    %v887 = vunpack.c.l.b16 %v134
    %v888 = vunpack.c.h.b16 %v134
    %v889 = vunpack.c.l.b16 %v135
    %v890 = vunpack.c.h.b16 %v135
    %v891 = vunpack.c.l.b16 %v136
    %v892 = vunpack.c.h.b16 %v136
    %v893 = vunpack.c.l.b16 %v137
    %v894 = vunpack.c.h.b16 %v137
    %v895 = vunpack.c.l.b16 %v138
    %v896 = vunpack.c.h.b16 %v138
    %v897 = vunpack.c.l.b16 %v139
    %v898 = vunpack.c.h.b16 %v139
    %v899 = vunpack.c.l.b16 %v140
    %v900 = vunpack.c.h.b16 %v140
    %v901 = vunpack.c.l.b16 %v141
    %v902 = vunpack.c.h.b16 %v141
    %v903 = vunpack.c.l.b16 %v142
    %v904 = vunpack.c.h.b16 %v142
    %v905 = vunpack.c.l.b16 %v143
    %v906 = vunpack.c.h.b16 %v143
    %v907 = vunpack.c.l.b16 %v144
    %v908 = vunpack.c.h.b16 %v144
    %v909 = vunpack.c.l.b16 %v145
    %v910 = vunpack.c.h.b16 %v145
    %v911 = vunpack.c.l.b16 %v146
    %v912 = vunpack.c.h.b16 %v146
    %v913 = vunpack.c.l.b16 %v147
    %v914 = vunpack.c.h.b16 %v147
    %v915 = vunpack.c.l.b16 %v148
    %v916 = vunpack.c.h.b16 %v148
    %v917 = vunpack.c.l.b16 %v149
    %v918 = vunpack.c.h.b16 %v149
    %v919 = vunpack.c.l.b16 %v150
    %v920 = vunpack.c.h.b16 %v150
    %v921 = vunpack.c.l.b16 %v151
    %v922 = vunpack.c.h.b16 %v151
    %v923 = vunpack.c.l.b16 %v152
    %v924 = vunpack.c.h.b16 %v152
    %v925 = vunpack.c.l.b16 %v153
    %v926 = vunpack.c.h.b16 %v153
    %v927 = vunpack.c.l.b16 %v154
    %v928 = vunpack.c.h.b16 %v154
    %v929 = vunpack.c.l.b16 %v155
    %v930 = vunpack.c.h.b16 %v155
    %v931 = vunpack.c.l.b16 %v156
    %v932 = vunpack.c.h.b16 %v156
    %v933 = vunpack.c.l.b16 %v157
    %v934 = vunpack.c.h.b16 %v157
    %v935 = vunpack.c.l.b16 %v158
    %v936 = vunpack.c.h.b16 %v158
    %v937 = vunpack.c.l.b16 %v159
    %v938 = vunpack.c.h.b16 %v159
    %v939 = vunpack.c.l.b16 %v160
    %v940 = vunpack.c.h.b16 %v160
    %v941 = vunpack.c.l.b16 %v161
    %v942 = vunpack.c.h.b16 %v161
    %v943 = vunpack.c.l.b16 %v162
    %v944 = vunpack.c.h.b16 %v162
    %v945 = vunpack.c.l.b16 %v163
    %v946 = vunpack.c.h.b16 %v163
    %v947 = vunpack.c.l.b16 %v164
    %v948 = vunpack.c.h.b16 %v164
    %v949 = vunpack.c.l.b16 %v165
    %v950 = vunpack.c.h.b16 %v165
    %v951 = vunpack.c.l.b16 %v166
    %v952 = vunpack.c.h.b16 %v166
    %v953 = vunpack.c.l.b16 %v167
    %v954 = vunpack.c.h.b16 %v167
    %v955 = vunpack.c.l.b16 %v168
    %v956 = vunpack.c.h.b16 %v168
    %v957 = vunpack.c.l.b16 %v169
    %v958 = vunpack.c.h.b16 %v169
    %v959 = vunpack.c.l.b16 %v170
    %v960 = vunpack.c.h.b16 %v170
    %v961 = vunpack.c.l.b16 %v171
    %v962 = vunpack.c.h.b16 %v171
    %v963 = vunpack.c.l.b16 %v172
    %v964 = vunpack.c.h.b16 %v172
    %v965 = vunpack.c.l.b16 %v173
    %v966 = vunpack.c.h.b16 %v173
    %v967 = vunpack.c.l.b16 %v174
    %v968 = vunpack.c.h.b16 %v174
    %v969 = vunpack.c.l.b16 %v175
    %v970 = vunpack.c.h.b16 %v175
    %v971 = vunpack.c.l.b16 %v176
    %v972 = vunpack.c.h.b16 %v176
    %v973 = vunpack.c.l.b16 %v177
    %v974 = vunpack.c.h.b16 %v177
    %v975 = vunpack.c.l.b16 %v178
    %v976 = vunpack.c.h.b16 %v178
    %v977 = vunpack.c.l.b16 %v179
    %v978 = vunpack.c.h.b16 %v179
    %v979 = vunpack.c.l.b16 %v180
    %v980 = vunpack.c.h.b16 %v180
    %v981 = vunpack.c.l.b16 %v181
    %v982 = vunpack.c.h.b16 %v181
    %v983 = vunpack.c.l.b16 %v182
    %v984 = vunpack.c.h.b16 %v182
    %v985 = vunpack.c.l.b16 %v183
    %v986 = vunpack.c.h.b16 %v183
    %v987 = vunpack.c.l.b16 %v184
    %v988 = vunpack.c.h.b16 %v184
    %v989 = vunpack.c.l.b16 %v185
    %v990 = vunpack.c.h.b16 %v185
    %v991 = vunpack.c.l.b16 %v186
    %v992 = vunpack.c.h.b16 %v186
    %v993 = vunpack.c.l.b16 %v187
    %v994 = vunpack.c.h.b16 %v187
    %v995 = vunpack.c.l.b16 %v188
    %v996 = vunpack.c.h.b16 %v188
    %v997 = vunpack.c.l.b16 %v189
    %v998 = vunpack.c.h.b16 %v189
    %v999 = vunpack.c.l.b16 %v190
    %v1000 = vunpack.c.h.b16 %v190
    %v1001 = vunpack.c.l.b16 %v191
    %v1002 = vunpack.c.h.b16 %v191
    %v1003 = vunpack.c.l.b16 %v192
    %v1004 = vunpack.c.h.b16 %v192
    %v1005 = vunpack.c.l.b16 %v193
    %v1006 = vunpack.c.h.b16 %v193
    %v1007 = vunpack.c.l.b16 %v194
    %v1008 = vunpack.c.h.b16 %v194
    %v1009 = vunpack.c.l.b16 %v195
    %v1010 = vunpack.c.h.b16 %v195
    %v1011 = vunpack.c.l.b16 %v196
    %v1012 = vunpack.c.h.b16 %v196
    %v1013 = vunpack.c.l.b16 %v197
    %v1014 = vunpack.c.h.b16 %v197
    %v1015 = vunpack.c.l.b16 %v198
    %v1016 = vunpack.c.h.b16 %v198
    %v1017 = vunpack.c.l.b16 %v199
    %v1018 = vunpack.c.h.b16 %v199
    %v1019 = vunpack.c.l.b16 %v200
    %v1020 = vunpack.c.h.b16 %v200
    %v1021 = vunpack.c.l.b16 %v201
    %v1022 = vunpack.c.h.b16 %v201
    %v1023 = vunpack.c.l.b16 %v202
    %v1024 = vunpack.c.h.b16 %v202
    %v1025 = vunpack.c.l.b16 %v203
    %v1026 = vunpack.c.h.b16 %v203
    %v1027 = vunpack.c.l.b16 %v204
    %v1028 = vunpack.c.h.b16 %v204
    %v1029 = vunpack.c.l.b16 %v205
    %v1030 = vunpack.c.h.b16 %v205
    %v1031 = vunpack.c.l.b16 %v206
    %v1032 = vunpack.c.h.b16 %v206
    %v1033 = vunpack.c.l.b16 %v207
    %v1034 = vunpack.c.h.b16 %v207
    %v1035 = vunpack.c.l.b16 %v208
    %v1036 = vunpack.c.h.b16 %v208
    %v1037 = vunpack.c.l.b16 %v209
    %v1038 = vunpack.c.h.b16 %v209
    %v1039 = vunpack.c.l.b16 %v210
    %v1040 = vunpack.c.h.b16 %v210
    %v1041 = vunpack.c.l.b16 %v211
    %v1042 = vunpack.c.h.b16 %v211
    %v1043 = vunpack.c.l.b16 %v212
    %v1044 = vunpack.c.h.b16 %v212
    %v1045 = vunpack.c.l.b16 %v213
    %v1046 = vunpack.c.h.b16 %v213
    %v1047 = vunpack.c.l.b16 %v214
    %v1048 = vunpack.c.h.b16 %v214
    %v1049 = vunpack.c.l.b16 %v215
    %v1050 = vunpack.c.h.b16 %v215
    %v1051 = vunpack.c.l.b16 %v216
    %v1052 = vunpack.c.h.b16 %v216
    %v1053 = vunpack.c.l.b16 %v217
    %v1054 = vunpack.c.h.b16 %v217
    %v1055 = vunpack.c.l.b16 %v218
    %v1056 = vunpack.c.h.b16 %v218
    %v1057 = vunpack.c.l.b16 %v219
    %v1058 = vunpack.c.h.b16 %v219
    %v1059 = vunpack.c.l.b16 %v220
    %v1060 = vunpack.c.h.b16 %v220
    %v1061 = vunpack.c.l.b16 %v221
    %v1062 = vunpack.c.h.b16 %v221
    %v1063 = vunpack.c.l.b16 %v222
    %v1064 = vunpack.c.h.b16 %v222
    %v1065 = vunpack.c.l.b16 %v223
    %v1066 = vunpack.c.h.b16 %v223
    %v1067 = vunpack.c.l.b16 %v224
    %v1068 = vunpack.c.h.b16 %v224
    %v1069 = vunpack.c.l.b16 %v225
    %v1070 = vunpack.c.h.b16 %v225
    %v1071 = vunpack.c.l.b16 %v226
    %v1072 = vunpack.c.h.b16 %v226
    %v1073 = vunpack.c.l.b16 %v227
    %v1074 = vunpack.c.h.b16 %v227
    %v1075 = vunpack.c.l.b16 %v228
    %v1076 = vunpack.c.h.b16 %v228
    %v1077 = vunpack.c.l.b16 %v229
    %v1078 = vunpack.c.h.b16 %v229
    %v1079 = vunpack.c.l.b16 %v230
    %v1080 = vunpack.c.h.b16 %v230
    %v1081 = vunpack.c.l.b16 %v231
    %v1082 = vunpack.c.h.b16 %v231
    %v1083 = vunpack.c.l.b16 %v232
    %v1084 = vunpack.c.h.b16 %v232
    %v1085 = vunpack.c.l.b16 %v233
    %v1086 = vunpack.c.h.b16 %v233
    %v1087 = vunpack.c.l.b16 %v234
    %v1088 = vunpack.c.h.b16 %v234
    %v1089 = vunpack.c.l.b16 %v235
    %v1090 = vunpack.c.h.b16 %v235
    %v1091 = vunpack.c.l.b16 %v236
    %v1092 = vunpack.c.h.b16 %v236
    %v1093 = vunpack.c.l.b16 %v237
    %v1094 = vunpack.c.h.b16 %v237
    %v1095 = vunpack.c.l.b16 %v238
    %v1096 = vunpack.c.h.b16 %v238
    %v1097 = vunpack.c.l.b16 %v239
    %v1098 = vunpack.c.h.b16 %v239
    %v1099 = vunpack.c.l.b16 %v240
    %v1100 = vunpack.c.h.b16 %v240
    %v1101 = vunpack.c.l.b16 %v241
    %v1102 = vunpack.c.h.b16 %v241
    %v1103 = vunpack.c.l.b16 %v242
    %v1104 = vunpack.c.h.b16 %v242
    %v1105 = vunpack.c.l.b16 %v243
    %v1106 = vunpack.c.h.b16 %v243
    %v1107 = vunpack.c.l.b16 %v244
    %v1108 = vunpack.c.h.b16 %v244
    %v1109 = vunpack.c.l.b16 %v245
    %v1110 = vunpack.c.h.b16 %v245
    %v1111 = vunpack.c.l.b16 %v246
    %v1112 = vunpack.c.h.b16 %v246
    %v1113 = vunpack.c.l.b16 %v247
    %v1114 = vunpack.c.h.b16 %v247
    %v1115 = vunpack.c.l.b16 %v248
    %v1116 = vunpack.c.h.b16 %v248
    %v1117 = vunpack.c.l.b16 %v249
    %v1118 = vunpack.c.h.b16 %v249
    %v1119 = vunpack.c.l.b16 %v250
    %v1120 = vunpack.c.h.b16 %v250
    %v1121 = vunpack.c.l.b16 %v251
    %v1122 = vunpack.c.h.b16 %v251
    %v1123 = vunpack.c.l.b16 %v252
    %v1124 = vunpack.c.h.b16 %v252
    %v1125 = vunpack.c.l.b16 %v253
    %v1126 = vunpack.c.h.b16 %v253
    %v1127 = vunpack.c.l.b16 %v254
    %v1128 = vunpack.c.h.b16 %v254
    %v1129 = vunpack.c.l.b16 %v255
    %v1130 = vunpack.c.h.b16 %v255
    %v1131 = vunpack.c.l.b16 %v256
    %v1132 = vunpack.c.h.b16 %v256
    %v1133 = vunpack.c.l.b16 %v257
    %v1134 = vunpack.c.h.b16 %v257
    %v1135 = vunpack.c.l.b16 %v258
    %v1136 = vunpack.c.h.b16 %v258
    %v1137 = vunpack.c.l.b16 %v259
    %v1138 = vunpack.c.h.b16 %v259
    %v1139 = vunpack.c.l.b16 %v260
    %v1140 = vunpack.c.h.b16 %v260
    %v1141 = vunpack.c.l.b16 %v261
    %v1142 = vunpack.c.h.b16 %v261
    %v1143 = vunpack.c.l.b16 %v262
    %v1144 = vunpack.c.h.b16 %v262
    %v1145 = vunpack.c.l.b16 %v263
    %v1146 = vunpack.c.h.b16 %v263
    %v1147 = vunpack.c.l.b16 %v264
    %v1148 = vunpack.c.h.b16 %v264
    %v1149 = vunpack.c.l.b16 %v265
    %v1150 = vunpack.c.h.b16 %v265
    %v1151 = vunpack.c.l.b16 %v266
    %v1152 = vunpack.c.h.b16 %v266
    %v1153 = vunpack.c.l.b16 %v267
    %v1154 = vunpack.c.h.b16 %v267
    %v1155 = vunpack.c.l.b16 %v268
    %v1156 = vunpack.c.h.b16 %v268
    %v1157 = vunpack.c.l.b16 %v269
    %v1158 = vunpack.c.h.b16 %v269
    %v1159 = vunpack.c.l.b16 %v270
    %v1160 = vunpack.c.h.b16 %v270
    %v1161 = vunpack.c.l.b16 %v271
    %v1162 = vunpack.c.h.b16 %v271
    %v1163 = vunpack.c.l.b16 %v272
    %v1164 = vunpack.c.h.b16 %v272
    %v1165 = vunpack.c.l.b16 %v273
    %v1166 = vunpack.c.h.b16 %v273
    %v1167 = vunpack.c.l.b16 %v274
    %v1168 = vunpack.c.h.b16 %v274
    %v1169 = vunpack.c.l.b16 %v275
    %v1170 = vunpack.c.h.b16 %v275
    %v1171 = vunpack.c.l.b16 %v276
    %v1172 = vunpack.c.h.b16 %v276
    %v1173 = vunpack.c.l.b16 %v277
    %v1174 = vunpack.c.h.b16 %v277
    %v1175 = vunpack.c.l.b16 %v278
    %v1176 = vunpack.c.h.b16 %v278
    %v1177 = vunpack.c.l.b16 %v279
    %v1178 = vunpack.c.h.b16 %v279
    %v1179 = vunpack.c.l.b16 %v280
    %v1180 = vunpack.c.h.b16 %v280
    %v1181 = vunpack.c.l.b16 %v281
    %v1182 = vunpack.c.h.b16 %v281
    %v1183 = vunpack.c.l.b16 %v282
    %v1184 = vunpack.c.h.b16 %v282
    %v1185 = vunpack.c.l.b16 %v283
    %v1186 = vunpack.c.h.b16 %v283
    %v1187 = vunpack.c.l.b16 %v284
    %v1188 = vunpack.c.h.b16 %v284
    %v1189 = vunpack.c.l.b16 %v285
    %v1190 = vunpack.c.h.b16 %v285
    %v1191 = vunpack.c.l.b16 %v286
    %v1192 = vunpack.c.h.b16 %v286
    %v1193 = vunpack.c.l.b16 %v287
    %v1194 = vunpack.c.h.b16 %v287
    %v1195 = vunpack.c.l.b16 %v288
    %v1196 = vunpack.c.h.b16 %v288
    %v1197 = vunpack.c.l.b16 %v289
    %v1198 = vunpack.c.h.b16 %v289
    %v1199 = vunpack.c.l.b16 %v290
    %v1200 = vunpack.c.h.b16 %v290
    %v1201 = vunpack.c.l.b16 %v291
    %v1202 = vunpack.c.h.b16 %v291
    %v1203 = vunpack.c.l.b16 %v292
    %v1204 = vunpack.c.h.b16 %v292
    %v1205 = vunpack.c.l.b16 %v293
    %v1206 = vunpack.c.h.b16 %v293
    %v1207 = vunpack.c.l.b16 %v294
    %v1208 = vunpack.c.h.b16 %v294
    %v1209 = vunpack.c.l.b16 %v295
    %v1210 = vunpack.c.h.b16 %v295
    %v1211 = vunpack.c.l.b16 %v296
    %v1212 = vunpack.c.h.b16 %v296
    %v1213 = vunpack.c.l.b16 %v297
    %v1214 = vunpack.c.h.b16 %v297
    %v1215 = vunpack.c.l.b16 %v298
    %v1216 = vunpack.c.h.b16 %v298
    %v1217 = vunpack.c.l.b16 %v299
    %v1218 = vunpack.c.h.b16 %v299
    %v1219 = vunpack.c.l.b16 %v300
    %v1220 = vunpack.c.h.b16 %v300
    %v1221 = vunpack.c.l.b16 %v301
    %v1222 = vunpack.c.h.b16 %v301
    %v1223 = vunpack.c.l.b16 %v302
    %v1224 = vunpack.c.h.b16 %v302
    %v1225 = vunpack.c.l.b16 %v303
    %v1226 = vunpack.c.h.b16 %v303
    %v1227 = vunpack.c.l.b16 %v304
    %v1228 = vunpack.c.h.b16 %v304
    %v1229 = vunpack.c.l.b16 %v305
    %v1230 = vunpack.c.h.b16 %v305
    %v1231 = vunpack.c.l.b16 %v306
    %v1232 = vunpack.c.h.b16 %v306
    %v1233 = vunpack.c.l.b16 %v307
    %v1234 = vunpack.c.h.b16 %v307
    %v1235 = vunpack.c.l.b16 %v308
    %v1236 = vunpack.c.h.b16 %v308
    %v1237 = vunpack.c.l.b16 %v309
    %v1238 = vunpack.c.h.b16 %v309
    %v1239 = vunpack.c.l.b16 %v310
    %v1240 = vunpack.c.h.b16 %v310
    %v1241 = vunpack.c.l.b16 %v311
    %v1242 = vunpack.c.h.b16 %v311
    %v1243 = vunpack.c.l.b16 %v312
    %v1244 = vunpack.c.h.b16 %v312
    %v1245 = vunpack.c.l.b16 %v313
    %v1246 = vunpack.c.h.b16 %v313
    %v1247 = vunpack.c.l.b16 %v314
    %v1248 = vunpack.c.h.b16 %v314
    %v1249 = vunpack.c.l.b16 %v315
    %v1250 = vunpack.c.h.b16 %v315
    %v1251 = vunpack.c.l.b16 %v316
    %v1252 = vunpack.c.h.b16 %v316
    %v1253 = vunpack.c.l.b16 %v317
    %v1254 = vunpack.c.h.b16 %v317
    %v1255 = vunpack.c.l.b16 %v318
    %v1256 = vunpack.c.h.b16 %v318
    %v1257 = vunpack.c.l.b16 %v319
    %v1258 = vunpack.c.h.b16 %v319
    %v1259 = vunpack.c.l.b16 %v320
    %v1260 = vunpack.c.h.b16 %v320
    %v1261 = vunpack.c.l.b16 %v321
    %v1262 = vunpack.c.h.b16 %v321
    %v1263 = vunpack.c.l.b16 %v322
    %v1264 = vunpack.c.h.b16 %v322
    %v1265 = vunpack.c.l.b16 %v323
    %v1266 = vunpack.c.h.b16 %v323
    %v1267 = vunpack.c.l.b16 %v324
    %v1268 = vunpack.c.h.b16 %v324
    %v1269 = vunpack.c.l.b16 %v325
    %v1270 = vunpack.c.h.b16 %v325
    %v1271 = vunpack.c.l.b16 %v326
    %v1272 = vunpack.c.h.b16 %v326
    %v1273 = vunpack.c.l.b16 %v327
    %v1274 = vunpack.c.h.b16 %v327
    %v1275 = vunpack.c.l.b16 %v328
    %v1276 = vunpack.c.h.b16 %v328
    %v1277 = vunpack.c.l.b16 %v329
    %v1278 = vunpack.c.h.b16 %v329
    %v1279 = vunpack.c.l.b16 %v330
    %v1280 = vunpack.c.h.b16 %v330
    %v1281 = vunpack.c.l.b16 %v331
    %v1282 = vunpack.c.h.b16 %v331
    %v1283 = vunpack.c.l.b16 %v332
    %v1284 = vunpack.c.h.b16 %v332
    %v1285 = vunpack.c.l.b16 %v333
    %v1286 = vunpack.c.h.b16 %v333
    %v1287 = vunpack.c.l.b16 %v334
    %v1288 = vunpack.c.h.b16 %v334
    %v1289 = vunpack.c.l.b16 %v335
    %v1290 = vunpack.c.h.b16 %v335
    %v1291 = vunpack.c.l.b16 %v336
    %v1292 = vunpack.c.h.b16 %v336
    %v1293 = vunpack.c.l.b16 %v337
    %v1294 = vunpack.c.h.b16 %v337
    %v1295 = vunpack.c.l.b16 %v338
    %v1296 = vunpack.c.h.b16 %v338
    %v1297 = vunpack.c.l.b16 %v339
    %v1298 = vunpack.c.h.b16 %v339
    %v1299 = vunpack.c.l.b16 %v340
    %v1300 = vunpack.c.h.b16 %v340
    %v1301 = vunpack.c.l.b16 %v341
    %v1302 = vunpack.c.h.b16 %v341
    %v1303 = vunpack.c.l.b16 %v342
    %v1304 = vunpack.c.h.b16 %v342
    %v1305 = vunpack.c.l.b16 %v343
    %v1306 = vunpack.c.h.b16 %v343
    %v1307 = vunpack.c.l.b16 %v344
    %v1308 = vunpack.c.h.b16 %v344
    %v1309 = vunpack.c.l.b16 %v345
    %v1310 = vunpack.c.h.b16 %v345
    %v1311 = vunpack.c.l.b16 %v346
    %v1312 = vunpack.c.h.b16 %v346
    %v1313 = vunpack.c.l.b16 %v347
    %v1314 = vunpack.c.h.b16 %v347
    %v1315 = vunpack.c.l.b16 %v348
    %v1316 = vunpack.c.h.b16 %v348
    %v1317 = vunpack.c.l.b16 %v349
    %v1318 = vunpack.c.h.b16 %v349
    %v1319 = vunpack.c.l.b16 %v350
    %v1320 = vunpack.c.h.b16 %v350
    %v1321 = vunpack.c.l.b16 %v351
    %v1322 = vunpack.c.h.b16 %v351
    %v1323 = vunpack.c.l.b16 %v352
    %v1324 = vunpack.c.h.b16 %v352
    %v1325 = vunpack.c.l.b16 %v353
    %v1326 = vunpack.c.h.b16 %v353
    %v1327 = vunpack.c.l.b16 %v354
    %v1328 = vunpack.c.h.b16 %v354
    %v1329 = vunpack.c.l.b16 %v355
    %v1330 = vunpack.c.h.b16 %v355
    %v1331 = vunpack.c.l.b16 %v356
    %v1332 = vunpack.c.h.b16 %v356
    %v1333 = vunpack.c.l.b16 %v357
    %v1334 = vunpack.c.h.b16 %v357
    %v1335 = vunpack.c.l.b16 %v358
    %v1336 = vunpack.c.h.b16 %v358
    %v1337 = vunpack.c.l.b16 %v359
    %v1338 = vunpack.c.h.b16 %v359
    %v1339 = vunpack.c.l.b16 %v360
    %v1340 = vunpack.c.h.b16 %v360
    %v1341 = vunpack.c.l.b16 %v361
    %v1342 = vunpack.c.h.b16 %v361
    %v1343 = vunpack.c.l.b16 %v362
    %v1344 = vunpack.c.h.b16 %v362
    %v1345 = vunpack.c.l.b16 %v363
    %v1346 = vunpack.c.h.b16 %v363
    %v1347 = vunpack.c.l.b16 %v364
    %v1348 = vunpack.c.h.b16 %v364
    %v1349 = vunpack.c.l.b16 %v365
    %v1350 = vunpack.c.h.b16 %v365
    %v1351 = vunpack.c.l.b16 %v366
    %v1352 = vunpack.c.h.b16 %v366
    %v1353 = vunpack.c.l.b16 %v367
    %v1354 = vunpack.c.h.b16 %v367
    %v1355 = vunpack.c.l.b16 %v368
    %v1356 = vunpack.c.h.b16 %v368
    %v1357 = vunpack.c.l.b16 %v369
    %v1358 = vunpack.c.h.b16 %v369
    %v1359 = vunpack.c.l.b16 %v370
    %v1360 = vunpack.c.h.b16 %v370
    %v1361 = vunpack.c.l.b16 %v371
    %v1362 = vunpack.c.h.b16 %v371
    %v1363 = vunpack.c.l.b16 %v372
    %v1364 = vunpack.c.h.b16 %v372
    %v1365 = vunpack.c.l.b16 %v373
    %v1366 = vunpack.c.h.b16 %v373
    %v1367 = vunpack.c.l.b16 %v374
    %v1368 = vunpack.c.h.b16 %v374
    %v1369 = vunpack.c.l.b16 %v375
    %v1370 = vunpack.c.h.b16 %v375
    %v1371 = vunpack.c.l.b16 %v376
    %v1372 = vunpack.c.h.b16 %v376
    %v1373 = vunpack.c.l.b16 %v377
    %v1374 = vunpack.c.h.b16 %v377
    %v1375 = vunpack.c.l.b16 %v378
    %v1376 = vunpack.c.h.b16 %v378
    %v1377 = vunpack.c.l.b16 %v379
    %v1378 = vunpack.c.h.b16 %v379
    %v1379 = vunpack.c.l.b16 %v380
    %v1380 = vunpack.c.h.b16 %v380
    %v1381 = vunpack.c.l.b16 %v381
    %v1382 = vunpack.c.h.b16 %v381
    %v1383 = vunpack.c.l.b16 %v382
    %v1384 = vunpack.c.h.b16 %v382
    %v1385 = vunpack.c.l.b16 %v383
    %v1386 = vunpack.c.h.b16 %v383
    %v1387 = vunpack.c.l.b16 %v384
    %v1388 = vunpack.c.h.b16 %v384
    %v1389 = vunpack.c.l.b16 %v385
    %v1390 = vunpack.c.h.b16 %v385
    %v1391 = vunpack.c.l.b16 %v386
    %v1392 = vunpack.c.h.b16 %v386
    %v1393 = vunpack.c.l.b16 %v387
    %v1394 = vunpack.c.h.b16 %v387
    %v1395 = vunpack.c.l.b16 %v388
    %v1396 = vunpack.c.h.b16 %v388
    %v1397 = vunpack.c.l.b16 %v389
    %v1398 = vunpack.c.h.b16 %v389
    %v1399 = vunpack.c.l.b16 %v390
    %v1400 = vunpack.c.h.b16 %v390
    %v1401 = vunpack.c.l.b16 %v391
    %v1402 = vunpack.c.h.b16 %v391
    %v1403 = vunpack.c.l.b16 %v392
    %v1404 = vunpack.c.h.b16 %v392
    %v1405 = vunpack.c.l.b16 %v393
    %v1406 = vunpack.c.h.b16 %v393
    %v1407 = vunpack.c.l.b16 %v394
    %v1408 = vunpack.c.h.b16 %v394
    %v1409 = vunpack.c.l.b16 %v395
    %v1410 = vunpack.c.h.b16 %v395
    %v1411 = vunpack.c.l.b16 %v396
    %v1412 = vunpack.c.h.b16 %v396
    %v1413 = vunpack.c.l.b16 %v397
    %v1414 = vunpack.c.h.b16 %v397
    %v1415 = vunpack.c.l.b16 %v398
    %v1416 = vunpack.c.h.b16 %v398
    %v1417 = vunpack.c.l.b16 %v399
    %v1418 = vunpack.c.h.b16 %v399
    %v1419 = vunpack.c.l.b16 %v400
    %v1420 = vunpack.c.h.b16 %v400
    %v1421 = vunpack.c.l.b16 %v401
    %v1422 = vunpack.c.h.b16 %v401
    %v1423 = vunpack.c.l.b16 %v402
    %v1424 = vunpack.c.h.b16 %v402
    %v1425 = vunpack.c.l.b16 %v403
    %v1426 = vunpack.c.h.b16 %v403
    %v1427 = vunpack.c.l.b16 %v404
    %v1428 = vunpack.c.h.b16 %v404
    %v1429 = vunpack.c.l.b16 %v405
    %v1430 = vunpack.c.h.b16 %v405
    %v1431 = vunpack.c.l.b16 %v406
    %v1432 = vunpack.c.h.b16 %v406
    %v1433 = vunpack.c.l.b16 %v407
    %v1434 = vunpack.c.h.b16 %v407
    %v1435 = vunpack.c.l.b16 %v408
    %v1436 = vunpack.c.h.b16 %v408
    %v1437 = vunpack.c.l.b16 %v409
    %v1438 = vunpack.c.h.b16 %v409
    %v1439 = vunpack.c.l.b16 %v410
    %v1440 = vunpack.c.h.b16 %v410
    %v1441 = vunpack.c.l.b16 %v411
    %v1442 = vunpack.c.h.b16 %v411
    %v1443 = vunpack.c.l.b16 %v412
    %v1444 = vunpack.c.h.b16 %v412
    %v1445 = vunpack.c.l.b16 %v413
    %v1446 = vunpack.c.h.b16 %v413
    %v1447 = vunpack.c.l.b16 %v414
    %v1448 = vunpack.c.h.b16 %v414
    %v1449 = vunpack.c.l.b16 %v415
    %v1450 = vunpack.c.h.b16 %v415
    %v1451 = vunpack.c.l.b16 %v416
    %v1452 = vunpack.c.h.b16 %v416
    %v1453 = vunpack.c.l.b16 %v417
    %v1454 = vunpack.c.h.b16 %v417
    %v1455 = vunpack.c.l.b16 %v418
    %v1456 = vunpack.c.h.b16 %v418
    %v1457 = vunpack.c.l.b16 %v419
    %v1458 = vunpack.c.h.b16 %v419
    %v1459 = vunpack.c.l.b16 %v420
    %v1460 = vunpack.c.h.b16 %v420
    %v1461 = vunpack.c.l.b16 %v421
    %v1462 = vunpack.c.h.b16 %v421
    %v1463 = vunpack.c.l.b16 %v422
    %v1464 = vunpack.c.h.b16 %v422
    %v1465 = vunpack.c.l.b16 %v423
    %v1466 = vunpack.c.h.b16 %v423
    %v1467 = vunpack.c.l.b16 %v424
    %v1468 = vunpack.c.h.b16 %v424
    %v1469 = vunpack.c.l.b16 %v425
    %v1470 = vunpack.c.h.b16 %v425
    %v1471 = vunpack.c.l.b16 %v426
    %v1472 = vunpack.c.h.b16 %v426
    %v1473 = vunpack.c.l.b16 %v427
    %v1474 = vunpack.c.h.b16 %v427
    %v1475 = vunpack.c.l.b16 %v428
    %v1476 = vunpack.c.h.b16 %v428
    %v1477 = vunpack.c.l.b16 %v429
    %v1478 = vunpack.c.h.b16 %v429
    %v1479 = vunpack.c.l.b16 %v430
    %v1480 = vunpack.c.h.b16 %v430
    %v1481 = vunpack.c.l.b16 %v431
    %v1482 = vunpack.c.h.b16 %v431
    %v1483 = vunpack.c.l.b16 %v432
    %v1484 = vunpack.c.h.b16 %v432
    %v1485 = vunpack.c.l.b16 %v433
    %v1486 = vunpack.c.h.b16 %v433
    %v1487 = vunpack.c.l.b16 %v434
    %v1488 = vunpack.c.h.b16 %v434
    %v1489 = vunpack.c.l.b16 %v435
    %v1490 = vunpack.c.h.b16 %v435
    %v1491 = vunpack.c.l.b16 %v436
    %v1492 = vunpack.c.h.b16 %v436
    %v1493 = vunpack.c.l.b16 %v437
    %v1494 = vunpack.c.h.b16 %v437
    %v1495 = vunpack.c.l.b16 %v438
    %v1496 = vunpack.c.h.b16 %v438
    %v1497 = vunpack.c.l.b16 %v439
    %v1498 = vunpack.c.h.b16 %v439
    %v1499 = vunpack.c.l.b16 %v440
    %v1500 = vunpack.c.h.b16 %v440
    %v1501 = vunpack.c.l.b16 %v441
    %v1502 = vunpack.c.h.b16 %v441
    %v1503 = vunpack.c.l.b16 %v442
    %v1504 = vunpack.c.h.b16 %v442
    %v1505 = vunpack.c.l.b16 %v443
    %v1506 = vunpack.c.h.b16 %v443
    %v1507 = vunpack.c.l.b16 %v444
    %v1508 = vunpack.c.h.b16 %v444
    %v1509 = vunpack.c.l.b16 %v445
    %v1510 = vunpack.c.h.b16 %v445
    %v1511 = vunpack.c.l.b16 %v446
    %v1512 = vunpack.c.h.b16 %v446
    %v1513 = vunpack.c.l.b16 %v447
    %v1514 = vunpack.c.h.b16 %v447
    %v1515 = vunpack.c.l.b16 %v448
    %v1516 = vunpack.c.h.b16 %v448
    %v1517 = vunpack.c.l.b16 %v449
    %v1518 = vunpack.c.h.b16 %v449
    %v1519 = vunpack.c.l.b16 %v450
    %v1520 = vunpack.c.h.b16 %v450
    %v1521 = vunpack.c.l.b16 %v451
    %v1522 = vunpack.c.h.b16 %v451
    %v1523 = vunpack.c.l.b16 %v452
    %v1524 = vunpack.c.h.b16 %v452
    %v1525 = vunpack.c.l.b16 %v453
    %v1526 = vunpack.c.h.b16 %v453
    %v1527 = vunpack.c.l.b16 %v454
    %v1528 = vunpack.c.h.b16 %v454
    %v1529 = vunpack.c.l.b16 %v455
    %v1530 = vunpack.c.h.b16 %v455
    %v1531 = vunpack.c.l.b16 %v456
    %v1532 = vunpack.c.h.b16 %v456
    %v1533 = vunpack.c.l.b16 %v457
    %v1534 = vunpack.c.h.b16 %v457
    %v1535 = vunpack.c.l.b16 %v458
    %v1536 = vunpack.c.h.b16 %v458
    %v1537 = vunpack.c.l.b16 %v459
    %v1538 = vunpack.c.h.b16 %v459
    %v1539 = vunpack.c.l.b16 %v460
    %v1540 = vunpack.c.h.b16 %v460
    %v1541 = vunpack.c.l.b16 %v461
    %v1542 = vunpack.c.h.b16 %v461
    %v1543 = vunpack.c.l.b16 %v462
    %v1544 = vunpack.c.h.b16 %v462
    %v1545 = vpack.c.b16 %v875, %v873
    %v1546 = vpack.c.b16 %v876, %v874
    %v1547 = vpack.c.b16 %v879, %v877
    %v1548 = vpack.c.b16 %v880, %v878
    %v1549 = vpack.c.b16 %v883, %v881
    %v1550 = vpack.c.b16 %v884, %v882
    %v1551 = vpack.c.b16 %v887, %v885
    %v1552 = vpack.c.b16 %v888, %v886
    %v1553 = vpack.c.b16 %v891, %v889
    %v1554 = vpack.c.b16 %v892, %v890
    %v1555 = vpack.c.b16 %v895, %v893
    %v1556 = vpack.c.b16 %v896, %v894
    %v1557 = vpack.c.b16 %v899, %v897
    %v1558 = vpack.c.b16 %v900, %v898
    %v1559 = vpack.c.b16 %v903, %v901
    %v1560 = vpack.c.b16 %v904, %v902
    %v1561 = vpack.c.b16 %v907, %v905
    %v1562 = vpack.c.b16 %v908, %v906
    %v1563 = vpack.c.b16 %v911, %v909
    %v1564 = vpack.c.b16 %v912, %v910
    %v1565 = vpack.c.b16 %v915, %v913
    %v1566 = vpack.c.b16 %v916, %v914
    %v1567 = vpack.c.b16 %v919, %v917
    %v1568 = vpack.c.b16 %v920, %v918
    %v1569 = vpack.c.b16 %v923, %v921
    %v1570 = vpack.c.b16 %v924, %v922
    %v1571 = vpack.c.b16 %v927, %v925
    %v1572 = vpack.c.b16 %v928, %v926
    %v1573 = vpack.c.b16 %v931, %v929
    %v1574 = vpack.c.b16 %v932, %v930
    %v1575 = vpack.c.b16 %v935, %v933
    %v1576 = vpack.c.b16 %v936, %v934
    %v1577 = vpack.c.b16 %v939, %v937
    %v1578 = vpack.c.b16 %v940, %v938
    %v1579 = vpack.c.b16 %v943, %v941
    %v1580 = vpack.c.b16 %v944, %v942
    %v1581 = vpack.c.b16 %v947, %v945
    %v1582 = vpack.c.b16 %v948, %v946
    %v1583 = vpack.c.b16 %v951, %v949
    %v1584 = vpack.c.b16 %v952, %v950
    %v1585 = vpack.c.b16 %v955, %v953
    %v1586 = vpack.c.b16 %v956, %v954
    %v1587 = vpack.c.b16 %v959, %v957
    %v1588 = vpack.c.b16 %v960, %v958
    %v1589 = vpack.c.b16 %v963, %v961
    %v1590 = vpack.c.b16 %v964, %v962
    %v1591 = vpack.c.b16 %v967, %v965
    %v1592 = vpack.c.b16 %v968, %v966
    %v1593 = vpack.c.b16 %v971, %v969
    %v1594 = vpack.c.b16 %v972, %v970
    %v1595 = vpack.c.b16 %v975, %v973
    %v1596 = vpack.c.b16 %v976, %v974
    %v1597 = vpack.c.b16 %v979, %v977
    %v1598 = vpack.c.b16 %v980, %v978
    %v1599 = vpack.c.b16 %v983, %v981
    %v1600 = vpack.c.b16 %v984, %v982
    %v1601 = vpack.c.b16 %v987, %v985
    %v1602 = vpack.c.b16 %v988, %v986
    %v1603 = vpack.c.b16 %v991, %v989
    %v1604 = vpack.c.b16 %v992, %v990
    %v1605 = vpack.c.b16 %v995, %v993
    %v1606 = vpack.c.b16 %v996, %v994
    %v1607 = vpack.c.b16 %v999, %v997
    %v1608 = vpack.c.b16 %v1000, %v998
    %v1609 = vpack.c.b16 %v1003, %v1001
    %v1610 = vpack.c.b16 %v1004, %v1002
    %v1611 = vpack.c.b16 %v1007, %v1005
    %v1612 = vpack.c.b16 %v1008, %v1006
    %v1613 = vpack.c.b16 %v1011, %v1009
    %v1614 = vpack.c.b16 %v1012, %v1010
    %v1615 = vpack.c.b16 %v1015, %v1013
    %v1616 = vpack.c.b16 %v1016, %v1014
    %v1617 = vpack.c.b16 %v1019, %v1017
    %v1618 = vpack.c.b16 %v1020, %v1018
    %v1619 = vpack.c.b16 %v1023, %v1021
    %v1620 = vpack.c.b16 %v1024, %v1022
    %v1621 = vpack.c.b16 %v1027, %v1025
    %v1622 = vpack.c.b16 %v1028, %v1026
    %v1623 = vpack.c.b16 %v1031, %v1029
    %v1624 = vpack.c.b16 %v1032, %v1030
    %v1625 = vpack.c.b16 %v1035, %v1033
    %v1626 = vpack.c.b16 %v1036, %v1034
    %v1627 = vpack.c.b16 %v1039, %v1037
    %v1628 = vpack.c.b16 %v1040, %v1038
    %v1629 = vpack.c.b16 %v1043, %v1041
    %v1630 = vpack.c.b16 %v1044, %v1042
    %v1631 = vpack.c.b16 %v1047, %v1045
    %v1632 = vpack.c.b16 %v1048, %v1046
    %v1633 = vpack.c.b16 %v1051, %v1049
    %v1634 = vpack.c.b16 %v1052, %v1050
    %v1635 = vpack.c.b16 %v1055, %v1053
    %v1636 = vpack.c.b16 %v1056, %v1054
    %v1637 = vpack.c.b16 %v1059, %v1057
    %v1638 = vpack.c.b16 %v1060, %v1058
    %v1639 = vpack.c.b16 %v1063, %v1061
    %v1640 = vpack.c.b16 %v1064, %v1062
    %v1641 = vpack.c.b16 %v1067, %v1065
    %v1642 = vpack.c.b16 %v1068, %v1066
    %v1643 = vpack.c.b16 %v1071, %v1069
    %v1644 = vpack.c.b16 %v1072, %v1070
    %v1645 = vpack.c.b16 %v1075, %v1073
    %v1646 = vpack.c.b16 %v1076, %v1074
    %v1647 = vpack.c.b16 %v1079, %v1077
    %v1648 = vpack.c.b16 %v1080, %v1078
    %v1649 = vpack.c.b16 %v1083, %v1081
    %v1650 = vpack.c.b16 %v1084, %v1082
    %v1651 = vpack.c.b16 %v1087, %v1085
    %v1652 = vpack.c.b16 %v1088, %v1086
    %v1653 = vpack.c.b16 %v1091, %v1089
    %v1654 = vpack.c.b16 %v1092, %v1090
    %v1655 = vpack.c.b16 %v1095, %v1093
    %v1656 = vpack.c.b16 %v1096, %v1094
    %v1657 = vpack.c.b16 %v1099, %v1097
    %v1658 = vpack.c.b16 %v1100, %v1098
    %v1659 = vpack.c.b16 %v1103, %v1101
    %v1660 = vpack.c.b16 %v1104, %v1102
    %v1661 = vpack.c.b16 %v1107, %v1105
    %v1662 = vpack.c.b16 %v1108, %v1106
    %v1663 = vpack.c.b16 %v1111, %v1109
    %v1664 = vpack.c.b16 %v1112, %v1110
    %v1665 = vpack.c.b16 %v1115, %v1113
    %v1666 = vpack.c.b16 %v1116, %v1114
    %v1667 = vpack.c.b16 %v1119, %v1117
    %v1668 = vpack.c.b16 %v1120, %v1118
    %v1669 = vpack.c.b16 %v1123, %v1121
    %v1670 = vpack.c.b16 %v1124, %v1122
    %v1671 = vpack.c.b16 %v1127, %v1125
    %v1672 = vpack.c.b16 %v1128, %v1126
    %v1673 = vpack.c.b16 %v1131, %v1129
    %v1674 = vpack.c.b16 %v1132, %v1130
    %v1675 = vpack.c.b16 %v1135, %v1133
    %v1676 = vpack.c.b16 %v1136, %v1134
    %v1677 = vpack.c.b16 %v1139, %v1137
    %v1678 = vpack.c.b16 %v1140, %v1138
    %v1679 = vpack.c.b16 %v1143, %v1141
    %v1680 = vpack.c.b16 %v1144, %v1142
    %v1681 = vpack.c.b16 %v1147, %v1145
    %v1682 = vpack.c.b16 %v1148, %v1146
    %v1683 = vpack.c.b16 %v1151, %v1149
    %v1684 = vpack.c.b16 %v1152, %v1150
    %v1685 = vpack.c.b16 %v1155, %v1153
    %v1686 = vpack.c.b16 %v1156, %v1154
    %v1687 = vpack.c.b16 %v1159, %v1157
    %v1688 = vpack.c.b16 %v1160, %v1158
    %v1689 = vpack.c.b16 %v1163, %v1161
    %v1690 = vpack.c.b16 %v1164, %v1162
    %v1691 = vpack.c.b16 %v1167, %v1165
    %v1692 = vpack.c.b16 %v1168, %v1166
    %v1693 = vpack.c.b16 %v1171, %v1169
    %v1694 = vpack.c.b16 %v1172, %v1170
    %v1695 = vpack.c.b16 %v1175, %v1173
    %v1696 = vpack.c.b16 %v1176, %v1174
    %v1697 = vpack.c.b16 %v1179, %v1177
    %v1698 = vpack.c.b16 %v1180, %v1178
    %v1699 = vpack.c.b16 %v1183, %v1181
    %v1700 = vpack.c.b16 %v1184, %v1182
    %v1701 = vpack.c.b16 %v1187, %v1185
    %v1702 = vpack.c.b16 %v1188, %v1186
    %v1703 = vpack.c.b16 %v1191, %v1189
    %v1704 = vpack.c.b16 %v1192, %v1190
    %v1705 = vpack.c.b16 %v1195, %v1193
    %v1706 = vpack.c.b16 %v1196, %v1194
    %v1707 = vpack.c.b16 %v1199, %v1197
    %v1708 = vpack.c.b16 %v1200, %v1198
    %v1709 = vpack.c.b16 %v1203, %v1201
    %v1710 = vpack.c.b16 %v1204, %v1202
    %v1711 = vpack.c.b16 %v1207, %v1205
    %v1712 = vpack.c.b16 %v1208, %v1206
    %v1713 = vpack.c.b16 %v1211, %v1209
    %v1714 = vpack.c.b16 %v1212, %v1210
    %v1715 = vpack.c.b16 %v1215, %v1213
    %v1716 = vpack.c.b16 %v1216, %v1214
    %v1717 = vpack.c.b16 %v1219, %v1217
    %v1718 = vpack.c.b16 %v1220, %v1218
    %v1719 = vpack.c.b16 %v1223, %v1221
    %v1720 = vpack.c.b16 %v1224, %v1222
    %v1721 = vpack.c.b16 %v1227, %v1225
    %v1722 = vpack.c.b16 %v1228, %v1226
    %v1723 = vpack.c.b16 %v1231, %v1229
    %v1724 = vpack.c.b16 %v1232, %v1230
    %v1725 = vpack.c.b16 %v1235, %v1233
    %v1726 = vpack.c.b16 %v1236, %v1234
    %v1727 = vpack.c.b16 %v1239, %v1237
    %v1728 = vpack.c.b16 %v1240, %v1238
    %v1729 = vpack.c.b16 %v1243, %v1241
    %v1730 = vpack.c.b16 %v1244, %v1242
    %v1731 = vpack.c.b16 %v1247, %v1245
    %v1732 = vpack.c.b16 %v1248, %v1246
    %v1733 = vpack.c.b16 %v1251, %v1249
    %v1734 = vpack.c.b16 %v1252, %v1250
    %v1735 = vpack.c.b16 %v1255, %v1253
    %v1736 = vpack.c.b16 %v1256, %v1254
    %v1737 = vpack.c.b16 %v1259, %v1257
    %v1738 = vpack.c.b16 %v1260, %v1258
    %v1739 = vpack.c.b16 %v1263, %v1261
    %v1740 = vpack.c.b16 %v1264, %v1262
    %v1741 = vpack.c.b16 %v1267, %v1265
    %v1742 = vpack.c.b16 %v1268, %v1266
    %v1743 = vpack.c.b16 %v1271, %v1269
    %v1744 = vpack.c.b16 %v1272, %v1270
    %v1745 = vpack.c.b16 %v1275, %v1273
    %v1746 = vpack.c.b16 %v1276, %v1274
    %v1747 = vpack.c.b16 %v1279, %v1277
    %v1748 = vpack.c.b16 %v1280, %v1278
    %v1749 = vpack.c.b16 %v1283, %v1281
    %v1750 = vpack.c.b16 %v1284, %v1282
    %v1751 = vpack.c.b16 %v1287, %v1285
    %v1752 = vpack.c.b16 %v1288, %v1286
    %v1753 = vpack.c.b16 %v1291, %v1289
    %v1754 = vpack.c.b16 %v1292, %v1290
    %v1755 = vpack.c.b16 %v1295, %v1293
    %v1756 = vpack.c.b16 %v1296, %v1294
    %v1757 = vpack.c.b16 %v1299, %v1297
    %v1758 = vpack.c.b16 %v1300, %v1298
    %v1759 = vpack.c.b16 %v1303, %v1301
    %v1760 = vpack.c.b16 %v1304, %v1302
    %v1761 = vpack.c.b16 %v1307, %v1305
    %v1762 = vpack.c.b16 %v1308, %v1306
    %v1763 = vpack.c.b16 %v1311, %v1309
    %v1764 = vpack.c.b16 %v1312, %v1310
    %v1765 = vpack.c.b16 %v1315, %v1313
    %v1766 = vpack.c.b16 %v1316, %v1314
    %v1767 = vpack.c.b16 %v1319, %v1317
    %v1768 = vpack.c.b16 %v1320, %v1318
    %v1769 = vpack.c.b16 %v1323, %v1321
    %v1770 = vpack.c.b16 %v1324, %v1322
    %v1771 = vpack.c.b16 %v1327, %v1325
    %v1772 = vpack.c.b16 %v1328, %v1326
    %v1773 = vpack.c.b16 %v1331, %v1329
    %v1774 = vpack.c.b16 %v1332, %v1330
    %v1775 = vpack.c.b16 %v1335, %v1333
    %v1776 = vpack.c.b16 %v1336, %v1334
    %v1777 = vpack.c.b16 %v1339, %v1337
    %v1778 = vpack.c.b16 %v1340, %v1338
    %v1779 = vpack.c.b16 %v1343, %v1341
    %v1780 = vpack.c.b16 %v1344, %v1342
    %v1781 = vpack.c.b16 %v1347, %v1345
    %v1782 = vpack.c.b16 %v1348, %v1346
    %v1783 = vpack.c.b16 %v1351, %v1349
    %v1784 = vpack.c.b16 %v1352, %v1350
    %v1785 = vpack.c.b16 %v1355, %v1353
    %v1786 = vpack.c.b16 %v1356, %v1354
    %v1787 = vpack.c.b16 %v1359, %v1357
    %v1788 = vpack.c.b16 %v1360, %v1358
    %v1789 = vpack.c.b16 %v1363, %v1361
    %v1790 = vpack.c.b16 %v1364, %v1362
    %v1791 = vpack.c.b16 %v1367, %v1365
    %v1792 = vpack.c.b16 %v1368, %v1366
    %v1793 = vpack.c.b16 %v1371, %v1369
    %v1794 = vpack.c.b16 %v1372, %v1370
    %v1795 = vpack.c.b16 %v1375, %v1373
    %v1796 = vpack.c.b16 %v1376, %v1374
    %v1797 = vpack.c.b16 %v1379, %v1377
    %v1798 = vpack.c.b16 %v1380, %v1378
    %v1799 = vpack.c.b16 %v1383, %v1381
    %v1800 = vpack.c.b16 %v1384, %v1382
    %v1801 = vpack.c.b16 %v1387, %v1385
    %v1802 = vpack.c.b16 %v1388, %v1386
    %v1803 = vpack.c.b16 %v1391, %v1389
    %v1804 = vpack.c.b16 %v1392, %v1390
    %v1805 = vpack.c.b16 %v1395, %v1393
    %v1806 = vpack.c.b16 %v1396, %v1394
    %v1807 = vpack.c.b16 %v1399, %v1397
    %v1808 = vpack.c.b16 %v1400, %v1398
    %v1809 = vpack.c.b16 %v1403, %v1401
    %v1810 = vpack.c.b16 %v1404, %v1402
    %v1811 = vpack.c.b16 %v1407, %v1405
    %v1812 = vpack.c.b16 %v1408, %v1406
    %v1813 = vpack.c.b16 %v1411, %v1409
    %v1814 = vpack.c.b16 %v1412, %v1410
    %v1815 = vpack.c.b16 %v1415, %v1413
    %v1816 = vpack.c.b16 %v1416, %v1414
    %v1817 = vpack.c.b16 %v1419, %v1417
    %v1818 = vpack.c.b16 %v1420, %v1418
    %v1819 = vpack.c.b16 %v1423, %v1421
    %v1820 = vpack.c.b16 %v1424, %v1422
    %v1821 = vpack.c.b16 %v1427, %v1425
    %v1822 = vpack.c.b16 %v1428, %v1426
    %v1823 = vpack.c.b16 %v1431, %v1429
    %v1824 = vpack.c.b16 %v1432, %v1430
    %v1825 = vpack.c.b16 %v1435, %v1433
    %v1826 = vpack.c.b16 %v1436, %v1434
    %v1827 = vpack.c.b16 %v1439, %v1437
    %v1828 = vpack.c.b16 %v1440, %v1438
    %v1829 = vpack.c.b16 %v1443, %v1441
    %v1830 = vpack.c.b16 %v1444, %v1442
    %v1831 = vpack.c.b16 %v1447, %v1445
    %v1832 = vpack.c.b16 %v1448, %v1446
    %v1833 = vpack.c.b16 %v1451, %v1449
    %v1834 = vpack.c.b16 %v1452, %v1450
    %v1835 = vpack.c.b16 %v1455, %v1453
    %v1836 = vpack.c.b16 %v1456, %v1454
    %v1837 = vpack.c.b16 %v1459, %v1457
    %v1838 = vpack.c.b16 %v1460, %v1458
    %v1839 = vpack.c.b16 %v1463, %v1461
    %v1840 = vpack.c.b16 %v1464, %v1462
    %v1841 = vpack.c.b16 %v1467, %v1465
    %v1842 = vpack.c.b16 %v1468, %v1466
    %v1843 = vpack.c.b16 %v1471, %v1469
    %v1844 = vpack.c.b16 %v1472, %v1470
    %v1845 = vpack.c.b16 %v1475, %v1473
    %v1846 = vpack.c.b16 %v1476, %v1474
    %v1847 = vpack.c.b16 %v1479, %v1477
    %v1848 = vpack.c.b16 %v1480, %v1478
    %v1849 = vpack.c.b16 %v1483, %v1481
    %v1850 = vpack.c.b16 %v1484, %v1482
    %v1851 = vpack.c.b16 %v1487, %v1485
    %v1852 = vpack.c.b16 %v1488, %v1486
    %v1853 = vpack.c.b16 %v1491, %v1489
    %v1854 = vpack.c.b16 %v1492, %v1490
    %v1855 = vpack.c.b16 %v1495, %v1493
    %v1856 = vpack.c.b16 %v1496, %v1494
    %v1857 = vpack.c.b16 %v1499, %v1497
    %v1858 = vpack.c.b16 %v1500, %v1498
    %v1859 = vpack.c.b16 %v1503, %v1501
    %v1860 = vpack.c.b16 %v1504, %v1502
    %v1861 = vpack.c.b16 %v1507, %v1505
    %v1862 = vpack.c.b16 %v1508, %v1506
    %v1863 = vpack.c.b16 %v1511, %v1509
    %v1864 = vpack.c.b16 %v1512, %v1510
    %v1865 = vpack.c.b16 %v1515, %v1513
    %v1866 = vpack.c.b16 %v1516, %v1514
    %v1867 = vpack.c.b16 %v1519, %v1517
    %v1868 = vpack.c.b16 %v1520, %v1518
    %v1869 = vpack.c.b16 %v1523, %v1521
    %v1870 = vpack.c.b16 %v1524, %v1522
    %v1871 = vpack.c.b16 %v1527, %v1525
    %v1872 = vpack.c.b16 %v1528, %v1526
    %v1873 = vpack.c.b16 %v1531, %v1529
    %v1874 = vpack.c.b16 %v1532, %v1530
    %v1875 = vpack.c.b16 %v1535, %v1533
    %v1876 = vpack.c.b16 %v1536, %v1534
    %v1877 = vpack.c.b16 %v1539, %v1537
    %v1878 = vpack.c.b16 %v1540, %v1538
    %v1879 = vpack.c.b16 %v1543, %v1541
    %v1880 = vpack.c.b16 %v1544, %v1542
    %2217 = vmatprep.subr.bf16.mxu0 %v1546
    %2218 = vmatpush1.bf16.msra.mxu0 %v1545
    %2219 = vmatprep.subr.bf16.mxu0 %v1548
    %2220 = vmatpush1.bf16.msra.mxu0 %v1547
    %2221 = vmatprep.subr.bf16.mxu0 %v1550
    %2222 = vmatpush1.bf16.msra.mxu0 %v1549
    %2223 = vmatprep.subr.bf16.mxu0 %v1552
    %2224 = vmatpush1.bf16.msra.mxu0 %v1551
    %2225 = vmatprep.subr.bf16.mxu0 %v1554
    %2226 = vmatpush1.bf16.msra.mxu0 %v1553
    %2227 = vmatprep.subr.bf16.mxu0 %v1556
    %2228 = vmatpush1.bf16.msra.mxu0 %v1555
    %2229 = vmatprep.subr.bf16.mxu0 %v1558
    %2230 = vmatpush1.bf16.msra.mxu0 %v1557
    %2231 = vmatprep.subr.bf16.mxu0 %v1560
    %2232 = vmatpush1.bf16.msra.mxu0 %v1559
    %2233 = vmatprep.subr.bf16.mxu0 %v1562
    %2234 = vmatpush1.bf16.msra.mxu0 %v1561
    %2235 = vmatprep.subr.bf16.mxu0 %v1564
    %2236 = vmatpush1.bf16.msra.mxu0 %v1563
    %2237 = vmatprep.subr.bf16.mxu0 %v1566
    %2238 = vmatpush1.bf16.msra.mxu0 %v1565
    %2239 = vmatprep.subr.bf16.mxu0 %v1568
    %2240 = vmatpush1.bf16.msra.mxu0 %v1567
    %2241 = vmatprep.subr.bf16.mxu0 %v1570
    %2242 = vmatpush1.bf16.msra.mxu0 %v1569
    %2243 = vmatprep.subr.bf16.mxu0 %v1572
    %2244 = vmatpush1.bf16.msra.mxu0 %v1571
    %2245 = vmatprep.subr.bf16.mxu0 %v1574
    %2246 = vmatpush1.bf16.msra.mxu0 %v1573
    %2247 = vmatprep.subr.bf16.mxu0 %v1576
    %2248 = vmatpush1.bf16.msra.mxu0 %v1575
    %2249 = vmatprep.mubr.bf16.mxu0 %v496
    %2250 = vmatmul.mubr.bf16.gmra.mrb[0].mxu0 %v495
    %v2251 = vpop.f32.mrb[0].mxu0
    %v2252 = vadd.f32 0.0, %v2251
    %v2253 = vpop.f32.mrb[0].mxu0
    %v2254 = vadd.f32 0.0, %v2253
    %v2255 = vpop.f32.mrb[0].mxu0
    %v2256 = vpop.f32.mrb[0].mxu0
    %2257 = vdwg.mxu0
    %2258 = vmatprep.subr.bf16.mxu0 %v1578
    %2259 = vmatpush1.bf16.msra.mxu0 %v1577
    %2260 = vmatprep.subr.bf16.mxu0 %v1580
    %2261 = vmatpush1.bf16.msra.mxu0 %v1579
    %2262 = vmatprep.subr.bf16.mxu0 %v1582
    %2263 = vmatpush1.bf16.msra.mxu0 %v1581
    %2264 = vmatprep.subr.bf16.mxu0 %v1584
    %2265 = vmatpush1.bf16.msra.mxu0 %v1583
    %2266 = vmatprep.subr.bf16.mxu0 %v1586
    %2267 = vmatpush1.bf16.msra.mxu0 %v1585
    %2268 = vmatprep.subr.bf16.mxu0 %v1588
    %2269 = vmatpush1.bf16.msra.mxu0 %v1587
    %2270 = vmatprep.subr.bf16.mxu0 %v1590
    %2271 = vmatpush1.bf16.msra.mxu0 %v1589
    %2272 = vmatprep.subr.bf16.mxu0 %v1592
    %2273 = vmatpush1.bf16.msra.mxu0 %v1591
    %2274 = vmatprep.subr.bf16.mxu0 %v1594
    %2275 = vmatpush1.bf16.msra.mxu0 %v1593
    %2276 = vmatprep.subr.bf16.mxu0 %v1596
    %2277 = vmatpush1.bf16.msra.mxu0 %v1595
    %2278 = vmatprep.subr.bf16.mxu0 %v1598
    %2279 = vmatpush1.bf16.msra.mxu0 %v1597
    %2280 = vmatprep.subr.bf16.mxu0 %v1600
    %2281 = vmatpush1.bf16.msra.mxu0 %v1599
    %2282 = vmatprep.subr.bf16.mxu0 %v1602
    %2283 = vmatpush1.bf16.msra.mxu0 %v1601
    %2284 = vmatprep.subr.bf16.mxu0 %v1604
    %2285 = vmatpush1.bf16.msra.mxu0 %v1603
    %2286 = vmatprep.subr.bf16.mxu0 %v1606
    %2287 = vmatpush1.bf16.msra.mxu0 %v1605
    %2288 = vmatprep.subr.bf16.mxu0 %v1608
    %2289 = vmatpush1.bf16.msra.mxu0 %v1607
    %2290 = vmatprep.mubr.bf16.mxu0 %v498
    %2291 = vmatmul.mubr.bf16.gmra.mrb[0].mxu0 %v497
    %v2292 = vpop.f32.mrb[0].mxu0
    %v2293 = vadd.f32 %v2252, %v2292
    %v2294 = vpop.f32.mrb[0].mxu0
    %v2295 = vadd.f32 %v2254, %v2294
    %v2296 = vpop.f32.mrb[0].mxu0
    %v2297 = vpop.f32.mrb[0].mxu0
    %2298 = vdwg.mxu0
    %2299 = vmatprep.subr.bf16.mxu0 %v1610
    %2300 = vmatpush1.bf16.msra.mxu0 %v1609
    %2301 = vmatprep.subr.bf16.mxu0 %v1612
    %2302 = vmatpush1.bf16.msra.mxu0 %v1611
    %2303 = vmatprep.subr.bf16.mxu0 %v1614
    %2304 = vmatpush1.bf16.msra.mxu0 %v1613
    %2305 = vmatprep.subr.bf16.mxu0 %v1616
    %2306 = vmatpush1.bf16.msra.mxu0 %v1615
    %2307 = vmatprep.subr.bf16.mxu0 %v1618
    %2308 = vmatpush1.bf16.msra.mxu0 %v1617
    %2309 = vmatprep.subr.bf16.mxu0 %v1620
    %2310 = vmatpush1.bf16.msra.mxu0 %v1619
    %2311 = vmatprep.subr.bf16.mxu0 %v1622
    %2312 = vmatpush1.bf16.msra.mxu0 %v1621
    %2313 = vmatprep.subr.bf16.mxu0 %v1624
    %2314 = vmatpush1.bf16.msra.mxu0 %v1623
    %2315 = vmatprep.subr.bf16.mxu0 %v1626
    %2316 = vmatpush1.bf16.msra.mxu0 %v1625
    %2317 = vmatprep.subr.bf16.mxu0 %v1628
    %2318 = vmatpush1.bf16.msra.mxu0 %v1627
    %2319 = vmatprep.subr.bf16.mxu0 %v1630
    %2320 = vmatpush1.bf16.msra.mxu0 %v1629
    %2321 = vmatprep.subr.bf16.mxu0 %v1632
    %2322 = vmatpush1.bf16.msra.mxu0 %v1631
    %2323 = vmatprep.subr.bf16.mxu0 %v1634
    %2324 = vmatpush1.bf16.msra.mxu0 %v1633
    %2325 = vmatprep.subr.bf16.mxu0 %v1636
    %2326 = vmatpush1.bf16.msra.mxu0 %v1635
    %2327 = vmatprep.subr.bf16.mxu0 %v1638
    %2328 = vmatpush1.bf16.msra.mxu0 %v1637
    %2329 = vmatprep.subr.bf16.mxu0 %v1640
    %2330 = vmatpush1.bf16.msra.mxu0 %v1639
    %2331 = vmatprep.mubr.bf16.mxu0 %v500
    %2332 = vmatmul.mubr.bf16.gmra.mrb[0].mxu0 %v499
    %v2333 = vpop.f32.mrb[0].mxu0
    %v2334 = vadd.f32 %v2293, %v2333
    %v2335 = vpop.f32.mrb[0].mxu0
    %v2336 = vadd.f32 %v2295, %v2335
    %v2337 = vpop.f32.mrb[0].mxu0
    %v2338 = vpop.f32.mrb[0].mxu0
    %2339 = vdwg.mxu0
    %2340 = vmatprep.subr.bf16.mxu0 %v1642
    %2341 = vmatpush1.bf16.msra.mxu0 %v1641
    %2342 = vmatprep.subr.bf16.mxu0 %v1644
    %2343 = vmatpush1.bf16.msra.mxu0 %v1643
    %2344 = vmatprep.subr.bf16.mxu0 %v1646
    %2345 = vmatpush1.bf16.msra.mxu0 %v1645
    %2346 = vmatprep.subr.bf16.mxu0 %v1648
    %2347 = vmatpush1.bf16.msra.mxu0 %v1647
    %2348 = vmatprep.subr.bf16.mxu0 %v1650
    %2349 = vmatpush1.bf16.msra.mxu0 %v1649
    %2350 = vmatprep.subr.bf16.mxu0 %v1652
    %2351 = vmatpush1.bf16.msra.mxu0 %v1651
    %2352 = vmatprep.subr.bf16.mxu0 %v1654
    %2353 = vmatpush1.bf16.msra.mxu0 %v1653
    %2354 = vmatprep.subr.bf16.mxu0 %v1656
    %2355 = vmatpush1.bf16.msra.mxu0 %v1655
    %2356 = vmatprep.subr.bf16.mxu0 %v1658
    %2357 = vmatpush1.bf16.msra.mxu0 %v1657
    %2358 = vmatprep.subr.bf16.mxu0 %v1660
    %2359 = vmatpush1.bf16.msra.mxu0 %v1659
    %2360 = vmatprep.subr.bf16.mxu0 %v1662
    %2361 = vmatpush1.bf16.msra.mxu0 %v1661
    %2362 = vmatprep.subr.bf16.mxu0 %v1664
    %2363 = vmatpush1.bf16.msra.mxu0 %v1663
    %2364 = vmatprep.subr.bf16.mxu0 %v1666
    %2365 = vmatpush1.bf16.msra.mxu0 %v1665
    %2366 = vmatprep.subr.bf16.mxu0 %v1668
    %2367 = vmatpush1.bf16.msra.mxu0 %v1667
    %2368 = vmatprep.subr.bf16.mxu0 %v1670
    %2369 = vmatpush1.bf16.msra.mxu0 %v1669
    %2370 = vmatprep.subr.bf16.mxu0 %v1672
    %2371 = vmatpush1.bf16.msra.mxu0 %v1671
    %2372 = vmatprep.mubr.bf16.mxu0 %v502
    %2373 = vmatmul.mubr.bf16.gmra.mrb[0].mxu0 %v501
    %v2374 = vpop.f32.mrb[0].mxu0
    %v2375 = vadd.f32 %v2334, %v2374
    %v2376 = vpop.f32.mrb[0].mxu0
    %v2377 = vadd.f32 %v2336, %v2376
    %v2378 = vpop.f32.mrb[0].mxu0
    %v2379 = vpop.f32.mrb[0].mxu0
    %2380 = vdwg.mxu0
    %2381 = vmatprep.subr.bf16.mxu0 %v1674
    %2382 = vmatpush1.bf16.msra.mxu0 %v1673
    %2383 = vmatprep.subr.bf16.mxu0 %v1676
    %2384 = vmatpush1.bf16.msra.mxu0 %v1675
    %2385 = vmatprep.subr.bf16.mxu0 %v1678
    %2386 = vmatpush1.bf16.msra.mxu0 %v1677
    %2387 = vmatprep.subr.bf16.mxu0 %v1680
    %2388 = vmatpush1.bf16.msra.mxu0 %v1679
    %2389 = vmatprep.subr.bf16.mxu0 %v1682
    %2390 = vmatpush1.bf16.msra.mxu0 %v1681
    %2391 = vmatprep.subr.bf16.mxu0 %v1684
    %2392 = vmatpush1.bf16.msra.mxu0 %v1683
    %2393 = vmatprep.subr.bf16.mxu0 %v1686
    %2394 = vmatpush1.bf16.msra.mxu0 %v1685
    %2395 = vmatprep.subr.bf16.mxu0 %v1688
    %2396 = vmatpush1.bf16.msra.mxu0 %v1687
    %2397 = vmatprep.subr.bf16.mxu0 %v1690
    %2398 = vmatpush1.bf16.msra.mxu0 %v1689
    %2399 = vmatprep.subr.bf16.mxu0 %v1692
    %2400 = vmatpush1.bf16.msra.mxu0 %v1691
    %2401 = vmatprep.subr.bf16.mxu0 %v1694
    %2402 = vmatpush1.bf16.msra.mxu0 %v1693
    %2403 = vmatprep.subr.bf16.mxu0 %v1696
    %2404 = vmatpush1.bf16.msra.mxu0 %v1695
    %2405 = vmatprep.subr.bf16.mxu0 %v1698
    %2406 = vmatpush1.bf16.msra.mxu0 %v1697
    %2407 = vmatprep.subr.bf16.mxu0 %v1700
    %2408 = vmatpush1.bf16.msra.mxu0 %v1699
    %2409 = vmatprep.subr.bf16.mxu0 %v1702
    %2410 = vmatpush1.bf16.msra.mxu0 %v1701
    %2411 = vmatprep.subr.bf16.mxu0 %v1704
    %2412 = vmatpush1.bf16.msra.mxu0 %v1703
    %2413 = vmatprep.mubr.bf16.mxu0 %v504
    %2414 = vmatmul.mubr.bf16.gmra.mrb[0].mxu0 %v503
    %v2415 = vpop.f32.mrb[0].mxu0
    %v2416 = vadd.f32 %v2375, %v2415
    %v2417 = vpop.f32.mrb[0].mxu0
    %v2418 = vadd.f32 %v2377, %v2417
    %v2419 = vpop.f32.mrb[0].mxu0
    %v2420 = vpop.f32.mrb[0].mxu0
    %2421 = vdwg.mxu0
    %2422 = vmatprep.subr.bf16.mxu0 %v1706
    %2423 = vmatpush1.bf16.msra.mxu0 %v1705
    %2424 = vmatprep.subr.bf16.mxu0 %v1708
    %2425 = vmatpush1.bf16.msra.mxu0 %v1707
    %2426 = vmatprep.subr.bf16.mxu0 %v1710
    %2427 = vmatpush1.bf16.msra.mxu0 %v1709
    %2428 = vmatprep.subr.bf16.mxu0 %v1712
    %2429 = vmatpush1.bf16.msra.mxu0 %v1711
    %2430 = vmatprep.subr.bf16.mxu0 %v1714
    %2431 = vmatpush1.bf16.msra.mxu0 %v1713
    %2432 = vmatprep.subr.bf16.mxu0 %v1716
    %2433 = vmatpush1.bf16.msra.mxu0 %v1715
    %2434 = vmatprep.subr.bf16.mxu0 %v1718
    %2435 = vmatpush1.bf16.msra.mxu0 %v1717
    %2436 = vmatprep.subr.bf16.mxu0 %v1720
    %2437 = vmatpush1.bf16.msra.mxu0 %v1719
    %2438 = vmatprep.subr.bf16.mxu0 %v1722
    %2439 = vmatpush1.bf16.msra.mxu0 %v1721
    %2440 = vmatprep.subr.bf16.mxu0 %v1724
    %2441 = vmatpush1.bf16.msra.mxu0 %v1723
    %2442 = vmatprep.subr.bf16.mxu0 %v1726
    %2443 = vmatpush1.bf16.msra.mxu0 %v1725
    %2444 = vmatprep.subr.bf16.mxu0 %v1728
    %2445 = vmatpush1.bf16.msra.mxu0 %v1727
    %2446 = vmatprep.subr.bf16.mxu0 %v1730
    %2447 = vmatpush1.bf16.msra.mxu0 %v1729
    %2448 = vmatprep.subr.bf16.mxu0 %v1732
    %2449 = vmatpush1.bf16.msra.mxu0 %v1731
    %2450 = vmatprep.subr.bf16.mxu0 %v1734
    %2451 = vmatpush1.bf16.msra.mxu0 %v1733
    %2452 = vmatprep.subr.bf16.mxu0 %v1736
    %2453 = vmatpush1.bf16.msra.mxu0 %v1735
    %2454 = vmatprep.mubr.bf16.mxu0 %v506
    %2455 = vmatmul.mubr.bf16.gmra.mrb[0].mxu0 %v505
    %v2456 = vpop.f32.mrb[0].mxu0
    %v2457 = vadd.f32 %v2416, %v2456
    %v2458 = vpop.f32.mrb[0].mxu0
    %v2459 = vadd.f32 %v2418, %v2458
    %v2460 = vpop.f32.mrb[0].mxu0
    %v2461 = vpop.f32.mrb[0].mxu0
    %2462 = vdwg.mxu0
    %2463 = vmatprep.subr.bf16.mxu0 %v1738
    %2464 = vmatpush1.bf16.msra.mxu0 %v1737
    %2465 = vmatprep.subr.bf16.mxu0 %v1740
    %2466 = vmatpush1.bf16.msra.mxu0 %v1739
    %2467 = vmatprep.subr.bf16.mxu0 %v1742
    %2468 = vmatpush1.bf16.msra.mxu0 %v1741
    %2469 = vmatprep.subr.bf16.mxu0 %v1744
    %2470 = vmatpush1.bf16.msra.mxu0 %v1743
    %2471 = vmatprep.subr.bf16.mxu0 %v1746
    %2472 = vmatpush1.bf16.msra.mxu0 %v1745
    %2473 = vmatprep.subr.bf16.mxu0 %v1748
    %2474 = vmatpush1.bf16.msra.mxu0 %v1747
    %2475 = vmatprep.subr.bf16.mxu0 %v1750
    %2476 = vmatpush1.bf16.msra.mxu0 %v1749
    %2477 = vmatprep.subr.bf16.mxu0 %v1752
    %2478 = vmatpush1.bf16.msra.mxu0 %v1751
    %2479 = vmatprep.subr.bf16.mxu0 %v1754
    %2480 = vmatpush1.bf16.msra.mxu0 %v1753
    %2481 = vmatprep.subr.bf16.mxu0 %v1756
    %2482 = vmatpush1.bf16.msra.mxu0 %v1755
    %2483 = vmatprep.subr.bf16.mxu0 %v1758
    %2484 = vmatpush1.bf16.msra.mxu0 %v1757
    %2485 = vmatprep.subr.bf16.mxu0 %v1760
    %2486 = vmatpush1.bf16.msra.mxu0 %v1759
    %2487 = vmatprep.subr.bf16.mxu0 %v1762
    %2488 = vmatpush1.bf16.msra.mxu0 %v1761
    %2489 = vmatprep.subr.bf16.mxu0 %v1764
    %2490 = vmatpush1.bf16.msra.mxu0 %v1763
    %2491 = vmatprep.subr.bf16.mxu0 %v1766
    %2492 = vmatpush1.bf16.msra.mxu0 %v1765
    %2493 = vmatprep.subr.bf16.mxu0 %v1768
    %2494 = vmatpush1.bf16.msra.mxu0 %v1767
    %2495 = vmatprep.mubr.bf16.mxu0 %v508
    %2496 = vmatmul.mubr.bf16.gmra.mrb[0].mxu0 %v507
    %v2497 = vpop.f32.mrb[0].mxu0
    %v2498 = vadd.f32 %v2457, %v2497
    %v2499 = vpop.f32.mrb[0].mxu0
    %v2500 = vadd.f32 %v2459, %v2499
    %v2501 = vpop.f32.mrb[0].mxu0
    %v2502 = vpop.f32.mrb[0].mxu0
    %2503 = vdwg.mxu0
    %2504 = vmatprep.subr.bf16.mxu0 %v1770
    %2505 = vmatpush1.bf16.msra.mxu0 %v1769
    %2506 = vmatprep.subr.bf16.mxu0 %v1772
    %2507 = vmatpush1.bf16.msra.mxu0 %v1771
    %2508 = vmatprep.subr.bf16.mxu0 %v1774
    %2509 = vmatpush1.bf16.msra.mxu0 %v1773
    %2510 = vmatprep.subr.bf16.mxu0 %v1776
    %2511 = vmatpush1.bf16.msra.mxu0 %v1775
    %2512 = vmatprep.subr.bf16.mxu0 %v1778
    %2513 = vmatpush1.bf16.msra.mxu0 %v1777
    %2514 = vmatprep.subr.bf16.mxu0 %v1780
    %2515 = vmatpush1.bf16.msra.mxu0 %v1779
    %2516 = vmatprep.subr.bf16.mxu0 %v1782
    %2517 = vmatpush1.bf16.msra.mxu0 %v1781
    %2518 = vmatprep.subr.bf16.mxu0 %v1784
    %2519 = vmatpush1.bf16.msra.mxu0 %v1783
    %2520 = vmatprep.subr.bf16.mxu0 %v1786
    %2521 = vmatpush1.bf16.msra.mxu0 %v1785
    %2522 = vmatprep.subr.bf16.mxu0 %v1788
    %2523 = vmatpush1.bf16.msra.mxu0 %v1787
    %2524 = vmatprep.subr.bf16.mxu0 %v1790
    %2525 = vmatpush1.bf16.msra.mxu0 %v1789
    %2526 = vmatprep.subr.bf16.mxu0 %v1792
    %2527 = vmatpush1.bf16.msra.mxu0 %v1791
    %2528 = vmatprep.subr.bf16.mxu0 %v1794
    %2529 = vmatpush1.bf16.msra.mxu0 %v1793
    %2530 = vmatprep.subr.bf16.mxu0 %v1796
    %2531 = vmatpush1.bf16.msra.mxu0 %v1795
    %2532 = vmatprep.subr.bf16.mxu0 %v1798
    %2533 = vmatpush1.bf16.msra.mxu0 %v1797
    %2534 = vmatprep.subr.bf16.mxu0 %v1800
    %2535 = vmatpush1.bf16.msra.mxu0 %v1799
    %2536 = vmatprep.mubr.bf16.mxu0 %v510
    %2537 = vmatmul.mubr.bf16.gmra.mrb[0].mxu0 %v509
    %v2538 = vpop.f32.mrb[0].mxu0
    %v2539 = vadd.f32 %v2498, %v2538
    %v2540 = vpop.f32.mrb[0].mxu0
    %v2541 = vadd.f32 %v2500, %v2540
    %v2542 = vpop.f32.mrb[0].mxu0
    %v2543 = vpop.f32.mrb[0].mxu0
    %2544 = vdwg.mxu0
    %2545 = vmatprep.subr.bf16.mxu0 %v1802
    %2546 = vmatpush1.bf16.msra.mxu0 %v1801
    %2547 = vmatprep.subr.bf16.mxu0 %v1804
    %2548 = vmatpush1.bf16.msra.mxu0 %v1803
    %2549 = vmatprep.subr.bf16.mxu0 %v1806
    %2550 = vmatpush1.bf16.msra.mxu0 %v1805
    %2551 = vmatprep.subr.bf16.mxu0 %v1808
    %2552 = vmatpush1.bf16.msra.mxu0 %v1807
    %2553 = vmatprep.subr.bf16.mxu0 %v1810
    %2554 = vmatpush1.bf16.msra.mxu0 %v1809
    %2555 = vmatprep.subr.bf16.mxu0 %v1812
    %2556 = vmatpush1.bf16.msra.mxu0 %v1811
    %2557 = vmatprep.subr.bf16.mxu0 %v1814
    %2558 = vmatpush1.bf16.msra.mxu0 %v1813
    %2559 = vmatprep.subr.bf16.mxu0 %v1816
    %2560 = vmatpush1.bf16.msra.mxu0 %v1815
    %2561 = vmatprep.subr.bf16.mxu0 %v1818
    %2562 = vmatpush1.bf16.msra.mxu0 %v1817
    %2563 = vmatprep.subr.bf16.mxu0 %v1820
    %2564 = vmatpush1.bf16.msra.mxu0 %v1819
    %2565 = vmatprep.subr.bf16.mxu0 %v1822
    %2566 = vmatpush1.bf16.msra.mxu0 %v1821
    %2567 = vmatprep.subr.bf16.mxu0 %v1824
    %2568 = vmatpush1.bf16.msra.mxu0 %v1823
    %2569 = vmatprep.subr.bf16.mxu0 %v1826
    %2570 = vmatpush1.bf16.msra.mxu0 %v1825
    %2571 = vmatprep.subr.bf16.mxu0 %v1828
    %2572 = vmatpush1.bf16.msra.mxu0 %v1827
    %2573 = vmatprep.subr.bf16.mxu0 %v1830
    %2574 = vmatpush1.bf16.msra.mxu0 %v1829
    %2575 = vmatprep.subr.bf16.mxu0 %v1832
    %2576 = vmatpush1.bf16.msra.mxu0 %v1831
    %2577 = vmatprep.mubr.bf16.mxu0 %v512
    %2578 = vmatmul.mubr.bf16.gmra.mrb[0].mxu0 %v511
    %v2579 = vpop.f32.mrb[0].mxu0
    %v2580 = vadd.f32 %v2539, %v2579
    %v2581 = vpop.f32.mrb[0].mxu0
    %v2582 = vadd.f32 %v2541, %v2581
    %v2583 = vpop.f32.mrb[0].mxu0
    %v2584 = vpop.f32.mrb[0].mxu0
    %2585 = vdwg.mxu0
    %2586 = vmatprep.subr.bf16.mxu0 %v1834
    %2587 = vmatpush1.bf16.msra.mxu0 %v1833
    %2588 = vmatprep.subr.bf16.mxu0 %v1836
    %2589 = vmatpush1.bf16.msra.mxu0 %v1835
    %2590 = vmatprep.subr.bf16.mxu0 %v1838
    %2591 = vmatpush1.bf16.msra.mxu0 %v1837
    %2592 = vmatprep.subr.bf16.mxu0 %v1840
    %2593 = vmatpush1.bf16.msra.mxu0 %v1839
    %2594 = vmatprep.subr.bf16.mxu0 %v1842
    %2595 = vmatpush1.bf16.msra.mxu0 %v1841
    %2596 = vmatprep.subr.bf16.mxu0 %v1844
    %2597 = vmatpush1.bf16.msra.mxu0 %v1843
    %2598 = vmatprep.subr.bf16.mxu0 %v1846
    %2599 = vmatpush1.bf16.msra.mxu0 %v1845
    %2600 = vmatprep.subr.bf16.mxu0 %v1848
    %2601 = vmatpush1.bf16.msra.mxu0 %v1847
    %2602 = vmatprep.subr.bf16.mxu0 %v1850
    %2603 = vmatpush1.bf16.msra.mxu0 %v1849
    %2604 = vmatprep.subr.bf16.mxu0 %v1852
    %2605 = vmatpush1.bf16.msra.mxu0 %v1851
    %2606 = vmatprep.subr.bf16.mxu0 %v1854
    %2607 = vmatpush1.bf16.msra.mxu0 %v1853
    %2608 = vmatprep.subr.bf16.mxu0 %v1856
    %2609 = vmatpush1.bf16.msra.mxu0 %v1855
    %2610 = vmatprep.subr.bf16.mxu0 %v1858
    %2611 = vmatpush1.bf16.msra.mxu0 %v1857
    %2612 = vmatprep.subr.bf16.mxu0 %v1860
    %2613 = vmatpush1.bf16.msra.mxu0 %v1859
    %2614 = vmatprep.subr.bf16.mxu0 %v1862
    %2615 = vmatpush1.bf16.msra.mxu0 %v1861
    %2616 = vmatprep.subr.bf16.mxu0 %v1864
    %2617 = vmatpush1.bf16.msra.mxu0 %v1863
    %2618 = vmatprep.mubr.bf16.mxu0 %v514
    %2619 = vmatmul.mubr.bf16.gmra.mrb[0].mxu0 %v513
    %v2620 = vpop.f32.mrb[0].mxu0
    %v2621 = vadd.f32 %v2580, %v2620
    %v2622 = vpop.f32.mrb[0].mxu0
    %v2623 = vadd.f32 %v2582, %v2622
    %v2624 = vpop.f32.mrb[0].mxu0
    %v2625 = vpop.f32.mrb[0].mxu0
    %2626 = vdwg.mxu0
    %2627 = vmatprep.subr.bf16.mxu0 %v1866
    %2628 = vmatpush1.bf16.msra.mxu0 %v1865
    %2629 = vmatprep.subr.bf16.mxu0 %v1868
    %2630 = vmatpush1.bf16.msra.mxu0 %v1867
    %2631 = vmatprep.subr.bf16.mxu0 %v1870
    %2632 = vmatpush1.bf16.msra.mxu0 %v1869
    %2633 = vmatprep.subr.bf16.mxu0 %v1872
    %2634 = vmatpush1.bf16.msra.mxu0 %v1871
    %2635 = vmatprep.subr.bf16.mxu0 %v1874
    %2636 = vmatpush1.bf16.msra.mxu0 %v1873
    %2637 = vmatprep.subr.bf16.mxu0 %v1876
    %2638 = vmatpush1.bf16.msra.mxu0 %v1875
    %2639 = vmatprep.subr.bf16.mxu0 %v1878
    %2640 = vmatpush1.bf16.msra.mxu0 %v1877
    %2641 = vmatprep.subr.bf16.mxu0 %v1880
    %2642 = vmatpush1.bf16.msra.mxu0 %v1879
    %2643 = vmatprep.subr.bf16.mxu0 0
    %2644 = vmatpush1.bf16.msra.mxu0 0
    %2645 = vmatprep.subr.bf16.mxu0 0
    %2646 = vmatpush1.bf16.msra.mxu0 0
    %2647 = vmatprep.subr.bf16.mxu0 0
    %2648 = vmatpush1.bf16.msra.mxu0 0
    %2649 = vmatprep.subr.bf16.mxu0 0
    %2650 = vmatpush1.bf16.msra.mxu0 0
    %2651 = vmatprep.subr.bf16.mxu0 0
    %2652 = vmatpush1.bf16.msra.mxu0 0
    %2653 = vmatprep.subr.bf16.mxu0 0
    %2654 = vmatpush1.bf16.msra.mxu0 0
    %2655 = vmatprep.subr.bf16.mxu0 0
    %2656 = vmatpush1.bf16.msra.mxu0 0
    %2657 = vmatprep.subr.bf16.mxu0 0
    %2658 = vmatpush1.bf16.msra.mxu0 0
    %2659 = vmatprep.mubr.bf16.mxu0 0
    %2660 = vmatmul.mubr.bf16.gmra.mrb[0].mxu0 %v515
    %v2661 = vpop.f32.mrb[0].mxu0
    %v2662 = vadd.f32 %v2621, %v2661
    %v2663 = vpop.f32.mrb[0].mxu0
    %v2664 = vadd.f32 %v2623, %v2663
    %v2665 = vpop.f32.mrb[0].mxu0
    %v2666 = vpop.f32.mrb[0].mxu0
    %2667 = vdwg.mxu0
    %v2668 = vld [vmem:[%s2] sm:$0x3]
    %v2669 = vld [vmem:[%s2 + $0x2] sm:$0x3]
    %v2670 = vrot.slane %v2662, 4
    %v2671 = vadd.f32 %v2662, %v2670
    %v2672 = vrot.slane %v2671, 2
    %v2673 = vadd.f32 %v2671, %v2672
    %v2674 = vrot.slane %v2673, 1
    %v2675 = vadd.f32 %v2673, %v2674
    %v2676 = vrot.slane %v2664, 4
    %v2677 = vadd.f32 %v2664, %v2676
    %v2678 = vrot.slane %v2677, 2
    %v2679 = vadd.f32 %v2677, %v2678
    %v2680 = vrot.slane %v2679, 1
    %v2681 = vadd.f32 %v2679, %v2680
    %v2682 = vrcp.pop 8.0
    %v2683 = vmul.f32 %v2675, %v2682
    %v2684 = vmul.f32 %v2681, %v2682
    %v2685 = vmul.f32 %v2662, %v2662
    %v2686 = vmul.f32 %v2664, %v2664
    %v2687 = vrot.slane %v2685, 4
    %v2688 = vadd.f32 %v2685, %v2687
    %v2689 = vrot.slane %v2688, 2
    %v2690 = vadd.f32 %v2688, %v2689
    %v2691 = vrot.slane %v2690, 1
    %v2692 = vadd.f32 %v2690, %v2691
    %v2693 = vrot.slane %v2686, 4
    %v2694 = vadd.f32 %v2686, %v2693
    %v2695 = vrot.slane %v2694, 2
    %v2696 = vadd.f32 %v2694, %v2695
    %v2697 = vrot.slane %v2696, 1
    %v2698 = vadd.f32 %v2696, %v2697
    %v2699 = vmul.f32 %v2692, %v2682
    %v2700 = vmul.f32 %v2698, %v2682
    %v2701 = vmul.f32 %v2683, %v2683
    %v2702 = vmul.f32 %v2684, %v2684
    %v2703 = vsub.f32 %v2699, %v2701
    %v2704 = vsub.f32 %v2700, %v2702
    %v2705 = vmax.f32 %v2703, 0.0
    %v2706 = vmax.f32 %v2704, 0.0
    %v2707 = vsub.f32 %v2662, %v2683
    %v2708 = vsub.f32 %v2664, %v2684
    %v2710 = vlaneseq
    %v2711 = vshrl.u32 %v2710, 7
    %v2712 = vsub.s32 0, %v2711
    %v2713 = vrot.slane %v2668, %v2712
    %v2714 = vlaneseq
    %v2715 = vshrl.u32 %v2714, 7
    %v2716 = vsub.s32 1, %v2715
    %v2717 = vrot.slane %v2668, %v2716
    %v2720 = vmul.f32 %v2713, %v2707
    %v2721 = vmul.f32 %v2717, %v2708
    %v2722 = vadd.f32 %v2705, 1e-05
    %v2723 = vadd.f32 %v2706, 1e-05
    %v2724 = vrsqrt.pop %v2722
    %v2725 = vrsqrt.pop %v2723
    %v2726 = vmul.f32 %v2720, %v2724
    %v2727 = vmul.f32 %v2721, %v2725
    %v2729 = vlaneseq
    %v2730 = vshrl.u32 %v2729, 7
    %v2731 = vsub.s32 0, %v2730
    %v2732 = vrot.slane %v2669, %v2731
    %v2733 = vlaneseq
    %v2734 = vshrl.u32 %v2733, 7
    %v2735 = vsub.s32 1, %v2734
    %v2736 = vrot.slane %v2669, %v2735
    %v2739 = vadd.f32 %v2726, %v2732
    %v2740 = vadd.f32 %v2727, %v2736
    %vm2741 = vcmp.gt.f32.partialorder %v2739, 0.0
    %vm2742 = vcmp.gt.f32.partialorder %v2740, 0.0
    %v2743 = vmin.f32 %v2739, 0.0
    %v2744 = vmin.f32 %v2740, 0.0
    %v2745 = vmul.f32 %v2743, 1.442695
    %v2746 = vpow.pop %v2745
    %v2747 = vmul.f32 %v2744, 1.442695
    %v2748 = vpow.pop %v2747
    %v2749 = vsub.f32 %v2746, 1.0
    %v2750 = vsub.f32 %v2748, 1.0
    %v2751 = vsel %vm2741, %v2739, %v2749
    %v2752 = vsel %vm2742, %v2740, %v2750
    %v2753 = vpack.c.bf16 %v2751, %v2751
    %v2754 = vpack.c.bf16 %v2752, %v2752
    %v2755 = vld [vmem:[%s4] sm:$0xff]
    %v2756 = vld [vmem:[%s4 + $0x8] sm:$0xff]
    %v2757 = vld [vmem:[%s4 + $0x10] sm:$0xff]
    %v2758 = vld [vmem:[%s4 + $0x18] sm:$0xff]
    %v2759 = vld [vmem:[%s4 + $0x20] sm:$0xff]
    %v2760 = vld [vmem:[%s4 + $0x28] sm:$0xff]
    %v2761 = vld [vmem:[%s4 + $0x30] sm:$0xff]
    %v2762 = vld [vmem:[%s4 + $0x38] sm:$0xff]
    %v2763 = vld [vmem:[%s4 + $0x40] sm:$0xff]
    %v2764 = vld [vmem:[%s4 + $0x48] sm:$0xff]
    %v2765 = vld [vmem:[%s4 + $0x50] sm:$0xff]
    %v2766 = vld [vmem:[%s4 + $0x58] sm:$0xff]
    %v2767 = vld [vmem:[%s4 + $0x60] sm:$0xff]
    %v2768 = vld [vmem:[%s4 + $0x68] sm:$0xff]
    %v2769 = vld [vmem:[%s4 + $0x70] sm:$0xff]
    %v2770 = vld [vmem:[%s4 + $0x78] sm:$0xff]
    %v2771 = vld [vmem:[%s4 + $0x80] sm:$0xff]
    %v2772 = vld [vmem:[%s4 + $0x88] sm:$0xff]
    %v2773 = vld [vmem:[%s4 + $0x90] sm:$0xff]
    %v2774 = vld [vmem:[%s4 + $0x98] sm:$0xff]
    %v2775 = vld [vmem:[%s4 + $0xa0] sm:$0xff]
    %v2776 = vld [vmem:[%s4 + $0xa8] sm:$0xff]
    %v2777 = vld [vmem:[%s4 + $0xb0] sm:$0xff]
    %v2778 = vld [vmem:[%s4 + $0xb8] sm:$0xff]
    %v2779 = vld [vmem:[%s4 + $0xc0] sm:$0xff]
    %v2780 = vld [vmem:[%s4 + $0xc8] sm:$0xff]
    %v2781 = vld [vmem:[%s4 + $0xd0] sm:$0xff]
    %v2782 = vld [vmem:[%s4 + $0xd8] sm:$0xff]
    %v2783 = vld [vmem:[%s4 + $0xe0] sm:$0xff]
    %v2784 = vld [vmem:[%s4 + $0xe8] sm:$0xff]
    %v2785 = vld [vmem:[%s4 + $0xf0] sm:$0xff]
    %v2786 = vld [vmem:[%s4 + $0xf8] sm:$0xff]
    %v2819 = vunpack.c.l.b16 %v2755
    %v2820 = vunpack.c.h.b16 %v2755
    %v2821 = vunpack.c.l.b16 %v2756
    %v2822 = vunpack.c.h.b16 %v2756
    %v2823 = vunpack.c.l.b16 %v2757
    %v2824 = vunpack.c.h.b16 %v2757
    %v2825 = vunpack.c.l.b16 %v2758
    %v2826 = vunpack.c.h.b16 %v2758
    %v2827 = vunpack.c.l.b16 %v2759
    %v2828 = vunpack.c.h.b16 %v2759
    %v2829 = vunpack.c.l.b16 %v2760
    %v2830 = vunpack.c.h.b16 %v2760
    %v2831 = vunpack.c.l.b16 %v2761
    %v2832 = vunpack.c.h.b16 %v2761
    %v2833 = vunpack.c.l.b16 %v2762
    %v2834 = vunpack.c.h.b16 %v2762
    %v2835 = vunpack.c.l.b16 %v2763
    %v2836 = vunpack.c.h.b16 %v2763
    %v2837 = vunpack.c.l.b16 %v2764
    %v2838 = vunpack.c.h.b16 %v2764
    %v2839 = vunpack.c.l.b16 %v2765
    %v2840 = vunpack.c.h.b16 %v2765
    %v2841 = vunpack.c.l.b16 %v2766
    %v2842 = vunpack.c.h.b16 %v2766
    %v2843 = vunpack.c.l.b16 %v2767
    %v2844 = vunpack.c.h.b16 %v2767
    %v2845 = vunpack.c.l.b16 %v2768
    %v2846 = vunpack.c.h.b16 %v2768
    %v2847 = vunpack.c.l.b16 %v2769
    %v2848 = vunpack.c.h.b16 %v2769
    %v2849 = vunpack.c.l.b16 %v2770
    %v2850 = vunpack.c.h.b16 %v2770
    %v2851 = vunpack.c.l.b16 %v2771
    %v2852 = vunpack.c.h.b16 %v2771
    %v2853 = vunpack.c.l.b16 %v2772
    %v2854 = vunpack.c.h.b16 %v2772
    %v2855 = vunpack.c.l.b16 %v2773
    %v2856 = vunpack.c.h.b16 %v2773
    %v2857 = vunpack.c.l.b16 %v2774
    %v2858 = vunpack.c.h.b16 %v2774
    %v2859 = vunpack.c.l.b16 %v2775
    %v2860 = vunpack.c.h.b16 %v2775
    %v2861 = vunpack.c.l.b16 %v2776
    %v2862 = vunpack.c.h.b16 %v2776
    %v2863 = vunpack.c.l.b16 %v2777
    %v2864 = vunpack.c.h.b16 %v2777
    %v2865 = vunpack.c.l.b16 %v2778
    %v2866 = vunpack.c.h.b16 %v2778
    %v2867 = vunpack.c.l.b16 %v2779
    %v2868 = vunpack.c.h.b16 %v2779
    %v2869 = vunpack.c.l.b16 %v2780
    %v2870 = vunpack.c.h.b16 %v2780
    %v2871 = vunpack.c.l.b16 %v2781
    %v2872 = vunpack.c.h.b16 %v2781
    %v2873 = vunpack.c.l.b16 %v2782
    %v2874 = vunpack.c.h.b16 %v2782
    %v2875 = vunpack.c.l.b16 %v2783
    %v2876 = vunpack.c.h.b16 %v2783
    %v2877 = vunpack.c.l.b16 %v2784
    %v2878 = vunpack.c.h.b16 %v2784
    %v2879 = vunpack.c.l.b16 %v2785
    %v2880 = vunpack.c.h.b16 %v2785
    %v2881 = vunpack.c.l.b16 %v2786
    %v2882 = vunpack.c.h.b16 %v2786
    %v2883 = vpack.c.b16 %v2821, %v2819
    %v2884 = vpack.c.b16 %v2822, %v2820
    %v2885 = vpack.c.b16 %v2825, %v2823
    %v2886 = vpack.c.b16 %v2826, %v2824
    %v2887 = vpack.c.b16 %v2829, %v2827
    %v2888 = vpack.c.b16 %v2830, %v2828
    %v2889 = vpack.c.b16 %v2833, %v2831
    %v2890 = vpack.c.b16 %v2834, %v2832
    %v2891 = vpack.c.b16 %v2837, %v2835
    %v2892 = vpack.c.b16 %v2838, %v2836
    %v2893 = vpack.c.b16 %v2841, %v2839
    %v2894 = vpack.c.b16 %v2842, %v2840
    %v2895 = vpack.c.b16 %v2845, %v2843
    %v2896 = vpack.c.b16 %v2846, %v2844
    %v2897 = vpack.c.b16 %v2849, %v2847
    %v2898 = vpack.c.b16 %v2850, %v2848
    %v2899 = vpack.c.b16 %v2853, %v2851
    %v2900 = vpack.c.b16 %v2854, %v2852
    %v2901 = vpack.c.b16 %v2857, %v2855
    %v2902 = vpack.c.b16 %v2858, %v2856
    %v2903 = vpack.c.b16 %v2861, %v2859
    %v2904 = vpack.c.b16 %v2862, %v2860
    %v2905 = vpack.c.b16 %v2865, %v2863
    %v2906 = vpack.c.b16 %v2866, %v2864
    %v2907 = vpack.c.b16 %v2869, %v2867
    %v2908 = vpack.c.b16 %v2870, %v2868
    %v2909 = vpack.c.b16 %v2873, %v2871
    %v2910 = vpack.c.b16 %v2874, %v2872
    %v2911 = vpack.c.b16 %v2877, %v2875
    %v2912 = vpack.c.b16 %v2878, %v2876
    %v2913 = vpack.c.b16 %v2881, %v2879
    %v2914 = vpack.c.b16 %v2882, %v2880
    %2947 = vmatprep.subr.bf16.mxu0 %v2884
    %2948 = vmatpush1.bf16.msra.mxu0 %v2883
    %2949 = vmatprep.subr.bf16.mxu0 %v2886
    %2950 = vmatpush1.bf16.msra.mxu0 %v2885
    %2951 = vmatprep.subr.bf16.mxu0 %v2888
    %2952 = vmatpush1.bf16.msra.mxu0 %v2887
    %2953 = vmatprep.subr.bf16.mxu0 %v2890
    %2954 = vmatpush1.bf16.msra.mxu0 %v2889
    %2955 = vmatprep.subr.bf16.mxu0 %v2892
    %2956 = vmatpush1.bf16.msra.mxu0 %v2891
    %2957 = vmatprep.subr.bf16.mxu0 %v2894
    %2958 = vmatpush1.bf16.msra.mxu0 %v2893
    %2959 = vmatprep.subr.bf16.mxu0 %v2896
    %2960 = vmatpush1.bf16.msra.mxu0 %v2895
    %2961 = vmatprep.subr.bf16.mxu0 %v2898
    %2962 = vmatpush1.bf16.msra.mxu0 %v2897
    %2963 = vmatprep.subr.bf16.mxu0 %v2900
    %2964 = vmatpush1.bf16.msra.mxu0 %v2899
    %2965 = vmatprep.subr.bf16.mxu0 %v2902
    %2966 = vmatpush1.bf16.msra.mxu0 %v2901
    %2967 = vmatprep.subr.bf16.mxu0 %v2904
    %2968 = vmatpush1.bf16.msra.mxu0 %v2903
    %2969 = vmatprep.subr.bf16.mxu0 %v2906
    %2970 = vmatpush1.bf16.msra.mxu0 %v2905
    %2971 = vmatprep.subr.bf16.mxu0 %v2908
    %2972 = vmatpush1.bf16.msra.mxu0 %v2907
    %2973 = vmatprep.subr.bf16.mxu0 %v2910
    %2974 = vmatpush1.bf16.msra.mxu0 %v2909
    %2975 = vmatprep.subr.bf16.mxu0 %v2912
    %2976 = vmatpush1.bf16.msra.mxu0 %v2911
    %2977 = vmatprep.subr.bf16.mxu0 %v2914
    %2978 = vmatpush1.bf16.msra.mxu0 %v2913
    %2979 = vmatprep.mubr.bf16.mxu0 %v2754
    %2980 = vmatmul.mubr.bf16.gmra.mrb[0].mxu0 %v2753
    %v2981 = vpop.f32.mrb[0].mxu0
    %v2982 = vadd.f32 0.0, %v2981
    %v2983 = vpop.f32.mrb[0].mxu0
    %v2984 = vadd.f32 0.0, %v2983
    %v2985 = vpop.f32.mrb[0].mxu0
    %v2986 = vpop.f32.mrb[0].mxu0
    %2987 = vdwg.mxu0
    %v2988 = vld [vmem:[%s2 + $0x4] sm:$0x3]
    %v2989 = vld [vmem:[%s2 + $0x6] sm:$0x3]
    %v2990 = vrot.slane %v2982, 4
    %v2991 = vadd.f32 %v2982, %v2990
    %v2992 = vrot.slane %v2991, 2
    %v2993 = vadd.f32 %v2991, %v2992
    %v2994 = vrot.slane %v2993, 1
    %v2995 = vadd.f32 %v2993, %v2994
    %v2996 = vrot.slane %v2984, 4
    %v2997 = vadd.f32 %v2984, %v2996
    %v2998 = vrot.slane %v2997, 2
    %v2999 = vadd.f32 %v2997, %v2998
    %v3000 = vrot.slane %v2999, 1
    %v3001 = vadd.f32 %v2999, %v3000
    %v3002 = vmul.f32 %v2995, %v2682
    %v3003 = vmul.f32 %v3001, %v2682
    %v3004 = vmul.f32 %v2982, %v2982
    %v3005 = vmul.f32 %v2984, %v2984
    %v3006 = vrot.slane %v3004, 4
    %v3007 = vadd.f32 %v3004, %v3006
    %v3008 = vrot.slane %v3007, 2
    %v3009 = vadd.f32 %v3007, %v3008
    %v3010 = vrot.slane %v3009, 1
    %v3011 = vadd.f32 %v3009, %v3010
    %v3012 = vrot.slane %v3005, 4
    %v3013 = vadd.f32 %v3005, %v3012
    %v3014 = vrot.slane %v3013, 2
    %v3015 = vadd.f32 %v3013, %v3014
    %v3016 = vrot.slane %v3015, 1
    %v3017 = vadd.f32 %v3015, %v3016
    %v3018 = vmul.f32 %v3011, %v2682
    %v3019 = vmul.f32 %v3017, %v2682
    %v3020 = vmul.f32 %v3002, %v3002
    %v3021 = vmul.f32 %v3003, %v3003
    %v3022 = vsub.f32 %v3018, %v3020
    %v3023 = vsub.f32 %v3019, %v3021
    %v3024 = vmax.f32 %v3022, 0.0
    %v3025 = vmax.f32 %v3023, 0.0
    %v3026 = vsub.f32 %v2982, %v3002
    %v3027 = vsub.f32 %v2984, %v3003
    %v3029 = vlaneseq
    %v3030 = vshrl.u32 %v3029, 7
    %v3031 = vsub.s32 0, %v3030
    %v3032 = vrot.slane %v2988, %v3031
    %v3033 = vlaneseq
    %v3034 = vshrl.u32 %v3033, 7
    %v3035 = vsub.s32 1, %v3034
    %v3036 = vrot.slane %v2988, %v3035
    %v3039 = vmul.f32 %v3032, %v3026
    %v3040 = vmul.f32 %v3036, %v3027
    %v3041 = vadd.f32 %v3024, 1e-05
    %v3042 = vadd.f32 %v3025, 1e-05
    %v3043 = vrsqrt.pop %v3041
    %v3044 = vrsqrt.pop %v3042
    %v3045 = vmul.f32 %v3039, %v3043
    %v3046 = vmul.f32 %v3040, %v3044
    %v3048 = vlaneseq
    %v3049 = vshrl.u32 %v3048, 7
    %v3050 = vsub.s32 0, %v3049
    %v3051 = vrot.slane %v2989, %v3050
    %v3052 = vlaneseq
    %v3053 = vshrl.u32 %v3052, 7
    %v3054 = vsub.s32 1, %v3053
    %v3055 = vrot.slane %v2989, %v3054
    %v3058 = vadd.f32 %v3045, %v3051
    %v3059 = vadd.f32 %v3046, %v3055
    %vm3060 = vcmp.gt.f32.partialorder %v3058, 0.0
    %vm3061 = vcmp.gt.f32.partialorder %v3059, 0.0
    %v3062 = vmin.f32 %v3058, 0.0
    %v3063 = vmin.f32 %v3059, 0.0
    %v3064 = vmul.f32 %v3062, 1.442695
    %v3065 = vpow.pop %v3064
    %v3066 = vmul.f32 %v3063, 1.442695
    %v3067 = vpow.pop %v3066
    %v3068 = vsub.f32 %v3065, 1.0
    %v3069 = vsub.f32 %v3067, 1.0
    %v3070 = vsel %vm3060, %v3058, %v3068
    %v3071 = vsel %vm3061, %v3059, %v3069
    %v3072 = vpack.c.bf16 %v3070, %v3070
    %v3073 = vpack.c.bf16 %v3071, %v3071
    %v3074 = vld [vmem:[#allocation3] sm:$0xff]
    %v3075 = vld [vmem:[#allocation3 + $0x8] sm:$0xff]
    %v3076 = vld [vmem:[#allocation3 + $0x10] sm:$0xff]
    %v3077 = vld [vmem:[#allocation3 + $0x18] sm:$0xff]
    %v3078 = vld [vmem:[#allocation3 + $0x20] sm:$0xff]
    %v3079 = vld [vmem:[#allocation3 + $0x28] sm:$0xff]
    %v3080 = vld [vmem:[#allocation3 + $0x30] sm:$0xff]
    %v3081 = vld [vmem:[#allocation3 + $0x38] sm:$0xff]
    %v3082 = vld [vmem:[#allocation3 + $0x40] sm:$0xff]
    %v3083 = vld [vmem:[#allocation3 + $0x48] sm:$0xff]
    %v3084 = vld [vmem:[#allocation3 + $0x50] sm:$0xff]
    %v3085 = vld [vmem:[#allocation3 + $0x58] sm:$0xff]
    %v3086 = vld [vmem:[#allocation3 + $0x60] sm:$0xff]
    %v3087 = vld [vmem:[#allocation3 + $0x68] sm:$0xff]
    %v3088 = vld [vmem:[#allocation3 + $0x70] sm:$0xff]
    %v3089 = vld [vmem:[#allocation3 + $0x78] sm:$0xff]
    %v3090 = vld [vmem:[#allocation3 + $0x80] sm:$0xff]
    %v3091 = vld [vmem:[#allocation3 + $0x88] sm:$0xff]
    %v3092 = vld [vmem:[#allocation3 + $0x90] sm:$0xff]
    %v3093 = vld [vmem:[#allocation3 + $0x98] sm:$0xff]
    %v3094 = vld [vmem:[#allocation3 + $0xa0] sm:$0xff]
    %v3095 = vld [vmem:[#allocation3 + $0xa8] sm:$0xff]
    %v3096 = vld [vmem:[#allocation3 + $0xb0] sm:$0xff]
    %v3097 = vld [vmem:[#allocation3 + $0xb8] sm:$0xff]
    %v3098 = vld [vmem:[#allocation3 + $0xc0] sm:$0xff]
    %v3099 = vld [vmem:[#allocation3 + $0xc8] sm:$0xff]
    %v3100 = vld [vmem:[#allocation3 + $0xd0] sm:$0xff]
    %v3101 = vld [vmem:[#allocation3 + $0xd8] sm:$0xff]
    %v3102 = vld [vmem:[#allocation3 + $0xe0] sm:$0xff]
    %v3103 = vld [vmem:[#allocation3 + $0xe8] sm:$0xff]
    %v3104 = vld [vmem:[#allocation3 + $0xf0] sm:$0xff]
    %v3105 = vld [vmem:[#allocation3 + $0xf8] sm:$0xff]
    %v3138 = vunpack.c.l.b16 %v3074
    %v3139 = vunpack.c.h.b16 %v3074
    %v3140 = vunpack.c.l.b16 %v3075
    %v3141 = vunpack.c.h.b16 %v3075
    %v3142 = vunpack.c.l.b16 %v3076
    %v3143 = vunpack.c.h.b16 %v3076
    %v3144 = vunpack.c.l.b16 %v3077
    %v3145 = vunpack.c.h.b16 %v3077
    %v3146 = vunpack.c.l.b16 %v3078
    %v3147 = vunpack.c.h.b16 %v3078
    %v3148 = vunpack.c.l.b16 %v3079
    %v3149 = vunpack.c.h.b16 %v3079
    %v3150 = vunpack.c.l.b16 %v3080
    %v3151 = vunpack.c.h.b16 %v3080
    %v3152 = vunpack.c.l.b16 %v3081
    %v3153 = vunpack.c.h.b16 %v3081
    %v3154 = vunpack.c.l.b16 %v3082
    %v3155 = vunpack.c.h.b16 %v3082
    %v3156 = vunpack.c.l.b16 %v3083
    %v3157 = vunpack.c.h.b16 %v3083
    %v3158 = vunpack.c.l.b16 %v3084
    %v3159 = vunpack.c.h.b16 %v3084
    %v3160 = vunpack.c.l.b16 %v3085
    %v3161 = vunpack.c.h.b16 %v3085
    %v3162 = vunpack.c.l.b16 %v3086
    %v3163 = vunpack.c.h.b16 %v3086
    %v3164 = vunpack.c.l.b16 %v3087
    %v3165 = vunpack.c.h.b16 %v3087
    %v3166 = vunpack.c.l.b16 %v3088
    %v3167 = vunpack.c.h.b16 %v3088
    %v3168 = vunpack.c.l.b16 %v3089
    %v3169 = vunpack.c.h.b16 %v3089
    %v3170 = vunpack.c.l.b16 %v3090
    %v3171 = vunpack.c.h.b16 %v3090
    %v3172 = vunpack.c.l.b16 %v3091
    %v3173 = vunpack.c.h.b16 %v3091
    %v3174 = vunpack.c.l.b16 %v3092
    %v3175 = vunpack.c.h.b16 %v3092
    %v3176 = vunpack.c.l.b16 %v3093
    %v3177 = vunpack.c.h.b16 %v3093
    %v3178 = vunpack.c.l.b16 %v3094
    %v3179 = vunpack.c.h.b16 %v3094
    %v3180 = vunpack.c.l.b16 %v3095
    %v3181 = vunpack.c.h.b16 %v3095
    %v3182 = vunpack.c.l.b16 %v3096
    %v3183 = vunpack.c.h.b16 %v3096
    %v3184 = vunpack.c.l.b16 %v3097
    %v3185 = vunpack.c.h.b16 %v3097
    %v3186 = vunpack.c.l.b16 %v3098
    %v3187 = vunpack.c.h.b16 %v3098
    %v3188 = vunpack.c.l.b16 %v3099
    %v3189 = vunpack.c.h.b16 %v3099
    %v3190 = vunpack.c.l.b16 %v3100
    %v3191 = vunpack.c.h.b16 %v3100
    %v3192 = vunpack.c.l.b16 %v3101
    %v3193 = vunpack.c.h.b16 %v3101
    %v3194 = vunpack.c.l.b16 %v3102
    %v3195 = vunpack.c.h.b16 %v3102
    %v3196 = vunpack.c.l.b16 %v3103
    %v3197 = vunpack.c.h.b16 %v3103
    %v3198 = vunpack.c.l.b16 %v3104
    %v3199 = vunpack.c.h.b16 %v3104
    %v3200 = vunpack.c.l.b16 %v3105
    %v3201 = vunpack.c.h.b16 %v3105
    %v3202 = vpack.c.b16 %v3140, %v3138
    %v3203 = vpack.c.b16 %v3141, %v3139
    %v3204 = vpack.c.b16 %v3144, %v3142
    %v3205 = vpack.c.b16 %v3145, %v3143
    %v3206 = vpack.c.b16 %v3148, %v3146
    %v3207 = vpack.c.b16 %v3149, %v3147
    %v3208 = vpack.c.b16 %v3152, %v3150
    %v3209 = vpack.c.b16 %v3153, %v3151
    %v3210 = vpack.c.b16 %v3156, %v3154
    %v3211 = vpack.c.b16 %v3157, %v3155
    %v3212 = vpack.c.b16 %v3160, %v3158
    %v3213 = vpack.c.b16 %v3161, %v3159
    %v3214 = vpack.c.b16 %v3164, %v3162
    %v3215 = vpack.c.b16 %v3165, %v3163
    %v3216 = vpack.c.b16 %v3168, %v3166
    %v3217 = vpack.c.b16 %v3169, %v3167
    %v3218 = vpack.c.b16 %v3172, %v3170
    %v3219 = vpack.c.b16 %v3173, %v3171
    %v3220 = vpack.c.b16 %v3176, %v3174
    %v3221 = vpack.c.b16 %v3177, %v3175
    %v3222 = vpack.c.b16 %v3180, %v3178
    %v3223 = vpack.c.b16 %v3181, %v3179
    %v3224 = vpack.c.b16 %v3184, %v3182
    %v3225 = vpack.c.b16 %v3185, %v3183
    %v3226 = vpack.c.b16 %v3188, %v3186
    %v3227 = vpack.c.b16 %v3189, %v3187
    %v3228 = vpack.c.b16 %v3192, %v3190
    %v3229 = vpack.c.b16 %v3193, %v3191
    %v3230 = vpack.c.b16 %v3196, %v3194
    %v3231 = vpack.c.b16 %v3197, %v3195
    %v3232 = vpack.c.b16 %v3200, %v3198
    %v3233 = vpack.c.b16 %v3201, %v3199
    %3266 = vmatprep.subr.bf16.mxu0 %v3203
    %3267 = vmatpush1.bf16.msra.mxu0 %v3202
    %3268 = vmatprep.subr.bf16.mxu0 %v3205
    %3269 = vmatpush1.bf16.msra.mxu0 %v3204
    %3270 = vmatprep.subr.bf16.mxu0 %v3207
    %3271 = vmatpush1.bf16.msra.mxu0 %v3206
    %3272 = vmatprep.subr.bf16.mxu0 %v3209
    %3273 = vmatpush1.bf16.msra.mxu0 %v3208
    %3274 = vmatprep.subr.bf16.mxu0 %v3211
    %3275 = vmatpush1.bf16.msra.mxu0 %v3210
    %3276 = vmatprep.subr.bf16.mxu0 %v3213
    %3277 = vmatpush1.bf16.msra.mxu0 %v3212
    %3278 = vmatprep.subr.bf16.mxu0 %v3215
    %3279 = vmatpush1.bf16.msra.mxu0 %v3214
    %3280 = vmatprep.subr.bf16.mxu0 %v3217
    %3281 = vmatpush1.bf16.msra.mxu0 %v3216
    %3282 = vmatprep.subr.bf16.mxu0 %v3219
    %3283 = vmatpush1.bf16.msra.mxu0 %v3218
    %3284 = vmatprep.subr.bf16.mxu0 %v3221
    %3285 = vmatpush1.bf16.msra.mxu0 %v3220
    %3286 = vmatprep.subr.bf16.mxu0 %v3223
    %3287 = vmatpush1.bf16.msra.mxu0 %v3222
    %3288 = vmatprep.subr.bf16.mxu0 %v3225
    %3289 = vmatpush1.bf16.msra.mxu0 %v3224
    %3290 = vmatprep.subr.bf16.mxu0 %v3227
    %3291 = vmatpush1.bf16.msra.mxu0 %v3226
    %3292 = vmatprep.subr.bf16.mxu0 %v3229
    %3293 = vmatpush1.bf16.msra.mxu0 %v3228
    %3294 = vmatprep.subr.bf16.mxu0 %v3231
    %3295 = vmatpush1.bf16.msra.mxu0 %v3230
    %3296 = vmatprep.subr.bf16.mxu0 %v3233
    %3297 = vmatpush1.bf16.msra.mxu0 %v3232
    %3298 = vmatprep.mubr.bf16.mxu0 %v3073
    %3299 = vmatmul.mubr.bf16.gmra.mrb[0].mxu0 %v3072
    %v3300 = vpop.f32.mrb[0].mxu0
    %v3301 = vadd.f32 0.0, %v3300
    %v3302 = vpop.f32.mrb[0].mxu0
    %v3303 = vadd.f32 0.0, %v3302
    %v3304 = vpop.f32.mrb[0].mxu0
    %v3305 = vpop.f32.mrb[0].mxu0
    %3306 = vdwg.mxu0
    %v3307 = vld [vmem:[%s2 + $0x8] sm:$0x3]
    %v3308 = vld [vmem:[%s2 + $0xa] sm:$0x3]
    %v3309 = vrot.slane %v3301, 4
    %v3310 = vadd.f32 %v3301, %v3309
    %v3311 = vrot.slane %v3310, 2
    %v3312 = vadd.f32 %v3310, %v3311
    %v3313 = vrot.slane %v3312, 1
    %v3314 = vadd.f32 %v3312, %v3313
    %v3315 = vrot.slane %v3303, 4
    %v3316 = vadd.f32 %v3303, %v3315
    %v3317 = vrot.slane %v3316, 2
    %v3318 = vadd.f32 %v3316, %v3317
    %v3319 = vrot.slane %v3318, 1
    %v3320 = vadd.f32 %v3318, %v3319
    %v3321 = vmul.f32 %v3314, %v2682
    %v3322 = vmul.f32 %v3320, %v2682
    %v3323 = vmul.f32 %v3301, %v3301
    %v3324 = vmul.f32 %v3303, %v3303
    %v3325 = vrot.slane %v3323, 4
    %v3326 = vadd.f32 %v3323, %v3325
    %v3327 = vrot.slane %v3326, 2
    %v3328 = vadd.f32 %v3326, %v3327
    %v3329 = vrot.slane %v3328, 1
    %v3330 = vadd.f32 %v3328, %v3329
    %v3331 = vrot.slane %v3324, 4
    %v3332 = vadd.f32 %v3324, %v3331
    %v3333 = vrot.slane %v3332, 2
    %v3334 = vadd.f32 %v3332, %v3333
    %v3335 = vrot.slane %v3334, 1
    %v3336 = vadd.f32 %v3334, %v3335
    %v3337 = vmul.f32 %v3330, %v2682
    %v3338 = vmul.f32 %v3336, %v2682
    %v3339 = vmul.f32 %v3321, %v3321
    %v3340 = vmul.f32 %v3322, %v3322
    %v3341 = vsub.f32 %v3337, %v3339
    %v3342 = vsub.f32 %v3338, %v3340
    %v3343 = vmax.f32 %v3341, 0.0
    %v3344 = vmax.f32 %v3342, 0.0
    %v3345 = vsub.f32 %v3301, %v3321
    %v3346 = vsub.f32 %v3303, %v3322
    %v3348 = vlaneseq
    %v3349 = vshrl.u32 %v3348, 7
    %v3350 = vsub.s32 0, %v3349
    %v3351 = vrot.slane %v3307, %v3350
    %v3352 = vlaneseq
    %v3353 = vshrl.u32 %v3352, 7
    %v3354 = vsub.s32 1, %v3353
    %v3355 = vrot.slane %v3307, %v3354
    %v3358 = vmul.f32 %v3351, %v3345
    %v3359 = vmul.f32 %v3355, %v3346
    %v3360 = vadd.f32 %v3343, 1e-05
    %v3361 = vadd.f32 %v3344, 1e-05
    %v3362 = vrsqrt.pop %v3360
    %v3363 = vrsqrt.pop %v3361
    %v3364 = vmul.f32 %v3358, %v3362
    %v3365 = vmul.f32 %v3359, %v3363
    %v3367 = vlaneseq
    %v3368 = vshrl.u32 %v3367, 7
    %v3369 = vsub.s32 0, %v3368
    %v3370 = vrot.slane %v3308, %v3369
    %v3371 = vlaneseq
    %v3372 = vshrl.u32 %v3371, 7
    %v3373 = vsub.s32 1, %v3372
    %v3374 = vrot.slane %v3308, %v3373
    %v3377 = vadd.f32 %v3364, %v3370
    %v3378 = vadd.f32 %v3365, %v3374
    %vm3379 = vcmp.gt.f32.partialorder %v3377, 0.0
    %vm3380 = vcmp.gt.f32.partialorder %v3378, 0.0
    %v3381 = vmin.f32 %v3377, 0.0
    %v3382 = vmin.f32 %v3378, 0.0
    %v3383 = vmul.f32 %v3381, 1.442695
    %v3384 = vpow.pop %v3383
    %v3385 = vmul.f32 %v3382, 1.442695
    %v3386 = vpow.pop %v3385
    %v3387 = vsub.f32 %v3384, 1.0
    %v3388 = vsub.f32 %v3386, 1.0
    %v3389 = vsel %vm3379, %v3377, %v3387
    %v3390 = vsel %vm3380, %v3378, %v3388
    %v3391 = vpack.c.bf16 %v3389, %v3389
    %v3392 = vpack.c.bf16 %v3390, %v3390
    %v3393 = vld [vmem:[#allocation6] sm:$0xff]
    %v3394 = vld [vmem:[#allocation6 + $0x8] sm:$0xff]
    %v3395 = vld [vmem:[#allocation6 + $0x10] sm:$0xff]
    %v3396 = vld [vmem:[#allocation6 + $0x18] sm:$0xff]
    %v3397 = vld [vmem:[#allocation6 + $0x20] sm:$0xff]
    %v3398 = vld [vmem:[#allocation6 + $0x28] sm:$0xff]
    %v3399 = vld [vmem:[#allocation6 + $0x30] sm:$0xff]
    %v3400 = vld [vmem:[#allocation6 + $0x38] sm:$0xff]
    %v3401 = vld [vmem:[#allocation6 + $0x40] sm:$0xff]
    %v3402 = vld [vmem:[#allocation6 + $0x48] sm:$0xff]
    %v3403 = vld [vmem:[#allocation6 + $0x50] sm:$0xff]
    %v3404 = vld [vmem:[#allocation6 + $0x58] sm:$0xff]
    %v3405 = vld [vmem:[#allocation6 + $0x60] sm:$0xff]
    %v3406 = vld [vmem:[#allocation6 + $0x68] sm:$0xff]
    %v3407 = vld [vmem:[#allocation6 + $0x70] sm:$0xff]
    %v3408 = vld [vmem:[#allocation6 + $0x78] sm:$0xff]
    %v3409 = vld [vmem:[#allocation6 + $0x80] sm:$0xff]
    %v3410 = vld [vmem:[#allocation6 + $0x88] sm:$0xff]
    %v3411 = vld [vmem:[#allocation6 + $0x90] sm:$0xff]
    %v3412 = vld [vmem:[#allocation6 + $0x98] sm:$0xff]
    %v3413 = vld [vmem:[#allocation6 + $0xa0] sm:$0xff]
    %v3414 = vld [vmem:[#allocation6 + $0xa8] sm:$0xff]
    %v3415 = vld [vmem:[#allocation6 + $0xb0] sm:$0xff]
    %v3416 = vld [vmem:[#allocation6 + $0xb8] sm:$0xff]
    %v3417 = vld [vmem:[#allocation6 + $0xc0] sm:$0xff]
    %v3418 = vld [vmem:[#allocation6 + $0xc8] sm:$0xff]
    %v3419 = vld [vmem:[#allocation6 + $0xd0] sm:$0xff]
    %v3420 = vld [vmem:[#allocation6 + $0xd8] sm:$0xff]
    %v3421 = vld [vmem:[#allocation6 + $0xe0] sm:$0xff]
    %v3422 = vld [vmem:[#allocation6 + $0xe8] sm:$0xff]
    %v3423 = vld [vmem:[#allocation6 + $0xf0] sm:$0xff]
    %v3424 = vld [vmem:[#allocation6 + $0xf8] sm:$0xff]
    %v3425 = vld [vmem:[#allocation6 + $0x100] sm:$0xff]
    %v3426 = vld [vmem:[#allocation6 + $0x108] sm:$0xff]
    %v3427 = vld [vmem:[#allocation6 + $0x110] sm:$0xff]
    %v3428 = vld [vmem:[#allocation6 + $0x118] sm:$0xff]
    %v3429 = vld [vmem:[#allocation6 + $0x120] sm:$0xff]
    %v3430 = vld [vmem:[#allocation6 + $0x128] sm:$0xff]
    %v3431 = vld [vmem:[#allocation6 + $0x130] sm:$0xff]
    %v3432 = vld [vmem:[#allocation6 + $0x138] sm:$0xff]
    %v3433 = vld [vmem:[#allocation6 + $0x140] sm:$0xff]
    %v3434 = vld [vmem:[#allocation6 + $0x148] sm:$0xff]
    %v3435 = vld [vmem:[#allocation6 + $0x150] sm:$0xff]
    %v3436 = vld [vmem:[#allocation6 + $0x158] sm:$0xff]
    %v3437 = vld [vmem:[#allocation6 + $0x160] sm:$0xff]
    %v3438 = vld [vmem:[#allocation6 + $0x168] sm:$0xff]
    %v3439 = vld [vmem:[#allocation6 + $0x170] sm:$0xff]
    %v3440 = vld [vmem:[#allocation6 + $0x178] sm:$0xff]
    %v3441 = vld [vmem:[#allocation6 + $0x180] sm:$0xff]
    %v3442 = vld [vmem:[#allocation6 + $0x188] sm:$0xff]
    %v3443 = vld [vmem:[#allocation6 + $0x190] sm:$0xff]
    %v3444 = vld [vmem:[#allocation6 + $0x198] sm:$0xff]
    %v3445 = vld [vmem:[#allocation6 + $0x1a0] sm:$0xff]
    %v3446 = vld [vmem:[#allocation6 + $0x1a8] sm:$0xff]
    %v3447 = vld [vmem:[#allocation6 + $0x1b0] sm:$0xff]
    %v3448 = vld [vmem:[#allocation6 + $0x1b8] sm:$0xff]
    %v3449 = vld [vmem:[#allocation6 + $0x1c0] sm:$0xff]
    %v3450 = vld [vmem:[#allocation6 + $0x1c8] sm:$0xff]
    %v3451 = vld [vmem:[#allocation6 + $0x1d0] sm:$0xff]
    %v3452 = vld [vmem:[#allocation6 + $0x1d8] sm:$0xff]
    %v3453 = vld [vmem:[#allocation6 + $0x1e0] sm:$0xff]
    %v3454 = vld [vmem:[#allocation6 + $0x1e8] sm:$0xff]
    %v3455 = vld [vmem:[#allocation6 + $0x1f0] sm:$0xff]
    %v3456 = vld [vmem:[#allocation6 + $0x1f8] sm:$0xff]
    %v3521 = vunpack.c.l.b16 %v3393
    %v3522 = vunpack.c.h.b16 %v3393
    %v3523 = vunpack.c.l.b16 %v3394
    %v3524 = vunpack.c.h.b16 %v3394
    %v3525 = vunpack.c.l.b16 %v3395
    %v3526 = vunpack.c.h.b16 %v3395
    %v3527 = vunpack.c.l.b16 %v3396
    %v3528 = vunpack.c.h.b16 %v3396
    %v3529 = vunpack.c.l.b16 %v3397
    %v3530 = vunpack.c.h.b16 %v3397
    %v3531 = vunpack.c.l.b16 %v3398
    %v3532 = vunpack.c.h.b16 %v3398
    %v3533 = vunpack.c.l.b16 %v3399
    %v3534 = vunpack.c.h.b16 %v3399
    %v3535 = vunpack.c.l.b16 %v3400
    %v3536 = vunpack.c.h.b16 %v3400
    %v3537 = vunpack.c.l.b16 %v3401
    %v3538 = vunpack.c.h.b16 %v3401
    %v3539 = vunpack.c.l.b16 %v3402
    %v3540 = vunpack.c.h.b16 %v3402
    %v3541 = vunpack.c.l.b16 %v3403
    %v3542 = vunpack.c.h.b16 %v3403
    %v3543 = vunpack.c.l.b16 %v3404
    %v3544 = vunpack.c.h.b16 %v3404
    %v3545 = vunpack.c.l.b16 %v3405
    %v3546 = vunpack.c.h.b16 %v3405
    %v3547 = vunpack.c.l.b16 %v3406
    %v3548 = vunpack.c.h.b16 %v3406
    %v3549 = vunpack.c.l.b16 %v3407
    %v3550 = vunpack.c.h.b16 %v3407
    %v3551 = vunpack.c.l.b16 %v3408
    %v3552 = vunpack.c.h.b16 %v3408
    %v3553 = vunpack.c.l.b16 %v3409
    %v3554 = vunpack.c.h.b16 %v3409
    %v3555 = vunpack.c.l.b16 %v3410
    %v3556 = vunpack.c.h.b16 %v3410
    %v3557 = vunpack.c.l.b16 %v3411
    %v3558 = vunpack.c.h.b16 %v3411
    %v3559 = vunpack.c.l.b16 %v3412
    %v3560 = vunpack.c.h.b16 %v3412
    %v3561 = vunpack.c.l.b16 %v3413
    %v3562 = vunpack.c.h.b16 %v3413
    %v3563 = vunpack.c.l.b16 %v3414
    %v3564 = vunpack.c.h.b16 %v3414
    %v3565 = vunpack.c.l.b16 %v3415
    %v3566 = vunpack.c.h.b16 %v3415
    %v3567 = vunpack.c.l.b16 %v3416
    %v3568 = vunpack.c.h.b16 %v3416
    %v3569 = vunpack.c.l.b16 %v3417
    %v3570 = vunpack.c.h.b16 %v3417
    %v3571 = vunpack.c.l.b16 %v3418
    %v3572 = vunpack.c.h.b16 %v3418
    %v3573 = vunpack.c.l.b16 %v3419
    %v3574 = vunpack.c.h.b16 %v3419
    %v3575 = vunpack.c.l.b16 %v3420
    %v3576 = vunpack.c.h.b16 %v3420
    %v3577 = vunpack.c.l.b16 %v3421
    %v3578 = vunpack.c.h.b16 %v3421
    %v3579 = vunpack.c.l.b16 %v3422
    %v3580 = vunpack.c.h.b16 %v3422
    %v3581 = vunpack.c.l.b16 %v3423
    %v3582 = vunpack.c.h.b16 %v3423
    %v3583 = vunpack.c.l.b16 %v3424
    %v3584 = vunpack.c.h.b16 %v3424
    %v3585 = vunpack.c.l.b16 %v3425
    %v3586 = vunpack.c.h.b16 %v3425
    %v3587 = vunpack.c.l.b16 %v3426
    %v3588 = vunpack.c.h.b16 %v3426
    %v3589 = vunpack.c.l.b16 %v3427
    %v3590 = vunpack.c.h.b16 %v3427
    %v3591 = vunpack.c.l.b16 %v3428
    %v3592 = vunpack.c.h.b16 %v3428
    %v3593 = vunpack.c.l.b16 %v3429
    %v3594 = vunpack.c.h.b16 %v3429
    %v3595 = vunpack.c.l.b16 %v3430
    %v3596 = vunpack.c.h.b16 %v3430
    %v3597 = vunpack.c.l.b16 %v3431
    %v3598 = vunpack.c.h.b16 %v3431
    %v3599 = vunpack.c.l.b16 %v3432
    %v3600 = vunpack.c.h.b16 %v3432
    %v3601 = vunpack.c.l.b16 %v3433
    %v3602 = vunpack.c.h.b16 %v3433
    %v3603 = vunpack.c.l.b16 %v3434
    %v3604 = vunpack.c.h.b16 %v3434
    %v3605 = vunpack.c.l.b16 %v3435
    %v3606 = vunpack.c.h.b16 %v3435
    %v3607 = vunpack.c.l.b16 %v3436
    %v3608 = vunpack.c.h.b16 %v3436
    %v3609 = vunpack.c.l.b16 %v3437
    %v3610 = vunpack.c.h.b16 %v3437
    %v3611 = vunpack.c.l.b16 %v3438
    %v3612 = vunpack.c.h.b16 %v3438
    %v3613 = vunpack.c.l.b16 %v3439
    %v3614 = vunpack.c.h.b16 %v3439
    %v3615 = vunpack.c.l.b16 %v3440
    %v3616 = vunpack.c.h.b16 %v3440
    %v3617 = vunpack.c.l.b16 %v3441
    %v3618 = vunpack.c.h.b16 %v3441
    %v3619 = vunpack.c.l.b16 %v3442
    %v3620 = vunpack.c.h.b16 %v3442
    %v3621 = vunpack.c.l.b16 %v3443
    %v3622 = vunpack.c.h.b16 %v3443
    %v3623 = vunpack.c.l.b16 %v3444
    %v3624 = vunpack.c.h.b16 %v3444
    %v3625 = vunpack.c.l.b16 %v3445
    %v3626 = vunpack.c.h.b16 %v3445
    %v3627 = vunpack.c.l.b16 %v3446
    %v3628 = vunpack.c.h.b16 %v3446
    %v3629 = vunpack.c.l.b16 %v3447
    %v3630 = vunpack.c.h.b16 %v3447
    %v3631 = vunpack.c.l.b16 %v3448
    %v3632 = vunpack.c.h.b16 %v3448
    %v3633 = vunpack.c.l.b16 %v3449
    %v3634 = vunpack.c.h.b16 %v3449
    %v3635 = vunpack.c.l.b16 %v3450
    %v3636 = vunpack.c.h.b16 %v3450
    %v3637 = vunpack.c.l.b16 %v3451
    %v3638 = vunpack.c.h.b16 %v3451
    %v3639 = vunpack.c.l.b16 %v3452
    %v3640 = vunpack.c.h.b16 %v3452
    %v3641 = vunpack.c.l.b16 %v3453
    %v3642 = vunpack.c.h.b16 %v3453
    %v3643 = vunpack.c.l.b16 %v3454
    %v3644 = vunpack.c.h.b16 %v3454
    %v3645 = vunpack.c.l.b16 %v3455
    %v3646 = vunpack.c.h.b16 %v3455
    %v3647 = vunpack.c.l.b16 %v3456
    %v3648 = vunpack.c.h.b16 %v3456
    %v3649 = vpack.c.b16 %v3525, %v3521
    %v3650 = vpack.c.b16 %v3526, %v3522
    %v3651 = vpack.c.b16 %v3527, %v3523
    %v3652 = vpack.c.b16 %v3528, %v3524
    %v3653 = vpack.c.b16 %v3533, %v3529
    %v3654 = vpack.c.b16 %v3534, %v3530
    %v3655 = vpack.c.b16 %v3535, %v3531
    %v3656 = vpack.c.b16 %v3536, %v3532
    %v3657 = vpack.c.b16 %v3541, %v3537
    %v3658 = vpack.c.b16 %v3542, %v3538
    %v3659 = vpack.c.b16 %v3543, %v3539
    %v3660 = vpack.c.b16 %v3544, %v3540
    %v3661 = vpack.c.b16 %v3549, %v3545
    %v3662 = vpack.c.b16 %v3550, %v3546
    %v3663 = vpack.c.b16 %v3551, %v3547
    %v3664 = vpack.c.b16 %v3552, %v3548
    %v3665 = vpack.c.b16 %v3557, %v3553
    %v3666 = vpack.c.b16 %v3558, %v3554
    %v3667 = vpack.c.b16 %v3559, %v3555
    %v3668 = vpack.c.b16 %v3560, %v3556
    %v3669 = vpack.c.b16 %v3565, %v3561
    %v3670 = vpack.c.b16 %v3566, %v3562
    %v3671 = vpack.c.b16 %v3567, %v3563
    %v3672 = vpack.c.b16 %v3568, %v3564
    %v3673 = vpack.c.b16 %v3573, %v3569
    %v3674 = vpack.c.b16 %v3574, %v3570
    %v3675 = vpack.c.b16 %v3575, %v3571
    %v3676 = vpack.c.b16 %v3576, %v3572
    %v3677 = vpack.c.b16 %v3581, %v3577
    %v3678 = vpack.c.b16 %v3582, %v3578
    %v3679 = vpack.c.b16 %v3583, %v3579
    %v3680 = vpack.c.b16 %v3584, %v3580
    %v3681 = vpack.c.b16 %v3589, %v3585
    %v3682 = vpack.c.b16 %v3590, %v3586
    %v3683 = vpack.c.b16 %v3591, %v3587
    %v3684 = vpack.c.b16 %v3592, %v3588
    %v3685 = vpack.c.b16 %v3597, %v3593
    %v3686 = vpack.c.b16 %v3598, %v3594
    %v3687 = vpack.c.b16 %v3599, %v3595
    %v3688 = vpack.c.b16 %v3600, %v3596
    %v3689 = vpack.c.b16 %v3605, %v3601
    %v3690 = vpack.c.b16 %v3606, %v3602
    %v3691 = vpack.c.b16 %v3607, %v3603
    %v3692 = vpack.c.b16 %v3608, %v3604
    %v3693 = vpack.c.b16 %v3613, %v3609
    %v3694 = vpack.c.b16 %v3614, %v3610
    %v3695 = vpack.c.b16 %v3615, %v3611
    %v3696 = vpack.c.b16 %v3616, %v3612
    %v3697 = vpack.c.b16 %v3621, %v3617
    %v3698 = vpack.c.b16 %v3622, %v3618
    %v3699 = vpack.c.b16 %v3623, %v3619
    %v3700 = vpack.c.b16 %v3624, %v3620
    %v3701 = vpack.c.b16 %v3629, %v3625
    %v3702 = vpack.c.b16 %v3630, %v3626
    %v3703 = vpack.c.b16 %v3631, %v3627
    %v3704 = vpack.c.b16 %v3632, %v3628
    %v3705 = vpack.c.b16 %v3637, %v3633
    %v3706 = vpack.c.b16 %v3638, %v3634
    %v3707 = vpack.c.b16 %v3639, %v3635
    %v3708 = vpack.c.b16 %v3640, %v3636
    %v3709 = vpack.c.b16 %v3645, %v3641
    %v3710 = vpack.c.b16 %v3646, %v3642
    %v3711 = vpack.c.b16 %v3647, %v3643
    %v3712 = vpack.c.b16 %v3648, %v3644
    %3777 = vmatprep.subr.bf16.mxu0 %v3650
    %3778 = vmatpush1.bf16.msra.mxu0 %v3649
    %3779 = vmatprep.subr.bf16.mxu0 %v3654
    %3780 = vmatpush1.bf16.msra.mxu0 %v3653
    %3781 = vmatprep.subr.bf16.mxu0 %v3658
    %3782 = vmatpush1.bf16.msra.mxu0 %v3657
    %3783 = vmatprep.subr.bf16.mxu0 %v3662
    %3784 = vmatpush1.bf16.msra.mxu0 %v3661
    %3785 = vmatprep.subr.bf16.mxu0 %v3666
    %3786 = vmatpush1.bf16.msra.mxu0 %v3665
    %3787 = vmatprep.subr.bf16.mxu0 %v3670
    %3788 = vmatpush1.bf16.msra.mxu0 %v3669
    %3789 = vmatprep.subr.bf16.mxu0 %v3674
    %3790 = vmatpush1.bf16.msra.mxu0 %v3673
    %3791 = vmatprep.subr.bf16.mxu0 %v3678
    %3792 = vmatpush1.bf16.msra.mxu0 %v3677
    %3793 = vmatprep.subr.bf16.mxu0 %v3682
    %3794 = vmatpush1.bf16.msra.mxu0 %v3681
    %3795 = vmatprep.subr.bf16.mxu0 %v3686
    %3796 = vmatpush1.bf16.msra.mxu0 %v3685
    %3797 = vmatprep.subr.bf16.mxu0 %v3690
    %3798 = vmatpush1.bf16.msra.mxu0 %v3689
    %3799 = vmatprep.subr.bf16.mxu0 %v3694
    %3800 = vmatpush1.bf16.msra.mxu0 %v3693
    %3801 = vmatprep.subr.bf16.mxu0 %v3698
    %3802 = vmatpush1.bf16.msra.mxu0 %v3697
    %3803 = vmatprep.subr.bf16.mxu0 %v3702
    %3804 = vmatpush1.bf16.msra.mxu0 %v3701
    %3805 = vmatprep.subr.bf16.mxu0 %v3706
    %3806 = vmatpush1.bf16.msra.mxu0 %v3705
    %3807 = vmatprep.subr.bf16.mxu0 %v3710
    %3808 = vmatpush1.bf16.msra.mxu0 %v3709
    %3809 = vmatprep.mubr.bf16.mxu0 %v3392
    %3810 = vmatmul.mubr.bf16.gmra.mrb[0].mxu0 %v3391
    %v3811 = vpop.f32.mrb[0].mxu0
    %v3812 = vadd.f32 0.0, %v3811
    %v3813 = vpop.f32.mrb[0].mxu0
    %v3814 = vadd.f32 0.0, %v3813
    %v3815 = vpop.f32.mrb[0].mxu0
    %v3816 = vpop.f32.mrb[0].mxu0
    %3817 = vdwg.mxu0
    %3818 = vmatprep.subr.bf16.mxu0 %v3652
    %3819 = vmatpush1.bf16.msra.mxu0 %v3651
    %3820 = vmatprep.subr.bf16.mxu0 %v3656
    %3821 = vmatpush1.bf16.msra.mxu0 %v3655
    %3822 = vmatprep.subr.bf16.mxu0 %v3660
    %3823 = vmatpush1.bf16.msra.mxu0 %v3659
    %3824 = vmatprep.subr.bf16.mxu0 %v3664
    %3825 = vmatpush1.bf16.msra.mxu0 %v3663
    %3826 = vmatprep.subr.bf16.mxu0 %v3668
    %3827 = vmatpush1.bf16.msra.mxu0 %v3667
    %3828 = vmatprep.subr.bf16.mxu0 %v3672
    %3829 = vmatpush1.bf16.msra.mxu0 %v3671
    %3830 = vmatprep.subr.bf16.mxu0 %v3676
    %3831 = vmatpush1.bf16.msra.mxu0 %v3675
    %3832 = vmatprep.subr.bf16.mxu0 %v3680
    %3833 = vmatpush1.bf16.msra.mxu0 %v3679
    %3834 = vmatprep.subr.bf16.mxu0 %v3684
    %3835 = vmatpush1.bf16.msra.mxu0 %v3683
    %3836 = vmatprep.subr.bf16.mxu0 %v3688
    %3837 = vmatpush1.bf16.msra.mxu0 %v3687
    %3838 = vmatprep.subr.bf16.mxu0 %v3692
    %3839 = vmatpush1.bf16.msra.mxu0 %v3691
    %3840 = vmatprep.subr.bf16.mxu0 %v3696
    %3841 = vmatpush1.bf16.msra.mxu0 %v3695
    %3842 = vmatprep.subr.bf16.mxu0 %v3700
    %3843 = vmatpush1.bf16.msra.mxu0 %v3699
    %3844 = vmatprep.subr.bf16.mxu0 %v3704
    %3845 = vmatpush1.bf16.msra.mxu0 %v3703
    %3846 = vmatprep.subr.bf16.mxu0 %v3708
    %3847 = vmatpush1.bf16.msra.mxu0 %v3707
    %3848 = vmatprep.subr.bf16.mxu0 %v3712
    %3849 = vmatpush1.bf16.msra.mxu0 %v3711
    %3850 = vmatprep.mubr.bf16.mxu0 %v3392
    %3851 = vmatmul.mubr.bf16.gmra.mrb[0].mxu0 %v3391
    %v3852 = vpop.f32.mrb[0].mxu0
    %v3853 = vadd.f32 0.0, %v3852
    %v3854 = vpop.f32.mrb[0].mxu0
    %v3855 = vadd.f32 0.0, %v3854
    %v3856 = vpop.f32.mrb[0].mxu0
    %v3857 = vpop.f32.mrb[0].mxu0
    %3858 = vdwg.mxu0
    %v3859 = vpack.c.bf16 %v3812, %v3812
    %v3860 = vpack.c.bf16 %v3814, %v3814
    %v3861 = vpack.c.bf16 %v3853, %v3853
    %v3862 = vpack.c.bf16 %v3855, %v3855
    %v3863 = vld [vmem:[%s7] sm:$0xf]
    %v3864 = vld [vmem:[%s7 + $0x4] sm:$0xf]
    %v3865 = vld [vmem:[%s7 + $0x8] sm:$0xf]
    %v3866 = vld [vmem:[%s7 + $0xc] sm:$0xf]
    %v3867 = vld [vmem:[%s7 + $0x10] sm:$0xf]
    %v3868 = vld [vmem:[%s7 + $0x14] sm:$0xf]
    %v3869 = vld [vmem:[%s7 + $0x18] sm:$0xf]
    %v3870 = vld [vmem:[%s7 + $0x1c] sm:$0xf]
    %v3871 = vld [vmem:[%s7 + $0x20] sm:$0xf]
    %v3872 = vld [vmem:[%s7 + $0x24] sm:$0xf]
    %v3873 = vld [vmem:[%s7 + $0x28] sm:$0xf]
    %v3874 = vld [vmem:[%s7 + $0x2c] sm:$0xf]
    %v3875 = vld [vmem:[%s7 + $0x30] sm:$0xf]
    %v3876 = vld [vmem:[%s7 + $0x34] sm:$0xf]
    %v3877 = vld [vmem:[%s7 + $0x38] sm:$0xf]
    %v3878 = vld [vmem:[%s7 + $0x3c] sm:$0xf]
    %v3879 = vld [vmem:[%s7 + $0x40] sm:$0xf]
    %v3880 = vld [vmem:[%s7 + $0x44] sm:$0xf]
    %v3881 = vld [vmem:[%s7 + $0x48] sm:$0xf]
    %v3882 = vld [vmem:[%s7 + $0x4c] sm:$0xf]
    %v3883 = vld [vmem:[%s7 + $0x50] sm:$0xf]
    %v3884 = vld [vmem:[%s7 + $0x54] sm:$0xf]
    %v3885 = vld [vmem:[%s7 + $0x58] sm:$0xf]
    %v3886 = vld [vmem:[%s7 + $0x5c] sm:$0xf]
    %v3887 = vld [vmem:[%s7 + $0x60] sm:$0xf]
    %v3888 = vld [vmem:[%s7 + $0x64] sm:$0xf]
    %v3889 = vld [vmem:[%s7 + $0x68] sm:$0xf]
    %v3890 = vld [vmem:[%s7 + $0x6c] sm:$0xf]
    %v3891 = vld [vmem:[%s7 + $0x70] sm:$0xf]
    %v3892 = vld [vmem:[%s7 + $0x74] sm:$0xf]
    %v3893 = vld [vmem:[%s7 + $0x78] sm:$0xf]
    %v3894 = vld [vmem:[%s7 + $0x7c] sm:$0xf]
    %v3895 = vld [vmem:[%s7 + $0x80] sm:$0xf]
    %v3896 = vld [vmem:[%s7 + $0x84] sm:$0xf]
    %v3897 = vld [vmem:[%s7 + $0x88] sm:$0xf]
    %v3898 = vld [vmem:[%s7 + $0x8c] sm:$0xf]
    %v3899 = vld [vmem:[%s7 + $0x90] sm:$0xf]
    %v3900 = vld [vmem:[%s7 + $0x94] sm:$0xf]
    %v3901 = vld [vmem:[%s7 + $0x98] sm:$0xf]
    %v3902 = vld [vmem:[%s7 + $0x9c] sm:$0xf]
    %v3903 = vld [vmem:[%s7 + $0xa0] sm:$0xf]
    %v3904 = vld [vmem:[%s7 + $0xa4] sm:$0xf]
    %v3905 = vld [vmem:[%s7 + $0xa8] sm:$0xf]
    %v3906 = vld [vmem:[%s7 + $0xac] sm:$0xf]
    %v3907 = vld [vmem:[%s7 + $0xb0] sm:$0xf]
    %v3908 = vld [vmem:[%s7 + $0xb4] sm:$0xf]
    %v3909 = vld [vmem:[%s7 + $0xb8] sm:$0xf]
    %v3910 = vld [vmem:[%s7 + $0xbc] sm:$0xf]
    %v3911 = vld [vmem:[%s7 + $0xc0] sm:$0xf]
    %v3912 = vld [vmem:[%s7 + $0xc4] sm:$0xf]
    %v3913 = vld [vmem:[%s7 + $0xc8] sm:$0xf]
    %v3914 = vld [vmem:[%s7 + $0xcc] sm:$0xf]
    %v3915 = vld [vmem:[%s7 + $0xd0] sm:$0xf]
    %v3916 = vld [vmem:[%s7 + $0xd4] sm:$0xf]
    %v3917 = vld [vmem:[%s7 + $0xd8] sm:$0xf]
    %v3918 = vld [vmem:[%s7 + $0xdc] sm:$0xf]
    %v3919 = vld [vmem:[%s7 + $0xe0] sm:$0xf]
    %v3920 = vld [vmem:[%s7 + $0xe4] sm:$0xf]
    %v3921 = vld [vmem:[%s7 + $0xe8] sm:$0xf]
    %v3922 = vld [vmem:[%s7 + $0xec] sm:$0xf]
    %v3923 = vld [vmem:[%s7 + $0xf0] sm:$0xf]
    %v3924 = vld [vmem:[%s7 + $0xf4] sm:$0xf]
    %v3925 = vld [vmem:[%s7 + $0xf8] sm:$0xf]
    %v3926 = vld [vmem:[%s7 + $0xfc] sm:$0xf]
    %v3991 = vunpack.c.l.b16 %v3863
    %v3992 = vunpack.c.l.b16 %v3864
    %v3993 = vunpack.c.l.b16 %v3865
    %v3994 = vunpack.c.l.b16 %v3866
    %v3995 = vunpack.c.l.b16 %v3867
    %v3996 = vunpack.c.l.b16 %v3868
    %v3997 = vunpack.c.l.b16 %v3869
    %v3998 = vunpack.c.l.b16 %v3870
    %v3999 = vunpack.c.l.b16 %v3871
    %v4000 = vunpack.c.l.b16 %v3872
    %v4001 = vunpack.c.l.b16 %v3873
    %v4002 = vunpack.c.l.b16 %v3874
    %v4003 = vunpack.c.l.b16 %v3875
    %v4004 = vunpack.c.l.b16 %v3876
    %v4005 = vunpack.c.l.b16 %v3877
    %v4006 = vunpack.c.l.b16 %v3878
    %v4007 = vunpack.c.l.b16 %v3879
    %v4008 = vunpack.c.l.b16 %v3880
    %v4009 = vunpack.c.l.b16 %v3881
    %v4010 = vunpack.c.l.b16 %v3882
    %v4011 = vunpack.c.l.b16 %v3883
    %v4012 = vunpack.c.l.b16 %v3884
    %v4013 = vunpack.c.l.b16 %v3885
    %v4014 = vunpack.c.l.b16 %v3886
    %v4015 = vunpack.c.l.b16 %v3887
    %v4016 = vunpack.c.l.b16 %v3888
    %v4017 = vunpack.c.l.b16 %v3889
    %v4018 = vunpack.c.l.b16 %v3890
    %v4019 = vunpack.c.l.b16 %v3891
    %v4020 = vunpack.c.l.b16 %v3892
    %v4021 = vunpack.c.l.b16 %v3893
    %v4022 = vunpack.c.l.b16 %v3894
    %v4023 = vunpack.c.l.b16 %v3895
    %v4024 = vunpack.c.l.b16 %v3896
    %v4025 = vunpack.c.l.b16 %v3897
    %v4026 = vunpack.c.l.b16 %v3898
    %v4027 = vunpack.c.l.b16 %v3899
    %v4028 = vunpack.c.l.b16 %v3900
    %v4029 = vunpack.c.l.b16 %v3901
    %v4030 = vunpack.c.l.b16 %v3902
    %v4031 = vunpack.c.l.b16 %v3903
    %v4032 = vunpack.c.l.b16 %v3904
    %v4033 = vunpack.c.l.b16 %v3905
    %v4034 = vunpack.c.l.b16 %v3906
    %v4035 = vunpack.c.l.b16 %v3907
    %v4036 = vunpack.c.l.b16 %v3908
    %v4037 = vunpack.c.l.b16 %v3909
    %v4038 = vunpack.c.l.b16 %v3910
    %v4039 = vunpack.c.l.b16 %v3911
    %v4040 = vunpack.c.l.b16 %v3912
    %v4041 = vunpack.c.l.b16 %v3913
    %v4042 = vunpack.c.l.b16 %v3914
    %v4043 = vunpack.c.l.b16 %v3915
    %v4044 = vunpack.c.l.b16 %v3916
    %v4045 = vunpack.c.l.b16 %v3917
    %v4046 = vunpack.c.l.b16 %v3918
    %v4047 = vunpack.c.l.b16 %v3919
    %v4048 = vunpack.c.l.b16 %v3920
    %v4049 = vunpack.c.l.b16 %v3921
    %v4050 = vunpack.c.l.b16 %v3922
    %v4051 = vunpack.c.l.b16 %v3923
    %v4052 = vunpack.c.l.b16 %v3924
    %v4053 = vunpack.c.l.b16 %v3925
    %v4054 = vunpack.c.l.b16 %v3926
    %v4055 = vpack.c.b16 %v3992, %v3991
    %v4056 = vpack.c.b16 %v3994, %v3993
    %v4057 = vpack.c.b16 %v3996, %v3995
    %v4058 = vpack.c.b16 %v3998, %v3997
    %v4059 = vpack.c.b16 %v4000, %v3999
    %v4060 = vpack.c.b16 %v4002, %v4001
    %v4061 = vpack.c.b16 %v4004, %v4003
    %v4062 = vpack.c.b16 %v4006, %v4005
    %v4063 = vpack.c.b16 %v4008, %v4007
    %v4064 = vpack.c.b16 %v4010, %v4009
    %v4065 = vpack.c.b16 %v4012, %v4011
    %v4066 = vpack.c.b16 %v4014, %v4013
    %v4067 = vpack.c.b16 %v4016, %v4015
    %v4068 = vpack.c.b16 %v4018, %v4017
    %v4069 = vpack.c.b16 %v4020, %v4019
    %v4070 = vpack.c.b16 %v4022, %v4021
    %v4071 = vpack.c.b16 %v4024, %v4023
    %v4072 = vpack.c.b16 %v4026, %v4025
    %v4073 = vpack.c.b16 %v4028, %v4027
    %v4074 = vpack.c.b16 %v4030, %v4029
    %v4075 = vpack.c.b16 %v4032, %v4031
    %v4076 = vpack.c.b16 %v4034, %v4033
    %v4077 = vpack.c.b16 %v4036, %v4035
    %v4078 = vpack.c.b16 %v4038, %v4037
    %v4079 = vpack.c.b16 %v4040, %v4039
    %v4080 = vpack.c.b16 %v4042, %v4041
    %v4081 = vpack.c.b16 %v4044, %v4043
    %v4082 = vpack.c.b16 %v4046, %v4045
    %v4083 = vpack.c.b16 %v4048, %v4047
    %v4084 = vpack.c.b16 %v4050, %v4049
    %v4085 = vpack.c.b16 %v4052, %v4051
    %v4086 = vpack.c.b16 %v4054, %v4053
    %4119 = vmatprep.subr.bf16.mxu0 0
    %4120 = vmatpush1.bf16.msra.mxu0 %v4055
    %4121 = vmatprep.subr.bf16.mxu0 0
    %4122 = vmatpush1.bf16.msra.mxu0 %v4056
    %4123 = vmatprep.subr.bf16.mxu0 0
    %4124 = vmatpush1.bf16.msra.mxu0 %v4057
    %4125 = vmatprep.subr.bf16.mxu0 0
    %4126 = vmatpush1.bf16.msra.mxu0 %v4058
    %4127 = vmatprep.subr.bf16.mxu0 0
    %4128 = vmatpush1.bf16.msra.mxu0 %v4059
    %4129 = vmatprep.subr.bf16.mxu0 0
    %4130 = vmatpush1.bf16.msra.mxu0 %v4060
    %4131 = vmatprep.subr.bf16.mxu0 0
    %4132 = vmatpush1.bf16.msra.mxu0 %v4061
    %4133 = vmatprep.subr.bf16.mxu0 0
    %4134 = vmatpush1.bf16.msra.mxu0 %v4062
    %4135 = vmatprep.subr.bf16.mxu0 0
    %4136 = vmatpush1.bf16.msra.mxu0 %v4063
    %4137 = vmatprep.subr.bf16.mxu0 0
    %4138 = vmatpush1.bf16.msra.mxu0 %v4064
    %4139 = vmatprep.subr.bf16.mxu0 0
    %4140 = vmatpush1.bf16.msra.mxu0 %v4065
    %4141 = vmatprep.subr.bf16.mxu0 0
    %4142 = vmatpush1.bf16.msra.mxu0 %v4066
    %4143 = vmatprep.subr.bf16.mxu0 0
    %4144 = vmatpush1.bf16.msra.mxu0 %v4067
    %4145 = vmatprep.subr.bf16.mxu0 0
    %4146 = vmatpush1.bf16.msra.mxu0 %v4068
    %4147 = vmatprep.subr.bf16.mxu0 0
    %4148 = vmatpush1.bf16.msra.mxu0 %v4069
    %4149 = vmatprep.subr.bf16.mxu0 0
    %4150 = vmatpush1.bf16.msra.mxu0 %v4070
    %4151 = vmatprep.mubr.bf16.mxu0 %v3860
    %4152 = vmatmul.mubr.bf16.gmra.mrb[0].mxu0 %v3859
    %v4153 = vpop.f32.mrb[0].mxu0
    %v4154 = vadd.f32 0.0, %v4153
    %v4155 = vpop.f32.mrb[0].mxu0
    %v4156 = vpop.f32.mrb[0].mxu0
    %v4157 = vpop.f32.mrb[0].mxu0
    %4158 = vdwg.mxu0
    %4159 = vmatprep.subr.bf16.mxu0 0
    %4160 = vmatpush1.bf16.msra.mxu0 %v4071
    %4161 = vmatprep.subr.bf16.mxu0 0
    %4162 = vmatpush1.bf16.msra.mxu0 %v4072
    %4163 = vmatprep.subr.bf16.mxu0 0
    %4164 = vmatpush1.bf16.msra.mxu0 %v4073
    %4165 = vmatprep.subr.bf16.mxu0 0
    %4166 = vmatpush1.bf16.msra.mxu0 %v4074
    %4167 = vmatprep.subr.bf16.mxu0 0
    %4168 = vmatpush1.bf16.msra.mxu0 %v4075
    %4169 = vmatprep.subr.bf16.mxu0 0
    %4170 = vmatpush1.bf16.msra.mxu0 %v4076
    %4171 = vmatprep.subr.bf16.mxu0 0
    %4172 = vmatpush1.bf16.msra.mxu0 %v4077
    %4173 = vmatprep.subr.bf16.mxu0 0
    %4174 = vmatpush1.bf16.msra.mxu0 %v4078
    %4175 = vmatprep.subr.bf16.mxu0 0
    %4176 = vmatpush1.bf16.msra.mxu0 %v4079
    %4177 = vmatprep.subr.bf16.mxu0 0
    %4178 = vmatpush1.bf16.msra.mxu0 %v4080
    %4179 = vmatprep.subr.bf16.mxu0 0
    %4180 = vmatpush1.bf16.msra.mxu0 %v4081
    %4181 = vmatprep.subr.bf16.mxu0 0
    %4182 = vmatpush1.bf16.msra.mxu0 %v4082
    %4183 = vmatprep.subr.bf16.mxu0 0
    %4184 = vmatpush1.bf16.msra.mxu0 %v4083
    %4185 = vmatprep.subr.bf16.mxu0 0
    %4186 = vmatpush1.bf16.msra.mxu0 %v4084
    %4187 = vmatprep.subr.bf16.mxu0 0
    %4188 = vmatpush1.bf16.msra.mxu0 %v4085
    %4189 = vmatprep.subr.bf16.mxu0 0
    %4190 = vmatpush1.bf16.msra.mxu0 %v4086
    %4191 = vmatprep.mubr.bf16.mxu0 %v3862
    %4192 = vmatmul.mubr.bf16.gmra.mrb[0].mxu0 %v3861
    %v4193 = vpop.f32.mrb[0].mxu0
    %v4194 = vadd.f32 %v4154, %v4193
    %v4195 = vpop.f32.mrb[0].mxu0
    %v4196 = vpop.f32.mrb[0].mxu0
    %v4197 = vpop.f32.mrb[0].mxu0
    %4198 = vdwg.mxu0
    %4199 = vxpose.xlu0.b32.start [1/16] %v4194, 128
    %4200 = vxpose.xlu0.b32.cont [2/16] 0.0, 128
    %4201 = vxpose.xlu0.b32.cont [3/16] 0.0, 128
    %4202 = vxpose.xlu0.b32.cont [4/16] 0.0, 128
    %4203 = vxpose.xlu0.b32.cont [5/16] 0.0, 128
    %4204 = vxpose.xlu0.b32.cont [6/16] 0.0, 128
    %4205 = vxpose.xlu0.b32.cont [7/16] 0.0, 128
    %4206 = vxpose.xlu0.b32.cont [8/16] 0.0, 128
    %4207 = vxpose.xlu0.b32.cont [9/16] 0.0, 128
    %4208 = vxpose.xlu0.b32.cont [10/16] 0.0, 128
    %4209 = vxpose.xlu0.b32.cont [11/16] 0.0, 128
    %4210 = vxpose.xlu0.b32.cont [12/16] 0.0, 128
    %4211 = vxpose.xlu0.b32.cont [13/16] 0.0, 128
    %4212 = vxpose.xlu0.b32.cont [14/16] 0.0, 128
    %4213 = vxpose.xlu0.b32.cont [15/16] 0.0, 128
    %4214 = vxpose.xlu0.b32.end [16/16] 0.0, 128
    %v4215 = vpop.trf.xlu0
    %v4216 = vpop.trf.xlu0
    %v4217 = vpop.trf.xlu0
    %v4218 = vpop.trf.xlu0
    %v4219 = vpop.trf.xlu0
    %v4220 = vpop.trf.xlu0
    %v4221 = vpop.trf.xlu0
    %v4222 = vpop.trf.xlu0
    %v4223 = vpop.trf.xlu0
    %v4224 = vpop.trf.xlu0
    %v4225 = vpop.trf.xlu0
    %v4226 = vpop.trf.xlu0
    %v4227 = vpop.trf.xlu0
    %v4228 = vpop.trf.xlu0
    %v4229 = vpop.trf.xlu0
    %v4230 = vpop.trf.xlu0
    %4232 = vset.pattern.permute.xlu0 0
    %4233 = vperm.xlu0 %4232, %v4194
    %v4234 = vpop.permute.xlu0 %4233
    %v4236 = vlaneseq
    %v4237 = vshrl.u32 %v4236, 7
    %v4238 = vsub.s32 1, %v4237
    %v4239 = vrot.slane %v4215, %v4238
    %v4240 = vadd.f32 %v4234, %v4239
    %vm4241 = vcmp.gt.f32.partialorder %v4240, 0.0
    %v4242 = vmul.f32 %v4240, 0.2
    %v4243 = vsel %vm4241, %v4240, %v4242
    %v4244 = vadd.f32 %v4243, %v115
    %vm4245 = vcmask 64512
    %v4246 = vsel %vm4245, %v4244, -inf
    %4247 = vmax.xlane.f32.xlu0 %v4246
    %v4248 = vpop.xlane.xlu0 %4247
    %v4249 = vsub.f32 %v4244, %v4248
    %v4250 = vmul.f32 %v4249, 1.442695
    %v4251 = vpow.pop %v4250
    %v4252 = vsel %vm4245, %v4251, 0.0
    %4253 = vadd.xlane.f32.xlu0 %v4252
    %v4254 = vpop.xlane.xlu0 %4253
    %v4255 = vrcp.pop %v4254
    %v4256 = vmul.f32 %v4251, %v4255
    %v4257 = vpack.c.bf16 %v4256, %v4256
    %v4259 = vsel %vm4245, %v4257, 0
    %vm4261 = vcmask 1043456
    %v4263 = vsel %vm4261, %v3859, 0
    %v4266 = vsel %vm4261, %v3860, 0
    %4268 = vmatprep.subr.bf16.mxu0 %v4266
    %4269 = vmatpush1.bf16.msra.mxu0 %v4263
    %4270 = vmatprep.subr.bf16.mxu0 0
    %4271 = vmatpush1.bf16.msra.mxu0 0
    %4272 = vmatprep.subr.bf16.mxu0 0
    %4273 = vmatpush1.bf16.msra.mxu0 0
    %4274 = vmatprep.subr.bf16.mxu0 0
    %4275 = vmatpush1.bf16.msra.mxu0 0
    %4276 = vmatprep.subr.bf16.mxu0 0
    %4277 = vmatpush1.bf16.msra.mxu0 0
    %4278 = vmatprep.subr.bf16.mxu0 0
    %4279 = vmatpush1.bf16.msra.mxu0 0
    %4280 = vmatprep.subr.bf16.mxu0 0
    %4281 = vmatpush1.bf16.msra.mxu0 0
    %4282 = vmatprep.subr.bf16.mxu0 0
    %4283 = vmatpush1.bf16.msra.mxu0 0
    %4284 = vmatprep.subr.bf16.mxu0 0
    %4285 = vmatpush1.bf16.msra.mxu0 0
    %4286 = vmatprep.subr.bf16.mxu0 0
    %4287 = vmatpush1.bf16.msra.mxu0 0
    %4288 = vmatprep.subr.bf16.mxu0 0
    %4289 = vmatpush1.bf16.msra.mxu0 0
    %4290 = vmatprep.subr.bf16.mxu0 0
    %4291 = vmatpush1.bf16.msra.mxu0 0
    %4292 = vmatprep.subr.bf16.mxu0 0
    %4293 = vmatpush1.bf16.msra.mxu0 0
    %4294 = vmatprep.subr.bf16.mxu0 0
    %4295 = vmatpush1.bf16.msra.mxu0 0
    %4296 = vmatprep.subr.bf16.mxu0 0
    %4297 = vmatpush1.bf16.msra.mxu0 0
    %4298 = vmatprep.subr.bf16.mxu0 0
    %4299 = vmatpush1.bf16.msra.mxu0 0
    %4300 = vmatprep.mubr.bf16.mxu0 0
    %4301 = vmatmul.mubr.bf16.gmra.mrb[0].mxu0 %v4259
    %v4302 = vpop.f32.mrb[0].mxu0
    %v4303 = vadd.f32 0.0, %v4302
    %v4304 = vpop.f32.mrb[0].mxu0
    %v4305 = vadd.f32 0.0, %v4304
    %v4306 = vpop.f32.mrb[0].mxu0
    %v4307 = vpop.f32.mrb[0].mxu0
    %4308 = vdwg.mxu0
    %4309 = vst [vmem:[#allocation2] sm:$0xff] %v4303
    %4310 = vst [vmem:[#allocation2 + $0x8] sm:$0xff] %v4305
    %4311 = vset.pattern.permute.xlu0 2
    %4312 = vperm.xlu0 %4311, %v4194
    %v4313 = vpop.permute.xlu0 %4312
    %v4315 = vlaneseq
    %v4316 = vshrl.u32 %v4315, 7
    %v4317 = vsub.s32 3, %v4316
    %v4318 = vrot.slane %v4215, %v4317
    %v4319 = vadd.f32 %v4313, %v4318
    %vm4320 = vcmp.gt.f32.partialorder %v4319, 0.0
    %v4321 = vmul.f32 %v4319, 0.2
    %v4322 = vsel %vm4320, %v4319, %v4321
    %v4323 = vadd.f32 %v4322, %v115
    %v4324 = vsel %vm4245, %v4323, -inf
    %4325 = vmax.xlane.f32.xlu0 %v4324
    %v4326 = vpop.xlane.xlu0 %4325
    %v4327 = vsub.f32 %v4323, %v4326
    %v4328 = vmul.f32 %v4327, 1.442695
    %v4329 = vpow.pop %v4328
    %v4330 = vsel %vm4245, %v4329, 0.0
    %4331 = vadd.xlane.f32.xlu0 %v4330
    %v4332 = vpop.xlane.xlu0 %4331
    %v4333 = vrcp.pop %v4332
    %v4334 = vmul.f32 %v4329, %v4333
    %v4335 = vpack.c.bf16 %v4334, %v4334
    %v4337 = vsel %vm4245, %v4335, 0
    %v4340 = vsel %vm4261, %v3861, 0
    %v4343 = vsel %vm4261, %v3862, 0
    %4345 = vmatprep.subr.bf16.mxu0 %v4343
    %4346 = vmatpush1.bf16.msra.mxu0 %v4340
    %4347 = vmatprep.subr.bf16.mxu0 0
    %4348 = vmatpush1.bf16.msra.mxu0 0
    %4349 = vmatprep.subr.bf16.mxu0 0
    %4350 = vmatpush1.bf16.msra.mxu0 0
    %4351 = vmatprep.subr.bf16.mxu0 0
    %4352 = vmatpush1.bf16.msra.mxu0 0
    %4353 = vmatprep.subr.bf16.mxu0 0
    %4354 = vmatpush1.bf16.msra.mxu0 0
    %4355 = vmatprep.subr.bf16.mxu0 0
    %4356 = vmatpush1.bf16.msra.mxu0 0
    %4357 = vmatprep.subr.bf16.mxu0 0
    %4358 = vmatpush1.bf16.msra.mxu0 0
    %4359 = vmatprep.subr.bf16.mxu0 0
    %4360 = vmatpush1.bf16.msra.mxu0 0
    %4361 = vmatprep.subr.bf16.mxu0 0
    %4362 = vmatpush1.bf16.msra.mxu0 0
    %4363 = vmatprep.subr.bf16.mxu0 0
    %4364 = vmatpush1.bf16.msra.mxu0 0
    %4365 = vmatprep.subr.bf16.mxu0 0
    %4366 = vmatpush1.bf16.msra.mxu0 0
    %4367 = vmatprep.subr.bf16.mxu0 0
    %4368 = vmatpush1.bf16.msra.mxu0 0
    %4369 = vmatprep.subr.bf16.mxu0 0
    %4370 = vmatpush1.bf16.msra.mxu0 0
    %4371 = vmatprep.subr.bf16.mxu0 0
    %4372 = vmatpush1.bf16.msra.mxu0 0
    %4373 = vmatprep.subr.bf16.mxu0 0
    %4374 = vmatpush1.bf16.msra.mxu0 0
    %4375 = vmatprep.subr.bf16.mxu0 0
    %4376 = vmatpush1.bf16.msra.mxu0 0
    %4377 = vmatprep.mubr.bf16.mxu0 0
    %4378 = vmatmul.mubr.bf16.gmra.mrb[0].mxu0 %v4337
    %v4379 = vpop.f32.mrb[0].mxu0
    %v4380 = vadd.f32 0.0, %v4379
    %v4381 = vpop.f32.mrb[0].mxu0
    %v4382 = vadd.f32 0.0, %v4381
    %v4383 = vpop.f32.mrb[0].mxu0
    %v4384 = vpop.f32.mrb[0].mxu0
    %4385 = vdwg.mxu0
    %4386 = vst [vmem:[#allocation2 + $0x10] sm:$0xff] %v4380
    %4387 = vst [vmem:[#allocation2 + $0x18] sm:$0xff] %v4382
    %v4388 = vld [vmem:[#allocation2] sm:$0xff]
    %v4389 = vld [vmem:[#allocation2 + $0x8] sm:$0xff]
    %v4390 = vld [vmem:[#allocation2 + $0x10] sm:$0xff]
    %v4391 = vld [vmem:[#allocation2 + $0x18] sm:$0xff]
    %v4392 = vld [vmem:[%s2 + $0xc] sm:$0xf]
    %v4393 = vld [vmem:[%s2 + $0x10] sm:$0xf]
    %v4394 = vrot.slane %v4388, 4
    %v4395 = vadd.f32 %v4388, %v4394
    %v4396 = vrot.slane %v4395, 2
    %v4397 = vadd.f32 %v4395, %v4396
    %v4398 = vrot.slane %v4397, 1
    %v4399 = vadd.f32 %v4397, %v4398
    %v4400 = vrot.slane %v4389, 4
    %v4401 = vadd.f32 %v4389, %v4400
    %v4402 = vrot.slane %v4401, 2
    %v4403 = vadd.f32 %v4401, %v4402
    %v4404 = vrot.slane %v4403, 1
    %v4405 = vadd.f32 %v4403, %v4404
    %v4406 = vrot.slane %v4390, 4
    %v4407 = vadd.f32 %v4390, %v4406
    %v4408 = vrot.slane %v4407, 2
    %v4409 = vadd.f32 %v4407, %v4408
    %v4410 = vrot.slane %v4409, 1
    %v4411 = vadd.f32 %v4409, %v4410
    %v4412 = vrot.slane %v4391, 4
    %v4413 = vadd.f32 %v4391, %v4412
    %v4414 = vrot.slane %v4413, 2
    %v4415 = vadd.f32 %v4413, %v4414
    %v4416 = vrot.slane %v4415, 1
    %v4417 = vadd.f32 %v4415, %v4416
    %v4418 = vmul.f32 %v4399, %v2682
    %v4419 = vmul.f32 %v4405, %v2682
    %v4420 = vmul.f32 %v4411, %v2682
    %v4421 = vmul.f32 %v4417, %v2682
    %v4422 = vmul.f32 %v4388, %v4388
    %v4423 = vmul.f32 %v4389, %v4389
    %v4424 = vmul.f32 %v4390, %v4390
    %v4425 = vmul.f32 %v4391, %v4391
    %v4426 = vrot.slane %v4422, 4
    %v4427 = vadd.f32 %v4422, %v4426
    %v4428 = vrot.slane %v4427, 2
    %v4429 = vadd.f32 %v4427, %v4428
    %v4430 = vrot.slane %v4429, 1
    %v4431 = vadd.f32 %v4429, %v4430
    %v4432 = vrot.slane %v4423, 4
    %v4433 = vadd.f32 %v4423, %v4432
    %v4434 = vrot.slane %v4433, 2
    %v4435 = vadd.f32 %v4433, %v4434
    %v4436 = vrot.slane %v4435, 1
    %v4437 = vadd.f32 %v4435, %v4436
    %v4438 = vrot.slane %v4424, 4
    %v4439 = vadd.f32 %v4424, %v4438
    %v4440 = vrot.slane %v4439, 2
    %v4441 = vadd.f32 %v4439, %v4440
    %v4442 = vrot.slane %v4441, 1
    %v4443 = vadd.f32 %v4441, %v4442
    %v4444 = vrot.slane %v4425, 4
    %v4445 = vadd.f32 %v4425, %v4444
    %v4446 = vrot.slane %v4445, 2
    %v4447 = vadd.f32 %v4445, %v4446
    %v4448 = vrot.slane %v4447, 1
    %v4449 = vadd.f32 %v4447, %v4448
    %v4450 = vmul.f32 %v4431, %v2682
    %v4451 = vmul.f32 %v4437, %v2682
    %v4452 = vmul.f32 %v4443, %v2682
    %v4453 = vmul.f32 %v4449, %v2682
    %v4454 = vmul.f32 %v4418, %v4418
    %v4455 = vmul.f32 %v4419, %v4419
    %v4456 = vmul.f32 %v4420, %v4420
    %v4457 = vmul.f32 %v4421, %v4421
    %v4458 = vsub.f32 %v4450, %v4454
    %v4459 = vsub.f32 %v4451, %v4455
    %v4460 = vsub.f32 %v4452, %v4456
    %v4461 = vsub.f32 %v4453, %v4457
    %v4462 = vmax.f32 %v4458, 0.0
    %v4463 = vmax.f32 %v4459, 0.0
    %v4464 = vmax.f32 %v4460, 0.0
    %v4465 = vmax.f32 %v4461, 0.0
    %v4466 = vsub.f32 %v4388, %v4418
    %v4467 = vsub.f32 %v4389, %v4419
    %v4468 = vsub.f32 %v4390, %v4420
    %v4469 = vsub.f32 %v4391, %v4421
    %v4471 = vlaneseq
    %v4472 = vshrl.u32 %v4471, 7
    %v4473 = vsub.s32 0, %v4472
    %v4474 = vrot.slane %v4392, %v4473
    %v4475 = vlaneseq
    %v4476 = vshrl.u32 %v4475, 7
    %v4477 = vsub.s32 1, %v4476
    %v4478 = vrot.slane %v4392, %v4477
    %v4479 = vlaneseq
    %v4480 = vshrl.u32 %v4479, 7
    %v4481 = vsub.s32 2, %v4480
    %v4482 = vrot.slane %v4392, %v4481
    %v4483 = vlaneseq
    %v4484 = vshrl.u32 %v4483, 7
    %v4485 = vsub.s32 3, %v4484
    %v4486 = vrot.slane %v4392, %v4485
    %v4491 = vmul.f32 %v4474, %v4466
    %v4492 = vmul.f32 %v4478, %v4467
    %v4493 = vmul.f32 %v4482, %v4468
    %v4494 = vmul.f32 %v4486, %v4469
    %v4495 = vadd.f32 %v4462, 1e-05
    %v4496 = vadd.f32 %v4463, 1e-05
    %v4497 = vadd.f32 %v4464, 1e-05
    %v4498 = vadd.f32 %v4465, 1e-05
    %v4499 = vrsqrt.pop %v4495
    %v4500 = vrsqrt.pop %v4496
    %v4501 = vrsqrt.pop %v4497
    %v4502 = vrsqrt.pop %v4498
    %v4503 = vmul.f32 %v4491, %v4499
    %v4504 = vmul.f32 %v4492, %v4500
    %v4505 = vmul.f32 %v4493, %v4501
    %v4506 = vmul.f32 %v4494, %v4502
    %v4508 = vlaneseq
    %v4509 = vshrl.u32 %v4508, 7
    %v4510 = vsub.s32 0, %v4509
    %v4511 = vrot.slane %v4393, %v4510
    %v4512 = vlaneseq
    %v4513 = vshrl.u32 %v4512, 7
    %v4514 = vsub.s32 1, %v4513
    %v4515 = vrot.slane %v4393, %v4514
    %v4516 = vlaneseq
    %v4517 = vshrl.u32 %v4516, 7
    %v4518 = vsub.s32 2, %v4517
    %v4519 = vrot.slane %v4393, %v4518
    %v4520 = vlaneseq
    %v4521 = vshrl.u32 %v4520, 7
    %v4522 = vsub.s32 3, %v4521
    %v4523 = vrot.slane %v4393, %v4522
    %v4528 = vadd.f32 %v4503, %v4511
    %v4529 = vadd.f32 %v4504, %v4515
    %v4530 = vadd.f32 %v4505, %v4519
    %v4531 = vadd.f32 %v4506, %v4523
    %vm4532 = vcmp.gt.f32.partialorder %v4528, 0.0
    %vm4533 = vcmp.gt.f32.partialorder %v4529, 0.0
    %vm4534 = vcmp.gt.f32.partialorder %v4530, 0.0
    %vm4535 = vcmp.gt.f32.partialorder %v4531, 0.0
    %v4536 = vmin.f32 %v4528, 0.0
    %v4537 = vmin.f32 %v4529, 0.0
    %v4538 = vmin.f32 %v4530, 0.0
    %v4539 = vmin.f32 %v4531, 0.0
    %v4540 = vmul.f32 %v4536, 1.442695
    %v4541 = vpow.pop %v4540
    %v4542 = vmul.f32 %v4537, 1.442695
    %v4543 = vpow.pop %v4542
    %v4544 = vmul.f32 %v4538, 1.442695
    %v4545 = vpow.pop %v4544
    %v4546 = vmul.f32 %v4539, 1.442695
    %v4547 = vpow.pop %v4546
    %v4548 = vsub.f32 %v4541, 1.0
    %v4549 = vsub.f32 %v4543, 1.0
    %v4550 = vsub.f32 %v4545, 1.0
    %v4551 = vsub.f32 %v4547, 1.0
    %v4552 = vsel %vm4532, %v4528, %v4548
    %v4553 = vsel %vm4533, %v4529, %v4549
    %v4554 = vsel %vm4534, %v4530, %v4550
    %v4555 = vsel %vm4535, %v4531, %v4551
    %v4556 = vpack.c.bf16 %v4552, %v4552
    %v4557 = vpack.c.bf16 %v4553, %v4553
    %v4558 = vpack.c.bf16 %v4554, %v4554
    %v4559 = vpack.c.bf16 %v4555, %v4555
    %v4560 = vld [vmem:[%s8] sm:$0xff]
    %v4561 = vld [vmem:[%s8 + $0x8] sm:$0xff]
    %v4562 = vld [vmem:[%s8 + $0x10] sm:$0xff]
    %v4563 = vld [vmem:[%s8 + $0x18] sm:$0xff]
    %v4564 = vld [vmem:[%s8 + $0x20] sm:$0xff]
    %v4565 = vld [vmem:[%s8 + $0x28] sm:$0xff]
    %v4566 = vld [vmem:[%s8 + $0x30] sm:$0xff]
    %v4567 = vld [vmem:[%s8 + $0x38] sm:$0xff]
    %v4568 = vld [vmem:[%s8 + $0x40] sm:$0xff]
    %v4569 = vld [vmem:[%s8 + $0x48] sm:$0xff]
    %v4570 = vld [vmem:[%s8 + $0x50] sm:$0xff]
    %v4571 = vld [vmem:[%s8 + $0x58] sm:$0xff]
    %v4572 = vld [vmem:[%s8 + $0x60] sm:$0xff]
    %v4573 = vld [vmem:[%s8 + $0x68] sm:$0xff]
    %v4574 = vld [vmem:[%s8 + $0x70] sm:$0xff]
    %v4575 = vld [vmem:[%s8 + $0x78] sm:$0xff]
    %v4576 = vld [vmem:[%s8 + $0x80] sm:$0xff]
    %v4577 = vld [vmem:[%s8 + $0x88] sm:$0xff]
    %v4578 = vld [vmem:[%s8 + $0x90] sm:$0xff]
    %v4579 = vld [vmem:[%s8 + $0x98] sm:$0xff]
    %v4580 = vld [vmem:[%s8 + $0xa0] sm:$0xff]
    %v4581 = vld [vmem:[%s8 + $0xa8] sm:$0xff]
    %v4582 = vld [vmem:[%s8 + $0xb0] sm:$0xff]
    %v4583 = vld [vmem:[%s8 + $0xb8] sm:$0xff]
    %v4584 = vld [vmem:[%s8 + $0xc0] sm:$0xff]
    %v4585 = vld [vmem:[%s8 + $0xc8] sm:$0xff]
    %v4586 = vld [vmem:[%s8 + $0xd0] sm:$0xff]
    %v4587 = vld [vmem:[%s8 + $0xd8] sm:$0xff]
    %v4588 = vld [vmem:[%s8 + $0xe0] sm:$0xff]
    %v4589 = vld [vmem:[%s8 + $0xe8] sm:$0xff]
    %v4590 = vld [vmem:[%s8 + $0xf0] sm:$0xff]
    %v4591 = vld [vmem:[%s8 + $0xf8] sm:$0xff]
    %v4592 = vld [vmem:[%s8 + $0x100] sm:$0xff]
    %v4593 = vld [vmem:[%s8 + $0x108] sm:$0xff]
    %v4594 = vld [vmem:[%s8 + $0x110] sm:$0xff]
    %v4595 = vld [vmem:[%s8 + $0x118] sm:$0xff]
    %v4596 = vld [vmem:[%s8 + $0x120] sm:$0xff]
    %v4597 = vld [vmem:[%s8 + $0x128] sm:$0xff]
    %v4598 = vld [vmem:[%s8 + $0x130] sm:$0xff]
    %v4599 = vld [vmem:[%s8 + $0x138] sm:$0xff]
    %v4600 = vld [vmem:[%s8 + $0x140] sm:$0xff]
    %v4601 = vld [vmem:[%s8 + $0x148] sm:$0xff]
    %v4602 = vld [vmem:[%s8 + $0x150] sm:$0xff]
    %v4603 = vld [vmem:[%s8 + $0x158] sm:$0xff]
    %v4604 = vld [vmem:[%s8 + $0x160] sm:$0xff]
    %v4605 = vld [vmem:[%s8 + $0x168] sm:$0xff]
    %v4606 = vld [vmem:[%s8 + $0x170] sm:$0xff]
    %v4607 = vld [vmem:[%s8 + $0x178] sm:$0xff]
    %v4608 = vld [vmem:[%s8 + $0x180] sm:$0xff]
    %v4609 = vld [vmem:[%s8 + $0x188] sm:$0xff]
    %v4610 = vld [vmem:[%s8 + $0x190] sm:$0xff]
    %v4611 = vld [vmem:[%s8 + $0x198] sm:$0xff]
    %v4612 = vld [vmem:[%s8 + $0x1a0] sm:$0xff]
    %v4613 = vld [vmem:[%s8 + $0x1a8] sm:$0xff]
    %v4614 = vld [vmem:[%s8 + $0x1b0] sm:$0xff]
    %v4615 = vld [vmem:[%s8 + $0x1b8] sm:$0xff]
    %v4616 = vld [vmem:[%s8 + $0x1c0] sm:$0xff]
    %v4617 = vld [vmem:[%s8 + $0x1c8] sm:$0xff]
    %v4618 = vld [vmem:[%s8 + $0x1d0] sm:$0xff]
    %v4619 = vld [vmem:[%s8 + $0x1d8] sm:$0xff]
    %v4620 = vld [vmem:[%s8 + $0x1e0] sm:$0xff]
    %v4621 = vld [vmem:[%s8 + $0x1e8] sm:$0xff]
    %v4622 = vld [vmem:[%s8 + $0x1f0] sm:$0xff]
    %v4623 = vld [vmem:[%s8 + $0x1f8] sm:$0xff]
    %v4624 = vld [vmem:[%s8 + $0x200] sm:$0xff]
    %v4625 = vld [vmem:[%s8 + $0x208] sm:$0xff]
    %v4626 = vld [vmem:[%s8 + $0x210] sm:$0xff]
    %v4627 = vld [vmem:[%s8 + $0x218] sm:$0xff]
    %v4628 = vld [vmem:[%s8 + $0x220] sm:$0xff]
    %v4629 = vld [vmem:[%s8 + $0x228] sm:$0xff]
    %v4630 = vld [vmem:[%s8 + $0x230] sm:$0xff]
    %v4631 = vld [vmem:[%s8 + $0x238] sm:$0xff]
    %v4632 = vld [vmem:[%s8 + $0x240] sm:$0xff]
    %v4633 = vld [vmem:[%s8 + $0x248] sm:$0xff]
    %v4634 = vld [vmem:[%s8 + $0x250] sm:$0xff]
    %v4635 = vld [vmem:[%s8 + $0x258] sm:$0xff]
    %v4636 = vld [vmem:[%s8 + $0x260] sm:$0xff]
    %v4637 = vld [vmem:[%s8 + $0x268] sm:$0xff]
    %v4638 = vld [vmem:[%s8 + $0x270] sm:$0xff]
    %v4639 = vld [vmem:[%s8 + $0x278] sm:$0xff]
    %v4640 = vld [vmem:[%s8 + $0x280] sm:$0xff]
    %v4641 = vld [vmem:[%s8 + $0x288] sm:$0xff]
    %v4642 = vld [vmem:[%s8 + $0x290] sm:$0xff]
    %v4643 = vld [vmem:[%s8 + $0x298] sm:$0xff]
    %v4644 = vld [vmem:[%s8 + $0x2a0] sm:$0xff]
    %v4645 = vld [vmem:[%s8 + $0x2a8] sm:$0xff]
    %v4646 = vld [vmem:[%s8 + $0x2b0] sm:$0xff]
    %v4647 = vld [vmem:[%s8 + $0x2b8] sm:$0xff]
    %v4648 = vld [vmem:[%s8 + $0x2c0] sm:$0xff]
    %v4649 = vld [vmem:[%s8 + $0x2c8] sm:$0xff]
    %v4650 = vld [vmem:[%s8 + $0x2d0] sm:$0xff]
    %v4651 = vld [vmem:[%s8 + $0x2d8] sm:$0xff]
    %v4652 = vld [vmem:[%s8 + $0x2e0] sm:$0xff]
    %v4653 = vld [vmem:[%s8 + $0x2e8] sm:$0xff]
    %v4654 = vld [vmem:[%s8 + $0x2f0] sm:$0xff]
    %v4655 = vld [vmem:[%s8 + $0x2f8] sm:$0xff]
    %v4656 = vld [vmem:[%s8 + $0x300] sm:$0xff]
    %v4657 = vld [vmem:[%s8 + $0x308] sm:$0xff]
    %v4658 = vld [vmem:[%s8 + $0x310] sm:$0xff]
    %v4659 = vld [vmem:[%s8 + $0x318] sm:$0xff]
    %v4660 = vld [vmem:[%s8 + $0x320] sm:$0xff]
    %v4661 = vld [vmem:[%s8 + $0x328] sm:$0xff]
    %v4662 = vld [vmem:[%s8 + $0x330] sm:$0xff]
    %v4663 = vld [vmem:[%s8 + $0x338] sm:$0xff]
    %v4664 = vld [vmem:[%s8 + $0x340] sm:$0xff]
    %v4665 = vld [vmem:[%s8 + $0x348] sm:$0xff]
    %v4666 = vld [vmem:[%s8 + $0x350] sm:$0xff]
    %v4667 = vld [vmem:[%s8 + $0x358] sm:$0xff]
    %v4668 = vld [vmem:[%s8 + $0x360] sm:$0xff]
    %v4669 = vld [vmem:[%s8 + $0x368] sm:$0xff]
    %v4670 = vld [vmem:[%s8 + $0x370] sm:$0xff]
    %v4671 = vld [vmem:[%s8 + $0x378] sm:$0xff]
    %v4672 = vld [vmem:[%s8 + $0x380] sm:$0xff]
    %v4673 = vld [vmem:[%s8 + $0x388] sm:$0xff]
    %v4674 = vld [vmem:[%s8 + $0x390] sm:$0xff]
    %v4675 = vld [vmem:[%s8 + $0x398] sm:$0xff]
    %v4676 = vld [vmem:[%s8 + $0x3a0] sm:$0xff]
    %v4677 = vld [vmem:[%s8 + $0x3a8] sm:$0xff]
    %v4678 = vld [vmem:[%s8 + $0x3b0] sm:$0xff]
    %v4679 = vld [vmem:[%s8 + $0x3b8] sm:$0xff]
    %v4680 = vld [vmem:[%s8 + $0x3c0] sm:$0xff]
    %v4681 = vld [vmem:[%s8 + $0x3c8] sm:$0xff]
    %v4682 = vld [vmem:[%s8 + $0x3d0] sm:$0xff]
    %v4683 = vld [vmem:[%s8 + $0x3d8] sm:$0xff]
    %v4684 = vld [vmem:[%s8 + $0x3e0] sm:$0xff]
    %v4685 = vld [vmem:[%s8 + $0x3e8] sm:$0xff]
    %v4686 = vld [vmem:[%s8 + $0x3f0] sm:$0xff]
    %v4687 = vld [vmem:[%s8 + $0x3f8] sm:$0xff]
    %v4816 = vunpack.c.l.b16 %v4560
    %v4817 = vunpack.c.h.b16 %v4560
    %v4818 = vunpack.c.l.b16 %v4561
    %v4819 = vunpack.c.h.b16 %v4561
    %v4820 = vunpack.c.l.b16 %v4562
    %v4821 = vunpack.c.h.b16 %v4562
    %v4822 = vunpack.c.l.b16 %v4563
    %v4823 = vunpack.c.h.b16 %v4563
    %v4824 = vunpack.c.l.b16 %v4564
    %v4825 = vunpack.c.h.b16 %v4564
    %v4826 = vunpack.c.l.b16 %v4565
    %v4827 = vunpack.c.h.b16 %v4565
    %v4828 = vunpack.c.l.b16 %v4566
    %v4829 = vunpack.c.h.b16 %v4566
    %v4830 = vunpack.c.l.b16 %v4567
    %v4831 = vunpack.c.h.b16 %v4567
    %v4832 = vunpack.c.l.b16 %v4568
    %v4833 = vunpack.c.h.b16 %v4568
    %v4834 = vunpack.c.l.b16 %v4569
    %v4835 = vunpack.c.h.b16 %v4569
    %v4836 = vunpack.c.l.b16 %v4570
    %v4837 = vunpack.c.h.b16 %v4570
    %v4838 = vunpack.c.l.b16 %v4571
    %v4839 = vunpack.c.h.b16 %v4571
    %v4840 = vunpack.c.l.b16 %v4572
    %v4841 = vunpack.c.h.b16 %v4572
    %v4842 = vunpack.c.l.b16 %v4573
    %v4843 = vunpack.c.h.b16 %v4573
    %v4844 = vunpack.c.l.b16 %v4574
    %v4845 = vunpack.c.h.b16 %v4574
    %v4846 = vunpack.c.l.b16 %v4575
    %v4847 = vunpack.c.h.b16 %v4575
    %v4848 = vunpack.c.l.b16 %v4576
    %v4849 = vunpack.c.h.b16 %v4576
    %v4850 = vunpack.c.l.b16 %v4577
    %v4851 = vunpack.c.h.b16 %v4577
    %v4852 = vunpack.c.l.b16 %v4578
    %v4853 = vunpack.c.h.b16 %v4578
    %v4854 = vunpack.c.l.b16 %v4579
    %v4855 = vunpack.c.h.b16 %v4579
    %v4856 = vunpack.c.l.b16 %v4580
    %v4857 = vunpack.c.h.b16 %v4580
    %v4858 = vunpack.c.l.b16 %v4581
    %v4859 = vunpack.c.h.b16 %v4581
    %v4860 = vunpack.c.l.b16 %v4582
    %v4861 = vunpack.c.h.b16 %v4582
    %v4862 = vunpack.c.l.b16 %v4583
    %v4863 = vunpack.c.h.b16 %v4583
    %v4864 = vunpack.c.l.b16 %v4584
    %v4865 = vunpack.c.h.b16 %v4584
    %v4866 = vunpack.c.l.b16 %v4585
    %v4867 = vunpack.c.h.b16 %v4585
    %v4868 = vunpack.c.l.b16 %v4586
    %v4869 = vunpack.c.h.b16 %v4586
    %v4870 = vunpack.c.l.b16 %v4587
    %v4871 = vunpack.c.h.b16 %v4587
    %v4872 = vunpack.c.l.b16 %v4588
    %v4873 = vunpack.c.h.b16 %v4588
    %v4874 = vunpack.c.l.b16 %v4589
    %v4875 = vunpack.c.h.b16 %v4589
    %v4876 = vunpack.c.l.b16 %v4590
    %v4877 = vunpack.c.h.b16 %v4590
    %v4878 = vunpack.c.l.b16 %v4591
    %v4879 = vunpack.c.h.b16 %v4591
    %v4880 = vunpack.c.l.b16 %v4592
    %v4881 = vunpack.c.h.b16 %v4592
    %v4882 = vunpack.c.l.b16 %v4593
    %v4883 = vunpack.c.h.b16 %v4593
    %v4884 = vunpack.c.l.b16 %v4594
    %v4885 = vunpack.c.h.b16 %v4594
    %v4886 = vunpack.c.l.b16 %v4595
    %v4887 = vunpack.c.h.b16 %v4595
    %v4888 = vunpack.c.l.b16 %v4596
    %v4889 = vunpack.c.h.b16 %v4596
    %v4890 = vunpack.c.l.b16 %v4597
    %v4891 = vunpack.c.h.b16 %v4597
    %v4892 = vunpack.c.l.b16 %v4598
    %v4893 = vunpack.c.h.b16 %v4598
    %v4894 = vunpack.c.l.b16 %v4599
    %v4895 = vunpack.c.h.b16 %v4599
    %v4896 = vunpack.c.l.b16 %v4600
    %v4897 = vunpack.c.h.b16 %v4600
    %v4898 = vunpack.c.l.b16 %v4601
    %v4899 = vunpack.c.h.b16 %v4601
    %v4900 = vunpack.c.l.b16 %v4602
    %v4901 = vunpack.c.h.b16 %v4602
    %v4902 = vunpack.c.l.b16 %v4603
    %v4903 = vunpack.c.h.b16 %v4603
    %v4904 = vunpack.c.l.b16 %v4604
    %v4905 = vunpack.c.h.b16 %v4604
    %v4906 = vunpack.c.l.b16 %v4605
    %v4907 = vunpack.c.h.b16 %v4605
    %v4908 = vunpack.c.l.b16 %v4606
    %v4909 = vunpack.c.h.b16 %v4606
    %v4910 = vunpack.c.l.b16 %v4607
    %v4911 = vunpack.c.h.b16 %v4607
    %v4912 = vunpack.c.l.b16 %v4608
    %v4913 = vunpack.c.h.b16 %v4608
    %v4914 = vunpack.c.l.b16 %v4609
    %v4915 = vunpack.c.h.b16 %v4609
    %v4916 = vunpack.c.l.b16 %v4610
    %v4917 = vunpack.c.h.b16 %v4610
    %v4918 = vunpack.c.l.b16 %v4611
    %v4919 = vunpack.c.h.b16 %v4611
    %v4920 = vunpack.c.l.b16 %v4612
    %v4921 = vunpack.c.h.b16 %v4612
    %v4922 = vunpack.c.l.b16 %v4613
    %v4923 = vunpack.c.h.b16 %v4613
    %v4924 = vunpack.c.l.b16 %v4614
    %v4925 = vunpack.c.h.b16 %v4614
    %v4926 = vunpack.c.l.b16 %v4615
    %v4927 = vunpack.c.h.b16 %v4615
    %v4928 = vunpack.c.l.b16 %v4616
    %v4929 = vunpack.c.h.b16 %v4616
    %v4930 = vunpack.c.l.b16 %v4617
    %v4931 = vunpack.c.h.b16 %v4617
    %v4932 = vunpack.c.l.b16 %v4618
    %v4933 = vunpack.c.h.b16 %v4618
    %v4934 = vunpack.c.l.b16 %v4619
    %v4935 = vunpack.c.h.b16 %v4619
    %v4936 = vunpack.c.l.b16 %v4620
    %v4937 = vunpack.c.h.b16 %v4620
    %v4938 = vunpack.c.l.b16 %v4621
    %v4939 = vunpack.c.h.b16 %v4621
    %v4940 = vunpack.c.l.b16 %v4622
    %v4941 = vunpack.c.h.b16 %v4622
    %v4942 = vunpack.c.l.b16 %v4623
    %v4943 = vunpack.c.h.b16 %v4623
    %v4944 = vunpack.c.l.b16 %v4624
    %v4945 = vunpack.c.h.b16 %v4624
    %v4946 = vunpack.c.l.b16 %v4625
    %v4947 = vunpack.c.h.b16 %v4625
    %v4948 = vunpack.c.l.b16 %v4626
    %v4949 = vunpack.c.h.b16 %v4626
    %v4950 = vunpack.c.l.b16 %v4627
    %v4951 = vunpack.c.h.b16 %v4627
    %v4952 = vunpack.c.l.b16 %v4628
    %v4953 = vunpack.c.h.b16 %v4628
    %v4954 = vunpack.c.l.b16 %v4629
    %v4955 = vunpack.c.h.b16 %v4629
    %v4956 = vunpack.c.l.b16 %v4630
    %v4957 = vunpack.c.h.b16 %v4630
    %v4958 = vunpack.c.l.b16 %v4631
    %v4959 = vunpack.c.h.b16 %v4631
    %v4960 = vunpack.c.l.b16 %v4632
    %v4961 = vunpack.c.h.b16 %v4632
    %v4962 = vunpack.c.l.b16 %v4633
    %v4963 = vunpack.c.h.b16 %v4633
    %v4964 = vunpack.c.l.b16 %v4634
    %v4965 = vunpack.c.h.b16 %v4634
    %v4966 = vunpack.c.l.b16 %v4635
    %v4967 = vunpack.c.h.b16 %v4635
    %v4968 = vunpack.c.l.b16 %v4636
    %v4969 = vunpack.c.h.b16 %v4636
    %v4970 = vunpack.c.l.b16 %v4637
    %v4971 = vunpack.c.h.b16 %v4637
    %v4972 = vunpack.c.l.b16 %v4638
    %v4973 = vunpack.c.h.b16 %v4638
    %v4974 = vunpack.c.l.b16 %v4639
    %v4975 = vunpack.c.h.b16 %v4639
    %v4976 = vunpack.c.l.b16 %v4640
    %v4977 = vunpack.c.h.b16 %v4640
    %v4978 = vunpack.c.l.b16 %v4641
    %v4979 = vunpack.c.h.b16 %v4641
    %v4980 = vunpack.c.l.b16 %v4642
    %v4981 = vunpack.c.h.b16 %v4642
    %v4982 = vunpack.c.l.b16 %v4643
    %v4983 = vunpack.c.h.b16 %v4643
    %v4984 = vunpack.c.l.b16 %v4644
    %v4985 = vunpack.c.h.b16 %v4644
    %v4986 = vunpack.c.l.b16 %v4645
    %v4987 = vunpack.c.h.b16 %v4645
    %v4988 = vunpack.c.l.b16 %v4646
    %v4989 = vunpack.c.h.b16 %v4646
    %v4990 = vunpack.c.l.b16 %v4647
    %v4991 = vunpack.c.h.b16 %v4647
    %v4992 = vunpack.c.l.b16 %v4648
    %v4993 = vunpack.c.h.b16 %v4648
    %v4994 = vunpack.c.l.b16 %v4649
    %v4995 = vunpack.c.h.b16 %v4649
    %v4996 = vunpack.c.l.b16 %v4650
    %v4997 = vunpack.c.h.b16 %v4650
    %v4998 = vunpack.c.l.b16 %v4651
    %v4999 = vunpack.c.h.b16 %v4651
    %v5000 = vunpack.c.l.b16 %v4652
    %v5001 = vunpack.c.h.b16 %v4652
    %v5002 = vunpack.c.l.b16 %v4653
    %v5003 = vunpack.c.h.b16 %v4653
    %v5004 = vunpack.c.l.b16 %v4654
    %v5005 = vunpack.c.h.b16 %v4654
    %v5006 = vunpack.c.l.b16 %v4655
    %v5007 = vunpack.c.h.b16 %v4655
    %v5008 = vunpack.c.l.b16 %v4656
    %v5009 = vunpack.c.h.b16 %v4656
    %v5010 = vunpack.c.l.b16 %v4657
    %v5011 = vunpack.c.h.b16 %v4657
    %v5012 = vunpack.c.l.b16 %v4658
    %v5013 = vunpack.c.h.b16 %v4658
    %v5014 = vunpack.c.l.b16 %v4659
    %v5015 = vunpack.c.h.b16 %v4659
    %v5016 = vunpack.c.l.b16 %v4660
    %v5017 = vunpack.c.h.b16 %v4660
    %v5018 = vunpack.c.l.b16 %v4661
    %v5019 = vunpack.c.h.b16 %v4661
    %v5020 = vunpack.c.l.b16 %v4662
    %v5021 = vunpack.c.h.b16 %v4662
    %v5022 = vunpack.c.l.b16 %v4663
    %v5023 = vunpack.c.h.b16 %v4663
    %v5024 = vunpack.c.l.b16 %v4664
    %v5025 = vunpack.c.h.b16 %v4664
    %v5026 = vunpack.c.l.b16 %v4665
    %v5027 = vunpack.c.h.b16 %v4665
    %v5028 = vunpack.c.l.b16 %v4666
    %v5029 = vunpack.c.h.b16 %v4666
    %v5030 = vunpack.c.l.b16 %v4667
    %v5031 = vunpack.c.h.b16 %v4667
    %v5032 = vunpack.c.l.b16 %v4668
    %v5033 = vunpack.c.h.b16 %v4668
    %v5034 = vunpack.c.l.b16 %v4669
    %v5035 = vunpack.c.h.b16 %v4669
    %v5036 = vunpack.c.l.b16 %v4670
    %v5037 = vunpack.c.h.b16 %v4670
    %v5038 = vunpack.c.l.b16 %v4671
    %v5039 = vunpack.c.h.b16 %v4671
    %v5040 = vunpack.c.l.b16 %v4672
    %v5041 = vunpack.c.h.b16 %v4672
    %v5042 = vunpack.c.l.b16 %v4673
    %v5043 = vunpack.c.h.b16 %v4673
    %v5044 = vunpack.c.l.b16 %v4674
    %v5045 = vunpack.c.h.b16 %v4674
    %v5046 = vunpack.c.l.b16 %v4675
    %v5047 = vunpack.c.h.b16 %v4675
    %v5048 = vunpack.c.l.b16 %v4676
    %v5049 = vunpack.c.h.b16 %v4676
    %v5050 = vunpack.c.l.b16 %v4677
    %v5051 = vunpack.c.h.b16 %v4677
    %v5052 = vunpack.c.l.b16 %v4678
    %v5053 = vunpack.c.h.b16 %v4678
    %v5054 = vunpack.c.l.b16 %v4679
    %v5055 = vunpack.c.h.b16 %v4679
    %v5056 = vunpack.c.l.b16 %v4680
    %v5057 = vunpack.c.h.b16 %v4680
    %v5058 = vunpack.c.l.b16 %v4681
    %v5059 = vunpack.c.h.b16 %v4681
    %v5060 = vunpack.c.l.b16 %v4682
    %v5061 = vunpack.c.h.b16 %v4682
    %v5062 = vunpack.c.l.b16 %v4683
    %v5063 = vunpack.c.h.b16 %v4683
    %v5064 = vunpack.c.l.b16 %v4684
    %v5065 = vunpack.c.h.b16 %v4684
    %v5066 = vunpack.c.l.b16 %v4685
    %v5067 = vunpack.c.h.b16 %v4685
    %v5068 = vunpack.c.l.b16 %v4686
    %v5069 = vunpack.c.h.b16 %v4686
    %v5070 = vunpack.c.l.b16 %v4687
    %v5071 = vunpack.c.h.b16 %v4687
    %v5072 = vpack.c.b16 %v4820, %v4816
    %v5073 = vpack.c.b16 %v4821, %v4817
    %v5074 = vpack.c.b16 %v4822, %v4818
    %v5075 = vpack.c.b16 %v4823, %v4819
    %v5076 = vpack.c.b16 %v4828, %v4824
    %v5077 = vpack.c.b16 %v4829, %v4825
    %v5078 = vpack.c.b16 %v4830, %v4826
    %v5079 = vpack.c.b16 %v4831, %v4827
    %v5080 = vpack.c.b16 %v4836, %v4832
    %v5081 = vpack.c.b16 %v4837, %v4833
    %v5082 = vpack.c.b16 %v4838, %v4834
    %v5083 = vpack.c.b16 %v4839, %v4835
    %v5084 = vpack.c.b16 %v4844, %v4840
    %v5085 = vpack.c.b16 %v4845, %v4841
    %v5086 = vpack.c.b16 %v4846, %v4842
    %v5087 = vpack.c.b16 %v4847, %v4843
    %v5088 = vpack.c.b16 %v4852, %v4848
    %v5089 = vpack.c.b16 %v4853, %v4849
    %v5090 = vpack.c.b16 %v4854, %v4850
    %v5091 = vpack.c.b16 %v4855, %v4851
    %v5092 = vpack.c.b16 %v4860, %v4856
    %v5093 = vpack.c.b16 %v4861, %v4857
    %v5094 = vpack.c.b16 %v4862, %v4858
    %v5095 = vpack.c.b16 %v4863, %v4859
    %v5096 = vpack.c.b16 %v4868, %v4864
    %v5097 = vpack.c.b16 %v4869, %v4865
    %v5098 = vpack.c.b16 %v4870, %v4866
    %v5099 = vpack.c.b16 %v4871, %v4867
    %v5100 = vpack.c.b16 %v4876, %v4872
    %v5101 = vpack.c.b16 %v4877, %v4873
    %v5102 = vpack.c.b16 %v4878, %v4874
    %v5103 = vpack.c.b16 %v4879, %v4875
    %v5104 = vpack.c.b16 %v4884, %v4880
    %v5105 = vpack.c.b16 %v4885, %v4881
    %v5106 = vpack.c.b16 %v4886, %v4882
    %v5107 = vpack.c.b16 %v4887, %v4883
    %v5108 = vpack.c.b16 %v4892, %v4888
    %v5109 = vpack.c.b16 %v4893, %v4889
    %v5110 = vpack.c.b16 %v4894, %v4890
    %v5111 = vpack.c.b16 %v4895, %v4891
    %v5112 = vpack.c.b16 %v4900, %v4896
    %v5113 = vpack.c.b16 %v4901, %v4897
    %v5114 = vpack.c.b16 %v4902, %v4898
    %v5115 = vpack.c.b16 %v4903, %v4899
    %v5116 = vpack.c.b16 %v4908, %v4904
    %v5117 = vpack.c.b16 %v4909, %v4905
    %v5118 = vpack.c.b16 %v4910, %v4906
    %v5119 = vpack.c.b16 %v4911, %v4907
    %v5120 = vpack.c.b16 %v4916, %v4912
    %v5121 = vpack.c.b16 %v4917, %v4913
    %v5122 = vpack.c.b16 %v4918, %v4914
    %v5123 = vpack.c.b16 %v4919, %v4915
    %v5124 = vpack.c.b16 %v4924, %v4920
    %v5125 = vpack.c.b16 %v4925, %v4921
    %v5126 = vpack.c.b16 %v4926, %v4922
    %v5127 = vpack.c.b16 %v4927, %v4923
    %v5128 = vpack.c.b16 %v4932, %v4928
    %v5129 = vpack.c.b16 %v4933, %v4929
    %v5130 = vpack.c.b16 %v4934, %v4930
    %v5131 = vpack.c.b16 %v4935, %v4931
    %v5132 = vpack.c.b16 %v4940, %v4936
    %v5133 = vpack.c.b16 %v4941, %v4937
    %v5134 = vpack.c.b16 %v4942, %v4938
    %v5135 = vpack.c.b16 %v4943, %v4939
    %v5136 = vpack.c.b16 %v4948, %v4944
    %v5137 = vpack.c.b16 %v4949, %v4945
    %v5138 = vpack.c.b16 %v4950, %v4946
    %v5139 = vpack.c.b16 %v4951, %v4947
    %v5140 = vpack.c.b16 %v4956, %v4952
    %v5141 = vpack.c.b16 %v4957, %v4953
    %v5142 = vpack.c.b16 %v4958, %v4954
    %v5143 = vpack.c.b16 %v4959, %v4955
    %v5144 = vpack.c.b16 %v4964, %v4960
    %v5145 = vpack.c.b16 %v4965, %v4961
    %v5146 = vpack.c.b16 %v4966, %v4962
    %v5147 = vpack.c.b16 %v4967, %v4963
    %v5148 = vpack.c.b16 %v4972, %v4968
    %v5149 = vpack.c.b16 %v4973, %v4969
    %v5150 = vpack.c.b16 %v4974, %v4970
    %v5151 = vpack.c.b16 %v4975, %v4971
    %v5152 = vpack.c.b16 %v4980, %v4976
    %v5153 = vpack.c.b16 %v4981, %v4977
    %v5154 = vpack.c.b16 %v4982, %v4978
    %v5155 = vpack.c.b16 %v4983, %v4979
    %v5156 = vpack.c.b16 %v4988, %v4984
    %v5157 = vpack.c.b16 %v4989, %v4985
    %v5158 = vpack.c.b16 %v4990, %v4986
    %v5159 = vpack.c.b16 %v4991, %v4987
    %v5160 = vpack.c.b16 %v4996, %v4992
    %v5161 = vpack.c.b16 %v4997, %v4993
    %v5162 = vpack.c.b16 %v4998, %v4994
    %v5163 = vpack.c.b16 %v4999, %v4995
    %v5164 = vpack.c.b16 %v5004, %v5000
    %v5165 = vpack.c.b16 %v5005, %v5001
    %v5166 = vpack.c.b16 %v5006, %v5002
    %v5167 = vpack.c.b16 %v5007, %v5003
    %v5168 = vpack.c.b16 %v5012, %v5008
    %v5169 = vpack.c.b16 %v5013, %v5009
    %v5170 = vpack.c.b16 %v5014, %v5010
    %v5171 = vpack.c.b16 %v5015, %v5011
    %v5172 = vpack.c.b16 %v5020, %v5016
    %v5173 = vpack.c.b16 %v5021, %v5017
    %v5174 = vpack.c.b16 %v5022, %v5018
    %v5175 = vpack.c.b16 %v5023, %v5019
    %v5176 = vpack.c.b16 %v5028, %v5024
    %v5177 = vpack.c.b16 %v5029, %v5025
    %v5178 = vpack.c.b16 %v5030, %v5026
    %v5179 = vpack.c.b16 %v5031, %v5027
    %v5180 = vpack.c.b16 %v5036, %v5032
    %v5181 = vpack.c.b16 %v5037, %v5033
    %v5182 = vpack.c.b16 %v5038, %v5034
    %v5183 = vpack.c.b16 %v5039, %v5035
    %v5184 = vpack.c.b16 %v5044, %v5040
    %v5185 = vpack.c.b16 %v5045, %v5041
    %v5186 = vpack.c.b16 %v5046, %v5042
    %v5187 = vpack.c.b16 %v5047, %v5043
    %v5188 = vpack.c.b16 %v5052, %v5048
    %v5189 = vpack.c.b16 %v5053, %v5049
    %v5190 = vpack.c.b16 %v5054, %v5050
    %v5191 = vpack.c.b16 %v5055, %v5051
    %v5192 = vpack.c.b16 %v5060, %v5056
    %v5193 = vpack.c.b16 %v5061, %v5057
    %v5194 = vpack.c.b16 %v5062, %v5058
    %v5195 = vpack.c.b16 %v5063, %v5059
    %v5196 = vpack.c.b16 %v5068, %v5064
    %v5197 = vpack.c.b16 %v5069, %v5065
    %v5198 = vpack.c.b16 %v5070, %v5066
    %v5199 = vpack.c.b16 %v5071, %v5067
    %5328 = vmatprep.subr.bf16.mxu0 %v5073
    %5329 = vmatpush1.bf16.msra.mxu0 %v5072
    %5330 = vmatprep.subr.bf16.mxu0 %v5077
    %5331 = vmatpush1.bf16.msra.mxu0 %v5076
    %5332 = vmatprep.subr.bf16.mxu0 %v5081
    %5333 = vmatpush1.bf16.msra.mxu0 %v5080
    %5334 = vmatprep.subr.bf16.mxu0 %v5085
    %5335 = vmatpush1.bf16.msra.mxu0 %v5084
    %5336 = vmatprep.subr.bf16.mxu0 %v5089
    %5337 = vmatpush1.bf16.msra.mxu0 %v5088
    %5338 = vmatprep.subr.bf16.mxu0 %v5093
    %5339 = vmatpush1.bf16.msra.mxu0 %v5092
    %5340 = vmatprep.subr.bf16.mxu0 %v5097
    %5341 = vmatpush1.bf16.msra.mxu0 %v5096
    %5342 = vmatprep.subr.bf16.mxu0 %v5101
    %5343 = vmatpush1.bf16.msra.mxu0 %v5100
    %5344 = vmatprep.subr.bf16.mxu0 %v5105
    %5345 = vmatpush1.bf16.msra.mxu0 %v5104
    %5346 = vmatprep.subr.bf16.mxu0 %v5109
    %5347 = vmatpush1.bf16.msra.mxu0 %v5108
    %5348 = vmatprep.subr.bf16.mxu0 %v5113
    %5349 = vmatpush1.bf16.msra.mxu0 %v5112
    %5350 = vmatprep.subr.bf16.mxu0 %v5117
    %5351 = vmatpush1.bf16.msra.mxu0 %v5116
    %5352 = vmatprep.subr.bf16.mxu0 %v5121
    %5353 = vmatpush1.bf16.msra.mxu0 %v5120
    %5354 = vmatprep.subr.bf16.mxu0 %v5125
    %5355 = vmatpush1.bf16.msra.mxu0 %v5124
    %5356 = vmatprep.subr.bf16.mxu0 %v5129
    %5357 = vmatpush1.bf16.msra.mxu0 %v5128
    %5358 = vmatprep.subr.bf16.mxu0 %v5133
    %5359 = vmatpush1.bf16.msra.mxu0 %v5132
    %5360 = vmatprep.mubr.bf16.mxu0 %v4557
    %5361 = vmatmul.mubr.bf16.gmra.mrb[0].mxu0 %v4556
    %v5362 = vpop.f32.mrb[0].mxu0
    %v5363 = vadd.f32 0.0, %v5362
    %v5364 = vpop.f32.mrb[0].mxu0
    %v5365 = vadd.f32 0.0, %v5364
    %v5366 = vpop.f32.mrb[0].mxu0
    %v5367 = vpop.f32.mrb[0].mxu0
    %5368 = vdwg.mxu0
    %5369 = vmatprep.subr.bf16.mxu0 %v5137
    %5370 = vmatpush1.bf16.msra.mxu0 %v5136
    %5371 = vmatprep.subr.bf16.mxu0 %v5141
    %5372 = vmatpush1.bf16.msra.mxu0 %v5140
    %5373 = vmatprep.subr.bf16.mxu0 %v5145
    %5374 = vmatpush1.bf16.msra.mxu0 %v5144
    %5375 = vmatprep.subr.bf16.mxu0 %v5149
    %5376 = vmatpush1.bf16.msra.mxu0 %v5148
    %5377 = vmatprep.subr.bf16.mxu0 %v5153
    %5378 = vmatpush1.bf16.msra.mxu0 %v5152
    %5379 = vmatprep.subr.bf16.mxu0 %v5157
    %5380 = vmatpush1.bf16.msra.mxu0 %v5156
    %5381 = vmatprep.subr.bf16.mxu0 %v5161
    %5382 = vmatpush1.bf16.msra.mxu0 %v5160
    %5383 = vmatprep.subr.bf16.mxu0 %v5165
    %5384 = vmatpush1.bf16.msra.mxu0 %v5164
    %5385 = vmatprep.subr.bf16.mxu0 %v5169
    %5386 = vmatpush1.bf16.msra.mxu0 %v5168
    %5387 = vmatprep.subr.bf16.mxu0 %v5173
    %5388 = vmatpush1.bf16.msra.mxu0 %v5172
    %5389 = vmatprep.subr.bf16.mxu0 %v5177
    %5390 = vmatpush1.bf16.msra.mxu0 %v5176
    %5391 = vmatprep.subr.bf16.mxu0 %v5181
    %5392 = vmatpush1.bf16.msra.mxu0 %v5180
    %5393 = vmatprep.subr.bf16.mxu0 %v5185
    %5394 = vmatpush1.bf16.msra.mxu0 %v5184
    %5395 = vmatprep.subr.bf16.mxu0 %v5189
    %5396 = vmatpush1.bf16.msra.mxu0 %v5188
    %5397 = vmatprep.subr.bf16.mxu0 %v5193
    %5398 = vmatpush1.bf16.msra.mxu0 %v5192
    %5399 = vmatprep.subr.bf16.mxu0 %v5197
    %5400 = vmatpush1.bf16.msra.mxu0 %v5196
    %5401 = vmatprep.mubr.bf16.mxu0 %v4559
    %5402 = vmatmul.mubr.bf16.gmra.mrb[0].mxu0 %v4558
    %v5403 = vpop.f32.mrb[0].mxu0
    %v5404 = vadd.f32 %v5363, %v5403
    %v5405 = vpop.f32.mrb[0].mxu0
    %v5406 = vadd.f32 %v5365, %v5405
    %v5407 = vpop.f32.mrb[0].mxu0
    %v5408 = vpop.f32.mrb[0].mxu0
    %5409 = vdwg.mxu0
    %5410 = vmatprep.subr.bf16.mxu0 %v5075
    %5411 = vmatpush1.bf16.msra.mxu0 %v5074
    %5412 = vmatprep.subr.bf16.mxu0 %v5079
    %5413 = vmatpush1.bf16.msra.mxu0 %v5078
    %5414 = vmatprep.subr.bf16.mxu0 %v5083
    %5415 = vmatpush1.bf16.msra.mxu0 %v5082
    %5416 = vmatprep.subr.bf16.mxu0 %v5087
    %5417 = vmatpush1.bf16.msra.mxu0 %v5086
    %5418 = vmatprep.subr.bf16.mxu0 %v5091
    %5419 = vmatpush1.bf16.msra.mxu0 %v5090
    %5420 = vmatprep.subr.bf16.mxu0 %v5095
    %5421 = vmatpush1.bf16.msra.mxu0 %v5094
    %5422 = vmatprep.subr.bf16.mxu0 %v5099
    %5423 = vmatpush1.bf16.msra.mxu0 %v5098
    %5424 = vmatprep.subr.bf16.mxu0 %v5103
    %5425 = vmatpush1.bf16.msra.mxu0 %v5102
    %5426 = vmatprep.subr.bf16.mxu0 %v5107
    %5427 = vmatpush1.bf16.msra.mxu0 %v5106
    %5428 = vmatprep.subr.bf16.mxu0 %v5111
    %5429 = vmatpush1.bf16.msra.mxu0 %v5110
    %5430 = vmatprep.subr.bf16.mxu0 %v5115
    %5431 = vmatpush1.bf16.msra.mxu0 %v5114
    %5432 = vmatprep.subr.bf16.mxu0 %v5119
    %5433 = vmatpush1.bf16.msra.mxu0 %v5118
    %5434 = vmatprep.subr.bf16.mxu0 %v5123
    %5435 = vmatpush1.bf16.msra.mxu0 %v5122
    %5436 = vmatprep.subr.bf16.mxu0 %v5127
    %5437 = vmatpush1.bf16.msra.mxu0 %v5126
    %5438 = vmatprep.subr.bf16.mxu0 %v5131
    %5439 = vmatpush1.bf16.msra.mxu0 %v5130
    %5440 = vmatprep.subr.bf16.mxu0 %v5135
    %5441 = vmatpush1.bf16.msra.mxu0 %v5134
    %5442 = vmatprep.mubr.bf16.mxu0 %v4557
    %5443 = vmatmul.mubr.bf16.gmra.mrb[0].mxu0 %v4556
    %v5444 = vpop.f32.mrb[0].mxu0
    %v5445 = vadd.f32 0.0, %v5444
    %v5446 = vpop.f32.mrb[0].mxu0
    %v5447 = vadd.f32 0.0, %v5446
    %v5448 = vpop.f32.mrb[0].mxu0
    %v5449 = vpop.f32.mrb[0].mxu0
    %5450 = vdwg.mxu0
    %5451 = vmatprep.subr.bf16.mxu0 %v5139
    %5452 = vmatpush1.bf16.msra.mxu0 %v5138
    %5453 = vmatprep.subr.bf16.mxu0 %v5143
    %5454 = vmatpush1.bf16.msra.mxu0 %v5142
    %5455 = vmatprep.subr.bf16.mxu0 %v5147
    %5456 = vmatpush1.bf16.msra.mxu0 %v5146
    %5457 = vmatprep.subr.bf16.mxu0 %v5151
    %5458 = vmatpush1.bf16.msra.mxu0 %v5150
    %5459 = vmatprep.subr.bf16.mxu0 %v5155
    %5460 = vmatpush1.bf16.msra.mxu0 %v5154
    %5461 = vmatprep.subr.bf16.mxu0 %v5159
    %5462 = vmatpush1.bf16.msra.mxu0 %v5158
    %5463 = vmatprep.subr.bf16.mxu0 %v5163
    %5464 = vmatpush1.bf16.msra.mxu0 %v5162
    %5465 = vmatprep.subr.bf16.mxu0 %v5167
    %5466 = vmatpush1.bf16.msra.mxu0 %v5166
    %5467 = vmatprep.subr.bf16.mxu0 %v5171
    %5468 = vmatpush1.bf16.msra.mxu0 %v5170
    %5469 = vmatprep.subr.bf16.mxu0 %v5175
    %5470 = vmatpush1.bf16.msra.mxu0 %v5174
    %5471 = vmatprep.subr.bf16.mxu0 %v5179
    %5472 = vmatpush1.bf16.msra.mxu0 %v5178
    %5473 = vmatprep.subr.bf16.mxu0 %v5183
    %5474 = vmatpush1.bf16.msra.mxu0 %v5182
    %5475 = vmatprep.subr.bf16.mxu0 %v5187
    %5476 = vmatpush1.bf16.msra.mxu0 %v5186
    %5477 = vmatprep.subr.bf16.mxu0 %v5191
    %5478 = vmatpush1.bf16.msra.mxu0 %v5190
    %5479 = vmatprep.subr.bf16.mxu0 %v5195
    %5480 = vmatpush1.bf16.msra.mxu0 %v5194
    %5481 = vmatprep.subr.bf16.mxu0 %v5199
    %5482 = vmatpush1.bf16.msra.mxu0 %v5198
    %5483 = vmatprep.mubr.bf16.mxu0 %v4559
    %5484 = vmatmul.mubr.bf16.gmra.mrb[0].mxu0 %v4558
    %v5485 = vpop.f32.mrb[0].mxu0
    %v5486 = vadd.f32 %v5445, %v5485
    %v5487 = vpop.f32.mrb[0].mxu0
    %v5488 = vadd.f32 %v5447, %v5487
    %v5489 = vpop.f32.mrb[0].mxu0
    %v5490 = vpop.f32.mrb[0].mxu0
    %5491 = vdwg.mxu0
    %v5492 = vpack.c.bf16 %v5404, %v5404
    %v5493 = vpack.c.bf16 %v5406, %v5406
    %v5494 = vpack.c.bf16 %v5486, %v5486
    %v5495 = vpack.c.bf16 %v5488, %v5488
    %v5496 = vld [vmem:[%s9] sm:$0xf]
    %v5497 = vld [vmem:[%s9 + $0x4] sm:$0xf]
    %v5498 = vld [vmem:[%s9 + $0x8] sm:$0xf]
    %v5499 = vld [vmem:[%s9 + $0xc] sm:$0xf]
    %v5500 = vld [vmem:[%s9 + $0x10] sm:$0xf]
    %v5501 = vld [vmem:[%s9 + $0x14] sm:$0xf]
    %v5502 = vld [vmem:[%s9 + $0x18] sm:$0xf]
    %v5503 = vld [vmem:[%s9 + $0x1c] sm:$0xf]
    %v5504 = vld [vmem:[%s9 + $0x20] sm:$0xf]
    %v5505 = vld [vmem:[%s9 + $0x24] sm:$0xf]
    %v5506 = vld [vmem:[%s9 + $0x28] sm:$0xf]
    %v5507 = vld [vmem:[%s9 + $0x2c] sm:$0xf]
    %v5508 = vld [vmem:[%s9 + $0x30] sm:$0xf]
    %v5509 = vld [vmem:[%s9 + $0x34] sm:$0xf]
    %v5510 = vld [vmem:[%s9 + $0x38] sm:$0xf]
    %v5511 = vld [vmem:[%s9 + $0x3c] sm:$0xf]
    %v5512 = vld [vmem:[%s9 + $0x40] sm:$0xf]
    %v5513 = vld [vmem:[%s9 + $0x44] sm:$0xf]
    %v5514 = vld [vmem:[%s9 + $0x48] sm:$0xf]
    %v5515 = vld [vmem:[%s9 + $0x4c] sm:$0xf]
    %v5516 = vld [vmem:[%s9 + $0x50] sm:$0xf]
    %v5517 = vld [vmem:[%s9 + $0x54] sm:$0xf]
    %v5518 = vld [vmem:[%s9 + $0x58] sm:$0xf]
    %v5519 = vld [vmem:[%s9 + $0x5c] sm:$0xf]
    %v5520 = vld [vmem:[%s9 + $0x60] sm:$0xf]
    %v5521 = vld [vmem:[%s9 + $0x64] sm:$0xf]
    %v5522 = vld [vmem:[%s9 + $0x68] sm:$0xf]
    %v5523 = vld [vmem:[%s9 + $0x6c] sm:$0xf]
    %v5524 = vld [vmem:[%s9 + $0x70] sm:$0xf]
    %v5525 = vld [vmem:[%s9 + $0x74] sm:$0xf]
    %v5526 = vld [vmem:[%s9 + $0x78] sm:$0xf]
    %v5527 = vld [vmem:[%s9 + $0x7c] sm:$0xf]
    %v5528 = vld [vmem:[%s9 + $0x80] sm:$0xf]
    %v5529 = vld [vmem:[%s9 + $0x84] sm:$0xf]
    %v5530 = vld [vmem:[%s9 + $0x88] sm:$0xf]
    %v5531 = vld [vmem:[%s9 + $0x8c] sm:$0xf]
    %v5532 = vld [vmem:[%s9 + $0x90] sm:$0xf]
    %v5533 = vld [vmem:[%s9 + $0x94] sm:$0xf]
    %v5534 = vld [vmem:[%s9 + $0x98] sm:$0xf]
    %v5535 = vld [vmem:[%s9 + $0x9c] sm:$0xf]
    %v5536 = vld [vmem:[%s9 + $0xa0] sm:$0xf]
    %v5537 = vld [vmem:[%s9 + $0xa4] sm:$0xf]
    %v5538 = vld [vmem:[%s9 + $0xa8] sm:$0xf]
    %v5539 = vld [vmem:[%s9 + $0xac] sm:$0xf]
    %v5540 = vld [vmem:[%s9 + $0xb0] sm:$0xf]
    %v5541 = vld [vmem:[%s9 + $0xb4] sm:$0xf]
    %v5542 = vld [vmem:[%s9 + $0xb8] sm:$0xf]
    %v5543 = vld [vmem:[%s9 + $0xbc] sm:$0xf]
    %v5544 = vld [vmem:[%s9 + $0xc0] sm:$0xf]
    %v5545 = vld [vmem:[%s9 + $0xc4] sm:$0xf]
    %v5546 = vld [vmem:[%s9 + $0xc8] sm:$0xf]
    %v5547 = vld [vmem:[%s9 + $0xcc] sm:$0xf]
    %v5548 = vld [vmem:[%s9 + $0xd0] sm:$0xf]
    %v5549 = vld [vmem:[%s9 + $0xd4] sm:$0xf]
    %v5550 = vld [vmem:[%s9 + $0xd8] sm:$0xf]
    %v5551 = vld [vmem:[%s9 + $0xdc] sm:$0xf]
    %v5552 = vld [vmem:[%s9 + $0xe0] sm:$0xf]
    %v5553 = vld [vmem:[%s9 + $0xe4] sm:$0xf]
    %v5554 = vld [vmem:[%s9 + $0xe8] sm:$0xf]
    %v5555 = vld [vmem:[%s9 + $0xec] sm:$0xf]
    %v5556 = vld [vmem:[%s9 + $0xf0] sm:$0xf]
    %v5557 = vld [vmem:[%s9 + $0xf4] sm:$0xf]
    %v5558 = vld [vmem:[%s9 + $0xf8] sm:$0xf]
    %v5559 = vld [vmem:[%s9 + $0xfc] sm:$0xf]
    %v5624 = vunpack.c.l.b16 %v5496
    %v5625 = vunpack.c.l.b16 %v5497
    %v5626 = vunpack.c.l.b16 %v5498
    %v5627 = vunpack.c.l.b16 %v5499
    %v5628 = vunpack.c.l.b16 %v5500
    %v5629 = vunpack.c.l.b16 %v5501
    %v5630 = vunpack.c.l.b16 %v5502
    %v5631 = vunpack.c.l.b16 %v5503
    %v5632 = vunpack.c.l.b16 %v5504
    %v5633 = vunpack.c.l.b16 %v5505
    %v5634 = vunpack.c.l.b16 %v5506
    %v5635 = vunpack.c.l.b16 %v5507
    %v5636 = vunpack.c.l.b16 %v5508
    %v5637 = vunpack.c.l.b16 %v5509
    %v5638 = vunpack.c.l.b16 %v5510
    %v5639 = vunpack.c.l.b16 %v5511
    %v5640 = vunpack.c.l.b16 %v5512
    %v5641 = vunpack.c.l.b16 %v5513
    %v5642 = vunpack.c.l.b16 %v5514
    %v5643 = vunpack.c.l.b16 %v5515
    %v5644 = vunpack.c.l.b16 %v5516
    %v5645 = vunpack.c.l.b16 %v5517
    %v5646 = vunpack.c.l.b16 %v5518
    %v5647 = vunpack.c.l.b16 %v5519
    %v5648 = vunpack.c.l.b16 %v5520
    %v5649 = vunpack.c.l.b16 %v5521
    %v5650 = vunpack.c.l.b16 %v5522
    %v5651 = vunpack.c.l.b16 %v5523
    %v5652 = vunpack.c.l.b16 %v5524
    %v5653 = vunpack.c.l.b16 %v5525
    %v5654 = vunpack.c.l.b16 %v5526
    %v5655 = vunpack.c.l.b16 %v5527
    %v5656 = vunpack.c.l.b16 %v5528
    %v5657 = vunpack.c.l.b16 %v5529
    %v5658 = vunpack.c.l.b16 %v5530
    %v5659 = vunpack.c.l.b16 %v5531
    %v5660 = vunpack.c.l.b16 %v5532
    %v5661 = vunpack.c.l.b16 %v5533
    %v5662 = vunpack.c.l.b16 %v5534
    %v5663 = vunpack.c.l.b16 %v5535
    %v5664 = vunpack.c.l.b16 %v5536
    %v5665 = vunpack.c.l.b16 %v5537
    %v5666 = vunpack.c.l.b16 %v5538
    %v5667 = vunpack.c.l.b16 %v5539
    %v5668 = vunpack.c.l.b16 %v5540
    %v5669 = vunpack.c.l.b16 %v5541
    %v5670 = vunpack.c.l.b16 %v5542
    %v5671 = vunpack.c.l.b16 %v5543
    %v5672 = vunpack.c.l.b16 %v5544
    %v5673 = vunpack.c.l.b16 %v5545
    %v5674 = vunpack.c.l.b16 %v5546
    %v5675 = vunpack.c.l.b16 %v5547
    %v5676 = vunpack.c.l.b16 %v5548
    %v5677 = vunpack.c.l.b16 %v5549
    %v5678 = vunpack.c.l.b16 %v5550
    %v5679 = vunpack.c.l.b16 %v5551
    %v5680 = vunpack.c.l.b16 %v5552
    %v5681 = vunpack.c.l.b16 %v5553
    %v5682 = vunpack.c.l.b16 %v5554
    %v5683 = vunpack.c.l.b16 %v5555
    %v5684 = vunpack.c.l.b16 %v5556
    %v5685 = vunpack.c.l.b16 %v5557
    %v5686 = vunpack.c.l.b16 %v5558
    %v5687 = vunpack.c.l.b16 %v5559
    %v5688 = vpack.c.b16 %v5625, %v5624
    %v5689 = vpack.c.b16 %v5627, %v5626
    %v5690 = vpack.c.b16 %v5629, %v5628
    %v5691 = vpack.c.b16 %v5631, %v5630
    %v5692 = vpack.c.b16 %v5633, %v5632
    %v5693 = vpack.c.b16 %v5635, %v5634
    %v5694 = vpack.c.b16 %v5637, %v5636
    %v5695 = vpack.c.b16 %v5639, %v5638
    %v5696 = vpack.c.b16 %v5641, %v5640
    %v5697 = vpack.c.b16 %v5643, %v5642
    %v5698 = vpack.c.b16 %v5645, %v5644
    %v5699 = vpack.c.b16 %v5647, %v5646
    %v5700 = vpack.c.b16 %v5649, %v5648
    %v5701 = vpack.c.b16 %v5651, %v5650
    %v5702 = vpack.c.b16 %v5653, %v5652
    %v5703 = vpack.c.b16 %v5655, %v5654
    %v5704 = vpack.c.b16 %v5657, %v5656
    %v5705 = vpack.c.b16 %v5659, %v5658
    %v5706 = vpack.c.b16 %v5661, %v5660
    %v5707 = vpack.c.b16 %v5663, %v5662
    %v5708 = vpack.c.b16 %v5665, %v5664
    %v5709 = vpack.c.b16 %v5667, %v5666
    %v5710 = vpack.c.b16 %v5669, %v5668
    %v5711 = vpack.c.b16 %v5671, %v5670
    %v5712 = vpack.c.b16 %v5673, %v5672
    %v5713 = vpack.c.b16 %v5675, %v5674
    %v5714 = vpack.c.b16 %v5677, %v5676
    %v5715 = vpack.c.b16 %v5679, %v5678
    %v5716 = vpack.c.b16 %v5681, %v5680
    %v5717 = vpack.c.b16 %v5683, %v5682
    %v5718 = vpack.c.b16 %v5685, %v5684
    %v5719 = vpack.c.b16 %v5687, %v5686
    %5752 = vmatprep.subr.bf16.mxu0 0
    %5753 = vmatpush1.bf16.msra.mxu0 %v5688
    %5754 = vmatprep.subr.bf16.mxu0 0
    %5755 = vmatpush1.bf16.msra.mxu0 %v5689
    %5756 = vmatprep.subr.bf16.mxu0 0
    %5757 = vmatpush1.bf16.msra.mxu0 %v5690
    %5758 = vmatprep.subr.bf16.mxu0 0
    %5759 = vmatpush1.bf16.msra.mxu0 %v5691
    %5760 = vmatprep.subr.bf16.mxu0 0
    %5761 = vmatpush1.bf16.msra.mxu0 %v5692
    %5762 = vmatprep.subr.bf16.mxu0 0
    %5763 = vmatpush1.bf16.msra.mxu0 %v5693
    %5764 = vmatprep.subr.bf16.mxu0 0
    %5765 = vmatpush1.bf16.msra.mxu0 %v5694
    %5766 = vmatprep.subr.bf16.mxu0 0
    %5767 = vmatpush1.bf16.msra.mxu0 %v5695
    %5768 = vmatprep.subr.bf16.mxu0 0
    %5769 = vmatpush1.bf16.msra.mxu0 %v5696
    %5770 = vmatprep.subr.bf16.mxu0 0
    %5771 = vmatpush1.bf16.msra.mxu0 %v5697
    %5772 = vmatprep.subr.bf16.mxu0 0
    %5773 = vmatpush1.bf16.msra.mxu0 %v5698
    %5774 = vmatprep.subr.bf16.mxu0 0
    %5775 = vmatpush1.bf16.msra.mxu0 %v5699
    %5776 = vmatprep.subr.bf16.mxu0 0
    %5777 = vmatpush1.bf16.msra.mxu0 %v5700
    %5778 = vmatprep.subr.bf16.mxu0 0
    %5779 = vmatpush1.bf16.msra.mxu0 %v5701
    %5780 = vmatprep.subr.bf16.mxu0 0
    %5781 = vmatpush1.bf16.msra.mxu0 %v5702
    %5782 = vmatprep.subr.bf16.mxu0 0
    %5783 = vmatpush1.bf16.msra.mxu0 %v5703
    %5784 = vmatprep.mubr.bf16.mxu0 %v5493
    %5785 = vmatmul.mubr.bf16.gmra.mrb[0].mxu0 %v5492
    %v5786 = vpop.f32.mrb[0].mxu0
    %v5787 = vadd.f32 0.0, %v5786
    %v5788 = vpop.f32.mrb[0].mxu0
    %v5789 = vpop.f32.mrb[0].mxu0
    %v5790 = vpop.f32.mrb[0].mxu0
    %5791 = vdwg.mxu0
    %5792 = vmatprep.subr.bf16.mxu0 0
    %5793 = vmatpush1.bf16.msra.mxu0 %v5704
    %5794 = vmatprep.subr.bf16.mxu0 0
    %5795 = vmatpush1.bf16.msra.mxu0 %v5705
    %5796 = vmatprep.subr.bf16.mxu0 0
    %5797 = vmatpush1.bf16.msra.mxu0 %v5706
    %5798 = vmatprep.subr.bf16.mxu0 0
    %5799 = vmatpush1.bf16.msra.mxu0 %v5707
    %5800 = vmatprep.subr.bf16.mxu0 0
    %5801 = vmatpush1.bf16.msra.mxu0 %v5708
    %5802 = vmatprep.subr.bf16.mxu0 0
    %5803 = vmatpush1.bf16.msra.mxu0 %v5709
    %5804 = vmatprep.subr.bf16.mxu0 0
    %5805 = vmatpush1.bf16.msra.mxu0 %v5710
    %5806 = vmatprep.subr.bf16.mxu0 0
    %5807 = vmatpush1.bf16.msra.mxu0 %v5711
    %5808 = vmatprep.subr.bf16.mxu0 0
    %5809 = vmatpush1.bf16.msra.mxu0 %v5712
    %5810 = vmatprep.subr.bf16.mxu0 0
    %5811 = vmatpush1.bf16.msra.mxu0 %v5713
    %5812 = vmatprep.subr.bf16.mxu0 0
    %5813 = vmatpush1.bf16.msra.mxu0 %v5714
    %5814 = vmatprep.subr.bf16.mxu0 0
    %5815 = vmatpush1.bf16.msra.mxu0 %v5715
    %5816 = vmatprep.subr.bf16.mxu0 0
    %5817 = vmatpush1.bf16.msra.mxu0 %v5716
    %5818 = vmatprep.subr.bf16.mxu0 0
    %5819 = vmatpush1.bf16.msra.mxu0 %v5717
    %5820 = vmatprep.subr.bf16.mxu0 0
    %5821 = vmatpush1.bf16.msra.mxu0 %v5718
    %5822 = vmatprep.subr.bf16.mxu0 0
    %5823 = vmatpush1.bf16.msra.mxu0 %v5719
    %5824 = vmatprep.mubr.bf16.mxu0 %v5495
    %5825 = vmatmul.mubr.bf16.gmra.mrb[0].mxu0 %v5494
    %v5826 = vpop.f32.mrb[0].mxu0
    %v5827 = vadd.f32 %v5787, %v5826
    %v5828 = vpop.f32.mrb[0].mxu0
    %v5829 = vpop.f32.mrb[0].mxu0
    %v5830 = vpop.f32.mrb[0].mxu0
    %5831 = vdwg.mxu0
    %5832 = vxpose.xlu0.b32.start [1/16] %v5827, 128
    %5833 = vxpose.xlu0.b32.cont [2/16] 0.0, 128
    %5834 = vxpose.xlu0.b32.cont [3/16] 0.0, 128
    %5835 = vxpose.xlu0.b32.cont [4/16] 0.0, 128
    %5836 = vxpose.xlu0.b32.cont [5/16] 0.0, 128
    %5837 = vxpose.xlu0.b32.cont [6/16] 0.0, 128
    %5838 = vxpose.xlu0.b32.cont [7/16] 0.0, 128
    %5839 = vxpose.xlu0.b32.cont [8/16] 0.0, 128
    %5840 = vxpose.xlu0.b32.cont [9/16] 0.0, 128
    %5841 = vxpose.xlu0.b32.cont [10/16] 0.0, 128
    %5842 = vxpose.xlu0.b32.cont [11/16] 0.0, 128
    %5843 = vxpose.xlu0.b32.cont [12/16] 0.0, 128
    %5844 = vxpose.xlu0.b32.cont [13/16] 0.0, 128
    %5845 = vxpose.xlu0.b32.cont [14/16] 0.0, 128
    %5846 = vxpose.xlu0.b32.cont [15/16] 0.0, 128
    %5847 = vxpose.xlu0.b32.end [16/16] 0.0, 128
    %v5848 = vpop.trf.xlu0
    %v5849 = vpop.trf.xlu0
    %v5850 = vpop.trf.xlu0
    %v5851 = vpop.trf.xlu0
    %v5852 = vpop.trf.xlu0
    %v5853 = vpop.trf.xlu0
    %v5854 = vpop.trf.xlu0
    %v5855 = vpop.trf.xlu0
    %v5856 = vpop.trf.xlu0
    %v5857 = vpop.trf.xlu0
    %v5858 = vpop.trf.xlu0
    %v5859 = vpop.trf.xlu0
    %v5860 = vpop.trf.xlu0
    %v5861 = vpop.trf.xlu0
    %v5862 = vpop.trf.xlu0
    %v5863 = vpop.trf.xlu0
    %5865 = vset.pattern.permute.xlu0 0
    %5866 = vperm.xlu0 %5865, %v5827
    %v5867 = vpop.permute.xlu0 %5866
    %v5869 = vlaneseq
    %v5870 = vshrl.u32 %v5869, 7
    %v5871 = vsub.s32 1, %v5870
    %v5872 = vrot.slane %v5848, %v5871
    %v5873 = vadd.f32 %v5867, %v5872
    %vm5874 = vcmp.gt.f32.partialorder %v5873, 0.0
    %v5875 = vmul.f32 %v5873, 0.2
    %v5876 = vsel %vm5874, %v5873, %v5875
    %v5877 = vadd.f32 %v5876, %v115
    %v5878 = vsel %vm4245, %v5877, -inf
    %5879 = vmax.xlane.f32.xlu0 %v5878
    %v5880 = vpop.xlane.xlu0 %5879
    %v5881 = vsub.f32 %v5877, %v5880
    %v5882 = vmul.f32 %v5881, 1.442695
    %v5883 = vpow.pop %v5882
    %v5884 = vsel %vm4245, %v5883, 0.0
    %5885 = vadd.xlane.f32.xlu0 %v5884
    %v5886 = vpop.xlane.xlu0 %5885
    %v5887 = vrcp.pop %v5886
    %v5888 = vmul.f32 %v5883, %v5887
    %v5889 = vpack.c.bf16 %v5888, %v5888
    %v5891 = vsel %vm4245, %v5889, 0
    %v5894 = vsel %vm4261, %v5492, 0
    %v5897 = vsel %vm4261, %v5493, 0
    %5899 = vmatprep.subr.bf16.mxu0 %v5897
    %5900 = vmatpush1.bf16.msra.mxu0 %v5894
    %5901 = vmatprep.subr.bf16.mxu0 0
    %5902 = vmatpush1.bf16.msra.mxu0 0
    %5903 = vmatprep.subr.bf16.mxu0 0
    %5904 = vmatpush1.bf16.msra.mxu0 0
    %5905 = vmatprep.subr.bf16.mxu0 0
    %5906 = vmatpush1.bf16.msra.mxu0 0
    %5907 = vmatprep.subr.bf16.mxu0 0
    %5908 = vmatpush1.bf16.msra.mxu0 0
    %5909 = vmatprep.subr.bf16.mxu0 0
    %5910 = vmatpush1.bf16.msra.mxu0 0
    %5911 = vmatprep.subr.bf16.mxu0 0
    %5912 = vmatpush1.bf16.msra.mxu0 0
    %5913 = vmatprep.subr.bf16.mxu0 0
    %5914 = vmatpush1.bf16.msra.mxu0 0
    %5915 = vmatprep.subr.bf16.mxu0 0
    %5916 = vmatpush1.bf16.msra.mxu0 0
    %5917 = vmatprep.subr.bf16.mxu0 0
    %5918 = vmatpush1.bf16.msra.mxu0 0
    %5919 = vmatprep.subr.bf16.mxu0 0
    %5920 = vmatpush1.bf16.msra.mxu0 0
    %5921 = vmatprep.subr.bf16.mxu0 0
    %5922 = vmatpush1.bf16.msra.mxu0 0
    %5923 = vmatprep.subr.bf16.mxu0 0
    %5924 = vmatpush1.bf16.msra.mxu0 0
    %5925 = vmatprep.subr.bf16.mxu0 0
    %5926 = vmatpush1.bf16.msra.mxu0 0
    %5927 = vmatprep.subr.bf16.mxu0 0
    %5928 = vmatpush1.bf16.msra.mxu0 0
    %5929 = vmatprep.subr.bf16.mxu0 0
    %5930 = vmatpush1.bf16.msra.mxu0 0
    %5931 = vmatprep.mubr.bf16.mxu0 0
    %5932 = vmatmul.mubr.bf16.gmra.mrb[0].mxu0 %v5891
    %v5933 = vpop.f32.mrb[0].mxu0
    %v5934 = vadd.f32 0.0, %v5933
    %v5935 = vpop.f32.mrb[0].mxu0
    %v5936 = vadd.f32 0.0, %v5935
    %v5937 = vpop.f32.mrb[0].mxu0
    %v5938 = vpop.f32.mrb[0].mxu0
    %5939 = vdwg.mxu0
    %5940 = vst [vmem:[#allocation2] sm:$0xff] %v5934
    %5941 = vst [vmem:[#allocation2 + $0x8] sm:$0xff] %v5936
    %5942 = vset.pattern.permute.xlu0 2
    %5943 = vperm.xlu0 %5942, %v5827
    %v5944 = vpop.permute.xlu0 %5943
    %v5946 = vlaneseq
    %v5947 = vshrl.u32 %v5946, 7
    %v5948 = vsub.s32 3, %v5947
    %v5949 = vrot.slane %v5848, %v5948
    %v5950 = vadd.f32 %v5944, %v5949
    %vm5951 = vcmp.gt.f32.partialorder %v5950, 0.0
    %v5952 = vmul.f32 %v5950, 0.2
    %v5953 = vsel %vm5951, %v5950, %v5952
    %v5954 = vadd.f32 %v5953, %v115
    %v5955 = vsel %vm4245, %v5954, -inf
    %5956 = vmax.xlane.f32.xlu0 %v5955
    %v5957 = vpop.xlane.xlu0 %5956
    %v5958 = vsub.f32 %v5954, %v5957
    %v5959 = vmul.f32 %v5958, 1.442695
    %v5960 = vpow.pop %v5959
    %v5961 = vsel %vm4245, %v5960, 0.0
    %5962 = vadd.xlane.f32.xlu0 %v5961
    %v5963 = vpop.xlane.xlu0 %5962
    %v5964 = vrcp.pop %v5963
    %v5965 = vmul.f32 %v5960, %v5964
    %v5966 = vpack.c.bf16 %v5965, %v5965
    %v5968 = vsel %vm4245, %v5966, 0
    %v5971 = vsel %vm4261, %v5494, 0
    %v5974 = vsel %vm4261, %v5495, 0
    %5976 = vmatprep.subr.bf16.mxu0 %v5974
    %5977 = vmatpush1.bf16.msra.mxu0 %v5971
    %5978 = vmatprep.subr.bf16.mxu0 0
    %5979 = vmatpush1.bf16.msra.mxu0 0
    %5980 = vmatprep.subr.bf16.mxu0 0
    %5981 = vmatpush1.bf16.msra.mxu0 0
    %5982 = vmatprep.subr.bf16.mxu0 0
    %5983 = vmatpush1.bf16.msra.mxu0 0
    %5984 = vmatprep.subr.bf16.mxu0 0
    %5985 = vmatpush1.bf16.msra.mxu0 0
    %5986 = vmatprep.subr.bf16.mxu0 0
    %5987 = vmatpush1.bf16.msra.mxu0 0
    %5988 = vmatprep.subr.bf16.mxu0 0
    %5989 = vmatpush1.bf16.msra.mxu0 0
    %5990 = vmatprep.subr.bf16.mxu0 0
    %5991 = vmatpush1.bf16.msra.mxu0 0
    %5992 = vmatprep.subr.bf16.mxu0 0
    %5993 = vmatpush1.bf16.msra.mxu0 0
    %5994 = vmatprep.subr.bf16.mxu0 0
    %5995 = vmatpush1.bf16.msra.mxu0 0
    %5996 = vmatprep.subr.bf16.mxu0 0
    %5997 = vmatpush1.bf16.msra.mxu0 0
    %5998 = vmatprep.subr.bf16.mxu0 0
    %5999 = vmatpush1.bf16.msra.mxu0 0
    %6000 = vmatprep.subr.bf16.mxu0 0
    %6001 = vmatpush1.bf16.msra.mxu0 0
    %6002 = vmatprep.subr.bf16.mxu0 0
    %6003 = vmatpush1.bf16.msra.mxu0 0
    %6004 = vmatprep.subr.bf16.mxu0 0
    %6005 = vmatpush1.bf16.msra.mxu0 0
    %6006 = vmatprep.subr.bf16.mxu0 0
    %6007 = vmatpush1.bf16.msra.mxu0 0
    %6008 = vmatprep.mubr.bf16.mxu0 0
    %6009 = vmatmul.mubr.bf16.gmra.mrb[0].mxu0 %v5968
    %v6010 = vpop.f32.mrb[0].mxu0
    %v6011 = vadd.f32 0.0, %v6010
    %v6012 = vpop.f32.mrb[0].mxu0
    %v6013 = vadd.f32 0.0, %v6012
    %v6014 = vpop.f32.mrb[0].mxu0
    %v6015 = vpop.f32.mrb[0].mxu0
    %6016 = vdwg.mxu0
    %6017 = vst [vmem:[#allocation2 + $0x10] sm:$0xff] %v6011
    %6018 = vst [vmem:[#allocation2 + $0x18] sm:$0xff] %v6013
    %v6019 = vld [vmem:[#allocation2] sm:$0xff]
    %v6020 = vld [vmem:[#allocation2 + $0x8] sm:$0xff]
    %v6021 = vld [vmem:[#allocation2 + $0x10] sm:$0xff]
    %v6022 = vld [vmem:[#allocation2 + $0x18] sm:$0xff]
    %v6023 = vld [vmem:[%s2 + $0x14] sm:$0xf]
    %v6024 = vld [vmem:[%s2 + $0x18] sm:$0xf]
    %v6025 = vrot.slane %v6019, 4
    %v6026 = vadd.f32 %v6019, %v6025
    %v6027 = vrot.slane %v6026, 2
    %v6028 = vadd.f32 %v6026, %v6027
    %v6029 = vrot.slane %v6028, 1
    %v6030 = vadd.f32 %v6028, %v6029
    %v6031 = vrot.slane %v6020, 4
    %v6032 = vadd.f32 %v6020, %v6031
    %v6033 = vrot.slane %v6032, 2
    %v6034 = vadd.f32 %v6032, %v6033
    %v6035 = vrot.slane %v6034, 1
    %v6036 = vadd.f32 %v6034, %v6035
    %v6037 = vrot.slane %v6021, 4
    %v6038 = vadd.f32 %v6021, %v6037
    %v6039 = vrot.slane %v6038, 2
    %v6040 = vadd.f32 %v6038, %v6039
    %v6041 = vrot.slane %v6040, 1
    %v6042 = vadd.f32 %v6040, %v6041
    %v6043 = vrot.slane %v6022, 4
    %v6044 = vadd.f32 %v6022, %v6043
    %v6045 = vrot.slane %v6044, 2
    %v6046 = vadd.f32 %v6044, %v6045
    %v6047 = vrot.slane %v6046, 1
    %v6048 = vadd.f32 %v6046, %v6047
    %v6049 = vmul.f32 %v6030, %v2682
    %v6050 = vmul.f32 %v6036, %v2682
    %v6051 = vmul.f32 %v6042, %v2682
    %v6052 = vmul.f32 %v6048, %v2682
    %v6053 = vmul.f32 %v6019, %v6019
    %v6054 = vmul.f32 %v6020, %v6020
    %v6055 = vmul.f32 %v6021, %v6021
    %v6056 = vmul.f32 %v6022, %v6022
    %v6057 = vrot.slane %v6053, 4
    %v6058 = vadd.f32 %v6053, %v6057
    %v6059 = vrot.slane %v6058, 2
    %v6060 = vadd.f32 %v6058, %v6059
    %v6061 = vrot.slane %v6060, 1
    %v6062 = vadd.f32 %v6060, %v6061
    %v6063 = vrot.slane %v6054, 4
    %v6064 = vadd.f32 %v6054, %v6063
    %v6065 = vrot.slane %v6064, 2
    %v6066 = vadd.f32 %v6064, %v6065
    %v6067 = vrot.slane %v6066, 1
    %v6068 = vadd.f32 %v6066, %v6067
    %v6069 = vrot.slane %v6055, 4
    %v6070 = vadd.f32 %v6055, %v6069
    %v6071 = vrot.slane %v6070, 2
    %v6072 = vadd.f32 %v6070, %v6071
    %v6073 = vrot.slane %v6072, 1
    %v6074 = vadd.f32 %v6072, %v6073
    %v6075 = vrot.slane %v6056, 4
    %v6076 = vadd.f32 %v6056, %v6075
    %v6077 = vrot.slane %v6076, 2
    %v6078 = vadd.f32 %v6076, %v6077
    %v6079 = vrot.slane %v6078, 1
    %v6080 = vadd.f32 %v6078, %v6079
    %v6081 = vmul.f32 %v6062, %v2682
    %v6082 = vmul.f32 %v6068, %v2682
    %v6083 = vmul.f32 %v6074, %v2682
    %v6084 = vmul.f32 %v6080, %v2682
    %v6085 = vmul.f32 %v6049, %v6049
    %v6086 = vmul.f32 %v6050, %v6050
    %v6087 = vmul.f32 %v6051, %v6051
    %v6088 = vmul.f32 %v6052, %v6052
    %v6089 = vsub.f32 %v6081, %v6085
    %v6090 = vsub.f32 %v6082, %v6086
    %v6091 = vsub.f32 %v6083, %v6087
    %v6092 = vsub.f32 %v6084, %v6088
    %v6093 = vmax.f32 %v6089, 0.0
    %v6094 = vmax.f32 %v6090, 0.0
    %v6095 = vmax.f32 %v6091, 0.0
    %v6096 = vmax.f32 %v6092, 0.0
    %v6097 = vsub.f32 %v6019, %v6049
    %v6098 = vsub.f32 %v6020, %v6050
    %v6099 = vsub.f32 %v6021, %v6051
    %v6100 = vsub.f32 %v6022, %v6052
    %v6102 = vlaneseq
    %v6103 = vshrl.u32 %v6102, 7
    %v6104 = vsub.s32 0, %v6103
    %v6105 = vrot.slane %v6023, %v6104
    %v6106 = vlaneseq
    %v6107 = vshrl.u32 %v6106, 7
    %v6108 = vsub.s32 1, %v6107
    %v6109 = vrot.slane %v6023, %v6108
    %v6110 = vlaneseq
    %v6111 = vshrl.u32 %v6110, 7
    %v6112 = vsub.s32 2, %v6111
    %v6113 = vrot.slane %v6023, %v6112
    %v6114 = vlaneseq
    %v6115 = vshrl.u32 %v6114, 7
    %v6116 = vsub.s32 3, %v6115
    %v6117 = vrot.slane %v6023, %v6116
    %v6122 = vmul.f32 %v6105, %v6097
    %v6123 = vmul.f32 %v6109, %v6098
    %v6124 = vmul.f32 %v6113, %v6099
    %v6125 = vmul.f32 %v6117, %v6100
    %v6126 = vadd.f32 %v6093, 1e-05
    %v6127 = vadd.f32 %v6094, 1e-05
    %v6128 = vadd.f32 %v6095, 1e-05
    %v6129 = vadd.f32 %v6096, 1e-05
    %v6130 = vrsqrt.pop %v6126
    %v6131 = vrsqrt.pop %v6127
    %v6132 = vrsqrt.pop %v6128
    %v6133 = vrsqrt.pop %v6129
    %v6134 = vmul.f32 %v6122, %v6130
    %v6135 = vmul.f32 %v6123, %v6131
    %v6136 = vmul.f32 %v6124, %v6132
    %v6137 = vmul.f32 %v6125, %v6133
    %v6139 = vlaneseq
    %v6140 = vshrl.u32 %v6139, 7
    %v6141 = vsub.s32 0, %v6140
    %v6142 = vrot.slane %v6024, %v6141
    %v6143 = vlaneseq
    %v6144 = vshrl.u32 %v6143, 7
    %v6145 = vsub.s32 1, %v6144
    %v6146 = vrot.slane %v6024, %v6145
    %v6147 = vlaneseq
    %v6148 = vshrl.u32 %v6147, 7
    %v6149 = vsub.s32 2, %v6148
    %v6150 = vrot.slane %v6024, %v6149
    %v6151 = vlaneseq
    %v6152 = vshrl.u32 %v6151, 7
    %v6153 = vsub.s32 3, %v6152
    %v6154 = vrot.slane %v6024, %v6153
    %v6159 = vadd.f32 %v6134, %v6142
    %v6160 = vadd.f32 %v6135, %v6146
    %v6161 = vadd.f32 %v6136, %v6150
    %v6162 = vadd.f32 %v6137, %v6154
    %vm6163 = vcmp.gt.f32.partialorder %v6159, 0.0
    %vm6164 = vcmp.gt.f32.partialorder %v6160, 0.0
    %vm6165 = vcmp.gt.f32.partialorder %v6161, 0.0
    %vm6166 = vcmp.gt.f32.partialorder %v6162, 0.0
    %v6167 = vmin.f32 %v6159, 0.0
    %v6168 = vmin.f32 %v6160, 0.0
    %v6169 = vmin.f32 %v6161, 0.0
    %v6170 = vmin.f32 %v6162, 0.0
    %v6171 = vmul.f32 %v6167, 1.442695
    %v6172 = vpow.pop %v6171
    %v6173 = vmul.f32 %v6168, 1.442695
    %v6174 = vpow.pop %v6173
    %v6175 = vmul.f32 %v6169, 1.442695
    %v6176 = vpow.pop %v6175
    %v6177 = vmul.f32 %v6170, 1.442695
    %v6178 = vpow.pop %v6177
    %v6179 = vsub.f32 %v6172, 1.0
    %v6180 = vsub.f32 %v6174, 1.0
    %v6181 = vsub.f32 %v6176, 1.0
    %v6182 = vsub.f32 %v6178, 1.0
    %v6183 = vsel %vm6163, %v6159, %v6179
    %v6184 = vsel %vm6164, %v6160, %v6180
    %v6185 = vsel %vm6165, %v6161, %v6181
    %v6186 = vsel %vm6166, %v6162, %v6182
    %v6187 = vpack.c.bf16 %v6183, %v6183
    %v6188 = vpack.c.bf16 %v6184, %v6184
    %v6189 = vpack.c.bf16 %v6185, %v6185
    %v6190 = vpack.c.bf16 %v6186, %v6186
    %v6191 = vld [vmem:[#allocation8] sm:$0xf]
    %v6192 = vld [vmem:[#allocation8 + $0x4] sm:$0xf]
    %v6193 = vld [vmem:[#allocation8 + $0x8] sm:$0xf]
    %v6194 = vld [vmem:[#allocation8 + $0xc] sm:$0xf]
    %v6195 = vld [vmem:[#allocation8 + $0x10] sm:$0xf]
    %v6196 = vld [vmem:[#allocation8 + $0x14] sm:$0xf]
    %v6197 = vld [vmem:[#allocation8 + $0x18] sm:$0xf]
    %v6198 = vld [vmem:[#allocation8 + $0x1c] sm:$0xf]
    %v6199 = vld [vmem:[#allocation8 + $0x20] sm:$0xf]
    %v6200 = vld [vmem:[#allocation8 + $0x24] sm:$0xf]
    %v6201 = vld [vmem:[#allocation8 + $0x28] sm:$0xf]
    %v6202 = vld [vmem:[#allocation8 + $0x2c] sm:$0xf]
    %v6203 = vld [vmem:[#allocation8 + $0x30] sm:$0xf]
    %v6204 = vld [vmem:[#allocation8 + $0x34] sm:$0xf]
    %v6205 = vld [vmem:[#allocation8 + $0x38] sm:$0xf]
    %v6206 = vld [vmem:[#allocation8 + $0x3c] sm:$0xf]
    %v6207 = vld [vmem:[#allocation8 + $0x40] sm:$0xf]
    %v6208 = vld [vmem:[#allocation8 + $0x44] sm:$0xf]
    %v6209 = vld [vmem:[#allocation8 + $0x48] sm:$0xf]
    %v6210 = vld [vmem:[#allocation8 + $0x4c] sm:$0xf]
    %v6211 = vld [vmem:[#allocation8 + $0x50] sm:$0xf]
    %v6212 = vld [vmem:[#allocation8 + $0x54] sm:$0xf]
    %v6213 = vld [vmem:[#allocation8 + $0x58] sm:$0xf]
    %v6214 = vld [vmem:[#allocation8 + $0x5c] sm:$0xf]
    %v6215 = vld [vmem:[#allocation8 + $0x60] sm:$0xf]
    %v6216 = vld [vmem:[#allocation8 + $0x64] sm:$0xf]
    %v6217 = vld [vmem:[#allocation8 + $0x68] sm:$0xf]
    %v6218 = vld [vmem:[#allocation8 + $0x6c] sm:$0xf]
    %v6219 = vld [vmem:[#allocation8 + $0x70] sm:$0xf]
    %v6220 = vld [vmem:[#allocation8 + $0x74] sm:$0xf]
    %v6221 = vld [vmem:[#allocation8 + $0x78] sm:$0xf]
    %v6222 = vld [vmem:[#allocation8 + $0x7c] sm:$0xf]
    %v6223 = vld [vmem:[#allocation8 + $0x80] sm:$0xf]
    %v6224 = vld [vmem:[#allocation8 + $0x84] sm:$0xf]
    %v6225 = vld [vmem:[#allocation8 + $0x88] sm:$0xf]
    %v6226 = vld [vmem:[#allocation8 + $0x8c] sm:$0xf]
    %v6227 = vld [vmem:[#allocation8 + $0x90] sm:$0xf]
    %v6228 = vld [vmem:[#allocation8 + $0x94] sm:$0xf]
    %v6229 = vld [vmem:[#allocation8 + $0x98] sm:$0xf]
    %v6230 = vld [vmem:[#allocation8 + $0x9c] sm:$0xf]
    %v6231 = vld [vmem:[#allocation8 + $0xa0] sm:$0xf]
    %v6232 = vld [vmem:[#allocation8 + $0xa4] sm:$0xf]
    %v6233 = vld [vmem:[#allocation8 + $0xa8] sm:$0xf]
    %v6234 = vld [vmem:[#allocation8 + $0xac] sm:$0xf]
    %v6235 = vld [vmem:[#allocation8 + $0xb0] sm:$0xf]
    %v6236 = vld [vmem:[#allocation8 + $0xb4] sm:$0xf]
    %v6237 = vld [vmem:[#allocation8 + $0xb8] sm:$0xf]
    %v6238 = vld [vmem:[#allocation8 + $0xbc] sm:$0xf]
    %v6239 = vld [vmem:[#allocation8 + $0xc0] sm:$0xf]
    %v6240 = vld [vmem:[#allocation8 + $0xc4] sm:$0xf]
    %v6241 = vld [vmem:[#allocation8 + $0xc8] sm:$0xf]
    %v6242 = vld [vmem:[#allocation8 + $0xcc] sm:$0xf]
    %v6243 = vld [vmem:[#allocation8 + $0xd0] sm:$0xf]
    %v6244 = vld [vmem:[#allocation8 + $0xd4] sm:$0xf]
    %v6245 = vld [vmem:[#allocation8 + $0xd8] sm:$0xf]
    %v6246 = vld [vmem:[#allocation8 + $0xdc] sm:$0xf]
    %v6247 = vld [vmem:[#allocation8 + $0xe0] sm:$0xf]
    %v6248 = vld [vmem:[#allocation8 + $0xe4] sm:$0xf]
    %v6249 = vld [vmem:[#allocation8 + $0xe8] sm:$0xf]
    %v6250 = vld [vmem:[#allocation8 + $0xec] sm:$0xf]
    %v6251 = vld [vmem:[#allocation8 + $0xf0] sm:$0xf]
    %v6252 = vld [vmem:[#allocation8 + $0xf4] sm:$0xf]
    %v6253 = vld [vmem:[#allocation8 + $0xf8] sm:$0xf]
    %v6254 = vld [vmem:[#allocation8 + $0xfc] sm:$0xf]
    %v6319 = vunpack.c.l.b16 %v6191
    %v6320 = vunpack.c.l.b16 %v6192
    %v6321 = vunpack.c.l.b16 %v6193
    %v6322 = vunpack.c.l.b16 %v6194
    %v6323 = vunpack.c.l.b16 %v6195
    %v6324 = vunpack.c.l.b16 %v6196
    %v6325 = vunpack.c.l.b16 %v6197
    %v6326 = vunpack.c.l.b16 %v6198
    %v6327 = vunpack.c.l.b16 %v6199
    %v6328 = vunpack.c.l.b16 %v6200
    %v6329 = vunpack.c.l.b16 %v6201
    %v6330 = vunpack.c.l.b16 %v6202
    %v6331 = vunpack.c.l.b16 %v6203
    %v6332 = vunpack.c.l.b16 %v6204
    %v6333 = vunpack.c.l.b16 %v6205
    %v6334 = vunpack.c.l.b16 %v6206
    %v6335 = vunpack.c.l.b16 %v6207
    %v6336 = vunpack.c.l.b16 %v6208
    %v6337 = vunpack.c.l.b16 %v6209
    %v6338 = vunpack.c.l.b16 %v6210
    %v6339 = vunpack.c.l.b16 %v6211
    %v6340 = vunpack.c.l.b16 %v6212
    %v6341 = vunpack.c.l.b16 %v6213
    %v6342 = vunpack.c.l.b16 %v6214
    %v6343 = vunpack.c.l.b16 %v6215
    %v6344 = vunpack.c.l.b16 %v6216
    %v6345 = vunpack.c.l.b16 %v6217
    %v6346 = vunpack.c.l.b16 %v6218
    %v6347 = vunpack.c.l.b16 %v6219
    %v6348 = vunpack.c.l.b16 %v6220
    %v6349 = vunpack.c.l.b16 %v6221
    %v6350 = vunpack.c.l.b16 %v6222
    %v6351 = vunpack.c.l.b16 %v6223
    %v6352 = vunpack.c.l.b16 %v6224
    %v6353 = vunpack.c.l.b16 %v6225
    %v6354 = vunpack.c.l.b16 %v6226
    %v6355 = vunpack.c.l.b16 %v6227
    %v6356 = vunpack.c.l.b16 %v6228
    %v6357 = vunpack.c.l.b16 %v6229
    %v6358 = vunpack.c.l.b16 %v6230
    %v6359 = vunpack.c.l.b16 %v6231
    %v6360 = vunpack.c.l.b16 %v6232
    %v6361 = vunpack.c.l.b16 %v6233
    %v6362 = vunpack.c.l.b16 %v6234
    %v6363 = vunpack.c.l.b16 %v6235
    %v6364 = vunpack.c.l.b16 %v6236
    %v6365 = vunpack.c.l.b16 %v6237
    %v6366 = vunpack.c.l.b16 %v6238
    %v6367 = vunpack.c.l.b16 %v6239
    %v6368 = vunpack.c.l.b16 %v6240
    %v6369 = vunpack.c.l.b16 %v6241
    %v6370 = vunpack.c.l.b16 %v6242
    %v6371 = vunpack.c.l.b16 %v6243
    %v6372 = vunpack.c.l.b16 %v6244
    %v6373 = vunpack.c.l.b16 %v6245
    %v6374 = vunpack.c.l.b16 %v6246
    %v6375 = vunpack.c.l.b16 %v6247
    %v6376 = vunpack.c.l.b16 %v6248
    %v6377 = vunpack.c.l.b16 %v6249
    %v6378 = vunpack.c.l.b16 %v6250
    %v6379 = vunpack.c.l.b16 %v6251
    %v6380 = vunpack.c.l.b16 %v6252
    %v6381 = vunpack.c.l.b16 %v6253
    %v6382 = vunpack.c.l.b16 %v6254
    %v6383 = vpack.c.b16 %v6320, %v6319
    %v6384 = vpack.c.b16 %v6322, %v6321
    %v6385 = vpack.c.b16 %v6324, %v6323
    %v6386 = vpack.c.b16 %v6326, %v6325
    %v6387 = vpack.c.b16 %v6328, %v6327
    %v6388 = vpack.c.b16 %v6330, %v6329
    %v6389 = vpack.c.b16 %v6332, %v6331
    %v6390 = vpack.c.b16 %v6334, %v6333
    %v6391 = vpack.c.b16 %v6336, %v6335
    %v6392 = vpack.c.b16 %v6338, %v6337
    %v6393 = vpack.c.b16 %v6340, %v6339
    %v6394 = vpack.c.b16 %v6342, %v6341
    %v6395 = vpack.c.b16 %v6344, %v6343
    %v6396 = vpack.c.b16 %v6346, %v6345
    %v6397 = vpack.c.b16 %v6348, %v6347
    %v6398 = vpack.c.b16 %v6350, %v6349
    %v6399 = vpack.c.b16 %v6352, %v6351
    %v6400 = vpack.c.b16 %v6354, %v6353
    %v6401 = vpack.c.b16 %v6356, %v6355
    %v6402 = vpack.c.b16 %v6358, %v6357
    %v6403 = vpack.c.b16 %v6360, %v6359
    %v6404 = vpack.c.b16 %v6362, %v6361
    %v6405 = vpack.c.b16 %v6364, %v6363
    %v6406 = vpack.c.b16 %v6366, %v6365
    %v6407 = vpack.c.b16 %v6368, %v6367
    %v6408 = vpack.c.b16 %v6370, %v6369
    %v6409 = vpack.c.b16 %v6372, %v6371
    %v6410 = vpack.c.b16 %v6374, %v6373
    %v6411 = vpack.c.b16 %v6376, %v6375
    %v6412 = vpack.c.b16 %v6378, %v6377
    %v6413 = vpack.c.b16 %v6380, %v6379
    %v6414 = vpack.c.b16 %v6382, %v6381
    %6447 = vmatprep.subr.bf16.mxu0 0
    %6448 = vmatpush1.bf16.msra.mxu0 %v6383
    %6449 = vmatprep.subr.bf16.mxu0 0
    %6450 = vmatpush1.bf16.msra.mxu0 %v6384
    %6451 = vmatprep.subr.bf16.mxu0 0
    %6452 = vmatpush1.bf16.msra.mxu0 %v6385
    %6453 = vmatprep.subr.bf16.mxu0 0
    %6454 = vmatpush1.bf16.msra.mxu0 %v6386
    %6455 = vmatprep.subr.bf16.mxu0 0
    %6456 = vmatpush1.bf16.msra.mxu0 %v6387
    %6457 = vmatprep.subr.bf16.mxu0 0
    %6458 = vmatpush1.bf16.msra.mxu0 %v6388
    %6459 = vmatprep.subr.bf16.mxu0 0
    %6460 = vmatpush1.bf16.msra.mxu0 %v6389
    %6461 = vmatprep.subr.bf16.mxu0 0
    %6462 = vmatpush1.bf16.msra.mxu0 %v6390
    %6463 = vmatprep.subr.bf16.mxu0 0
    %6464 = vmatpush1.bf16.msra.mxu0 %v6391
    %6465 = vmatprep.subr.bf16.mxu0 0
    %6466 = vmatpush1.bf16.msra.mxu0 %v6392
    %6467 = vmatprep.subr.bf16.mxu0 0
    %6468 = vmatpush1.bf16.msra.mxu0 %v6393
    %6469 = vmatprep.subr.bf16.mxu0 0
    %6470 = vmatpush1.bf16.msra.mxu0 %v6394
    %6471 = vmatprep.subr.bf16.mxu0 0
    %6472 = vmatpush1.bf16.msra.mxu0 %v6395
    %6473 = vmatprep.subr.bf16.mxu0 0
    %6474 = vmatpush1.bf16.msra.mxu0 %v6396
    %6475 = vmatprep.subr.bf16.mxu0 0
    %6476 = vmatpush1.bf16.msra.mxu0 %v6397
    %6477 = vmatprep.subr.bf16.mxu0 0
    %6478 = vmatpush1.bf16.msra.mxu0 %v6398
    %6479 = vmatprep.mubr.bf16.mxu0 %v6188
    %6480 = vmatmul.mubr.bf16.gmra.mrb[0].mxu0 %v6187
    %v6481 = vpop.f32.mrb[0].mxu0
    %v6482 = vadd.f32 0.0, %v6481
    %v6483 = vpop.f32.mrb[0].mxu0
    %v6484 = vpop.f32.mrb[0].mxu0
    %v6485 = vpop.f32.mrb[0].mxu0
    %6486 = vdwg.mxu0
    %6487 = vmatprep.subr.bf16.mxu0 0
    %6488 = vmatpush1.bf16.msra.mxu0 %v6399
    %6489 = vmatprep.subr.bf16.mxu0 0
    %6490 = vmatpush1.bf16.msra.mxu0 %v6400
    %6491 = vmatprep.subr.bf16.mxu0 0
    %6492 = vmatpush1.bf16.msra.mxu0 %v6401
    %6493 = vmatprep.subr.bf16.mxu0 0
    %6494 = vmatpush1.bf16.msra.mxu0 %v6402
    %6495 = vmatprep.subr.bf16.mxu0 0
    %6496 = vmatpush1.bf16.msra.mxu0 %v6403
    %6497 = vmatprep.subr.bf16.mxu0 0
    %6498 = vmatpush1.bf16.msra.mxu0 %v6404
    %6499 = vmatprep.subr.bf16.mxu0 0
    %6500 = vmatpush1.bf16.msra.mxu0 %v6405
    %6501 = vmatprep.subr.bf16.mxu0 0
    %6502 = vmatpush1.bf16.msra.mxu0 %v6406
    %6503 = vmatprep.subr.bf16.mxu0 0
    %6504 = vmatpush1.bf16.msra.mxu0 %v6407
    %6505 = vmatprep.subr.bf16.mxu0 0
    %6506 = vmatpush1.bf16.msra.mxu0 %v6408
    %6507 = vmatprep.subr.bf16.mxu0 0
    %6508 = vmatpush1.bf16.msra.mxu0 %v6409
    %6509 = vmatprep.subr.bf16.mxu0 0
    %6510 = vmatpush1.bf16.msra.mxu0 %v6410
    %6511 = vmatprep.subr.bf16.mxu0 0
    %6512 = vmatpush1.bf16.msra.mxu0 %v6411
    %6513 = vmatprep.subr.bf16.mxu0 0
    %6514 = vmatpush1.bf16.msra.mxu0 %v6412
    %6515 = vmatprep.subr.bf16.mxu0 0
    %6516 = vmatpush1.bf16.msra.mxu0 %v6413
    %6517 = vmatprep.subr.bf16.mxu0 0
    %6518 = vmatpush1.bf16.msra.mxu0 %v6414
    %6519 = vmatprep.mubr.bf16.mxu0 %v6190
    %6520 = vmatmul.mubr.bf16.gmra.mrb[0].mxu0 %v6189
    %v6521 = vpop.f32.mrb[0].mxu0
    %v6522 = vadd.f32 %v6482, %v6521
    %v6523 = vpop.f32.mrb[0].mxu0
    %v6524 = vpop.f32.mrb[0].mxu0
    %v6525 = vpop.f32.mrb[0].mxu0
    %6526 = vdwg.mxu0
    %v6527 = vld [vmem:[%s2 + $0x1c] sm:$0x1]
    %v6528 = vld [vmem:[%s2 + $0x1d] sm:$0x1]
    %v6529 = vrot.slane %v6522, 4
    %v6530 = vadd.f32 %v6522, %v6529
    %v6531 = vrot.slane %v6530, 2
    %v6532 = vadd.f32 %v6530, %v6531
    %v6533 = vrot.slane %v6532, 1
    %v6534 = vadd.f32 %v6532, %v6533
    %v6535 = vmul.f32 %v6534, %v2682
    %v6536 = vmul.f32 %v6522, %v6522
    %v6537 = vrot.slane %v6536, 4
    %v6538 = vadd.f32 %v6536, %v6537
    %v6539 = vrot.slane %v6538, 2
    %v6540 = vadd.f32 %v6538, %v6539
    %v6541 = vrot.slane %v6540, 1
    %v6542 = vadd.f32 %v6540, %v6541
    %v6543 = vmul.f32 %v6542, %v2682
    %v6544 = vmul.f32 %v6535, %v6535
    %v6545 = vsub.f32 %v6543, %v6544
    %v6546 = vmax.f32 %v6545, 0.0
    %v6547 = vsub.f32 %v6522, %v6535
    %v6549 = vlaneseq
    %v6550 = vshrl.u32 %v6549, 7
    %v6551 = vsub.s32 0, %v6550
    %v6552 = vrot.slane %v6527, %v6551
    %v6554 = vmul.f32 %v6552, %v6547
    %v6555 = vadd.f32 %v6546, 1e-05
    %v6556 = vrsqrt.pop %v6555
    %v6557 = vmul.f32 %v6554, %v6556
    %v6559 = vlaneseq
    %v6560 = vshrl.u32 %v6559, 7
    %v6561 = vsub.s32 0, %v6560
    %v6562 = vrot.slane %v6528, %v6561
    %v6564 = vadd.f32 %v6557, %v6562
    %vm6565 = vcmp.gt.f32.partialorder %v6564, 0.0
    %v6566 = vmin.f32 %v6564, 0.0
    %v6567 = vmul.f32 %v6566, 1.442695
    %v6568 = vpow.pop %v6567
    %v6569 = vsub.f32 %v6568, 1.0
    %v6570 = vsel %vm6565, %v6564, %v6569
    %v6571 = vpack.c.bf16 %v6570, %v6570
    %v6572 = vld [vmem:[#allocation9] sm:$0xf]
    %v6573 = vld [vmem:[#allocation9 + $0x4] sm:$0xf]
    %v6574 = vld [vmem:[#allocation9 + $0x8] sm:$0xf]
    %v6575 = vld [vmem:[#allocation9 + $0xc] sm:$0xf]
    %v6576 = vld [vmem:[#allocation9 + $0x10] sm:$0xf]
    %v6577 = vld [vmem:[#allocation9 + $0x14] sm:$0xf]
    %v6578 = vld [vmem:[#allocation9 + $0x18] sm:$0xf]
    %v6579 = vld [vmem:[#allocation9 + $0x1c] sm:$0xf]
    %v6580 = vld [vmem:[#allocation9 + $0x20] sm:$0xf]
    %v6581 = vld [vmem:[#allocation9 + $0x24] sm:$0xf]
    %v6582 = vld [vmem:[#allocation9 + $0x28] sm:$0xf]
    %v6583 = vld [vmem:[#allocation9 + $0x2c] sm:$0xf]
    %v6584 = vld [vmem:[#allocation9 + $0x30] sm:$0xf]
    %v6585 = vld [vmem:[#allocation9 + $0x34] sm:$0xf]
    %v6586 = vld [vmem:[#allocation9 + $0x38] sm:$0xf]
    %v6587 = vld [vmem:[#allocation9 + $0x3c] sm:$0xf]
    %v6604 = vunpack.c.l.b16 %v6572
    %v6605 = vunpack.c.l.b16 %v6573
    %v6606 = vunpack.c.l.b16 %v6574
    %v6607 = vunpack.c.l.b16 %v6575
    %v6608 = vunpack.c.l.b16 %v6576
    %v6609 = vunpack.c.l.b16 %v6577
    %v6610 = vunpack.c.l.b16 %v6578
    %v6611 = vunpack.c.l.b16 %v6579
    %v6612 = vunpack.c.l.b16 %v6580
    %v6613 = vunpack.c.l.b16 %v6581
    %v6614 = vunpack.c.l.b16 %v6582
    %v6615 = vunpack.c.l.b16 %v6583
    %v6616 = vunpack.c.l.b16 %v6584
    %v6617 = vunpack.c.l.b16 %v6585
    %v6618 = vunpack.c.l.b16 %v6586
    %v6619 = vunpack.c.l.b16 %v6587
    %v6620 = vpack.c.b16 %v6605, %v6604
    %v6621 = vpack.c.b16 %v6607, %v6606
    %v6622 = vpack.c.b16 %v6609, %v6608
    %v6623 = vpack.c.b16 %v6611, %v6610
    %v6624 = vpack.c.b16 %v6613, %v6612
    %v6625 = vpack.c.b16 %v6615, %v6614
    %v6626 = vpack.c.b16 %v6617, %v6616
    %v6627 = vpack.c.b16 %v6619, %v6618
    %6636 = vmatprep.subr.bf16.mxu0 0
    %6637 = vmatpush1.bf16.msra.mxu0 %v6620
    %6638 = vmatprep.subr.bf16.mxu0 0
    %6639 = vmatpush1.bf16.msra.mxu0 %v6621
    %6640 = vmatprep.subr.bf16.mxu0 0
    %6641 = vmatpush1.bf16.msra.mxu0 %v6622
    %6642 = vmatprep.subr.bf16.mxu0 0
    %6643 = vmatpush1.bf16.msra.mxu0 %v6623
    %6644 = vmatprep.subr.bf16.mxu0 0
    %6645 = vmatpush1.bf16.msra.mxu0 %v6624
    %6646 = vmatprep.subr.bf16.mxu0 0
    %6647 = vmatpush1.bf16.msra.mxu0 %v6625
    %6648 = vmatprep.subr.bf16.mxu0 0
    %6649 = vmatpush1.bf16.msra.mxu0 %v6626
    %6650 = vmatprep.subr.bf16.mxu0 0
    %6651 = vmatpush1.bf16.msra.mxu0 %v6627
    %6652 = vmatprep.subr.bf16.mxu0 0
    %6653 = vmatpush1.bf16.msra.mxu0 0
    %6654 = vmatprep.subr.bf16.mxu0 0
    %6655 = vmatpush1.bf16.msra.mxu0 0
    %6656 = vmatprep.subr.bf16.mxu0 0
    %6657 = vmatpush1.bf16.msra.mxu0 0
    %6658 = vmatprep.subr.bf16.mxu0 0
    %6659 = vmatpush1.bf16.msra.mxu0 0
    %6660 = vmatprep.subr.bf16.mxu0 0
    %6661 = vmatpush1.bf16.msra.mxu0 0
    %6662 = vmatprep.subr.bf16.mxu0 0
    %6663 = vmatpush1.bf16.msra.mxu0 0
    %6664 = vmatprep.subr.bf16.mxu0 0
    %6665 = vmatpush1.bf16.msra.mxu0 0
    %6666 = vmatprep.subr.bf16.mxu0 0
    %6667 = vmatpush1.bf16.msra.mxu0 0
    %6668 = vmatprep.mubr.bf16.mxu0 0
    %6669 = vmatmul.mubr.bf16.gmra.mrb[0].mxu0 %v6571
    %v6670 = vpop.f32.mrb[0].mxu0
    %v6671 = vadd.f32 0.0, %v6670
    %v6672 = vpop.f32.mrb[0].mxu0
    %v6673 = vpop.f32.mrb[0].mxu0
    %v6674 = vpop.f32.mrb[0].mxu0
    %6675 = vdwg.mxu0
    %v6676 = vld [vmem:[%s2 + $0x1e] sm:$0x1]
    %v6677 = vld [vmem:[%s2 + $0x1f] sm:$0x1]
    %v6678 = vrot.slane %v6671, 4
    %v6679 = vadd.f32 %v6671, %v6678
    %v6680 = vrot.slane %v6679, 2
    %v6681 = vadd.f32 %v6679, %v6680
    %v6682 = vrot.slane %v6681, 1
    %v6683 = vadd.f32 %v6681, %v6682
    %v6684 = vmul.f32 %v6683, %v2682
    %v6685 = vmul.f32 %v6671, %v6671
    %v6686 = vrot.slane %v6685, 4
    %v6687 = vadd.f32 %v6685, %v6686
    %v6688 = vrot.slane %v6687, 2
    %v6689 = vadd.f32 %v6687, %v6688
    %v6690 = vrot.slane %v6689, 1
    %v6691 = vadd.f32 %v6689, %v6690
    %v6692 = vmul.f32 %v6691, %v2682
    %v6693 = vmul.f32 %v6684, %v6684
    %v6694 = vsub.f32 %v6692, %v6693
    %v6695 = vmax.f32 %v6694, 0.0
    %v6696 = vsub.f32 %v6671, %v6684
    %v6698 = vlaneseq
    %v6699 = vshrl.u32 %v6698, 7
    %v6700 = vsub.s32 0, %v6699
    %v6701 = vrot.slane %v6676, %v6700
    %v6703 = vmul.f32 %v6701, %v6696
    %v6704 = vadd.f32 %v6695, 1e-05
    %v6705 = vrsqrt.pop %v6704
    %v6706 = vmul.f32 %v6703, %v6705
    %v6708 = vlaneseq
    %v6709 = vshrl.u32 %v6708, 7
    %v6710 = vsub.s32 0, %v6709
    %v6711 = vrot.slane %v6677, %v6710
    %v6713 = vadd.f32 %v6706, %v6711
    %vm6714 = vcmp.gt.f32.partialorder %v6713, 0.0
    %v6715 = vmin.f32 %v6713, 0.0
    %v6716 = vmul.f32 %v6715, 1.442695
    %v6717 = vpow.pop %v6716
    %v6718 = vsub.f32 %v6717, 1.0
    %v6719 = vsel %vm6714, %v6713, %v6718
    %v6720 = vpack.c.bf16 %v6719, %v6719
    %v6721 = vld [vmem:[#allocation11] sm:$0xf]
    %v6722 = vld [vmem:[#allocation11 + $0x4] sm:$0xf]
    %v6723 = vld [vmem:[#allocation11 + $0x8] sm:$0xf]
    %v6724 = vld [vmem:[#allocation11 + $0xc] sm:$0xf]
    %v6725 = vld [vmem:[#allocation11 + $0x10] sm:$0xf]
    %v6726 = vld [vmem:[#allocation11 + $0x14] sm:$0xf]
    %v6727 = vld [vmem:[#allocation11 + $0x18] sm:$0xf]
    %v6728 = vld [vmem:[#allocation11 + $0x1c] sm:$0xf]
    %v6729 = vld [vmem:[#allocation11 + $0x20] sm:$0xf]
    %v6730 = vld [vmem:[#allocation11 + $0x24] sm:$0xf]
    %v6731 = vld [vmem:[#allocation11 + $0x28] sm:$0xf]
    %v6732 = vld [vmem:[#allocation11 + $0x2c] sm:$0xf]
    %v6733 = vld [vmem:[#allocation11 + $0x30] sm:$0xf]
    %v6734 = vld [vmem:[#allocation11 + $0x34] sm:$0xf]
    %v6735 = vld [vmem:[#allocation11 + $0x38] sm:$0xf]
    %v6736 = vld [vmem:[#allocation11 + $0x3c] sm:$0xf]
    %v6737 = vld [vmem:[%s2 + $0x20] sm:$0x1]
    %v6739 = vlaneseq
    %v6740 = vshrl.u32 %v6739, 7
    %v6741 = vsub.s32 0, %v6740
    %v6742 = vrot.slane %v6737, %v6741
    %v6760 = vunpack.c.l.b16 %v6721
    %v6761 = vunpack.c.l.b16 %v6722
    %v6762 = vunpack.c.l.b16 %v6723
    %v6763 = vunpack.c.l.b16 %v6724
    %v6764 = vunpack.c.l.b16 %v6725
    %v6765 = vunpack.c.l.b16 %v6726
    %v6766 = vunpack.c.l.b16 %v6727
    %v6767 = vunpack.c.l.b16 %v6728
    %v6768 = vunpack.c.l.b16 %v6729
    %v6769 = vunpack.c.l.b16 %v6730
    %v6770 = vunpack.c.l.b16 %v6731
    %v6771 = vunpack.c.l.b16 %v6732
    %v6772 = vunpack.c.l.b16 %v6733
    %v6773 = vunpack.c.l.b16 %v6734
    %v6774 = vunpack.c.l.b16 %v6735
    %v6775 = vunpack.c.l.b16 %v6736
    %v6776 = vpack.c.b16 %v6761, %v6760
    %v6777 = vpack.c.b16 %v6763, %v6762
    %v6778 = vpack.c.b16 %v6765, %v6764
    %v6779 = vpack.c.b16 %v6767, %v6766
    %v6780 = vpack.c.b16 %v6769, %v6768
    %v6781 = vpack.c.b16 %v6771, %v6770
    %v6782 = vpack.c.b16 %v6773, %v6772
    %v6783 = vpack.c.b16 %v6775, %v6774
    %6792 = vmatprep.subr.bf16.mxu0 0
    %6793 = vmatpush1.bf16.msra.mxu0 %v6776
    %6794 = vmatprep.subr.bf16.mxu0 0
    %6795 = vmatpush1.bf16.msra.mxu0 %v6777
    %6796 = vmatprep.subr.bf16.mxu0 0
    %6797 = vmatpush1.bf16.msra.mxu0 %v6778
    %6798 = vmatprep.subr.bf16.mxu0 0
    %6799 = vmatpush1.bf16.msra.mxu0 %v6779
    %6800 = vmatprep.subr.bf16.mxu0 0
    %6801 = vmatpush1.bf16.msra.mxu0 %v6780
    %6802 = vmatprep.subr.bf16.mxu0 0
    %6803 = vmatpush1.bf16.msra.mxu0 %v6781
    %6804 = vmatprep.subr.bf16.mxu0 0
    %6805 = vmatpush1.bf16.msra.mxu0 %v6782
    %6806 = vmatprep.subr.bf16.mxu0 0
    %6807 = vmatpush1.bf16.msra.mxu0 %v6783
    %6808 = vmatprep.subr.bf16.mxu0 0
    %6809 = vmatpush1.bf16.msra.mxu0 0
    %6810 = vmatprep.subr.bf16.mxu0 0
    %6811 = vmatpush1.bf16.msra.mxu0 0
    %6812 = vmatprep.subr.bf16.mxu0 0
    %6813 = vmatpush1.bf16.msra.mxu0 0
    %6814 = vmatprep.subr.bf16.mxu0 0
    %6815 = vmatpush1.bf16.msra.mxu0 0
    %6816 = vmatprep.subr.bf16.mxu0 0
    %6817 = vmatpush1.bf16.msra.mxu0 0
    %6818 = vmatprep.subr.bf16.mxu0 0
    %6819 = vmatpush1.bf16.msra.mxu0 0
    %6820 = vmatprep.subr.bf16.mxu0 0
    %6821 = vmatpush1.bf16.msra.mxu0 0
    %6822 = vmatprep.subr.bf16.mxu0 0
    %6823 = vmatpush1.bf16.msra.mxu0 0
    %6824 = vmatprep.mubr.bf16.mxu0 0
    %6825 = vmatmul.mubr.bf16.gmra.mrb[0].mxu0 %v6720
    %v6826 = vpop.f32.mrb[0].mxu0
    %v6827 = vadd.f32 %v6742, %v6826
    %v6828 = vpop.f32.mrb[0].mxu0
    %v6829 = vpop.f32.mrb[0].mxu0
    %v6830 = vpop.f32.mrb[0].mxu0
    %6831 = vdwg.mxu0
    %6832 = vst [vmem:[#allocation12] sm:$0xff] %v6827
    // Predicated region
    $region74: #{gatsyfc_forward.1} parent=1 // pred_check
      _
    $region75: #{gatsyfc_forward.1} parent=1 // pred_check_branch
      %6834 = sbr.rel (0) target = $region77
    $region76: #{gatsyfc_forward.1} parent=1 // pred_region
      %s6836 = ssub.s32 128, 128
      %6837 = vsyncadd [#allocation5], %s6836
      %s6839 = sshll.u32 [#allocation12], 4
      %s6840 = int_to_ptr.vmem [resolvable:$true] %s6839
      %6842 = dma.vmem_to_hbm [thread:$0]  %s6840, 128, %s13, [#allocation5]
    $region77: #{gatsyfc_forward.1} parent=1 // pred_fallthru
      _
    // Predicated region
    $region78: #{gatsyfc_forward.1} parent=1 // pred_check
      _
    $region79: #{gatsyfc_forward.1} parent=1 // pred_check_branch
      %6844 = sbr.rel (0) target = $region81
    $region80: #{gatsyfc_forward.1} parent=1 // pred_region
      %6845 = dma.done [#allocation5], 128
    $region81: #{gatsyfc_forward.1} parent=1 // pred_fallthru
      _
    %6846 = vsyncpa [#allocation4], 1
    %6847 = vsyncpa [#allocation7], 1
    %6848 = vsyncpa [#allocation10], 1
    %6849 = vsyncpa [#allocation5], 1

</llo_original>
